<compile_context>
chip_gen: v7x
topology: tpu7x:2x2x1
jax: 0.10.0
libtpu: 0.0.40
codegen_flags: <defaults>
</compile_context>

<pallas_src>
import jax
import jax.numpy as jnp
from jax.experimental import pallas as pl
from jax.experimental.pallas import tpu as pltpu

# Full-precision f32 matmuls everywhere (kernel and pure-JAX reference) so the
# numerical comparison is meaningful.
jax.config.update("jax_default_matmul_precision", "highest")


def _user_encoder_kernel(x_ref, w1e_ref, b1e_ref, w2b_ref, ash_ref, padk_ref,
                         knum_ref, mden_ref, eexp_ref, b2_ref, o_ref):
    """One tile of TB users per grid step; everything lane-dense.

    x_ref    : (TB, L*D)   flattened click histories
    w1e_ref  : (LD, LH)    kron(shift, att_fc1.w)  -> hidden units for vec[1:]
    b1e_ref  : (1, LH)     tiled att_fc1.b + pad-doc contribution for vec[0]
    w2b_ref  : (LH, L)     kron(I_L, att_fc2.w)
    ash_ref  : (L, LD)     expands a[l+1] over the D lanes of history slot l
    padk_ref : (1, GD)     pad doc tiled over the G output slots
    knum_ref : (LD, GD)    blocked prefix-sum (autoregressive mask), numerator
    mden_ref : (L, G)      prefix-sum mask, denominator
    eexp_ref : (G, GD)     expands 1/den over the D lanes of each output slot
    b2_ref   : (1, 1)      att_fc2 bias (SMEM scalar; cancels in the softmax)
    o_ref    : (TB, GD)    user vectors, flattened
    """
    f32 = jnp.float32
    x = x_ref[...]                                                     # (TB, LD)

    # Additive-attention score for every history slot (pad doc + shifted clicks).
    h = jnp.tanh(jnp.dot(x, w1e_ref[...], preferred_element_type=f32)
                 + b1e_ref[...])                                       # (TB, LH)
    s = jnp.dot(h, w2b_ref[...], preferred_element_type=f32) + b2_ref[0, 0]  # (TB, L)

    # Stable exp; the masked autoregressive softmax becomes prefix sums.
    a = jnp.exp(s - jnp.max(s, axis=-1, keepdims=True))                # (TB, L)

    a_sh = jnp.dot(a, ash_ref[...], preferred_element_type=f32)        # (TB, LD)
    num = (jnp.dot(a_sh * x, knum_ref[...], preferred_element_type=f32)
           + a[:, 0:1] * padk_ref[...])                                # (TB, GD)
    den = jnp.dot(a, mden_ref[...], preferred_element_type=f32)        # (TB, G)
    # den only has TB*G entries, so an exact divide is effectively free here
    # (pl.reciprocal(..., approx=True) works too at looser tolerance).
    inv = jnp.dot(1.0 / den, eexp_ref[...], preferred_element_type=f32)  # (TB, GD)

    o_ref[...] = (num * inv).astype(o_ref.dtype)


def user_encoder_forward(log_vec, log_mask, pad_embedding, params, *,
                         block_batch=512):
    """Pallas implementation of UserEncoder.forward (add_pad=True, use_pad=True)."""
    del log_mask  # use_pad=True -> PyTorch code ignores log_mask in auto_mask.
    # TODO(synk): use_pad=False branch (auto_mask *= log_mask[:, :-1]) not wired in.
    w1, b1, w2, b2 = params
    B, L, D = log_vec.shape          # history length after pad-prepend + drop-last == L
    H = w1.shape[1]
    G = L - 1                        # min_log_length = 1 + 1(add_pad) -> G = L + 1 - 2
    LD, LH, GD = L * D, L * H, G * D
    f32 = jnp.float32

    pad = pad_embedding.reshape(1, D).astype(f32)
    w1f, w2f = w1.astype(f32), w2.astype(f32)

    # Constant matrices, built once outside the kernel.  With
    #   vec[0] = pad_doc, vec[l] = log_vec[l-1]  (l = 1..L-1),
    # they fold the pad-prepend / drop-last-click glue and the triu(-1)
    # autoregressive mask of _autoreg_user_modeling into plain matmuls.
    shift_up = jnp.eye(L, k=1, dtype=f32)                     # slot l <- click l-1
    w1_eff = jnp.kron(shift_up, w1f)                          # (LD, LH)
    b1_eff = jnp.tile(b1.reshape(1, H).astype(f32), (1, L))
    b1_eff = b1_eff.at[:, :H].add(pad @ w1f)                  # pad doc -> slot 0
    w2_bd = jnp.kron(jnp.eye(L, dtype=f32), w2f)              # (LH, L)

    m_pref = jnp.triu(jnp.ones((L, G), f32), k=-1)            # [l, g] = (l <= g+1)
    m_shift = jnp.concatenate([m_pref[1:], jnp.zeros((1, G), f32)], axis=0)
    k_num = jnp.kron(m_shift, jnp.eye(D, dtype=f32))          # (LD, GD)
    a_shift = jnp.kron(jnp.eye(L, k=-1, dtype=f32), jnp.ones((1, D), f32))  # (L, LD)
    e_exp = jnp.kron(jnp.eye(G, dtype=f32), jnp.ones((1, D), f32))          # (G, GD)
    pad_k = jnp.tile(pad, (1, G))                             # (1, GD)
    b2_s = jnp.asarray(b2, f32).reshape(1, 1)

    # Lane-dense views: one 256-lane row per user in, one 224-lane row out
    # (both are free reshapes of contiguous HBM).
    x2d = log_vec.astype(f32).reshape(B, LD)
    tb = min(block_batch, -(-B // 8) * 8)                     # keep sublane multiple of 8
    b_pad = pl.cdiv(B, tb) * tb
    if b_pad != B:
        x2d = jnp.concatenate([x2d, jnp.zeros((b_pad - B, LD), f32)], axis=0)

    out2d = pl.pallas_call(
        _user_encoder_kernel,
        out_shape=jax.ShapeDtypeStruct((b_pad, GD), f32),
        grid_spec=pltpu.PrefetchScalarGridSpec(
            num_scalar_prefetch=0,
            grid=(b_pad // tb,),
            in_specs=[
                pl.BlockSpec((tb, LD), lambda i: (i, 0)),     # per-tile histories
                pl.BlockSpec((LD, LH), lambda i: (0, 0)),     # w1_eff (resident)
                pl.BlockSpec((1, LH), lambda i: (0, 0)),      # b1_eff
                pl.BlockSpec((LH, L), lambda i: (0, 0)),      # w2_bd
                pl.BlockSpec((L, LD), lambda i: (0, 0)),      # a_shift
                pl.BlockSpec((1, GD), lambda i: (0, 0)),      # pad_k
                pl.BlockSpec((LD, GD), lambda i: (0, 0)),     # k_num
                pl.BlockSpec((L, G), lambda i: (0, 0)),       # m_pref
                pl.BlockSpec((G, GD), lambda i: (0, 0)),      # e_exp
                pl.BlockSpec(memory_space=pltpu.MemorySpace.SMEM),  # b2 scalar
            ],
            out_specs=pl.BlockSpec((tb, GD), lambda i: (i, 0)),
        ),
        compiler_params=pltpu.CompilerParams(
            dimension_semantics=("parallel",)),
    )(x2d, w1_eff, b1_eff, w2_bd, a_shift, pad_k, k_num, m_pref, e_exp, b2_s)

    return out2d[:B].reshape(B, G, D)


def _reference(log_vec, pad_embedding, params):
    """Pure-JAX transcription of the PyTorch code for verification."""
    w1, b1, w2, b2 = params
    B, L0, D = log_vec.shape
    pad = jnp.broadcast_to(pad_embedding.reshape(1, 1, D), (B, 1, D))
    vec = jnp.concatenate([pad, log_vec], axis=1)[:, :-1, :]
    L = vec.shape[1]
    m = 2
    G = L + 1 - m
    e = jnp.tanh(vec @ w1 + b1.reshape(1, 1, -1))
    s = (e @ w2)[..., 0] + b2.reshape(())                     # (B, L)
    scores = jnp.broadcast_to(s[:, None, :], (B, G, L))
    allowed = jnp.arange(L)[None, :] <= jnp.arange(G)[:, None] + (m - 1)
    w = jnp.where(allowed[None], scores, -1.0e8)
    p = jax.nn.softmax(w, axis=-1)
    return jnp.einsum("bgl,bld->bgd", p, vec)


if __name__ == "__main__":
    B, L0, D, H = 256, 8, 32, 16   # batch, history length, news_dim, user_query_vector_dim

    key = jax.random.PRNGKey(0)
    k_vec, k_mask, k_pad, k_w1, k_b1, k_w2, k_b2 = jax.random.split(key, 7)

    log_vec = jax.random.normal(k_vec, (B, L0, D), dtype=jnp.float32)
    log_mask = (jax.random.uniform(k_mask, (B, L0)) > 0.2).astype(jnp.float32)
    pad_embedding = jax.random.normal(k_pad, (D,), dtype=jnp.float32) * 0.1

    w1 = jax.random.normal(k_w1, (D, H), dtype=jnp.float32) * 0.1   # att_fc1 (in, out)
    b1 = jax.random.normal(k_b1, (1, H), dtype=jnp.float32) * 0.1
    w2 = jax.random.normal(k_w2, (H, 1), dtype=jnp.float32) * 0.1   # att_fc2 (in, out)
    b2 = jax.random.normal(k_b2, (1, 1), dtype=jnp.float32) * 0.1
    params = (w1, b1, w2, b2)

    # block_batch=128 -> grid of 2 steps, exercising the batch pipeline and the
    # "parallel" megacore sharding; production sizes should use the larger
    # default (512) so DMA per step dominates the ~0.35us per-step overhead.
    out = user_encoder_forward(log_vec, log_mask, pad_embedding, params,
                               block_batch=128)
    out = jax.block_until_ready(out)

    ref = _reference(log_vec, pad_embedding, params)
    assert out.shape == (B, L0 - 1, D), out.shape
    max_err = float(jnp.max(jnp.abs(out - ref)))
    assert jnp.allclose(out, ref, atol=1e-4, rtol=1e-4), max_err

    print("KERNEL_OK")
</pallas_src>

<mosaic_0001>
module attributes {stable_mosaic.version = 11 : i64} {
  func.func @_user_encoder_kernel(%arg0: i32, %arg1: memref<128x256xf32, #tpu.memory_space<vmem>>, %arg2: memref<256x128xf32, #tpu.memory_space<vmem>>, %arg3: memref<1x128xf32, #tpu.memory_space<vmem>>, %arg4: memref<128x8xf32, #tpu.memory_space<vmem>>, %arg5: memref<8x256xf32, #tpu.memory_space<vmem>>, %arg6: memref<1x224xf32, #tpu.memory_space<vmem>>, %arg7: memref<256x224xf32, #tpu.memory_space<vmem>>, %arg8: memref<8x7xf32, #tpu.memory_space<vmem>>, %arg9: memref<7x224xf32, #tpu.memory_space<vmem>>, %arg10: memref<1x1xf32, #tpu.memory_space<smem>>, %arg11: memref<128x224xf32, #tpu.memory_space<vmem>>) attributes {dimension_semantics = [#tpu.dimension_semantics<parallel>], iteration_bounds = array<i64: 2>, scalar_prefetch = 0 : i64, scratch_operands = 0 : i64, tpu.core_type = #tpu.core_type<tc>, window_params = [{transform_indices = @transform_0, window_bounds = array<i64: 128, 256>}, {pipeline_mode = #tpu.pipeline_mode<synchronous>, transform_indices = @transform_1, window_bounds = array<i64: 256, 128>}, {pipeline_mode = #tpu.pipeline_mode<synchronous>, transform_indices = @transform_2, window_bounds = array<i64: 1, 128>}, {pipeline_mode = #tpu.pipeline_mode<synchronous>, transform_indices = @transform_3, window_bounds = array<i64: 128, 8>}, {pipeline_mode = #tpu.pipeline_mode<synchronous>, transform_indices = @transform_4, window_bounds = array<i64: 8, 256>}, {pipeline_mode = #tpu.pipeline_mode<synchronous>, transform_indices = @transform_5, window_bounds = array<i64: 1, 224>}, {pipeline_mode = #tpu.pipeline_mode<synchronous>, transform_indices = @transform_6, window_bounds = array<i64: 256, 224>}, {pipeline_mode = #tpu.pipeline_mode<synchronous>, transform_indices = @transform_7, window_bounds = array<i64: 8, 7>}, {pipeline_mode = #tpu.pipeline_mode<synchronous>, transform_indices = @transform_8, window_bounds = array<i64: 7, 224>}, {transform_indices = @transform_9, window_bounds = array<i64: 1, 1>}, {transform_indices = @transform_10, window_bounds = array<i64: 128, 224>}]} {
    %c0 = arith.constant 0 : index
    %c0_0 = arith.constant 0 : index
    %0 = vector.load %arg1[%c0, %c0_0] : memref<128x256xf32, #tpu.memory_space<vmem>>, vector<128x256xf32>
    %c0_1 = arith.constant 0 : index
    %c0_2 = arith.constant 0 : index
    %1 = vector.load %arg2[%c0_1, %c0_2] : memref<256x128xf32, #tpu.memory_space<vmem>>, vector<256x128xf32>
    %cst = arith.constant dense<0.000000e+00> : vector<128x128xf32>
    %2 = tpu.matmul %0, %1, %cst {dimension_numbers = #tpu.dot_dimension_numbers<[1], [0], [0], [1], [0, 0, 1, 1], [], []>, precision = #tpu.contract_precision<fp32>} : vector<128x256xf32>, vector<256x128xf32>, vector<128x128xf32> -> vector<128x128xf32>
    %c0_3 = arith.constant 0 : index
    %c0_4 = arith.constant 0 : index
    %3 = vector.load %arg3[%c0_3, %c0_4] : memref<1x128xf32, #tpu.memory_space<vmem>>, vector<1x128xf32>
    %4 = vector.broadcast %3 : vector<1x128xf32> to vector<128x128xf32>
    %5 = arith.addf %2, %4 : vector<128x128xf32>
    %6 = math.tanh %5 : vector<128x128xf32>
    %c0_5 = arith.constant 0 : index
    %c0_6 = arith.constant 0 : index
    %7 = vector.load %arg4[%c0_5, %c0_6] : memref<128x8xf32, #tpu.memory_space<vmem>>, vector<128x8xf32>
    %cst_7 = arith.constant dense<0.000000e+00> : vector<128x8xf32>
    %8 = tpu.matmul %6, %7, %cst_7 {dimension_numbers = #tpu.dot_dimension_numbers<[1], [0], [0], [1], [0, 0, 1, 1], [], []>, precision = #tpu.contract_precision<fp32>} : vector<128x128xf32>, vector<128x8xf32>, vector<128x8xf32> -> vector<128x8xf32>
    %c0_8 = arith.constant 0 : index
    %c0_9 = arith.constant 0 : index
    %9 = memref.load %arg10[%c0_8, %c0_9] : memref<1x1xf32, #tpu.memory_space<smem>>
    %10 = vector.broadcast %9 : f32 to vector<128x8xf32>
    %11 = arith.addf %8, %10 : vector<128x8xf32>
    %cst_10 = arith.constant dense<0xFF800000> : vector<128xf32>
    %12 = vector.multi_reduction <maximumf>, %11, %cst_10 [1] : vector<128x8xf32> to vector<128xf32>
    %13 = vector.shape_cast %12 : vector<128xf32> to vector<128x1xf32>
    %14 = vector.broadcast %13 : vector<128x1xf32> to vector<128x8xf32>
    %15 = arith.subf %11, %14 : vector<128x8xf32>
    %16 = math.exp %15 : vector<128x8xf32>
    %c0_11 = arith.constant 0 : index
    %c0_12 = arith.constant 0 : index
    %17 = vector.load %arg5[%c0_11, %c0_12] : memref<8x256xf32, #tpu.memory_space<vmem>>, vector<8x256xf32>
    %cst_13 = arith.constant dense<0.000000e+00> : vector<128x256xf32>
    %18 = tpu.matmul %16, %17, %cst_13 {dimension_numbers = #tpu.dot_dimension_numbers<[1], [0], [0], [1], [0, 0, 1, 1], [], []>, precision = #tpu.contract_precision<fp32>} : vector<128x8xf32>, vector<8x256xf32>, vector<128x256xf32> -> vector<128x256xf32>
    %19 = arith.mulf %18, %0 : vector<128x256xf32>
    %c0_14 = arith.constant 0 : index
    %c0_15 = arith.constant 0 : index
    %20 = vector.load %arg7[%c0_14, %c0_15] : memref<256x224xf32, #tpu.memory_space<vmem>>, vector<256x224xf32>
    %cst_16 = arith.constant dense<0.000000e+00> : vector<128x224xf32>
    %21 = tpu.matmul %19, %20, %cst_16 {dimension_numbers = #tpu.dot_dimension_numbers<[1], [0], [0], [1], [0, 0, 1, 1], [], []>, precision = #tpu.contract_precision<fp32>} : vector<128x256xf32>, vector<256x224xf32>, vector<128x224xf32> -> vector<128x224xf32>
    %22 = vector.extract_strided_slice %16 {offsets = [0, 0], sizes = [128, 1], strides = [1, 1]} : vector<128x8xf32> to vector<128x1xf32>
    %c0_17 = arith.constant 0 : index
    %c0_18 = arith.constant 0 : index
    %23 = vector.load %arg6[%c0_17, %c0_18] : memref<1x224xf32, #tpu.memory_space<vmem>>, vector<1x224xf32>
    %24 = vector.broadcast %22 : vector<128x1xf32> to vector<128x224xf32>
    %25 = vector.broadcast %23 : vector<1x224xf32> to vector<128x224xf32>
    %26 = arith.mulf %24, %25 : vector<128x224xf32>
    %27 = arith.addf %21, %26 : vector<128x224xf32>
    %c0_19 = arith.constant 0 : index
    %c0_20 = arith.constant 0 : index
    %28 = vector.load %arg8[%c0_19, %c0_20] : memref<8x7xf32, #tpu.memory_space<vmem>>, vector<8x7xf32>
    %cst_21 = arith.constant dense<0.000000e+00> : vector<128x7xf32>
    %29 = tpu.matmul %16, %28, %cst_21 {dimension_numbers = #tpu.dot_dimension_numbers<[1], [0], [0], [1], [0, 0, 1, 1], [], []>, precision = #tpu.contract_precision<fp32>} : vector<128x8xf32>, vector<8x7xf32>, vector<128x7xf32> -> vector<128x7xf32>
    %cst_22 = arith.constant 1.000000e+00 : f32
    %30 = vector.broadcast %cst_22 : f32 to vector<128x7xf32>
    %31 = arith.divf %30, %29 : vector<128x7xf32>
    %c0_23 = arith.constant 0 : index
    %c0_24 = arith.constant 0 : index
    %32 = vector.load %arg9[%c0_23, %c0_24] : memref<7x224xf32, #tpu.memory_space<vmem>>, vector<7x224xf32>
    %cst_25 = arith.constant dense<0.000000e+00> : vector<128x224xf32>
    %33 = tpu.matmul %31, %32, %cst_25 {dimension_numbers = #tpu.dot_dimension_numbers<[1], [0], [0], [1], [0, 0, 1, 1], [], []>, precision = #tpu.contract_precision<fp32>} : vector<128x7xf32>, vector<7x224xf32>, vector<128x224xf32> -> vector<128x224xf32>
    %34 = arith.mulf %27, %33 : vector<128x224xf32>
    %c0_26 = arith.constant 0 : index
    %c0_27 = arith.constant 0 : index
    %35 = vector.load %arg11[%c0_26, %c0_27] : memref<128x224xf32, #tpu.memory_space<vmem>>, vector<128x224xf32>
    tpu.vector_store %arg11[%c0_26, %c0_27], %34 {strides = array<i32>} : memref<128x224xf32, #tpu.memory_space<vmem>>, vector<128x224xf32>,
    return
  }
  func.func @transform_0(%arg0: i32) -> (i32, i32) {
    %c0_i32 = arith.constant 0 : i32
    %c0_i32_0 = arith.constant 0 : i32
    return %arg0, %c0_i32 : i32, i32
  }
  func.func @transform_1(%arg0: i32) -> (i32, i32) {
    %c0_i32 = arith.constant 0 : i32
    %c0_i32_0 = arith.constant 0 : i32
    %c0_i32_1 = arith.constant 0 : i32
    return %c0_i32, %c0_i32_0 : i32, i32
  }
  func.func @transform_2(%arg0: i32) -> (i32, i32) {
    %c0_i32 = arith.constant 0 : i32
    %c0_i32_0 = arith.constant 0 : i32
    %c0_i32_1 = arith.constant 0 : i32
    return %c0_i32, %c0_i32_0 : i32, i32
  }
  func.func @transform_3(%arg0: i32) -> (i32, i32) {
    %c0_i32 = arith.constant 0 : i32
    %c0_i32_0 = arith.constant 0 : i32
    %c0_i32_1 = arith.constant 0 : i32
    return %c0_i32, %c0_i32_0 : i32, i32
  }
  func.func @transform_4(%arg0: i32) -> (i32, i32) {
    %c0_i32 = arith.constant 0 : i32
    %c0_i32_0 = arith.constant 0 : i32
    %c0_i32_1 = arith.constant 0 : i32
    return %c0_i32, %c0_i32_0 : i32, i32
  }
  func.func @transform_5(%arg0: i32) -> (i32, i32) {
    %c0_i32 = arith.constant 0 : i32
    %c0_i32_0 = arith.constant 0 : i32
    %c0_i32_1 = arith.constant 0 : i32
    return %c0_i32, %c0_i32_0 : i32, i32
  }
  func.func @transform_6(%arg0: i32) -> (i32, i32) {
    %c0_i32 = arith.constant 0 : i32
    %c0_i32_0 = arith.constant 0 : i32
    %c0_i32_1 = arith.constant 0 : i32
    return %c0_i32, %c0_i32_0 : i32, i32
  }
  func.func @transform_7(%arg0: i32) -> (i32, i32) {
    %c0_i32 = arith.constant 0 : i32
    %c0_i32_0 = arith.constant 0 : i32
    %c0_i32_1 = arith.constant 0 : i32
    return %c0_i32, %c0_i32_0 : i32, i32
  }
  func.func @transform_8(%arg0: i32) -> (i32, i32) {
    %c0_i32 = arith.constant 0 : i32
    %c0_i32_0 = arith.constant 0 : i32
    %c0_i32_1 = arith.constant 0 : i32
    return %c0_i32, %c0_i32_0 : i32, i32
  }
  func.func @transform_9(%arg0: i32) -> (i32, i32) {
    %c0_i32 = arith.constant 0 : i32
    %c0_i32_0 = arith.constant 0 : i32
    %c0_i32_1 = arith.constant 0 : i32
    return %c0_i32, %c0_i32_0 : i32, i32
  }
  func.func @transform_10(%arg0: i32) -> (i32, i32) {
    %c0_i32 = arith.constant 0 : i32
    %c0_i32_0 = arith.constant 0 : i32
    return %arg0, %c0_i32 : i32, i32
  }
}

</mosaic_0001>

<llo_original>
// kernel: tpu_custom_call.1
$region0: #{tpu_custom_call.1}
  #allocation0 [shape = 'u32[]', space=smem, size = 0x4, offset = 0x4, fixed_abs, tag = 'smem constant byte address 0x4 - core index']
  #allocation1 [shape = 'u32[144,128]{1,0:T(1,128)}', space=vmem, size = 0x12000, scoped, tag = 'internal scratch']
  #allocation2 [shape = 'f32[1,1]{1,0:T(1,128)S(6)}', space=smem, size = 0x200, scoped, tag = 'scoped memory for tpu_custom_call.1']
  %s0 = inlined_call_operand.vmem [shape: f32[256,256], index: 0, kind: input, shape index: {}]
  %s1 = inlined_call_operand.vmem [shape: f32[256,128], index: 1, kind: input, shape index: {}]
  %s2 = inlined_call_operand.vmem [shape: f32[1,128], index: 2, kind: input, shape index: {}]
  %s3 = inlined_call_operand.vmem [shape: f32[128,8], index: 3, kind: input, shape index: {}]
  %s4 = inlined_call_operand.vmem [shape: f32[8,256], index: 4, kind: input, shape index: {}]
  %s5 = inlined_call_operand.vmem [shape: f32[1,224], index: 5, kind: input, shape index: {}]
  %s6 = inlined_call_operand.vmem [shape: f32[256,224], index: 6, kind: input, shape index: {}]
  %s7 = inlined_call_operand.vmem [shape: f32[8,7], index: 7, kind: input, shape index: {}]
  %s8 = inlined_call_operand.vmem [shape: f32[7,224], index: 8, kind: input, shape index: {}]
  %s9 = inlined_call_operand.<no memory space> [shape: f32[1,1], index: 9, kind: input, shape index: {}]
  %s10 = inlined_call_operand.vmem [shape: f32[256,224], index: 10, kind: output, shape index: {}]
  %s11 = sld [smem:[#allocation0]]
  $region73: #{tpu_custom_call.1} parent=0
    _
  %s13 = ssub.s32 1, %s11
  %s14 = scalar_select 0, %s13, %s11
  %15 = sst [smem:[#allocation2]] %s9
  loop: start=0, step=1, limit=4
  $region2: #{tpu_custom_call.1} parent=0 // loop_pre_header
    _
  $region3: #{tpu_custom_call.1} parent=0 // loop_header
    %s17 = sphi 0, %s21
    %p18 = scmp.ge.s32.totalorder %s17, 4
    %s27 = sphi 0, %s29
    %s30 = sphi 0, %s27
    %s31 = sphi 0, %s30
    %s47 = sphi 0, %s31
    %s51 = sphi 0, %s51
    %s53 = sphi 0, %s51
    %s54 = sphi 0, %s53
    %s68 = sphi 0, %s54
    %s72 = sphi 0, %s72
    %s74 = sphi 0, %s72
    %s75 = sphi 0, %s74
    %s89 = sphi 0, %s75
    %s93 = sphi 0, %s93
    %s95 = sphi 0, %s93
    %s96 = sphi 0, %s95
    %s110 = sphi 0, %s96
    %s114 = sphi 0, %s114
    %s116 = sphi 0, %s114
    %s117 = sphi 0, %s116
    %s131 = sphi 0, %s117
    %s135 = sphi 0, %s135
    %s137 = sphi 0, %s135
    %s138 = sphi 0, %s137
    %s152 = sphi 0, %s138
    %s156 = sphi 0, %s156
    %s158 = sphi 0, %s156
    %s159 = sphi 0, %s158
    %s173 = sphi 0, %s159
    %s177 = sphi 0, %s177
    %s179 = sphi 0, %s177
    %s180 = sphi 0, %s179
    %s194 = sphi 0, %s180
    %s198 = sphi 0, %s198
    %s200 = sphi 0, %s198
    %s201 = sphi 0, %s200
    %s215 = sphi 0, %s201
    %s219 = sphi 0, %s219
    %s221 = sphi 0, %s219
    %s222 = sphi 0, %s221
    %s236 = sphi 0, %s222
    %s242 = sphi 0, %s244
    %s245 = sphi 0, %s242
    %s246 = sphi 0, %s245
    %s262 = sphi 0, %s246
  $region4: #{tpu_custom_call.1} parent=0 // loop_header_branch
    %20 = sbr.rel (%p18) target = $region8
  $region5: #{tpu_custom_call.1} parent=0 // loop_body
    %s22 = ssub.s32 %s17, 1
    %s23 = ssub.s32 %s17, 2
    %s24 = sadd.s32 %s17, 1
    %s25 = ssub.s32 %s17, %s24
    %p26 = scmp.eq.s32.totalorder %s25, 0
    %s28 = sadd.s32 %s27, 1
    %s29 = scalar_select %p26, %s27, %s28
    %p32 = pneg %p26
    %p33 = scmp.eq.s32.totalorder %s17, 1
    %p34 = por %p32, %p33
    %p35 = scmp.ne.s32.totalorder %s27, %s30
    %p36 = scmp.eq.s32.totalorder %s17, 0
    %p37 = por %p35, %p36
    %p38 = scmp.ne.s32.totalorder %s27, %s30
    %p39 = scmp.eq.s32.totalorder %s22, 1
    %p40 = por %p38, %p39
    %p41 = scmp.ne.s32.totalorder %s30, %s31
    %p42 = scmp.eq.s32.totalorder %s22, 0
    %p43 = por %p41, %p42
    %p44 = scmp.ne.s32.totalorder %s30, %s31
    %p45 = scmp.eq.s32.totalorder %s23, 1
    %p46 = por %p44, %p45
    %p48 = scmp.ne.s32.totalorder %s31, %s47
    %p49 = scmp.eq.s32.totalorder %s23, 0
    %p50 = por %p48, %p49
    %s52 = sadd.s32 %s51, 1
    %p55 = scmp.eq.s32.totalorder %s17, 1
    %p56 = scmp.ne.s32.totalorder %s51, %s53
    %p57 = scmp.eq.s32.totalorder %s17, 0
    %p58 = por %p56, %p57
    %p59 = scmp.ne.s32.totalorder %s51, %s53
    %p60 = scmp.eq.s32.totalorder %s22, 1
    %p61 = por %p59, %p60
    %p62 = scmp.ne.s32.totalorder %s53, %s54
    %p63 = scmp.eq.s32.totalorder %s22, 0
    %p64 = por %p62, %p63
    %p65 = scmp.ne.s32.totalorder %s53, %s54
    %p66 = scmp.eq.s32.totalorder %s23, 1
    %p67 = por %p65, %p66
    %p69 = scmp.ne.s32.totalorder %s54, %s68
    %p70 = scmp.eq.s32.totalorder %s23, 0
    %p71 = por %p69, %p70
    %s73 = sadd.s32 %s72, 1
    %p76 = scmp.eq.s32.totalorder %s17, 1
    %p77 = scmp.ne.s32.totalorder %s72, %s74
    %p78 = scmp.eq.s32.totalorder %s17, 0
    %p79 = por %p77, %p78
    %p80 = scmp.ne.s32.totalorder %s72, %s74
    %p81 = scmp.eq.s32.totalorder %s22, 1
    %p82 = por %p80, %p81
    %p83 = scmp.ne.s32.totalorder %s74, %s75
    %p84 = scmp.eq.s32.totalorder %s22, 0
    %p85 = por %p83, %p84
    %p86 = scmp.ne.s32.totalorder %s74, %s75
    %p87 = scmp.eq.s32.totalorder %s23, 1
    %p88 = por %p86, %p87
    %p90 = scmp.ne.s32.totalorder %s75, %s89
    %p91 = scmp.eq.s32.totalorder %s23, 0
    %p92 = por %p90, %p91
    %s94 = sadd.s32 %s93, 1
    %p97 = scmp.eq.s32.totalorder %s17, 1
    %p98 = scmp.ne.s32.totalorder %s93, %s95
    %p99 = scmp.eq.s32.totalorder %s17, 0
    %p100 = por %p98, %p99
    %p101 = scmp.ne.s32.totalorder %s93, %s95
    %p102 = scmp.eq.s32.totalorder %s22, 1
    %p103 = por %p101, %p102
    %p104 = scmp.ne.s32.totalorder %s95, %s96
    %p105 = scmp.eq.s32.totalorder %s22, 0
    %p106 = por %p104, %p105
    %p107 = scmp.ne.s32.totalorder %s95, %s96
    %p108 = scmp.eq.s32.totalorder %s23, 1
    %p109 = por %p107, %p108
    %p111 = scmp.ne.s32.totalorder %s96, %s110
    %p112 = scmp.eq.s32.totalorder %s23, 0
    %p113 = por %p111, %p112
    %s115 = sadd.s32 %s114, 1
    %p118 = scmp.eq.s32.totalorder %s17, 1
    %p119 = scmp.ne.s32.totalorder %s114, %s116
    %p120 = scmp.eq.s32.totalorder %s17, 0
    %p121 = por %p119, %p120
    %p122 = scmp.ne.s32.totalorder %s114, %s116
    %p123 = scmp.eq.s32.totalorder %s22, 1
    %p124 = por %p122, %p123
    %p125 = scmp.ne.s32.totalorder %s116, %s117
    %p126 = scmp.eq.s32.totalorder %s22, 0
    %p127 = por %p125, %p126
    %p128 = scmp.ne.s32.totalorder %s116, %s117
    %p129 = scmp.eq.s32.totalorder %s23, 1
    %p130 = por %p128, %p129
    %p132 = scmp.ne.s32.totalorder %s117, %s131
    %p133 = scmp.eq.s32.totalorder %s23, 0
    %p134 = por %p132, %p133
    %s136 = sadd.s32 %s135, 1
    %p139 = scmp.eq.s32.totalorder %s17, 1
    %p140 = scmp.ne.s32.totalorder %s135, %s137
    %p141 = scmp.eq.s32.totalorder %s17, 0
    %p142 = por %p140, %p141
    %p143 = scmp.ne.s32.totalorder %s135, %s137
    %p144 = scmp.eq.s32.totalorder %s22, 1
    %p145 = por %p143, %p144
    %p146 = scmp.ne.s32.totalorder %s137, %s138
    %p147 = scmp.eq.s32.totalorder %s22, 0
    %p148 = por %p146, %p147
    %p149 = scmp.ne.s32.totalorder %s137, %s138
    %p150 = scmp.eq.s32.totalorder %s23, 1
    %p151 = por %p149, %p150
    %p153 = scmp.ne.s32.totalorder %s138, %s152
    %p154 = scmp.eq.s32.totalorder %s23, 0
    %p155 = por %p153, %p154
    %s157 = sadd.s32 %s156, 1
    %p160 = scmp.eq.s32.totalorder %s17, 1
    %p161 = scmp.ne.s32.totalorder %s156, %s158
    %p162 = scmp.eq.s32.totalorder %s17, 0
    %p163 = por %p161, %p162
    %p164 = scmp.ne.s32.totalorder %s156, %s158
    %p165 = scmp.eq.s32.totalorder %s22, 1
    %p166 = por %p164, %p165
    %p167 = scmp.ne.s32.totalorder %s158, %s159
    %p168 = scmp.eq.s32.totalorder %s22, 0
    %p169 = por %p167, %p168
    %p170 = scmp.ne.s32.totalorder %s158, %s159
    %p171 = scmp.eq.s32.totalorder %s23, 1
    %p172 = por %p170, %p171
    %p174 = scmp.ne.s32.totalorder %s159, %s173
    %p175 = scmp.eq.s32.totalorder %s23, 0
    %p176 = por %p174, %p175
    %s178 = sadd.s32 %s177, 1
    %p181 = scmp.eq.s32.totalorder %s17, 1
    %p182 = scmp.ne.s32.totalorder %s177, %s179
    %p183 = scmp.eq.s32.totalorder %s17, 0
    %p184 = por %p182, %p183
    %p185 = scmp.ne.s32.totalorder %s177, %s179
    %p186 = scmp.eq.s32.totalorder %s22, 1
    %p187 = por %p185, %p186
    %p188 = scmp.ne.s32.totalorder %s179, %s180
    %p189 = scmp.eq.s32.totalorder %s22, 0
    %p190 = por %p188, %p189
    %p191 = scmp.ne.s32.totalorder %s179, %s180
    %p192 = scmp.eq.s32.totalorder %s23, 1
    %p193 = por %p191, %p192
    %p195 = scmp.ne.s32.totalorder %s180, %s194
    %p196 = scmp.eq.s32.totalorder %s23, 0
    %p197 = por %p195, %p196
    %s199 = sadd.s32 %s198, 1
    %p202 = scmp.eq.s32.totalorder %s17, 1
    %p203 = scmp.ne.s32.totalorder %s198, %s200
    %p204 = scmp.eq.s32.totalorder %s17, 0
    %p205 = por %p203, %p204
    %p206 = scmp.ne.s32.totalorder %s198, %s200
    %p207 = scmp.eq.s32.totalorder %s22, 1
    %p208 = por %p206, %p207
    %p209 = scmp.ne.s32.totalorder %s200, %s201
    %p210 = scmp.eq.s32.totalorder %s22, 0
    %p211 = por %p209, %p210
    %p212 = scmp.ne.s32.totalorder %s200, %s201
    %p213 = scmp.eq.s32.totalorder %s23, 1
    %p214 = por %p212, %p213
    %p216 = scmp.ne.s32.totalorder %s201, %s215
    %p217 = scmp.eq.s32.totalorder %s23, 0
    %p218 = por %p216, %p217
    %s220 = sadd.s32 %s219, 1
    %p223 = scmp.eq.s32.totalorder %s17, 1
    %p224 = scmp.ne.s32.totalorder %s219, %s221
    %p225 = scmp.eq.s32.totalorder %s17, 0
    %p226 = por %p224, %p225
    %p227 = scmp.ne.s32.totalorder %s219, %s221
    %p228 = scmp.eq.s32.totalorder %s22, 1
    %p229 = por %p227, %p228
    %p230 = scmp.ne.s32.totalorder %s221, %s222
    %p231 = scmp.eq.s32.totalorder %s22, 0
    %p232 = por %p230, %p231
    %p233 = scmp.ne.s32.totalorder %s221, %s222
    %p234 = scmp.eq.s32.totalorder %s23, 1
    %p235 = por %p233, %p234
    %p237 = scmp.ne.s32.totalorder %s222, %s236
    %p238 = scmp.eq.s32.totalorder %s23, 0
    %p239 = por %p237, %p238
    %s240 = ssub.s32 %s17, %s24
    %p241 = scmp.eq.s32.totalorder %s240, 0
    %s243 = sadd.s32 %s242, 1
    %s244 = scalar_select %p241, %s242, %s243
    %p247 = pneg %p241
    %p248 = scmp.eq.s32.totalorder %s17, 1
    %p249 = por %p247, %p248
    %p250 = scmp.ne.s32.totalorder %s242, %s245
    %p251 = scmp.eq.s32.totalorder %s17, 0
    %p252 = por %p250, %p251
    %p253 = scmp.ne.s32.totalorder %s242, %s245
    %p254 = scmp.eq.s32.totalorder %s22, 1
    %p255 = por %p253, %p254
    %p256 = scmp.ne.s32.totalorder %s245, %s246
    %p257 = scmp.eq.s32.totalorder %s22, 0
    %p258 = por %p256, %p257
    %p259 = scmp.ne.s32.totalorder %s245, %s246
    %p260 = scmp.eq.s32.totalorder %s23, 1
    %p261 = por %p259, %p260
    %p263 = scmp.ne.s32.totalorder %s246, %s262
    %p264 = scmp.eq.s32.totalorder %s23, 0
    %p265 = por %p263, %p264
    %p266 = scmp.le.s32.totalorder 1, %s17
    %p267 = scmp.lt.s32.totalorder %s17, 3
    %p268 = pnand %p266, %p267
    %p269 = pneg %p268
    // Predicated region
    $region9: #{tpu_custom_call.1} parent=5 // pred_check
      _
    $region10: #{tpu_custom_call.1} parent=5 // pred_check_branch
      %271 = sbr.rel (%p268) target = $region12
    $region11: #{tpu_custom_call.1} parent=5 // pred_region
      %s272 = ssub.s32 %s17, 1
      // Predicated region
      $region13: #{tpu_custom_call.1} parent=11 // pred_check
        %p273 = pneg %p64
      $region14: #{tpu_custom_call.1} parent=11 // pred_check_branch
        %275 = sbr.rel (%p273) target = $region16
      $region15: #{tpu_custom_call.1} parent=11 // pred_region
        _
      $region16: #{tpu_custom_call.1} parent=11 // pred_fallthru
        _
      // Predicated region
      $region17: #{tpu_custom_call.1} parent=11 // pred_check
        %p276 = pneg %p85
      $region18: #{tpu_custom_call.1} parent=11 // pred_check_branch
        %278 = sbr.rel (%p276) target = $region20
      $region19: #{tpu_custom_call.1} parent=11 // pred_region
        _
      $region20: #{tpu_custom_call.1} parent=11 // pred_fallthru
        _
      // Predicated region
      $region21: #{tpu_custom_call.1} parent=11 // pred_check
        %p279 = pneg %p106
      $region22: #{tpu_custom_call.1} parent=11 // pred_check_branch
        %281 = sbr.rel (%p279) target = $region24
      $region23: #{tpu_custom_call.1} parent=11 // pred_region
        _
      $region24: #{tpu_custom_call.1} parent=11 // pred_fallthru
        _
      // Predicated region
      $region25: #{tpu_custom_call.1} parent=11 // pred_check
        %p282 = pneg %p127
      $region26: #{tpu_custom_call.1} parent=11 // pred_check_branch
        %284 = sbr.rel (%p282) target = $region28
      $region27: #{tpu_custom_call.1} parent=11 // pred_region
        _
      $region28: #{tpu_custom_call.1} parent=11 // pred_fallthru
        _
      // Predicated region
      $region29: #{tpu_custom_call.1} parent=11 // pred_check
        %p285 = pneg %p148
      $region30: #{tpu_custom_call.1} parent=11 // pred_check_branch
        %287 = sbr.rel (%p285) target = $region32
      $region31: #{tpu_custom_call.1} parent=11 // pred_region
        _
      $region32: #{tpu_custom_call.1} parent=11 // pred_fallthru
        _
      // Predicated region
      $region33: #{tpu_custom_call.1} parent=11 // pred_check
        %p288 = pneg %p169
      $region34: #{tpu_custom_call.1} parent=11 // pred_check_branch
        %290 = sbr.rel (%p288) target = $region36
      $region35: #{tpu_custom_call.1} parent=11 // pred_region
        _
      $region36: #{tpu_custom_call.1} parent=11 // pred_fallthru
        _
      // Predicated region
      $region37: #{tpu_custom_call.1} parent=11 // pred_check
        %p291 = pneg %p190
      $region38: #{tpu_custom_call.1} parent=11 // pred_check_branch
        %293 = sbr.rel (%p291) target = $region40
      $region39: #{tpu_custom_call.1} parent=11 // pred_region
        _
      $region40: #{tpu_custom_call.1} parent=11 // pred_fallthru
        _
      // Predicated region
      $region41: #{tpu_custom_call.1} parent=11 // pred_check
        %p294 = pneg %p211
      $region42: #{tpu_custom_call.1} parent=11 // pred_check_branch
        %296 = sbr.rel (%p294) target = $region44
      $region43: #{tpu_custom_call.1} parent=11 // pred_region
        _
      $region44: #{tpu_custom_call.1} parent=11 // pred_fallthru
        _
      // Predicated region
      $region45: #{tpu_custom_call.1} parent=11 // pred_check
        %p297 = pneg %p232
      $region46: #{tpu_custom_call.1} parent=11 // pred_check_branch
        %299 = sbr.rel (%p297) target = $region48
      $region47: #{tpu_custom_call.1} parent=11 // pred_region
        _
      $region48: #{tpu_custom_call.1} parent=11 // pred_fallthru
        _
    $region12: #{tpu_custom_call.1} parent=5 // pred_fallthru
      _
    %p300 = scmp.lt.s32.totalorder %s17, 2
    // Predicated region
    $region49: #{tpu_custom_call.1} parent=5 // pred_check
      %p301 = pneg %p300
    $region50: #{tpu_custom_call.1} parent=5 // pred_check_branch
      %303 = sbr.rel (%p301) target = $region52
    $region51: #{tpu_custom_call.1} parent=5 // pred_region
      // Predicated region
      $region53: #{tpu_custom_call.1} parent=51 // pred_check
        %p304 = pneg %p37
      $region54: #{tpu_custom_call.1} parent=51 // pred_check_branch
        %306 = sbr.rel (%p304) target = $region56
      $region55: #{tpu_custom_call.1} parent=51 // pred_region
        %s307 = smul.u32 16, %s17
        %p308 = scmp.lt.s32.totalorder %s307, 31
        %s309 = scalar_select %p308, %s307, 31
        %s310 = smul.addr %s309, 2
        %s311 = smul.addr %s310, 8
        %s312 = scalar_lea.vmem %s0, %s311
        %s313 = smul.u32 16, %s17
      $region56: #{tpu_custom_call.1} parent=51 // pred_fallthru
        _
    $region52: #{tpu_custom_call.1} parent=5 // pred_fallthru
      _
    %p314 = scmp.le.s32.totalorder 1, %s17
    %p315 = scmp.lt.s32.totalorder %s17, 3
    %p316 = pnand %p314, %p315
    %p317 = pneg %p316
    // Predicated region
    $region57: #{tpu_custom_call.1} parent=5 // pred_check
      _
    $region58: #{tpu_custom_call.1} parent=5 // pred_check_branch
      %319 = sbr.rel (%p316) target = $region60
    $region59: #{tpu_custom_call.1} parent=5 // pred_region
      %s320 = ssub.s32 %s17, 1
      %s321 = smul.u32 16, %s22
      %p322 = scmp.lt.s32.totalorder %s321, 31
      %s323 = scalar_select %p322, %s321, 31
      %s324 = smul.addr %s323, 2
      %s325 = smul.addr %s324, 8
      %s326 = scalar_lea.vmem %s0, %s325
      %p327 = pneg %p43
      %p328 = pneg %p40
      %p329 = pneg %p64
      %p330 = pneg %p61
      %p331 = pneg %p85
      %p332 = pneg %p82
      %p333 = pneg %p106
      %p334 = pneg %p103
      %p335 = pneg %p127
      %p336 = pneg %p124
      %p337 = pneg %p148
      %p338 = pneg %p145
      %p339 = pneg %p169
      %p340 = pneg %p166
      %p341 = pneg %p190
      %p342 = pneg %p187
      %p343 = pneg %p211
      %p344 = pneg %p208
      %p345 = pneg %p232
      %p346 = pneg %p229
      %p347 = pneg %p258
      %p348 = pneg %p255
      %s349 = smul.u32 16, %s22
      %p350 = scmp.lt.s32.totalorder %s349, 31
      %s351 = scalar_select %p350, %s349, 31
      %s352 = smul.addr %s351, 2
      %s353 = smul.addr %s352, 8
      %s354 = scalar_lea.vmem %s10, %s353
      %s355 = smul.u32 16, %s22
      %p356 = scmp.lt.s32.totalorder %s355, 31
      %s357 = scalar_select %p356, %s355, 31
      %s358 = smul.addr %s357, 2
      %s359 = smul.addr %s358, 8
      %s360 = scalar_lea.vmem %s0, %s359
      %s361 = smul.u32 16, %s22
      %s362 = smul.u32 16, %s22
      %p363 = scmp.lt.s32.totalorder %s362, 31
      %s364 = scalar_select %p363, %s362, 31
      %s365 = smul.addr %s364, 2
      %s366 = smul.addr %s365, 8
      %s367 = scalar_lea.vmem %s10, %s366
      %s368 = smul.u32 16, %s22
      %v369 = vld [vmem:[%s360] sm:$0xff]
      %v370 = vld [vmem:[%s360 + $0x8] sm:$0xff]
      %v371 = vld [vmem:[%s360 + $0x10] sm:$0xff]
      %v372 = vld [vmem:[%s360 + $0x18] sm:$0xff]
      %v373 = vld [vmem:[%s360 + $0x20] sm:$0xff]
      %v374 = vld [vmem:[%s360 + $0x28] sm:$0xff]
      %v375 = vld [vmem:[%s360 + $0x30] sm:$0xff]
      %v376 = vld [vmem:[%s360 + $0x38] sm:$0xff]
      %v377 = vld [vmem:[%s360 + $0x40] sm:$0xff]
      %v378 = vld [vmem:[%s360 + $0x48] sm:$0xff]
      %v379 = vld [vmem:[%s360 + $0x50] sm:$0xff]
      %v380 = vld [vmem:[%s360 + $0x58] sm:$0xff]
      %v381 = vld [vmem:[%s360 + $0x60] sm:$0xff]
      %v382 = vld [vmem:[%s360 + $0x68] sm:$0xff]
      %v383 = vld [vmem:[%s360 + $0x70] sm:$0xff]
      %v384 = vld [vmem:[%s360 + $0x78] sm:$0xff]
      %v385 = vld [vmem:[%s360 + $0x80] sm:$0xff]
      %v386 = vld [vmem:[%s360 + $0x88] sm:$0xff]
      %v387 = vld [vmem:[%s360 + $0x90] sm:$0xff]
      %v388 = vld [vmem:[%s360 + $0x98] sm:$0xff]
      %v389 = vld [vmem:[%s360 + $0xa0] sm:$0xff]
      %v390 = vld [vmem:[%s360 + $0xa8] sm:$0xff]
      %v391 = vld [vmem:[%s360 + $0xb0] sm:$0xff]
      %v392 = vld [vmem:[%s360 + $0xb8] sm:$0xff]
      %v393 = vld [vmem:[%s360 + $0xc0] sm:$0xff]
      %v394 = vld [vmem:[%s360 + $0xc8] sm:$0xff]
      %v395 = vld [vmem:[%s360 + $0xd0] sm:$0xff]
      %v396 = vld [vmem:[%s360 + $0xd8] sm:$0xff]
      %v397 = vld [vmem:[%s360 + $0xe0] sm:$0xff]
      %v398 = vld [vmem:[%s360 + $0xe8] sm:$0xff]
      %v399 = vld [vmem:[%s360 + $0xf0] sm:$0xff]
      %v400 = vld [vmem:[%s360 + $0xf8] sm:$0xff]
      %v401 = vld [vmem:[%s1] sm:$0xff]
      %v402 = vld [vmem:[%s1 + $0x8] sm:$0xff]
      %v403 = vld [vmem:[%s1 + $0x10] sm:$0xff]
      %v404 = vld [vmem:[%s1 + $0x18] sm:$0xff]
      %v405 = vld [vmem:[%s1 + $0x20] sm:$0xff]
      %v406 = vld [vmem:[%s1 + $0x28] sm:$0xff]
      %v407 = vld [vmem:[%s1 + $0x30] sm:$0xff]
      %v408 = vld [vmem:[%s1 + $0x38] sm:$0xff]
      %v409 = vld [vmem:[%s1 + $0x40] sm:$0xff]
      %v410 = vld [vmem:[%s1 + $0x48] sm:$0xff]
      %v411 = vld [vmem:[%s1 + $0x50] sm:$0xff]
      %v412 = vld [vmem:[%s1 + $0x58] sm:$0xff]
      %v413 = vld [vmem:[%s1 + $0x60] sm:$0xff]
      %v414 = vld [vmem:[%s1 + $0x68] sm:$0xff]
      %v415 = vld [vmem:[%s1 + $0x70] sm:$0xff]
      %v416 = vld [vmem:[%s1 + $0x78] sm:$0xff]
      %v417 = vld [vmem:[%s1 + $0x80] sm:$0xff]
      %v418 = vld [vmem:[%s1 + $0x88] sm:$0xff]
      %v419 = vld [vmem:[%s1 + $0x90] sm:$0xff]
      %v420 = vld [vmem:[%s1 + $0x98] sm:$0xff]
      %v421 = vld [vmem:[%s1 + $0xa0] sm:$0xff]
      %v422 = vld [vmem:[%s1 + $0xa8] sm:$0xff]
      %v423 = vld [vmem:[%s1 + $0xb0] sm:$0xff]
      %v424 = vld [vmem:[%s1 + $0xb8] sm:$0xff]
      %v425 = vld [vmem:[%s1 + $0xc0] sm:$0xff]
      %v426 = vld [vmem:[%s1 + $0xc8] sm:$0xff]
      %v427 = vld [vmem:[%s1 + $0xd0] sm:$0xff]
      %v428 = vld [vmem:[%s1 + $0xd8] sm:$0xff]
      %v429 = vld [vmem:[%s1 + $0xe0] sm:$0xff]
      %v430 = vld [vmem:[%s1 + $0xe8] sm:$0xff]
      %v431 = vld [vmem:[%s1 + $0xf0] sm:$0xff]
      %v432 = vld [vmem:[%s1 + $0xf8] sm:$0xff]
      %v433 = vld [vmem:[%s2] sm:$0x1]
      %v435 = vlaneseq
      %v436 = vshrl.u32 %v435, 7
      %v437 = vsub.s32 0, %v436
      %v438 = vrot.slane %v433, %v437
      %440 = vmatprep.subr.mxu0 0.0
      %v441 = vand.u32 %v401, 4294901760
      %442 = vmatpush1.msra.mxu0 %v441
      %443 = vmatprep.subr.mxu0 0.0
      %v444 = vand.u32 %v402, 4294901760
      %445 = vmatpush1.msra.mxu0 %v444
      %446 = vmatprep.subr.mxu0 0.0
      %v447 = vand.u32 %v403, 4294901760
      %448 = vmatpush1.msra.mxu0 %v447
      %449 = vmatprep.subr.mxu0 0.0
      %v450 = vand.u32 %v404, 4294901760
      %451 = vmatpush1.msra.mxu0 %v450
      %452 = vmatprep.subr.mxu0 0.0
      %v453 = vand.u32 %v405, 4294901760
      %454 = vmatpush1.msra.mxu0 %v453
      %455 = vmatprep.subr.mxu0 0.0
      %v456 = vand.u32 %v406, 4294901760
      %457 = vmatpush1.msra.mxu0 %v456
      %458 = vmatprep.subr.mxu0 0.0
      %v459 = vand.u32 %v407, 4294901760
      %460 = vmatpush1.msra.mxu0 %v459
      %461 = vmatprep.subr.mxu0 0.0
      %v462 = vand.u32 %v408, 4294901760
      %463 = vmatpush1.msra.mxu0 %v462
      %464 = vmatprep.subr.mxu0 0.0
      %v465 = vand.u32 %v409, 4294901760
      %466 = vmatpush1.msra.mxu0 %v465
      %467 = vmatprep.subr.mxu0 0.0
      %v468 = vand.u32 %v410, 4294901760
      %469 = vmatpush1.msra.mxu0 %v468
      %470 = vmatprep.subr.mxu0 0.0
      %v471 = vand.u32 %v411, 4294901760
      %472 = vmatpush1.msra.mxu0 %v471
      %473 = vmatprep.subr.mxu0 0.0
      %v474 = vand.u32 %v412, 4294901760
      %475 = vmatpush1.msra.mxu0 %v474
      %476 = vmatprep.subr.mxu0 0.0
      %v477 = vand.u32 %v413, 4294901760
      %478 = vmatpush1.msra.mxu0 %v477
      %479 = vmatprep.subr.mxu0 0.0
      %v480 = vand.u32 %v414, 4294901760
      %481 = vmatpush1.msra.mxu0 %v480
      %482 = vmatprep.subr.mxu0 0.0
      %v483 = vand.u32 %v415, 4294901760
      %484 = vmatpush1.msra.mxu0 %v483
      %485 = vmatprep.subr.mxu0 0.0
      %v486 = vand.u32 %v416, 4294901760
      %487 = vmatpush1.msra.mxu0 %v486
      %488 = vmatprep.subr.mxu0 0.0
      %v489 = vand.u32 %v417, 4294901760
      %490 = vmatpush1.msra.mxu0 %v489
      %491 = vmatprep.subr.mxu0 0.0
      %v492 = vand.u32 %v418, 4294901760
      %493 = vmatpush1.msra.mxu0 %v492
      %494 = vmatprep.subr.mxu0 0.0
      %v495 = vand.u32 %v419, 4294901760
      %496 = vmatpush1.msra.mxu0 %v495
      %497 = vmatprep.subr.mxu0 0.0
      %v498 = vand.u32 %v420, 4294901760
      %499 = vmatpush1.msra.mxu0 %v498
      %500 = vmatprep.subr.mxu0 0.0
      %v501 = vand.u32 %v421, 4294901760
      %502 = vmatpush1.msra.mxu0 %v501
      %503 = vmatprep.subr.mxu0 0.0
      %v504 = vand.u32 %v422, 4294901760
      %505 = vmatpush1.msra.mxu0 %v504
      %506 = vmatprep.subr.mxu0 0.0
      %v507 = vand.u32 %v423, 4294901760
      %508 = vmatpush1.msra.mxu0 %v507
      %509 = vmatprep.subr.mxu0 0.0
      %v510 = vand.u32 %v424, 4294901760
      %511 = vmatpush1.msra.mxu0 %v510
      %512 = vmatprep.subr.mxu0 0.0
      %v513 = vand.u32 %v425, 4294901760
      %514 = vmatpush1.msra.mxu0 %v513
      %515 = vmatprep.subr.mxu0 0.0
      %v516 = vand.u32 %v426, 4294901760
      %517 = vmatpush1.msra.mxu0 %v516
      %518 = vmatprep.subr.mxu0 0.0
      %v519 = vand.u32 %v427, 4294901760
      %520 = vmatpush1.msra.mxu0 %v519
      %521 = vmatprep.subr.mxu0 0.0
      %v522 = vand.u32 %v428, 4294901760
      %523 = vmatpush1.msra.mxu0 %v522
      %524 = vmatprep.subr.mxu0 0.0
      %v525 = vand.u32 %v429, 4294901760
      %526 = vmatpush1.msra.mxu0 %v525
      %527 = vmatprep.subr.mxu0 0.0
      %v528 = vand.u32 %v430, 4294901760
      %529 = vmatpush1.msra.mxu0 %v528
      %530 = vmatprep.subr.mxu0 0.0
      %v531 = vand.u32 %v431, 4294901760
      %532 = vmatpush1.msra.mxu0 %v531
      %533 = vmatprep.subr.mxu0 0.0
      %v534 = vand.u32 %v432, 4294901760
      %535 = vmatpush1.msra.mxu0 %v534
      %v536 = vand.u32 %v370, 4294901760
      %v537 = vsub.f32 %v370, %v536
      %v538 = vand.u32 %v537, 4294901760
      %v539 = vsub.f32 %v537, %v538
      %v540 = vand.u32 %v539, 4294901760
      %541 = vmatprep.mubr.f32.mxu0 %v540
      %v542 = vand.u32 %v369, 4294901760
      %v543 = vsub.f32 %v369, %v542
      %v544 = vand.u32 %v543, 4294901760
      %v545 = vsub.f32 %v543, %v544
      %v546 = vand.u32 %v545, 4294901760
      %547 = vmatmul.mubr.f32.gmra.mrb[0].mxu0 %v546
      %v548 = vpop.f32.mrb[0].mxu0
      %v549 = vadd.f32 %v438, %v548
      %v550 = vpop.f32.mrb[0].mxu0
      %v551 = vand.u32 %v372, 4294901760
      %v552 = vsub.f32 %v372, %v551
      %v553 = vand.u32 %v552, 4294901760
      %v554 = vsub.f32 %v552, %v553
      %v555 = vand.u32 %v554, 4294901760
      %556 = vmatprep.mubr.f32.mxu0 %v555
      %v557 = vand.u32 %v371, 4294901760
      %v558 = vsub.f32 %v371, %v557
      %v559 = vand.u32 %v558, 4294901760
      %v560 = vsub.f32 %v558, %v559
      %v561 = vand.u32 %v560, 4294901760
      %562 = vmatmul.mubr.f32.gmra.mrb[0].mxu0 %v561
      %v563 = vpop.f32.mrb[0].mxu0
      %v564 = vadd.f32 %v438, %v563
      %v565 = vpop.f32.mrb[0].mxu0
      %v566 = vand.u32 %v374, 4294901760
      %v567 = vsub.f32 %v374, %v566
      %v568 = vand.u32 %v567, 4294901760
      %v569 = vsub.f32 %v567, %v568
      %v570 = vand.u32 %v569, 4294901760
      %571 = vmatprep.mubr.f32.mxu0 %v570
      %v572 = vand.u32 %v373, 4294901760
      %v573 = vsub.f32 %v373, %v572
      %v574 = vand.u32 %v573, 4294901760
      %v575 = vsub.f32 %v573, %v574
      %v576 = vand.u32 %v575, 4294901760
      %577 = vmatmul.mubr.f32.gmra.mrb[0].mxu0 %v576
      %v578 = vpop.f32.mrb[0].mxu0
      %v579 = vadd.f32 %v438, %v578
      %v580 = vpop.f32.mrb[0].mxu0
      %v581 = vand.u32 %v376, 4294901760
      %v582 = vsub.f32 %v376, %v581
      %v583 = vand.u32 %v582, 4294901760
      %v584 = vsub.f32 %v582, %v583
      %v585 = vand.u32 %v584, 4294901760
      %586 = vmatprep.mubr.f32.mxu0 %v585
      %v587 = vand.u32 %v375, 4294901760
      %v588 = vsub.f32 %v375, %v587
      %v589 = vand.u32 %v588, 4294901760
      %v590 = vsub.f32 %v588, %v589
      %v591 = vand.u32 %v590, 4294901760
      %592 = vmatmul.mubr.f32.gmra.mrb[0].mxu0 %v591
      %v593 = vpop.f32.mrb[0].mxu0
      %v594 = vadd.f32 %v438, %v593
      %v595 = vpop.f32.mrb[0].mxu0
      %v596 = vand.u32 %v378, 4294901760
      %v597 = vsub.f32 %v378, %v596
      %v598 = vand.u32 %v597, 4294901760
      %v599 = vsub.f32 %v597, %v598
      %v600 = vand.u32 %v599, 4294901760
      %601 = vmatprep.mubr.f32.mxu0 %v600
      %v602 = vand.u32 %v377, 4294901760
      %v603 = vsub.f32 %v377, %v602
      %v604 = vand.u32 %v603, 4294901760
      %v605 = vsub.f32 %v603, %v604
      %v606 = vand.u32 %v605, 4294901760
      %607 = vmatmul.mubr.f32.gmra.mrb[0].mxu0 %v606
      %v608 = vpop.f32.mrb[0].mxu0
      %v609 = vadd.f32 %v438, %v608
      %v610 = vpop.f32.mrb[0].mxu0
      %v611 = vand.u32 %v380, 4294901760
      %v612 = vsub.f32 %v380, %v611
      %v613 = vand.u32 %v612, 4294901760
      %v614 = vsub.f32 %v612, %v613
      %v615 = vand.u32 %v614, 4294901760
      %616 = vmatprep.mubr.f32.mxu0 %v615
      %v617 = vand.u32 %v379, 4294901760
      %v618 = vsub.f32 %v379, %v617
      %v619 = vand.u32 %v618, 4294901760
      %v620 = vsub.f32 %v618, %v619
      %v621 = vand.u32 %v620, 4294901760
      %622 = vmatmul.mubr.f32.gmra.mrb[0].mxu0 %v621
      %v623 = vpop.f32.mrb[0].mxu0
      %v624 = vadd.f32 %v438, %v623
      %v625 = vpop.f32.mrb[0].mxu0
      %v626 = vand.u32 %v382, 4294901760
      %v627 = vsub.f32 %v382, %v626
      %v628 = vand.u32 %v627, 4294901760
      %v629 = vsub.f32 %v627, %v628
      %v630 = vand.u32 %v629, 4294901760
      %631 = vmatprep.mubr.f32.mxu0 %v630
      %v632 = vand.u32 %v381, 4294901760
      %v633 = vsub.f32 %v381, %v632
      %v634 = vand.u32 %v633, 4294901760
      %v635 = vsub.f32 %v633, %v634
      %v636 = vand.u32 %v635, 4294901760
      %637 = vmatmul.mubr.f32.gmra.mrb[0].mxu0 %v636
      %v638 = vpop.f32.mrb[0].mxu0
      %v639 = vadd.f32 %v438, %v638
      %v640 = vpop.f32.mrb[0].mxu0
      %v641 = vand.u32 %v384, 4294901760
      %v642 = vsub.f32 %v384, %v641
      %v643 = vand.u32 %v642, 4294901760
      %v644 = vsub.f32 %v642, %v643
      %v645 = vand.u32 %v644, 4294901760
      %646 = vmatprep.mubr.f32.mxu0 %v645
      %v647 = vand.u32 %v383, 4294901760
      %v648 = vsub.f32 %v383, %v647
      %v649 = vand.u32 %v648, 4294901760
      %v650 = vsub.f32 %v648, %v649
      %v651 = vand.u32 %v650, 4294901760
      %652 = vmatmul.mubr.f32.gmra.mrb[0].mxu0 %v651
      %v653 = vpop.f32.mrb[0].mxu0
      %v654 = vadd.f32 %v438, %v653
      %v655 = vpop.f32.mrb[0].mxu0
      %v656 = vand.u32 %v386, 4294901760
      %v657 = vsub.f32 %v386, %v656
      %v658 = vand.u32 %v657, 4294901760
      %v659 = vsub.f32 %v657, %v658
      %v660 = vand.u32 %v659, 4294901760
      %661 = vmatprep.mubr.f32.mxu0 %v660
      %v662 = vand.u32 %v385, 4294901760
      %v663 = vsub.f32 %v385, %v662
      %v664 = vand.u32 %v663, 4294901760
      %v665 = vsub.f32 %v663, %v664
      %v666 = vand.u32 %v665, 4294901760
      %667 = vmatmul.mubr.f32.gmra.mrb[0].mxu0 %v666
      %v668 = vpop.f32.mrb[0].mxu0
      %v669 = vadd.f32 %v438, %v668
      %v670 = vpop.f32.mrb[0].mxu0
      %v671 = vand.u32 %v388, 4294901760
      %v672 = vsub.f32 %v388, %v671
      %v673 = vand.u32 %v672, 4294901760
      %v674 = vsub.f32 %v672, %v673
      %v675 = vand.u32 %v674, 4294901760
      %676 = vmatprep.mubr.f32.mxu0 %v675
      %v677 = vand.u32 %v387, 4294901760
      %v678 = vsub.f32 %v387, %v677
      %v679 = vand.u32 %v678, 4294901760
      %v680 = vsub.f32 %v678, %v679
      %v681 = vand.u32 %v680, 4294901760
      %682 = vmatmul.mubr.f32.gmra.mrb[0].mxu0 %v681
      %v683 = vpop.f32.mrb[0].mxu0
      %v684 = vadd.f32 %v438, %v683
      %v685 = vpop.f32.mrb[0].mxu0
      %v686 = vand.u32 %v390, 4294901760
      %v687 = vsub.f32 %v390, %v686
      %v688 = vand.u32 %v687, 4294901760
      %v689 = vsub.f32 %v687, %v688
      %v690 = vand.u32 %v689, 4294901760
      %691 = vmatprep.mubr.f32.mxu0 %v690
      %v692 = vand.u32 %v389, 4294901760
      %v693 = vsub.f32 %v389, %v692
      %v694 = vand.u32 %v693, 4294901760
      %v695 = vsub.f32 %v693, %v694
      %v696 = vand.u32 %v695, 4294901760
      %697 = vmatmul.mubr.f32.gmra.mrb[0].mxu0 %v696
      %v698 = vpop.f32.mrb[0].mxu0
      %v699 = vadd.f32 %v438, %v698
      %v700 = vpop.f32.mrb[0].mxu0
      %v701 = vand.u32 %v392, 4294901760
      %v702 = vsub.f32 %v392, %v701
      %v703 = vand.u32 %v702, 4294901760
      %v704 = vsub.f32 %v702, %v703
      %v705 = vand.u32 %v704, 4294901760
      %706 = vmatprep.mubr.f32.mxu0 %v705
      %v707 = vand.u32 %v391, 4294901760
      %v708 = vsub.f32 %v391, %v707
      %v709 = vand.u32 %v708, 4294901760
      %v710 = vsub.f32 %v708, %v709
      %v711 = vand.u32 %v710, 4294901760
      %712 = vmatmul.mubr.f32.gmra.mrb[0].mxu0 %v711
      %v713 = vpop.f32.mrb[0].mxu0
      %v714 = vadd.f32 %v438, %v713
      %v715 = vpop.f32.mrb[0].mxu0
      %v716 = vand.u32 %v394, 4294901760
      %v717 = vsub.f32 %v394, %v716
      %v718 = vand.u32 %v717, 4294901760
      %v719 = vsub.f32 %v717, %v718
      %v720 = vand.u32 %v719, 4294901760
      %721 = vmatprep.mubr.f32.mxu0 %v720
      %v722 = vand.u32 %v393, 4294901760
      %v723 = vsub.f32 %v393, %v722
      %v724 = vand.u32 %v723, 4294901760
      %v725 = vsub.f32 %v723, %v724
      %v726 = vand.u32 %v725, 4294901760
      %727 = vmatmul.mubr.f32.gmra.mrb[0].mxu0 %v726
      %v728 = vpop.f32.mrb[0].mxu0
      %v729 = vadd.f32 %v438, %v728
      %v730 = vpop.f32.mrb[0].mxu0
      %v731 = vand.u32 %v396, 4294901760
      %v732 = vsub.f32 %v396, %v731
      %v733 = vand.u32 %v732, 4294901760
      %v734 = vsub.f32 %v732, %v733
      %v735 = vand.u32 %v734, 4294901760
      %736 = vmatprep.mubr.f32.mxu0 %v735
      %v737 = vand.u32 %v395, 4294901760
      %v738 = vsub.f32 %v395, %v737
      %v739 = vand.u32 %v738, 4294901760
      %v740 = vsub.f32 %v738, %v739
      %v741 = vand.u32 %v740, 4294901760
      %742 = vmatmul.mubr.f32.gmra.mrb[0].mxu0 %v741
      %v743 = vpop.f32.mrb[0].mxu0
      %v744 = vadd.f32 %v438, %v743
      %v745 = vpop.f32.mrb[0].mxu0
      %v746 = vand.u32 %v398, 4294901760
      %v747 = vsub.f32 %v398, %v746
      %v748 = vand.u32 %v747, 4294901760
      %v749 = vsub.f32 %v747, %v748
      %v750 = vand.u32 %v749, 4294901760
      %751 = vmatprep.mubr.f32.mxu0 %v750
      %v752 = vand.u32 %v397, 4294901760
      %v753 = vsub.f32 %v397, %v752
      %v754 = vand.u32 %v753, 4294901760
      %v755 = vsub.f32 %v753, %v754
      %v756 = vand.u32 %v755, 4294901760
      %757 = vmatmul.mubr.f32.gmra.mrb[0].mxu0 %v756
      %v758 = vpop.f32.mrb[0].mxu0
      %v759 = vadd.f32 %v438, %v758
      %v760 = vpop.f32.mrb[0].mxu0
      %v761 = vand.u32 %v400, 4294901760
      %v762 = vsub.f32 %v400, %v761
      %v763 = vand.u32 %v762, 4294901760
      %v764 = vsub.f32 %v762, %v763
      %v765 = vand.u32 %v764, 4294901760
      %766 = vmatprep.mubr.f32.mxu0 %v765
      %v767 = vand.u32 %v399, 4294901760
      %v768 = vsub.f32 %v399, %v767
      %v769 = vand.u32 %v768, 4294901760
      %v770 = vsub.f32 %v768, %v769
      %v771 = vand.u32 %v770, 4294901760
      %772 = vmatmul.mubr.f32.gmra.mrb[0].mxu0 %v771
      %v773 = vpop.f32.mrb[0].mxu0
      %v774 = vadd.f32 %v438, %v773
      %v775 = vpop.f32.mrb[0].mxu0
      %776 = vdwg.mxu0
      %777 = vmatprep.subr.mxu0 0.0
      %v778 = vand.u32 %v401, 4294901760
      %v779 = vsub.f32 %v401, %v778
      %v780 = vand.u32 %v779, 4294901760
      %v781 = vsub.f32 %v779, %v780
      %v782 = vand.u32 %v781, 4294901760
      %783 = vmatpush1.msra.mxu0 %v782
      %784 = vmatprep.subr.mxu0 0.0
      %v785 = vand.u32 %v402, 4294901760
      %v786 = vsub.f32 %v402, %v785
      %v787 = vand.u32 %v786, 4294901760
      %v788 = vsub.f32 %v786, %v787
      %v789 = vand.u32 %v788, 4294901760
      %790 = vmatpush1.msra.mxu0 %v789
      %791 = vmatprep.subr.mxu0 0.0
      %v792 = vand.u32 %v403, 4294901760
      %v793 = vsub.f32 %v403, %v792
      %v794 = vand.u32 %v793, 4294901760
      %v795 = vsub.f32 %v793, %v794
      %v796 = vand.u32 %v795, 4294901760
      %797 = vmatpush1.msra.mxu0 %v796
      %798 = vmatprep.subr.mxu0 0.0
      %v799 = vand.u32 %v404, 4294901760
      %v800 = vsub.f32 %v404, %v799
      %v801 = vand.u32 %v800, 4294901760
      %v802 = vsub.f32 %v800, %v801
      %v803 = vand.u32 %v802, 4294901760
      %804 = vmatpush1.msra.mxu0 %v803
      %805 = vmatprep.subr.mxu0 0.0
      %v806 = vand.u32 %v405, 4294901760
      %v807 = vsub.f32 %v405, %v806
      %v808 = vand.u32 %v807, 4294901760
      %v809 = vsub.f32 %v807, %v808
      %v810 = vand.u32 %v809, 4294901760
      %811 = vmatpush1.msra.mxu0 %v810
      %812 = vmatprep.subr.mxu0 0.0
      %v813 = vand.u32 %v406, 4294901760
      %v814 = vsub.f32 %v406, %v813
      %v815 = vand.u32 %v814, 4294901760
      %v816 = vsub.f32 %v814, %v815
      %v817 = vand.u32 %v816, 4294901760
      %818 = vmatpush1.msra.mxu0 %v817
      %819 = vmatprep.subr.mxu0 0.0
      %v820 = vand.u32 %v407, 4294901760
      %v821 = vsub.f32 %v407, %v820
      %v822 = vand.u32 %v821, 4294901760
      %v823 = vsub.f32 %v821, %v822
      %v824 = vand.u32 %v823, 4294901760
      %825 = vmatpush1.msra.mxu0 %v824
      %826 = vmatprep.subr.mxu0 0.0
      %v827 = vand.u32 %v408, 4294901760
      %v828 = vsub.f32 %v408, %v827
      %v829 = vand.u32 %v828, 4294901760
      %v830 = vsub.f32 %v828, %v829
      %v831 = vand.u32 %v830, 4294901760
      %832 = vmatpush1.msra.mxu0 %v831
      %833 = vmatprep.subr.mxu0 0.0
      %v834 = vand.u32 %v409, 4294901760
      %v835 = vsub.f32 %v409, %v834
      %v836 = vand.u32 %v835, 4294901760
      %v837 = vsub.f32 %v835, %v836
      %v838 = vand.u32 %v837, 4294901760
      %839 = vmatpush1.msra.mxu0 %v838
      %840 = vmatprep.subr.mxu0 0.0
      %v841 = vand.u32 %v410, 4294901760
      %v842 = vsub.f32 %v410, %v841
      %v843 = vand.u32 %v842, 4294901760
      %v844 = vsub.f32 %v842, %v843
      %v845 = vand.u32 %v844, 4294901760
      %846 = vmatpush1.msra.mxu0 %v845
      %847 = vmatprep.subr.mxu0 0.0
      %v848 = vand.u32 %v411, 4294901760
      %v849 = vsub.f32 %v411, %v848
      %v850 = vand.u32 %v849, 4294901760
      %v851 = vsub.f32 %v849, %v850
      %v852 = vand.u32 %v851, 4294901760
      %853 = vmatpush1.msra.mxu0 %v852
      %854 = vmatprep.subr.mxu0 0.0
      %v855 = vand.u32 %v412, 4294901760
      %v856 = vsub.f32 %v412, %v855
      %v857 = vand.u32 %v856, 4294901760
      %v858 = vsub.f32 %v856, %v857
      %v859 = vand.u32 %v858, 4294901760
      %860 = vmatpush1.msra.mxu0 %v859
      %861 = vmatprep.subr.mxu0 0.0
      %v862 = vand.u32 %v413, 4294901760
      %v863 = vsub.f32 %v413, %v862
      %v864 = vand.u32 %v863, 4294901760
      %v865 = vsub.f32 %v863, %v864
      %v866 = vand.u32 %v865, 4294901760
      %867 = vmatpush1.msra.mxu0 %v866
      %868 = vmatprep.subr.mxu0 0.0
      %v869 = vand.u32 %v414, 4294901760
      %v870 = vsub.f32 %v414, %v869
      %v871 = vand.u32 %v870, 4294901760
      %v872 = vsub.f32 %v870, %v871
      %v873 = vand.u32 %v872, 4294901760
      %874 = vmatpush1.msra.mxu0 %v873
      %875 = vmatprep.subr.mxu0 0.0
      %v876 = vand.u32 %v415, 4294901760
      %v877 = vsub.f32 %v415, %v876
      %v878 = vand.u32 %v877, 4294901760
      %v879 = vsub.f32 %v877, %v878
      %v880 = vand.u32 %v879, 4294901760
      %881 = vmatpush1.msra.mxu0 %v880
      %882 = vmatprep.subr.mxu0 0.0
      %v883 = vand.u32 %v416, 4294901760
      %v884 = vsub.f32 %v416, %v883
      %v885 = vand.u32 %v884, 4294901760
      %v886 = vsub.f32 %v884, %v885
      %v887 = vand.u32 %v886, 4294901760
      %888 = vmatpush1.msra.mxu0 %v887
      %889 = vmatprep.subr.mxu0 0.0
      %v890 = vand.u32 %v417, 4294901760
      %v891 = vsub.f32 %v417, %v890
      %v892 = vand.u32 %v891, 4294901760
      %v893 = vsub.f32 %v891, %v892
      %v894 = vand.u32 %v893, 4294901760
      %895 = vmatpush1.msra.mxu0 %v894
      %896 = vmatprep.subr.mxu0 0.0
      %v897 = vand.u32 %v418, 4294901760
      %v898 = vsub.f32 %v418, %v897
      %v899 = vand.u32 %v898, 4294901760
      %v900 = vsub.f32 %v898, %v899
      %v901 = vand.u32 %v900, 4294901760
      %902 = vmatpush1.msra.mxu0 %v901
      %903 = vmatprep.subr.mxu0 0.0
      %v904 = vand.u32 %v419, 4294901760
      %v905 = vsub.f32 %v419, %v904
      %v906 = vand.u32 %v905, 4294901760
      %v907 = vsub.f32 %v905, %v906
      %v908 = vand.u32 %v907, 4294901760
      %909 = vmatpush1.msra.mxu0 %v908
      %910 = vmatprep.subr.mxu0 0.0
      %v911 = vand.u32 %v420, 4294901760
      %v912 = vsub.f32 %v420, %v911
      %v913 = vand.u32 %v912, 4294901760
      %v914 = vsub.f32 %v912, %v913
      %v915 = vand.u32 %v914, 4294901760
      %916 = vmatpush1.msra.mxu0 %v915
      %917 = vmatprep.subr.mxu0 0.0
      %v918 = vand.u32 %v421, 4294901760
      %v919 = vsub.f32 %v421, %v918
      %v920 = vand.u32 %v919, 4294901760
      %v921 = vsub.f32 %v919, %v920
      %v922 = vand.u32 %v921, 4294901760
      %923 = vmatpush1.msra.mxu0 %v922
      %924 = vmatprep.subr.mxu0 0.0
      %v925 = vand.u32 %v422, 4294901760
      %v926 = vsub.f32 %v422, %v925
      %v927 = vand.u32 %v926, 4294901760
      %v928 = vsub.f32 %v926, %v927
      %v929 = vand.u32 %v928, 4294901760
      %930 = vmatpush1.msra.mxu0 %v929
      %931 = vmatprep.subr.mxu0 0.0
      %v932 = vand.u32 %v423, 4294901760
      %v933 = vsub.f32 %v423, %v932
      %v934 = vand.u32 %v933, 4294901760
      %v935 = vsub.f32 %v933, %v934
      %v936 = vand.u32 %v935, 4294901760
      %937 = vmatpush1.msra.mxu0 %v936
      %938 = vmatprep.subr.mxu0 0.0
      %v939 = vand.u32 %v424, 4294901760
      %v940 = vsub.f32 %v424, %v939
      %v941 = vand.u32 %v940, 4294901760
      %v942 = vsub.f32 %v940, %v941
      %v943 = vand.u32 %v942, 4294901760
      %944 = vmatpush1.msra.mxu0 %v943
      %945 = vmatprep.subr.mxu0 0.0
      %v946 = vand.u32 %v425, 4294901760
      %v947 = vsub.f32 %v425, %v946
      %v948 = vand.u32 %v947, 4294901760
      %v949 = vsub.f32 %v947, %v948
      %v950 = vand.u32 %v949, 4294901760
      %951 = vmatpush1.msra.mxu0 %v950
      %952 = vmatprep.subr.mxu0 0.0
      %v953 = vand.u32 %v426, 4294901760
      %v954 = vsub.f32 %v426, %v953
      %v955 = vand.u32 %v954, 4294901760
      %v956 = vsub.f32 %v954, %v955
      %v957 = vand.u32 %v956, 4294901760
      %958 = vmatpush1.msra.mxu0 %v957
      %959 = vmatprep.subr.mxu0 0.0
      %v960 = vand.u32 %v427, 4294901760
      %v961 = vsub.f32 %v427, %v960
      %v962 = vand.u32 %v961, 4294901760
      %v963 = vsub.f32 %v961, %v962
      %v964 = vand.u32 %v963, 4294901760
      %965 = vmatpush1.msra.mxu0 %v964
      %966 = vmatprep.subr.mxu0 0.0
      %v967 = vand.u32 %v428, 4294901760
      %v968 = vsub.f32 %v428, %v967
      %v969 = vand.u32 %v968, 4294901760
      %v970 = vsub.f32 %v968, %v969
      %v971 = vand.u32 %v970, 4294901760
      %972 = vmatpush1.msra.mxu0 %v971
      %973 = vmatprep.subr.mxu0 0.0
      %v974 = vand.u32 %v429, 4294901760
      %v975 = vsub.f32 %v429, %v974
      %v976 = vand.u32 %v975, 4294901760
      %v977 = vsub.f32 %v975, %v976
      %v978 = vand.u32 %v977, 4294901760
      %979 = vmatpush1.msra.mxu0 %v978
      %980 = vmatprep.subr.mxu0 0.0
      %v981 = vand.u32 %v430, 4294901760
      %v982 = vsub.f32 %v430, %v981
      %v983 = vand.u32 %v982, 4294901760
      %v984 = vsub.f32 %v982, %v983
      %v985 = vand.u32 %v984, 4294901760
      %986 = vmatpush1.msra.mxu0 %v985
      %987 = vmatprep.subr.mxu0 0.0
      %v988 = vand.u32 %v431, 4294901760
      %v989 = vsub.f32 %v431, %v988
      %v990 = vand.u32 %v989, 4294901760
      %v991 = vsub.f32 %v989, %v990
      %v992 = vand.u32 %v991, 4294901760
      %993 = vmatpush1.msra.mxu0 %v992
      %994 = vmatprep.subr.mxu0 0.0
      %v995 = vand.u32 %v432, 4294901760
      %v996 = vsub.f32 %v432, %v995
      %v997 = vand.u32 %v996, 4294901760
      %v998 = vsub.f32 %v996, %v997
      %v999 = vand.u32 %v998, 4294901760
      %1000 = vmatpush1.msra.mxu0 %v999
      %v1001 = vand.u32 %v370, 4294901760
      %1002 = vmatprep.mubr.f32.mxu0 %v1001
      %v1003 = vand.u32 %v369, 4294901760
      %1004 = vmatmul.mubr.f32.gmra.mrb[0].mxu0 %v1003
      %v1005 = vpop.f32.mrb[0].mxu0
      %v1006 = vadd.f32 %v549, %v1005
      %v1007 = vpop.f32.mrb[0].mxu0
      %v1008 = vand.u32 %v372, 4294901760
      %1009 = vmatprep.mubr.f32.mxu0 %v1008
      %v1010 = vand.u32 %v371, 4294901760
      %1011 = vmatmul.mubr.f32.gmra.mrb[0].mxu0 %v1010
      %v1012 = vpop.f32.mrb[0].mxu0
      %v1013 = vadd.f32 %v564, %v1012
      %v1014 = vpop.f32.mrb[0].mxu0
      %v1015 = vand.u32 %v374, 4294901760
      %1016 = vmatprep.mubr.f32.mxu0 %v1015
      %v1017 = vand.u32 %v373, 4294901760
      %1018 = vmatmul.mubr.f32.gmra.mrb[0].mxu0 %v1017
      %v1019 = vpop.f32.mrb[0].mxu0
      %v1020 = vadd.f32 %v579, %v1019
      %v1021 = vpop.f32.mrb[0].mxu0
      %v1022 = vand.u32 %v376, 4294901760
      %1023 = vmatprep.mubr.f32.mxu0 %v1022
      %v1024 = vand.u32 %v375, 4294901760
      %1025 = vmatmul.mubr.f32.gmra.mrb[0].mxu0 %v1024
      %v1026 = vpop.f32.mrb[0].mxu0
      %v1027 = vadd.f32 %v594, %v1026
      %v1028 = vpop.f32.mrb[0].mxu0
      %v1029 = vand.u32 %v378, 4294901760
      %1030 = vmatprep.mubr.f32.mxu0 %v1029
      %v1031 = vand.u32 %v377, 4294901760
      %1032 = vmatmul.mubr.f32.gmra.mrb[0].mxu0 %v1031
      %v1033 = vpop.f32.mrb[0].mxu0
      %v1034 = vadd.f32 %v609, %v1033
      %v1035 = vpop.f32.mrb[0].mxu0
      %v1036 = vand.u32 %v380, 4294901760
      %1037 = vmatprep.mubr.f32.mxu0 %v1036
      %v1038 = vand.u32 %v379, 4294901760
      %1039 = vmatmul.mubr.f32.gmra.mrb[0].mxu0 %v1038
      %v1040 = vpop.f32.mrb[0].mxu0
      %v1041 = vadd.f32 %v624, %v1040
      %v1042 = vpop.f32.mrb[0].mxu0
      %v1043 = vand.u32 %v382, 4294901760
      %1044 = vmatprep.mubr.f32.mxu0 %v1043
      %v1045 = vand.u32 %v381, 4294901760
      %1046 = vmatmul.mubr.f32.gmra.mrb[0].mxu0 %v1045
      %v1047 = vpop.f32.mrb[0].mxu0
      %v1048 = vadd.f32 %v639, %v1047
      %v1049 = vpop.f32.mrb[0].mxu0
      %v1050 = vand.u32 %v384, 4294901760
      %1051 = vmatprep.mubr.f32.mxu0 %v1050
      %v1052 = vand.u32 %v383, 4294901760
      %1053 = vmatmul.mubr.f32.gmra.mrb[0].mxu0 %v1052
      %v1054 = vpop.f32.mrb[0].mxu0
      %v1055 = vadd.f32 %v654, %v1054
      %v1056 = vpop.f32.mrb[0].mxu0
      %v1057 = vand.u32 %v386, 4294901760
      %1058 = vmatprep.mubr.f32.mxu0 %v1057
      %v1059 = vand.u32 %v385, 4294901760
      %1060 = vmatmul.mubr.f32.gmra.mrb[0].mxu0 %v1059
      %v1061 = vpop.f32.mrb[0].mxu0
      %v1062 = vadd.f32 %v669, %v1061
      %v1063 = vpop.f32.mrb[0].mxu0
      %v1064 = vand.u32 %v388, 4294901760
      %1065 = vmatprep.mubr.f32.mxu0 %v1064
      %v1066 = vand.u32 %v387, 4294901760
      %1067 = vmatmul.mubr.f32.gmra.mrb[0].mxu0 %v1066
      %v1068 = vpop.f32.mrb[0].mxu0
      %v1069 = vadd.f32 %v684, %v1068
      %v1070 = vpop.f32.mrb[0].mxu0
      %v1071 = vand.u32 %v390, 4294901760
      %1072 = vmatprep.mubr.f32.mxu0 %v1071
      %v1073 = vand.u32 %v389, 4294901760
      %1074 = vmatmul.mubr.f32.gmra.mrb[0].mxu0 %v1073
      %v1075 = vpop.f32.mrb[0].mxu0
      %v1076 = vadd.f32 %v699, %v1075
      %v1077 = vpop.f32.mrb[0].mxu0
      %v1078 = vand.u32 %v392, 4294901760
      %1079 = vmatprep.mubr.f32.mxu0 %v1078
      %v1080 = vand.u32 %v391, 4294901760
      %1081 = vmatmul.mubr.f32.gmra.mrb[0].mxu0 %v1080
      %v1082 = vpop.f32.mrb[0].mxu0
      %v1083 = vadd.f32 %v714, %v1082
      %v1084 = vpop.f32.mrb[0].mxu0
      %v1085 = vand.u32 %v394, 4294901760
      %1086 = vmatprep.mubr.f32.mxu0 %v1085
      %v1087 = vand.u32 %v393, 4294901760
      %1088 = vmatmul.mubr.f32.gmra.mrb[0].mxu0 %v1087
      %v1089 = vpop.f32.mrb[0].mxu0
      %v1090 = vadd.f32 %v729, %v1089
      %v1091 = vpop.f32.mrb[0].mxu0
      %v1092 = vand.u32 %v396, 4294901760
      %1093 = vmatprep.mubr.f32.mxu0 %v1092
      %v1094 = vand.u32 %v395, 4294901760
      %1095 = vmatmul.mubr.f32.gmra.mrb[0].mxu0 %v1094
      %v1096 = vpop.f32.mrb[0].mxu0
      %v1097 = vadd.f32 %v744, %v1096
      %v1098 = vpop.f32.mrb[0].mxu0
      %v1099 = vand.u32 %v398, 4294901760
      %1100 = vmatprep.mubr.f32.mxu0 %v1099
      %v1101 = vand.u32 %v397, 4294901760
      %1102 = vmatmul.mubr.f32.gmra.mrb[0].mxu0 %v1101
      %v1103 = vpop.f32.mrb[0].mxu0
      %v1104 = vadd.f32 %v759, %v1103
      %v1105 = vpop.f32.mrb[0].mxu0
      %v1106 = vand.u32 %v400, 4294901760
      %1107 = vmatprep.mubr.f32.mxu0 %v1106
      %v1108 = vand.u32 %v399, 4294901760
      %1109 = vmatmul.mubr.f32.gmra.mrb[0].mxu0 %v1108
      %v1110 = vpop.f32.mrb[0].mxu0
      %v1111 = vadd.f32 %v774, %v1110
      %v1112 = vpop.f32.mrb[0].mxu0
      %1113 = vdwg.mxu0
      %1114 = vmatprep.subr.mxu0 0.0
      %v1115 = vand.u32 %v401, 4294901760
      %v1116 = vsub.f32 %v401, %v1115
      %1117 = vmatpush1.msra.mxu0 %v1116
      %1118 = vmatprep.subr.mxu0 0.0
      %v1119 = vand.u32 %v402, 4294901760
      %v1120 = vsub.f32 %v402, %v1119
      %1121 = vmatpush1.msra.mxu0 %v1120
      %1122 = vmatprep.subr.mxu0 0.0
      %v1123 = vand.u32 %v403, 4294901760
      %v1124 = vsub.f32 %v403, %v1123
      %1125 = vmatpush1.msra.mxu0 %v1124
      %1126 = vmatprep.subr.mxu0 0.0
      %v1127 = vand.u32 %v404, 4294901760
      %v1128 = vsub.f32 %v404, %v1127
      %1129 = vmatpush1.msra.mxu0 %v1128
      %1130 = vmatprep.subr.mxu0 0.0
      %v1131 = vand.u32 %v405, 4294901760
      %v1132 = vsub.f32 %v405, %v1131
      %1133 = vmatpush1.msra.mxu0 %v1132
      %1134 = vmatprep.subr.mxu0 0.0
      %v1135 = vand.u32 %v406, 4294901760
      %v1136 = vsub.f32 %v406, %v1135
      %1137 = vmatpush1.msra.mxu0 %v1136
      %1138 = vmatprep.subr.mxu0 0.0
      %v1139 = vand.u32 %v407, 4294901760
      %v1140 = vsub.f32 %v407, %v1139
      %1141 = vmatpush1.msra.mxu0 %v1140
      %1142 = vmatprep.subr.mxu0 0.0
      %v1143 = vand.u32 %v408, 4294901760
      %v1144 = vsub.f32 %v408, %v1143
      %1145 = vmatpush1.msra.mxu0 %v1144
      %1146 = vmatprep.subr.mxu0 0.0
      %v1147 = vand.u32 %v409, 4294901760
      %v1148 = vsub.f32 %v409, %v1147
      %1149 = vmatpush1.msra.mxu0 %v1148
      %1150 = vmatprep.subr.mxu0 0.0
      %v1151 = vand.u32 %v410, 4294901760
      %v1152 = vsub.f32 %v410, %v1151
      %1153 = vmatpush1.msra.mxu0 %v1152
      %1154 = vmatprep.subr.mxu0 0.0
      %v1155 = vand.u32 %v411, 4294901760
      %v1156 = vsub.f32 %v411, %v1155
      %1157 = vmatpush1.msra.mxu0 %v1156
      %1158 = vmatprep.subr.mxu0 0.0
      %v1159 = vand.u32 %v412, 4294901760
      %v1160 = vsub.f32 %v412, %v1159
      %1161 = vmatpush1.msra.mxu0 %v1160
      %1162 = vmatprep.subr.mxu0 0.0
      %v1163 = vand.u32 %v413, 4294901760
      %v1164 = vsub.f32 %v413, %v1163
      %1165 = vmatpush1.msra.mxu0 %v1164
      %1166 = vmatprep.subr.mxu0 0.0
      %v1167 = vand.u32 %v414, 4294901760
      %v1168 = vsub.f32 %v414, %v1167
      %1169 = vmatpush1.msra.mxu0 %v1168
      %1170 = vmatprep.subr.mxu0 0.0
      %v1171 = vand.u32 %v415, 4294901760
      %v1172 = vsub.f32 %v415, %v1171
      %1173 = vmatpush1.msra.mxu0 %v1172
      %1174 = vmatprep.subr.mxu0 0.0
      %v1175 = vand.u32 %v416, 4294901760
      %v1176 = vsub.f32 %v416, %v1175
      %1177 = vmatpush1.msra.mxu0 %v1176
      %1178 = vmatprep.subr.mxu0 0.0
      %v1179 = vand.u32 %v417, 4294901760
      %v1180 = vsub.f32 %v417, %v1179
      %1181 = vmatpush1.msra.mxu0 %v1180
      %1182 = vmatprep.subr.mxu0 0.0
      %v1183 = vand.u32 %v418, 4294901760
      %v1184 = vsub.f32 %v418, %v1183
      %1185 = vmatpush1.msra.mxu0 %v1184
      %1186 = vmatprep.subr.mxu0 0.0
      %v1187 = vand.u32 %v419, 4294901760
      %v1188 = vsub.f32 %v419, %v1187
      %1189 = vmatpush1.msra.mxu0 %v1188
      %1190 = vmatprep.subr.mxu0 0.0
      %v1191 = vand.u32 %v420, 4294901760
      %v1192 = vsub.f32 %v420, %v1191
      %1193 = vmatpush1.msra.mxu0 %v1192
      %1194 = vmatprep.subr.mxu0 0.0
      %v1195 = vand.u32 %v421, 4294901760
      %v1196 = vsub.f32 %v421, %v1195
      %1197 = vmatpush1.msra.mxu0 %v1196
      %1198 = vmatprep.subr.mxu0 0.0
      %v1199 = vand.u32 %v422, 4294901760
      %v1200 = vsub.f32 %v422, %v1199
      %1201 = vmatpush1.msra.mxu0 %v1200
      %1202 = vmatprep.subr.mxu0 0.0
      %v1203 = vand.u32 %v423, 4294901760
      %v1204 = vsub.f32 %v423, %v1203
      %1205 = vmatpush1.msra.mxu0 %v1204
      %1206 = vmatprep.subr.mxu0 0.0
      %v1207 = vand.u32 %v424, 4294901760
      %v1208 = vsub.f32 %v424, %v1207
      %1209 = vmatpush1.msra.mxu0 %v1208
      %1210 = vmatprep.subr.mxu0 0.0
      %v1211 = vand.u32 %v425, 4294901760
      %v1212 = vsub.f32 %v425, %v1211
      %1213 = vmatpush1.msra.mxu0 %v1212
      %1214 = vmatprep.subr.mxu0 0.0
      %v1215 = vand.u32 %v426, 4294901760
      %v1216 = vsub.f32 %v426, %v1215
      %1217 = vmatpush1.msra.mxu0 %v1216
      %1218 = vmatprep.subr.mxu0 0.0
      %v1219 = vand.u32 %v427, 4294901760
      %v1220 = vsub.f32 %v427, %v1219
      %1221 = vmatpush1.msra.mxu0 %v1220
      %1222 = vmatprep.subr.mxu0 0.0
      %v1223 = vand.u32 %v428, 4294901760
      %v1224 = vsub.f32 %v428, %v1223
      %1225 = vmatpush1.msra.mxu0 %v1224
      %1226 = vmatprep.subr.mxu0 0.0
      %v1227 = vand.u32 %v429, 4294901760
      %v1228 = vsub.f32 %v429, %v1227
      %1229 = vmatpush1.msra.mxu0 %v1228
      %1230 = vmatprep.subr.mxu0 0.0
      %v1231 = vand.u32 %v430, 4294901760
      %v1232 = vsub.f32 %v430, %v1231
      %1233 = vmatpush1.msra.mxu0 %v1232
      %1234 = vmatprep.subr.mxu0 0.0
      %v1235 = vand.u32 %v431, 4294901760
      %v1236 = vsub.f32 %v431, %v1235
      %1237 = vmatpush1.msra.mxu0 %v1236
      %1238 = vmatprep.subr.mxu0 0.0
      %v1239 = vand.u32 %v432, 4294901760
      %v1240 = vsub.f32 %v432, %v1239
      %1241 = vmatpush1.msra.mxu0 %v1240
      %v1242 = vand.u32 %v370, 4294901760
      %v1243 = vsub.f32 %v370, %v1242
      %1244 = vmatprep.mubr.f32.mxu0 %v1243
      %v1245 = vand.u32 %v369, 4294901760
      %v1246 = vsub.f32 %v369, %v1245
      %1247 = vmatmul.mubr.f32.gmra.mrb[0].mxu0 %v1246
      %v1248 = vpop.f32.mrb[0].mxu0
      %v1249 = vadd.f32 %v1006, %v1248
      %v1250 = vpop.f32.mrb[0].mxu0
      %v1251 = vand.u32 %v372, 4294901760
      %v1252 = vsub.f32 %v372, %v1251
      %1253 = vmatprep.mubr.f32.mxu0 %v1252
      %v1254 = vand.u32 %v371, 4294901760
      %v1255 = vsub.f32 %v371, %v1254
      %1256 = vmatmul.mubr.f32.gmra.mrb[0].mxu0 %v1255
      %v1257 = vpop.f32.mrb[0].mxu0
      %v1258 = vadd.f32 %v1013, %v1257
      %v1259 = vpop.f32.mrb[0].mxu0
      %v1260 = vand.u32 %v374, 4294901760
      %v1261 = vsub.f32 %v374, %v1260
      %1262 = vmatprep.mubr.f32.mxu0 %v1261
      %v1263 = vand.u32 %v373, 4294901760
      %v1264 = vsub.f32 %v373, %v1263
      %1265 = vmatmul.mubr.f32.gmra.mrb[0].mxu0 %v1264
      %v1266 = vpop.f32.mrb[0].mxu0
      %v1267 = vadd.f32 %v1020, %v1266
      %v1268 = vpop.f32.mrb[0].mxu0
      %v1269 = vand.u32 %v376, 4294901760
      %v1270 = vsub.f32 %v376, %v1269
      %1271 = vmatprep.mubr.f32.mxu0 %v1270
      %v1272 = vand.u32 %v375, 4294901760
      %v1273 = vsub.f32 %v375, %v1272
      %1274 = vmatmul.mubr.f32.gmra.mrb[0].mxu0 %v1273
      %v1275 = vpop.f32.mrb[0].mxu0
      %v1276 = vadd.f32 %v1027, %v1275
      %v1277 = vpop.f32.mrb[0].mxu0
      %v1278 = vand.u32 %v378, 4294901760
      %v1279 = vsub.f32 %v378, %v1278
      %1280 = vmatprep.mubr.f32.mxu0 %v1279
      %v1281 = vand.u32 %v377, 4294901760
      %v1282 = vsub.f32 %v377, %v1281
      %1283 = vmatmul.mubr.f32.gmra.mrb[0].mxu0 %v1282
      %v1284 = vpop.f32.mrb[0].mxu0
      %v1285 = vadd.f32 %v1034, %v1284
      %v1286 = vpop.f32.mrb[0].mxu0
      %v1287 = vand.u32 %v380, 4294901760
      %v1288 = vsub.f32 %v380, %v1287
      %1289 = vmatprep.mubr.f32.mxu0 %v1288
      %v1290 = vand.u32 %v379, 4294901760
      %v1291 = vsub.f32 %v379, %v1290
      %1292 = vmatmul.mubr.f32.gmra.mrb[0].mxu0 %v1291
      %v1293 = vpop.f32.mrb[0].mxu0
      %v1294 = vadd.f32 %v1041, %v1293
      %v1295 = vpop.f32.mrb[0].mxu0
      %v1296 = vand.u32 %v382, 4294901760
      %v1297 = vsub.f32 %v382, %v1296
      %1298 = vmatprep.mubr.f32.mxu0 %v1297
      %v1299 = vand.u32 %v381, 4294901760
      %v1300 = vsub.f32 %v381, %v1299
      %1301 = vmatmul.mubr.f32.gmra.mrb[0].mxu0 %v1300
      %v1302 = vpop.f32.mrb[0].mxu0
      %v1303 = vadd.f32 %v1048, %v1302
      %v1304 = vpop.f32.mrb[0].mxu0
      %v1305 = vand.u32 %v384, 4294901760
      %v1306 = vsub.f32 %v384, %v1305
      %1307 = vmatprep.mubr.f32.mxu0 %v1306
      %v1308 = vand.u32 %v383, 4294901760
      %v1309 = vsub.f32 %v383, %v1308
      %1310 = vmatmul.mubr.f32.gmra.mrb[0].mxu0 %v1309
      %v1311 = vpop.f32.mrb[0].mxu0
      %v1312 = vadd.f32 %v1055, %v1311
      %v1313 = vpop.f32.mrb[0].mxu0
      %v1314 = vand.u32 %v386, 4294901760
      %v1315 = vsub.f32 %v386, %v1314
      %1316 = vmatprep.mubr.f32.mxu0 %v1315
      %v1317 = vand.u32 %v385, 4294901760
      %v1318 = vsub.f32 %v385, %v1317
      %1319 = vmatmul.mubr.f32.gmra.mrb[0].mxu0 %v1318
      %v1320 = vpop.f32.mrb[0].mxu0
      %v1321 = vadd.f32 %v1062, %v1320
      %v1322 = vpop.f32.mrb[0].mxu0
      %v1323 = vand.u32 %v388, 4294901760
      %v1324 = vsub.f32 %v388, %v1323
      %1325 = vmatprep.mubr.f32.mxu0 %v1324
      %v1326 = vand.u32 %v387, 4294901760
      %v1327 = vsub.f32 %v387, %v1326
      %1328 = vmatmul.mubr.f32.gmra.mrb[0].mxu0 %v1327
      %v1329 = vpop.f32.mrb[0].mxu0
      %v1330 = vadd.f32 %v1069, %v1329
      %v1331 = vpop.f32.mrb[0].mxu0
      %v1332 = vand.u32 %v390, 4294901760
      %v1333 = vsub.f32 %v390, %v1332
      %1334 = vmatprep.mubr.f32.mxu0 %v1333
      %v1335 = vand.u32 %v389, 4294901760
      %v1336 = vsub.f32 %v389, %v1335
      %1337 = vmatmul.mubr.f32.gmra.mrb[0].mxu0 %v1336
      %v1338 = vpop.f32.mrb[0].mxu0
      %v1339 = vadd.f32 %v1076, %v1338
      %v1340 = vpop.f32.mrb[0].mxu0
      %v1341 = vand.u32 %v392, 4294901760
      %v1342 = vsub.f32 %v392, %v1341
      %1343 = vmatprep.mubr.f32.mxu0 %v1342
      %v1344 = vand.u32 %v391, 4294901760
      %v1345 = vsub.f32 %v391, %v1344
      %1346 = vmatmul.mubr.f32.gmra.mrb[0].mxu0 %v1345
      %v1347 = vpop.f32.mrb[0].mxu0
      %v1348 = vadd.f32 %v1083, %v1347
      %v1349 = vpop.f32.mrb[0].mxu0
      %v1350 = vand.u32 %v394, 4294901760
      %v1351 = vsub.f32 %v394, %v1350
      %1352 = vmatprep.mubr.f32.mxu0 %v1351
      %v1353 = vand.u32 %v393, 4294901760
      %v1354 = vsub.f32 %v393, %v1353
      %1355 = vmatmul.mubr.f32.gmra.mrb[0].mxu0 %v1354
      %v1356 = vpop.f32.mrb[0].mxu0
      %v1357 = vadd.f32 %v1090, %v1356
      %v1358 = vpop.f32.mrb[0].mxu0
      %v1359 = vand.u32 %v396, 4294901760
      %v1360 = vsub.f32 %v396, %v1359
      %1361 = vmatprep.mubr.f32.mxu0 %v1360
      %v1362 = vand.u32 %v395, 4294901760
      %v1363 = vsub.f32 %v395, %v1362
      %1364 = vmatmul.mubr.f32.gmra.mrb[0].mxu0 %v1363
      %v1365 = vpop.f32.mrb[0].mxu0
      %v1366 = vadd.f32 %v1097, %v1365
      %v1367 = vpop.f32.mrb[0].mxu0
      %v1368 = vand.u32 %v398, 4294901760
      %v1369 = vsub.f32 %v398, %v1368
      %1370 = vmatprep.mubr.f32.mxu0 %v1369
      %v1371 = vand.u32 %v397, 4294901760
      %v1372 = vsub.f32 %v397, %v1371
      %1373 = vmatmul.mubr.f32.gmra.mrb[0].mxu0 %v1372
      %v1374 = vpop.f32.mrb[0].mxu0
      %v1375 = vadd.f32 %v1104, %v1374
      %v1376 = vpop.f32.mrb[0].mxu0
      %v1377 = vand.u32 %v400, 4294901760
      %v1378 = vsub.f32 %v400, %v1377
      %1379 = vmatprep.mubr.f32.mxu0 %v1378
      %v1380 = vand.u32 %v399, 4294901760
      %v1381 = vsub.f32 %v399, %v1380
      %1382 = vmatmul.mubr.f32.gmra.mrb[0].mxu0 %v1381
      %v1383 = vpop.f32.mrb[0].mxu0
      %v1384 = vadd.f32 %v1111, %v1383
      %v1385 = vpop.f32.mrb[0].mxu0
      %1386 = vdwg.mxu0
      %1387 = vmatprep.subr.mxu0 0.0
      %v1388 = vand.u32 %v401, 4294901760
      %1389 = vmatpush1.msra.mxu0 %v1388
      %1390 = vmatprep.subr.mxu0 0.0
      %v1391 = vand.u32 %v402, 4294901760
      %1392 = vmatpush1.msra.mxu0 %v1391
      %1393 = vmatprep.subr.mxu0 0.0
      %v1394 = vand.u32 %v403, 4294901760
      %1395 = vmatpush1.msra.mxu0 %v1394
      %1396 = vmatprep.subr.mxu0 0.0
      %v1397 = vand.u32 %v404, 4294901760
      %1398 = vmatpush1.msra.mxu0 %v1397
      %1399 = vmatprep.subr.mxu0 0.0
      %v1400 = vand.u32 %v405, 4294901760
      %1401 = vmatpush1.msra.mxu0 %v1400
      %1402 = vmatprep.subr.mxu0 0.0
      %v1403 = vand.u32 %v406, 4294901760
      %1404 = vmatpush1.msra.mxu0 %v1403
      %1405 = vmatprep.subr.mxu0 0.0
      %v1406 = vand.u32 %v407, 4294901760
      %1407 = vmatpush1.msra.mxu0 %v1406
      %1408 = vmatprep.subr.mxu0 0.0
      %v1409 = vand.u32 %v408, 4294901760
      %1410 = vmatpush1.msra.mxu0 %v1409
      %1411 = vmatprep.subr.mxu0 0.0
      %v1412 = vand.u32 %v409, 4294901760
      %1413 = vmatpush1.msra.mxu0 %v1412
      %1414 = vmatprep.subr.mxu0 0.0
      %v1415 = vand.u32 %v410, 4294901760
      %1416 = vmatpush1.msra.mxu0 %v1415
      %1417 = vmatprep.subr.mxu0 0.0
      %v1418 = vand.u32 %v411, 4294901760
      %1419 = vmatpush1.msra.mxu0 %v1418
      %1420 = vmatprep.subr.mxu0 0.0
      %v1421 = vand.u32 %v412, 4294901760
      %1422 = vmatpush1.msra.mxu0 %v1421
      %1423 = vmatprep.subr.mxu0 0.0
      %v1424 = vand.u32 %v413, 4294901760
      %1425 = vmatpush1.msra.mxu0 %v1424
      %1426 = vmatprep.subr.mxu0 0.0
      %v1427 = vand.u32 %v414, 4294901760
      %1428 = vmatpush1.msra.mxu0 %v1427
      %1429 = vmatprep.subr.mxu0 0.0
      %v1430 = vand.u32 %v415, 4294901760
      %1431 = vmatpush1.msra.mxu0 %v1430
      %1432 = vmatprep.subr.mxu0 0.0
      %v1433 = vand.u32 %v416, 4294901760
      %1434 = vmatpush1.msra.mxu0 %v1433
      %1435 = vmatprep.subr.mxu0 0.0
      %v1436 = vand.u32 %v417, 4294901760
      %1437 = vmatpush1.msra.mxu0 %v1436
      %1438 = vmatprep.subr.mxu0 0.0
      %v1439 = vand.u32 %v418, 4294901760
      %1440 = vmatpush1.msra.mxu0 %v1439
      %1441 = vmatprep.subr.mxu0 0.0
      %v1442 = vand.u32 %v419, 4294901760
      %1443 = vmatpush1.msra.mxu0 %v1442
      %1444 = vmatprep.subr.mxu0 0.0
      %v1445 = vand.u32 %v420, 4294901760
      %1446 = vmatpush1.msra.mxu0 %v1445
      %1447 = vmatprep.subr.mxu0 0.0
      %v1448 = vand.u32 %v421, 4294901760
      %1449 = vmatpush1.msra.mxu0 %v1448
      %1450 = vmatprep.subr.mxu0 0.0
      %v1451 = vand.u32 %v422, 4294901760
      %1452 = vmatpush1.msra.mxu0 %v1451
      %1453 = vmatprep.subr.mxu0 0.0
      %v1454 = vand.u32 %v423, 4294901760
      %1455 = vmatpush1.msra.mxu0 %v1454
      %1456 = vmatprep.subr.mxu0 0.0
      %v1457 = vand.u32 %v424, 4294901760
      %1458 = vmatpush1.msra.mxu0 %v1457
      %1459 = vmatprep.subr.mxu0 0.0
      %v1460 = vand.u32 %v425, 4294901760
      %1461 = vmatpush1.msra.mxu0 %v1460
      %1462 = vmatprep.subr.mxu0 0.0
      %v1463 = vand.u32 %v426, 4294901760
      %1464 = vmatpush1.msra.mxu0 %v1463
      %1465 = vmatprep.subr.mxu0 0.0
      %v1466 = vand.u32 %v427, 4294901760
      %1467 = vmatpush1.msra.mxu0 %v1466
      %1468 = vmatprep.subr.mxu0 0.0
      %v1469 = vand.u32 %v428, 4294901760
      %1470 = vmatpush1.msra.mxu0 %v1469
      %1471 = vmatprep.subr.mxu0 0.0
      %v1472 = vand.u32 %v429, 4294901760
      %1473 = vmatpush1.msra.mxu0 %v1472
      %1474 = vmatprep.subr.mxu0 0.0
      %v1475 = vand.u32 %v430, 4294901760
      %1476 = vmatpush1.msra.mxu0 %v1475
      %1477 = vmatprep.subr.mxu0 0.0
      %v1478 = vand.u32 %v431, 4294901760
      %1479 = vmatpush1.msra.mxu0 %v1478
      %1480 = vmatprep.subr.mxu0 0.0
      %v1481 = vand.u32 %v432, 4294901760
      %1482 = vmatpush1.msra.mxu0 %v1481
      %v1483 = vand.u32 %v370, 4294901760
      %v1484 = vsub.f32 %v370, %v1483
      %v1485 = vand.u32 %v1484, 4294901760
      %1486 = vmatprep.mubr.f32.mxu0 %v1485
      %v1487 = vand.u32 %v369, 4294901760
      %v1488 = vsub.f32 %v369, %v1487
      %v1489 = vand.u32 %v1488, 4294901760
      %1490 = vmatmul.mubr.f32.gmra.mrb[0].mxu0 %v1489
      %v1491 = vpop.f32.mrb[0].mxu0
      %v1492 = vadd.f32 %v1249, %v1491
      %v1493 = vpop.f32.mrb[0].mxu0
      %v1494 = vand.u32 %v372, 4294901760
      %v1495 = vsub.f32 %v372, %v1494
      %v1496 = vand.u32 %v1495, 4294901760
      %1497 = vmatprep.mubr.f32.mxu0 %v1496
      %v1498 = vand.u32 %v371, 4294901760
      %v1499 = vsub.f32 %v371, %v1498
      %v1500 = vand.u32 %v1499, 4294901760
      %1501 = vmatmul.mubr.f32.gmra.mrb[0].mxu0 %v1500
      %v1502 = vpop.f32.mrb[0].mxu0
      %v1503 = vadd.f32 %v1258, %v1502
      %v1504 = vpop.f32.mrb[0].mxu0
      %v1505 = vand.u32 %v374, 4294901760
      %v1506 = vsub.f32 %v374, %v1505
      %v1507 = vand.u32 %v1506, 4294901760
      %1508 = vmatprep.mubr.f32.mxu0 %v1507
      %v1509 = vand.u32 %v373, 4294901760
      %v1510 = vsub.f32 %v373, %v1509
      %v1511 = vand.u32 %v1510, 4294901760
      %1512 = vmatmul.mubr.f32.gmra.mrb[0].mxu0 %v1511
      %v1513 = vpop.f32.mrb[0].mxu0
      %v1514 = vadd.f32 %v1267, %v1513
      %v1515 = vpop.f32.mrb[0].mxu0
      %v1516 = vand.u32 %v376, 4294901760
      %v1517 = vsub.f32 %v376, %v1516
      %v1518 = vand.u32 %v1517, 4294901760
      %1519 = vmatprep.mubr.f32.mxu0 %v1518
      %v1520 = vand.u32 %v375, 4294901760
      %v1521 = vsub.f32 %v375, %v1520
      %v1522 = vand.u32 %v1521, 4294901760
      %1523 = vmatmul.mubr.f32.gmra.mrb[0].mxu0 %v1522
      %v1524 = vpop.f32.mrb[0].mxu0
      %v1525 = vadd.f32 %v1276, %v1524
      %v1526 = vpop.f32.mrb[0].mxu0
      %v1527 = vand.u32 %v378, 4294901760
      %v1528 = vsub.f32 %v378, %v1527
      %v1529 = vand.u32 %v1528, 4294901760
      %1530 = vmatprep.mubr.f32.mxu0 %v1529
      %v1531 = vand.u32 %v377, 4294901760
      %v1532 = vsub.f32 %v377, %v1531
      %v1533 = vand.u32 %v1532, 4294901760
      %1534 = vmatmul.mubr.f32.gmra.mrb[0].mxu0 %v1533
      %v1535 = vpop.f32.mrb[0].mxu0
      %v1536 = vadd.f32 %v1285, %v1535
      %v1537 = vpop.f32.mrb[0].mxu0
      %v1538 = vand.u32 %v380, 4294901760
      %v1539 = vsub.f32 %v380, %v1538
      %v1540 = vand.u32 %v1539, 4294901760
      %1541 = vmatprep.mubr.f32.mxu0 %v1540
      %v1542 = vand.u32 %v379, 4294901760
      %v1543 = vsub.f32 %v379, %v1542
      %v1544 = vand.u32 %v1543, 4294901760
      %1545 = vmatmul.mubr.f32.gmra.mrb[0].mxu0 %v1544
      %v1546 = vpop.f32.mrb[0].mxu0
      %v1547 = vadd.f32 %v1294, %v1546
      %v1548 = vpop.f32.mrb[0].mxu0
      %v1549 = vand.u32 %v382, 4294901760
      %v1550 = vsub.f32 %v382, %v1549
      %v1551 = vand.u32 %v1550, 4294901760
      %1552 = vmatprep.mubr.f32.mxu0 %v1551
      %v1553 = vand.u32 %v381, 4294901760
      %v1554 = vsub.f32 %v381, %v1553
      %v1555 = vand.u32 %v1554, 4294901760
      %1556 = vmatmul.mubr.f32.gmra.mrb[0].mxu0 %v1555
      %v1557 = vpop.f32.mrb[0].mxu0
      %v1558 = vadd.f32 %v1303, %v1557
      %v1559 = vpop.f32.mrb[0].mxu0
      %v1560 = vand.u32 %v384, 4294901760
      %v1561 = vsub.f32 %v384, %v1560
      %v1562 = vand.u32 %v1561, 4294901760
      %1563 = vmatprep.mubr.f32.mxu0 %v1562
      %v1564 = vand.u32 %v383, 4294901760
      %v1565 = vsub.f32 %v383, %v1564
      %v1566 = vand.u32 %v1565, 4294901760
      %1567 = vmatmul.mubr.f32.gmra.mrb[0].mxu0 %v1566
      %v1568 = vpop.f32.mrb[0].mxu0
      %v1569 = vadd.f32 %v1312, %v1568
      %v1570 = vpop.f32.mrb[0].mxu0
      %v1571 = vand.u32 %v386, 4294901760
      %v1572 = vsub.f32 %v386, %v1571
      %v1573 = vand.u32 %v1572, 4294901760
      %1574 = vmatprep.mubr.f32.mxu0 %v1573
      %v1575 = vand.u32 %v385, 4294901760
      %v1576 = vsub.f32 %v385, %v1575
      %v1577 = vand.u32 %v1576, 4294901760
      %1578 = vmatmul.mubr.f32.gmra.mrb[0].mxu0 %v1577
      %v1579 = vpop.f32.mrb[0].mxu0
      %v1580 = vadd.f32 %v1321, %v1579
      %v1581 = vpop.f32.mrb[0].mxu0
      %v1582 = vand.u32 %v388, 4294901760
      %v1583 = vsub.f32 %v388, %v1582
      %v1584 = vand.u32 %v1583, 4294901760
      %1585 = vmatprep.mubr.f32.mxu0 %v1584
      %v1586 = vand.u32 %v387, 4294901760
      %v1587 = vsub.f32 %v387, %v1586
      %v1588 = vand.u32 %v1587, 4294901760
      %1589 = vmatmul.mubr.f32.gmra.mrb[0].mxu0 %v1588
      %v1590 = vpop.f32.mrb[0].mxu0
      %v1591 = vadd.f32 %v1330, %v1590
      %v1592 = vpop.f32.mrb[0].mxu0
      %v1593 = vand.u32 %v390, 4294901760
      %v1594 = vsub.f32 %v390, %v1593
      %v1595 = vand.u32 %v1594, 4294901760
      %1596 = vmatprep.mubr.f32.mxu0 %v1595
      %v1597 = vand.u32 %v389, 4294901760
      %v1598 = vsub.f32 %v389, %v1597
      %v1599 = vand.u32 %v1598, 4294901760
      %1600 = vmatmul.mubr.f32.gmra.mrb[0].mxu0 %v1599
      %v1601 = vpop.f32.mrb[0].mxu0
      %v1602 = vadd.f32 %v1339, %v1601
      %v1603 = vpop.f32.mrb[0].mxu0
      %v1604 = vand.u32 %v392, 4294901760
      %v1605 = vsub.f32 %v392, %v1604
      %v1606 = vand.u32 %v1605, 4294901760
      %1607 = vmatprep.mubr.f32.mxu0 %v1606
      %v1608 = vand.u32 %v391, 4294901760
      %v1609 = vsub.f32 %v391, %v1608
      %v1610 = vand.u32 %v1609, 4294901760
      %1611 = vmatmul.mubr.f32.gmra.mrb[0].mxu0 %v1610
      %v1612 = vpop.f32.mrb[0].mxu0
      %v1613 = vadd.f32 %v1348, %v1612
      %v1614 = vpop.f32.mrb[0].mxu0
      %v1615 = vand.u32 %v394, 4294901760
      %v1616 = vsub.f32 %v394, %v1615
      %v1617 = vand.u32 %v1616, 4294901760
      %1618 = vmatprep.mubr.f32.mxu0 %v1617
      %v1619 = vand.u32 %v393, 4294901760
      %v1620 = vsub.f32 %v393, %v1619
      %v1621 = vand.u32 %v1620, 4294901760
      %1622 = vmatmul.mubr.f32.gmra.mrb[0].mxu0 %v1621
      %v1623 = vpop.f32.mrb[0].mxu0
      %v1624 = vadd.f32 %v1357, %v1623
      %v1625 = vpop.f32.mrb[0].mxu0
      %v1626 = vand.u32 %v396, 4294901760
      %v1627 = vsub.f32 %v396, %v1626
      %v1628 = vand.u32 %v1627, 4294901760
      %1629 = vmatprep.mubr.f32.mxu0 %v1628
      %v1630 = vand.u32 %v395, 4294901760
      %v1631 = vsub.f32 %v395, %v1630
      %v1632 = vand.u32 %v1631, 4294901760
      %1633 = vmatmul.mubr.f32.gmra.mrb[0].mxu0 %v1632
      %v1634 = vpop.f32.mrb[0].mxu0
      %v1635 = vadd.f32 %v1366, %v1634
      %v1636 = vpop.f32.mrb[0].mxu0
      %v1637 = vand.u32 %v398, 4294901760
      %v1638 = vsub.f32 %v398, %v1637
      %v1639 = vand.u32 %v1638, 4294901760
      %1640 = vmatprep.mubr.f32.mxu0 %v1639
      %v1641 = vand.u32 %v397, 4294901760
      %v1642 = vsub.f32 %v397, %v1641
      %v1643 = vand.u32 %v1642, 4294901760
      %1644 = vmatmul.mubr.f32.gmra.mrb[0].mxu0 %v1643
      %v1645 = vpop.f32.mrb[0].mxu0
      %v1646 = vadd.f32 %v1375, %v1645
      %v1647 = vpop.f32.mrb[0].mxu0
      %v1648 = vand.u32 %v400, 4294901760
      %v1649 = vsub.f32 %v400, %v1648
      %v1650 = vand.u32 %v1649, 4294901760
      %1651 = vmatprep.mubr.f32.mxu0 %v1650
      %v1652 = vand.u32 %v399, 4294901760
      %v1653 = vsub.f32 %v399, %v1652
      %v1654 = vand.u32 %v1653, 4294901760
      %1655 = vmatmul.mubr.f32.gmra.mrb[0].mxu0 %v1654
      %v1656 = vpop.f32.mrb[0].mxu0
      %v1657 = vadd.f32 %v1384, %v1656
      %v1658 = vpop.f32.mrb[0].mxu0
      %1659 = vdwg.mxu0
      %1660 = vmatprep.subr.mxu0 0.0
      %v1661 = vand.u32 %v401, 4294901760
      %v1662 = vsub.f32 %v401, %v1661
      %v1663 = vand.u32 %v1662, 4294901760
      %1664 = vmatpush1.msra.mxu0 %v1663
      %1665 = vmatprep.subr.mxu0 0.0
      %v1666 = vand.u32 %v402, 4294901760
      %v1667 = vsub.f32 %v402, %v1666
      %v1668 = vand.u32 %v1667, 4294901760
      %1669 = vmatpush1.msra.mxu0 %v1668
      %1670 = vmatprep.subr.mxu0 0.0
      %v1671 = vand.u32 %v403, 4294901760
      %v1672 = vsub.f32 %v403, %v1671
      %v1673 = vand.u32 %v1672, 4294901760
      %1674 = vmatpush1.msra.mxu0 %v1673
      %1675 = vmatprep.subr.mxu0 0.0
      %v1676 = vand.u32 %v404, 4294901760
      %v1677 = vsub.f32 %v404, %v1676
      %v1678 = vand.u32 %v1677, 4294901760
      %1679 = vmatpush1.msra.mxu0 %v1678
      %1680 = vmatprep.subr.mxu0 0.0
      %v1681 = vand.u32 %v405, 4294901760
      %v1682 = vsub.f32 %v405, %v1681
      %v1683 = vand.u32 %v1682, 4294901760
      %1684 = vmatpush1.msra.mxu0 %v1683
      %1685 = vmatprep.subr.mxu0 0.0
      %v1686 = vand.u32 %v406, 4294901760
      %v1687 = vsub.f32 %v406, %v1686
      %v1688 = vand.u32 %v1687, 4294901760
      %1689 = vmatpush1.msra.mxu0 %v1688
      %1690 = vmatprep.subr.mxu0 0.0
      %v1691 = vand.u32 %v407, 4294901760
      %v1692 = vsub.f32 %v407, %v1691
      %v1693 = vand.u32 %v1692, 4294901760
      %1694 = vmatpush1.msra.mxu0 %v1693
      %1695 = vmatprep.subr.mxu0 0.0
      %v1696 = vand.u32 %v408, 4294901760
      %v1697 = vsub.f32 %v408, %v1696
      %v1698 = vand.u32 %v1697, 4294901760
      %1699 = vmatpush1.msra.mxu0 %v1698
      %1700 = vmatprep.subr.mxu0 0.0
      %v1701 = vand.u32 %v409, 4294901760
      %v1702 = vsub.f32 %v409, %v1701
      %v1703 = vand.u32 %v1702, 4294901760
      %1704 = vmatpush1.msra.mxu0 %v1703
      %1705 = vmatprep.subr.mxu0 0.0
      %v1706 = vand.u32 %v410, 4294901760
      %v1707 = vsub.f32 %v410, %v1706
      %v1708 = vand.u32 %v1707, 4294901760
      %1709 = vmatpush1.msra.mxu0 %v1708
      %1710 = vmatprep.subr.mxu0 0.0
      %v1711 = vand.u32 %v411, 4294901760
      %v1712 = vsub.f32 %v411, %v1711
      %v1713 = vand.u32 %v1712, 4294901760
      %1714 = vmatpush1.msra.mxu0 %v1713
      %1715 = vmatprep.subr.mxu0 0.0
      %v1716 = vand.u32 %v412, 4294901760
      %v1717 = vsub.f32 %v412, %v1716
      %v1718 = vand.u32 %v1717, 4294901760
      %1719 = vmatpush1.msra.mxu0 %v1718
      %1720 = vmatprep.subr.mxu0 0.0
      %v1721 = vand.u32 %v413, 4294901760
      %v1722 = vsub.f32 %v413, %v1721
      %v1723 = vand.u32 %v1722, 4294901760
      %1724 = vmatpush1.msra.mxu0 %v1723
      %1725 = vmatprep.subr.mxu0 0.0
      %v1726 = vand.u32 %v414, 4294901760
      %v1727 = vsub.f32 %v414, %v1726
      %v1728 = vand.u32 %v1727, 4294901760
      %1729 = vmatpush1.msra.mxu0 %v1728
      %1730 = vmatprep.subr.mxu0 0.0
      %v1731 = vand.u32 %v415, 4294901760
      %v1732 = vsub.f32 %v415, %v1731
      %v1733 = vand.u32 %v1732, 4294901760
      %1734 = vmatpush1.msra.mxu0 %v1733
      %1735 = vmatprep.subr.mxu0 0.0
      %v1736 = vand.u32 %v416, 4294901760
      %v1737 = vsub.f32 %v416, %v1736
      %v1738 = vand.u32 %v1737, 4294901760
      %1739 = vmatpush1.msra.mxu0 %v1738
      %1740 = vmatprep.subr.mxu0 0.0
      %v1741 = vand.u32 %v417, 4294901760
      %v1742 = vsub.f32 %v417, %v1741
      %v1743 = vand.u32 %v1742, 4294901760
      %1744 = vmatpush1.msra.mxu0 %v1743
      %1745 = vmatprep.subr.mxu0 0.0
      %v1746 = vand.u32 %v418, 4294901760
      %v1747 = vsub.f32 %v418, %v1746
      %v1748 = vand.u32 %v1747, 4294901760
      %1749 = vmatpush1.msra.mxu0 %v1748
      %1750 = vmatprep.subr.mxu0 0.0
      %v1751 = vand.u32 %v419, 4294901760
      %v1752 = vsub.f32 %v419, %v1751
      %v1753 = vand.u32 %v1752, 4294901760
      %1754 = vmatpush1.msra.mxu0 %v1753
      %1755 = vmatprep.subr.mxu0 0.0
      %v1756 = vand.u32 %v420, 4294901760
      %v1757 = vsub.f32 %v420, %v1756
      %v1758 = vand.u32 %v1757, 4294901760
      %1759 = vmatpush1.msra.mxu0 %v1758
      %1760 = vmatprep.subr.mxu0 0.0
      %v1761 = vand.u32 %v421, 4294901760
      %v1762 = vsub.f32 %v421, %v1761
      %v1763 = vand.u32 %v1762, 4294901760
      %1764 = vmatpush1.msra.mxu0 %v1763
      %1765 = vmatprep.subr.mxu0 0.0
      %v1766 = vand.u32 %v422, 4294901760
      %v1767 = vsub.f32 %v422, %v1766
      %v1768 = vand.u32 %v1767, 4294901760
      %1769 = vmatpush1.msra.mxu0 %v1768
      %1770 = vmatprep.subr.mxu0 0.0
      %v1771 = vand.u32 %v423, 4294901760
      %v1772 = vsub.f32 %v423, %v1771
      %v1773 = vand.u32 %v1772, 4294901760
      %1774 = vmatpush1.msra.mxu0 %v1773
      %1775 = vmatprep.subr.mxu0 0.0
      %v1776 = vand.u32 %v424, 4294901760
      %v1777 = vsub.f32 %v424, %v1776
      %v1778 = vand.u32 %v1777, 4294901760
      %1779 = vmatpush1.msra.mxu0 %v1778
      %1780 = vmatprep.subr.mxu0 0.0
      %v1781 = vand.u32 %v425, 4294901760
      %v1782 = vsub.f32 %v425, %v1781
      %v1783 = vand.u32 %v1782, 4294901760
      %1784 = vmatpush1.msra.mxu0 %v1783
      %1785 = vmatprep.subr.mxu0 0.0
      %v1786 = vand.u32 %v426, 4294901760
      %v1787 = vsub.f32 %v426, %v1786
      %v1788 = vand.u32 %v1787, 4294901760
      %1789 = vmatpush1.msra.mxu0 %v1788
      %1790 = vmatprep.subr.mxu0 0.0
      %v1791 = vand.u32 %v427, 4294901760
      %v1792 = vsub.f32 %v427, %v1791
      %v1793 = vand.u32 %v1792, 4294901760
      %1794 = vmatpush1.msra.mxu0 %v1793
      %1795 = vmatprep.subr.mxu0 0.0
      %v1796 = vand.u32 %v428, 4294901760
      %v1797 = vsub.f32 %v428, %v1796
      %v1798 = vand.u32 %v1797, 4294901760
      %1799 = vmatpush1.msra.mxu0 %v1798
      %1800 = vmatprep.subr.mxu0 0.0
      %v1801 = vand.u32 %v429, 4294901760
      %v1802 = vsub.f32 %v429, %v1801
      %v1803 = vand.u32 %v1802, 4294901760
      %1804 = vmatpush1.msra.mxu0 %v1803
      %1805 = vmatprep.subr.mxu0 0.0
      %v1806 = vand.u32 %v430, 4294901760
      %v1807 = vsub.f32 %v430, %v1806
      %v1808 = vand.u32 %v1807, 4294901760
      %1809 = vmatpush1.msra.mxu0 %v1808
      %1810 = vmatprep.subr.mxu0 0.0
      %v1811 = vand.u32 %v431, 4294901760
      %v1812 = vsub.f32 %v431, %v1811
      %v1813 = vand.u32 %v1812, 4294901760
      %1814 = vmatpush1.msra.mxu0 %v1813
      %1815 = vmatprep.subr.mxu0 0.0
      %v1816 = vand.u32 %v432, 4294901760
      %v1817 = vsub.f32 %v432, %v1816
      %v1818 = vand.u32 %v1817, 4294901760
      %1819 = vmatpush1.msra.mxu0 %v1818
      %v1820 = vand.u32 %v370, 4294901760
      %1821 = vmatprep.mubr.f32.mxu0 %v1820
      %v1822 = vand.u32 %v369, 4294901760
      %1823 = vmatmul.mubr.f32.gmra.mrb[0].mxu0 %v1822
      %v1824 = vpop.f32.mrb[0].mxu0
      %v1825 = vadd.f32 %v1492, %v1824
      %v1826 = vpop.f32.mrb[0].mxu0
      %v1827 = vand.u32 %v372, 4294901760
      %1828 = vmatprep.mubr.f32.mxu0 %v1827
      %v1829 = vand.u32 %v371, 4294901760
      %1830 = vmatmul.mubr.f32.gmra.mrb[0].mxu0 %v1829
      %v1831 = vpop.f32.mrb[0].mxu0
      %v1832 = vadd.f32 %v1503, %v1831
      %v1833 = vpop.f32.mrb[0].mxu0
      %v1834 = vand.u32 %v374, 4294901760
      %1835 = vmatprep.mubr.f32.mxu0 %v1834
      %v1836 = vand.u32 %v373, 4294901760
      %1837 = vmatmul.mubr.f32.gmra.mrb[0].mxu0 %v1836
      %v1838 = vpop.f32.mrb[0].mxu0
      %v1839 = vadd.f32 %v1514, %v1838
      %v1840 = vpop.f32.mrb[0].mxu0
      %v1841 = vand.u32 %v376, 4294901760
      %1842 = vmatprep.mubr.f32.mxu0 %v1841
      %v1843 = vand.u32 %v375, 4294901760
      %1844 = vmatmul.mubr.f32.gmra.mrb[0].mxu0 %v1843
      %v1845 = vpop.f32.mrb[0].mxu0
      %v1846 = vadd.f32 %v1525, %v1845
      %v1847 = vpop.f32.mrb[0].mxu0
      %v1848 = vand.u32 %v378, 4294901760
      %1849 = vmatprep.mubr.f32.mxu0 %v1848
      %v1850 = vand.u32 %v377, 4294901760
      %1851 = vmatmul.mubr.f32.gmra.mrb[0].mxu0 %v1850
      %v1852 = vpop.f32.mrb[0].mxu0
      %v1853 = vadd.f32 %v1536, %v1852
      %v1854 = vpop.f32.mrb[0].mxu0
      %v1855 = vand.u32 %v380, 4294901760
      %1856 = vmatprep.mubr.f32.mxu0 %v1855
      %v1857 = vand.u32 %v379, 4294901760
      %1858 = vmatmul.mubr.f32.gmra.mrb[0].mxu0 %v1857
      %v1859 = vpop.f32.mrb[0].mxu0
      %v1860 = vadd.f32 %v1547, %v1859
      %v1861 = vpop.f32.mrb[0].mxu0
      %v1862 = vand.u32 %v382, 4294901760
      %1863 = vmatprep.mubr.f32.mxu0 %v1862
      %v1864 = vand.u32 %v381, 4294901760
      %1865 = vmatmul.mubr.f32.gmra.mrb[0].mxu0 %v1864
      %v1866 = vpop.f32.mrb[0].mxu0
      %v1867 = vadd.f32 %v1558, %v1866
      %v1868 = vpop.f32.mrb[0].mxu0
      %v1869 = vand.u32 %v384, 4294901760
      %1870 = vmatprep.mubr.f32.mxu0 %v1869
      %v1871 = vand.u32 %v383, 4294901760
      %1872 = vmatmul.mubr.f32.gmra.mrb[0].mxu0 %v1871
      %v1873 = vpop.f32.mrb[0].mxu0
      %v1874 = vadd.f32 %v1569, %v1873
      %v1875 = vpop.f32.mrb[0].mxu0
      %v1876 = vand.u32 %v386, 4294901760
      %1877 = vmatprep.mubr.f32.mxu0 %v1876
      %v1878 = vand.u32 %v385, 4294901760
      %1879 = vmatmul.mubr.f32.gmra.mrb[0].mxu0 %v1878
      %v1880 = vpop.f32.mrb[0].mxu0
      %v1881 = vadd.f32 %v1580, %v1880
      %v1882 = vpop.f32.mrb[0].mxu0
      %v1883 = vand.u32 %v388, 4294901760
      %1884 = vmatprep.mubr.f32.mxu0 %v1883
      %v1885 = vand.u32 %v387, 4294901760
      %1886 = vmatmul.mubr.f32.gmra.mrb[0].mxu0 %v1885
      %v1887 = vpop.f32.mrb[0].mxu0
      %v1888 = vadd.f32 %v1591, %v1887
      %v1889 = vpop.f32.mrb[0].mxu0
      %v1890 = vand.u32 %v390, 4294901760
      %1891 = vmatprep.mubr.f32.mxu0 %v1890
      %v1892 = vand.u32 %v389, 4294901760
      %1893 = vmatmul.mubr.f32.gmra.mrb[0].mxu0 %v1892
      %v1894 = vpop.f32.mrb[0].mxu0
      %v1895 = vadd.f32 %v1602, %v1894
      %v1896 = vpop.f32.mrb[0].mxu0
      %v1897 = vand.u32 %v392, 4294901760
      %1898 = vmatprep.mubr.f32.mxu0 %v1897
      %v1899 = vand.u32 %v391, 4294901760
      %1900 = vmatmul.mubr.f32.gmra.mrb[0].mxu0 %v1899
      %v1901 = vpop.f32.mrb[0].mxu0
      %v1902 = vadd.f32 %v1613, %v1901
      %v1903 = vpop.f32.mrb[0].mxu0
      %v1904 = vand.u32 %v394, 4294901760
      %1905 = vmatprep.mubr.f32.mxu0 %v1904
      %v1906 = vand.u32 %v393, 4294901760
      %1907 = vmatmul.mubr.f32.gmra.mrb[0].mxu0 %v1906
      %v1908 = vpop.f32.mrb[0].mxu0
      %v1909 = vadd.f32 %v1624, %v1908
      %v1910 = vpop.f32.mrb[0].mxu0
      %v1911 = vand.u32 %v396, 4294901760
      %1912 = vmatprep.mubr.f32.mxu0 %v1911
      %v1913 = vand.u32 %v395, 4294901760
      %1914 = vmatmul.mubr.f32.gmra.mrb[0].mxu0 %v1913
      %v1915 = vpop.f32.mrb[0].mxu0
      %v1916 = vadd.f32 %v1635, %v1915
      %v1917 = vpop.f32.mrb[0].mxu0
      %v1918 = vand.u32 %v398, 4294901760
      %1919 = vmatprep.mubr.f32.mxu0 %v1918
      %v1920 = vand.u32 %v397, 4294901760
      %1921 = vmatmul.mubr.f32.gmra.mrb[0].mxu0 %v1920
      %v1922 = vpop.f32.mrb[0].mxu0
      %v1923 = vadd.f32 %v1646, %v1922
      %v1924 = vpop.f32.mrb[0].mxu0
      %v1925 = vand.u32 %v400, 4294901760
      %1926 = vmatprep.mubr.f32.mxu0 %v1925
      %v1927 = vand.u32 %v399, 4294901760
      %1928 = vmatmul.mubr.f32.gmra.mrb[0].mxu0 %v1927
      %v1929 = vpop.f32.mrb[0].mxu0
      %v1930 = vadd.f32 %v1657, %v1929
      %v1931 = vpop.f32.mrb[0].mxu0
      %1932 = vdwg.mxu0
      %1933 = vmatprep.subr.mxu0 0.0
      %v1934 = vand.u32 %v401, 4294901760
      %1935 = vmatpush1.msra.mxu0 %v1934
      %1936 = vmatprep.subr.mxu0 0.0
      %v1937 = vand.u32 %v402, 4294901760
      %1938 = vmatpush1.msra.mxu0 %v1937
      %1939 = vmatprep.subr.mxu0 0.0
      %v1940 = vand.u32 %v403, 4294901760
      %1941 = vmatpush1.msra.mxu0 %v1940
      %1942 = vmatprep.subr.mxu0 0.0
      %v1943 = vand.u32 %v404, 4294901760
      %1944 = vmatpush1.msra.mxu0 %v1943
      %1945 = vmatprep.subr.mxu0 0.0
      %v1946 = vand.u32 %v405, 4294901760
      %1947 = vmatpush1.msra.mxu0 %v1946
      %1948 = vmatprep.subr.mxu0 0.0
      %v1949 = vand.u32 %v406, 4294901760
      %1950 = vmatpush1.msra.mxu0 %v1949
      %1951 = vmatprep.subr.mxu0 0.0
      %v1952 = vand.u32 %v407, 4294901760
      %1953 = vmatpush1.msra.mxu0 %v1952
      %1954 = vmatprep.subr.mxu0 0.0
      %v1955 = vand.u32 %v408, 4294901760
      %1956 = vmatpush1.msra.mxu0 %v1955
      %1957 = vmatprep.subr.mxu0 0.0
      %v1958 = vand.u32 %v409, 4294901760
      %1959 = vmatpush1.msra.mxu0 %v1958
      %1960 = vmatprep.subr.mxu0 0.0
      %v1961 = vand.u32 %v410, 4294901760
      %1962 = vmatpush1.msra.mxu0 %v1961
      %1963 = vmatprep.subr.mxu0 0.0
      %v1964 = vand.u32 %v411, 4294901760
      %1965 = vmatpush1.msra.mxu0 %v1964
      %1966 = vmatprep.subr.mxu0 0.0
      %v1967 = vand.u32 %v412, 4294901760
      %1968 = vmatpush1.msra.mxu0 %v1967
      %1969 = vmatprep.subr.mxu0 0.0
      %v1970 = vand.u32 %v413, 4294901760
      %1971 = vmatpush1.msra.mxu0 %v1970
      %1972 = vmatprep.subr.mxu0 0.0
      %v1973 = vand.u32 %v414, 4294901760
      %1974 = vmatpush1.msra.mxu0 %v1973
      %1975 = vmatprep.subr.mxu0 0.0
      %v1976 = vand.u32 %v415, 4294901760
      %1977 = vmatpush1.msra.mxu0 %v1976
      %1978 = vmatprep.subr.mxu0 0.0
      %v1979 = vand.u32 %v416, 4294901760
      %1980 = vmatpush1.msra.mxu0 %v1979
      %1981 = vmatprep.subr.mxu0 0.0
      %v1982 = vand.u32 %v417, 4294901760
      %1983 = vmatpush1.msra.mxu0 %v1982
      %1984 = vmatprep.subr.mxu0 0.0
      %v1985 = vand.u32 %v418, 4294901760
      %1986 = vmatpush1.msra.mxu0 %v1985
      %1987 = vmatprep.subr.mxu0 0.0
      %v1988 = vand.u32 %v419, 4294901760
      %1989 = vmatpush1.msra.mxu0 %v1988
      %1990 = vmatprep.subr.mxu0 0.0
      %v1991 = vand.u32 %v420, 4294901760
      %1992 = vmatpush1.msra.mxu0 %v1991
      %1993 = vmatprep.subr.mxu0 0.0
      %v1994 = vand.u32 %v421, 4294901760
      %1995 = vmatpush1.msra.mxu0 %v1994
      %1996 = vmatprep.subr.mxu0 0.0
      %v1997 = vand.u32 %v422, 4294901760
      %1998 = vmatpush1.msra.mxu0 %v1997
      %1999 = vmatprep.subr.mxu0 0.0
      %v2000 = vand.u32 %v423, 4294901760
      %2001 = vmatpush1.msra.mxu0 %v2000
      %2002 = vmatprep.subr.mxu0 0.0
      %v2003 = vand.u32 %v424, 4294901760
      %2004 = vmatpush1.msra.mxu0 %v2003
      %2005 = vmatprep.subr.mxu0 0.0
      %v2006 = vand.u32 %v425, 4294901760
      %2007 = vmatpush1.msra.mxu0 %v2006
      %2008 = vmatprep.subr.mxu0 0.0
      %v2009 = vand.u32 %v426, 4294901760
      %2010 = vmatpush1.msra.mxu0 %v2009
      %2011 = vmatprep.subr.mxu0 0.0
      %v2012 = vand.u32 %v427, 4294901760
      %2013 = vmatpush1.msra.mxu0 %v2012
      %2014 = vmatprep.subr.mxu0 0.0
      %v2015 = vand.u32 %v428, 4294901760
      %2016 = vmatpush1.msra.mxu0 %v2015
      %2017 = vmatprep.subr.mxu0 0.0
      %v2018 = vand.u32 %v429, 4294901760
      %2019 = vmatpush1.msra.mxu0 %v2018
      %2020 = vmatprep.subr.mxu0 0.0
      %v2021 = vand.u32 %v430, 4294901760
      %2022 = vmatpush1.msra.mxu0 %v2021
      %2023 = vmatprep.subr.mxu0 0.0
      %v2024 = vand.u32 %v431, 4294901760
      %2025 = vmatpush1.msra.mxu0 %v2024
      %2026 = vmatprep.subr.mxu0 0.0
      %v2027 = vand.u32 %v432, 4294901760
      %2028 = vmatpush1.msra.mxu0 %v2027
      %v2029 = vand.u32 %v370, 4294901760
      %2030 = vmatprep.mubr.f32.mxu0 %v2029
      %v2031 = vand.u32 %v369, 4294901760
      %2032 = vmatmul.mubr.f32.gmra.mrb[0].mxu0 %v2031
      %v2033 = vpop.f32.mrb[0].mxu0
      %v2034 = vadd.f32 %v1825, %v2033
      %v2035 = vpop.f32.mrb[0].mxu0
      %v2036 = vand.u32 %v372, 4294901760
      %2037 = vmatprep.mubr.f32.mxu0 %v2036
      %v2038 = vand.u32 %v371, 4294901760
      %2039 = vmatmul.mubr.f32.gmra.mrb[0].mxu0 %v2038
      %v2040 = vpop.f32.mrb[0].mxu0
      %v2041 = vadd.f32 %v1832, %v2040
      %v2042 = vpop.f32.mrb[0].mxu0
      %v2043 = vand.u32 %v374, 4294901760
      %2044 = vmatprep.mubr.f32.mxu0 %v2043
      %v2045 = vand.u32 %v373, 4294901760
      %2046 = vmatmul.mubr.f32.gmra.mrb[0].mxu0 %v2045
      %v2047 = vpop.f32.mrb[0].mxu0
      %v2048 = vadd.f32 %v1839, %v2047
      %v2049 = vpop.f32.mrb[0].mxu0
      %v2050 = vand.u32 %v376, 4294901760
      %2051 = vmatprep.mubr.f32.mxu0 %v2050
      %v2052 = vand.u32 %v375, 4294901760
      %2053 = vmatmul.mubr.f32.gmra.mrb[0].mxu0 %v2052
      %v2054 = vpop.f32.mrb[0].mxu0
      %v2055 = vadd.f32 %v1846, %v2054
      %v2056 = vpop.f32.mrb[0].mxu0
      %v2057 = vand.u32 %v378, 4294901760
      %2058 = vmatprep.mubr.f32.mxu0 %v2057
      %v2059 = vand.u32 %v377, 4294901760
      %2060 = vmatmul.mubr.f32.gmra.mrb[0].mxu0 %v2059
      %v2061 = vpop.f32.mrb[0].mxu0
      %v2062 = vadd.f32 %v1853, %v2061
      %v2063 = vpop.f32.mrb[0].mxu0
      %v2064 = vand.u32 %v380, 4294901760
      %2065 = vmatprep.mubr.f32.mxu0 %v2064
      %v2066 = vand.u32 %v379, 4294901760
      %2067 = vmatmul.mubr.f32.gmra.mrb[0].mxu0 %v2066
      %v2068 = vpop.f32.mrb[0].mxu0
      %v2069 = vadd.f32 %v1860, %v2068
      %v2070 = vpop.f32.mrb[0].mxu0
      %v2071 = vand.u32 %v382, 4294901760
      %2072 = vmatprep.mubr.f32.mxu0 %v2071
      %v2073 = vand.u32 %v381, 4294901760
      %2074 = vmatmul.mubr.f32.gmra.mrb[0].mxu0 %v2073
      %v2075 = vpop.f32.mrb[0].mxu0
      %v2076 = vadd.f32 %v1867, %v2075
      %v2077 = vpop.f32.mrb[0].mxu0
      %v2078 = vand.u32 %v384, 4294901760
      %2079 = vmatprep.mubr.f32.mxu0 %v2078
      %v2080 = vand.u32 %v383, 4294901760
      %2081 = vmatmul.mubr.f32.gmra.mrb[0].mxu0 %v2080
      %v2082 = vpop.f32.mrb[0].mxu0
      %v2083 = vadd.f32 %v1874, %v2082
      %v2084 = vpop.f32.mrb[0].mxu0
      %v2085 = vand.u32 %v386, 4294901760
      %2086 = vmatprep.mubr.f32.mxu0 %v2085
      %v2087 = vand.u32 %v385, 4294901760
      %2088 = vmatmul.mubr.f32.gmra.mrb[0].mxu0 %v2087
      %v2089 = vpop.f32.mrb[0].mxu0
      %v2090 = vadd.f32 %v1881, %v2089
      %v2091 = vpop.f32.mrb[0].mxu0
      %v2092 = vand.u32 %v388, 4294901760
      %2093 = vmatprep.mubr.f32.mxu0 %v2092
      %v2094 = vand.u32 %v387, 4294901760
      %2095 = vmatmul.mubr.f32.gmra.mrb[0].mxu0 %v2094
      %v2096 = vpop.f32.mrb[0].mxu0
      %v2097 = vadd.f32 %v1888, %v2096
      %v2098 = vpop.f32.mrb[0].mxu0
      %v2099 = vand.u32 %v390, 4294901760
      %2100 = vmatprep.mubr.f32.mxu0 %v2099
      %v2101 = vand.u32 %v389, 4294901760
      %2102 = vmatmul.mubr.f32.gmra.mrb[0].mxu0 %v2101
      %v2103 = vpop.f32.mrb[0].mxu0
      %v2104 = vadd.f32 %v1895, %v2103
      %v2105 = vpop.f32.mrb[0].mxu0
      %v2106 = vand.u32 %v392, 4294901760
      %2107 = vmatprep.mubr.f32.mxu0 %v2106
      %v2108 = vand.u32 %v391, 4294901760
      %2109 = vmatmul.mubr.f32.gmra.mrb[0].mxu0 %v2108
      %v2110 = vpop.f32.mrb[0].mxu0
      %v2111 = vadd.f32 %v1902, %v2110
      %v2112 = vpop.f32.mrb[0].mxu0
      %v2113 = vand.u32 %v394, 4294901760
      %2114 = vmatprep.mubr.f32.mxu0 %v2113
      %v2115 = vand.u32 %v393, 4294901760
      %2116 = vmatmul.mubr.f32.gmra.mrb[0].mxu0 %v2115
      %v2117 = vpop.f32.mrb[0].mxu0
      %v2118 = vadd.f32 %v1909, %v2117
      %v2119 = vpop.f32.mrb[0].mxu0
      %v2120 = vand.u32 %v396, 4294901760
      %2121 = vmatprep.mubr.f32.mxu0 %v2120
      %v2122 = vand.u32 %v395, 4294901760
      %2123 = vmatmul.mubr.f32.gmra.mrb[0].mxu0 %v2122
      %v2124 = vpop.f32.mrb[0].mxu0
      %v2125 = vadd.f32 %v1916, %v2124
      %v2126 = vpop.f32.mrb[0].mxu0
      %v2127 = vand.u32 %v398, 4294901760
      %2128 = vmatprep.mubr.f32.mxu0 %v2127
      %v2129 = vand.u32 %v397, 4294901760
      %2130 = vmatmul.mubr.f32.gmra.mrb[0].mxu0 %v2129
      %v2131 = vpop.f32.mrb[0].mxu0
      %v2132 = vadd.f32 %v1923, %v2131
      %v2133 = vpop.f32.mrb[0].mxu0
      %v2134 = vand.u32 %v400, 4294901760
      %2135 = vmatprep.mubr.f32.mxu0 %v2134
      %v2136 = vand.u32 %v399, 4294901760
      %2137 = vmatmul.mubr.f32.gmra.mrb[0].mxu0 %v2136
      %v2138 = vpop.f32.mrb[0].mxu0
      %v2139 = vadd.f32 %v1930, %v2138
      %v2140 = vpop.f32.mrb[0].mxu0
      %2141 = vdwg.mxu0
      %v2142 = vtanh.pop %v2034
      %v2143 = vtanh.pop %v2041
      %v2144 = vtanh.pop %v2048
      %v2145 = vtanh.pop %v2055
      %v2146 = vtanh.pop %v2062
      %v2147 = vtanh.pop %v2069
      %v2148 = vtanh.pop %v2076
      %v2149 = vtanh.pop %v2083
      %v2150 = vtanh.pop %v2090
      %v2151 = vtanh.pop %v2097
      %v2152 = vtanh.pop %v2104
      %v2153 = vtanh.pop %v2111
      %v2154 = vtanh.pop %v2118
      %v2155 = vtanh.pop %v2125
      %v2156 = vtanh.pop %v2132
      %v2157 = vtanh.pop %v2139
      %v2158 = vld [vmem:[%s3] sm:$0xff]
      %v2159 = vld [vmem:[%s3 + $0x8] sm:$0xff]
      %v2160 = vld [vmem:[%s3 + $0x10] sm:$0xff]
      %v2161 = vld [vmem:[%s3 + $0x18] sm:$0xff]
      %v2162 = vld [vmem:[%s3 + $0x20] sm:$0xff]
      %v2163 = vld [vmem:[%s3 + $0x28] sm:$0xff]
      %v2164 = vld [vmem:[%s3 + $0x30] sm:$0xff]
      %v2165 = vld [vmem:[%s3 + $0x38] sm:$0xff]
      %v2166 = vld [vmem:[%s3 + $0x40] sm:$0xff]
      %v2167 = vld [vmem:[%s3 + $0x48] sm:$0xff]
      %v2168 = vld [vmem:[%s3 + $0x50] sm:$0xff]
      %v2169 = vld [vmem:[%s3 + $0x58] sm:$0xff]
      %v2170 = vld [vmem:[%s3 + $0x60] sm:$0xff]
      %v2171 = vld [vmem:[%s3 + $0x68] sm:$0xff]
      %v2172 = vld [vmem:[%s3 + $0x70] sm:$0xff]
      %v2173 = vld [vmem:[%s3 + $0x78] sm:$0xff]
      %s2174 = sld [smem:[#allocation2]]
      %v2175 = vstv %s2174
      %2176 = vmatprep.subr.mxu0 0.0
      %v2177 = vand.u32 %v2158, 4294901760
      %2178 = vmatpush1.msra.mxu0 %v2177
      %2179 = vmatprep.subr.mxu0 0.0
      %v2180 = vand.u32 %v2159, 4294901760
      %2181 = vmatpush1.msra.mxu0 %v2180
      %2182 = vmatprep.subr.mxu0 0.0
      %v2183 = vand.u32 %v2160, 4294901760
      %2184 = vmatpush1.msra.mxu0 %v2183
      %2185 = vmatprep.subr.mxu0 0.0
      %v2186 = vand.u32 %v2161, 4294901760
      %2187 = vmatpush1.msra.mxu0 %v2186
      %2188 = vmatprep.subr.mxu0 0.0
      %v2189 = vand.u32 %v2162, 4294901760
      %2190 = vmatpush1.msra.mxu0 %v2189
      %2191 = vmatprep.subr.mxu0 0.0
      %v2192 = vand.u32 %v2163, 4294901760
      %2193 = vmatpush1.msra.mxu0 %v2192
      %2194 = vmatprep.subr.mxu0 0.0
      %v2195 = vand.u32 %v2164, 4294901760
      %2196 = vmatpush1.msra.mxu0 %v2195
      %2197 = vmatprep.subr.mxu0 0.0
      %v2198 = vand.u32 %v2165, 4294901760
      %2199 = vmatpush1.msra.mxu0 %v2198
      %2200 = vmatprep.subr.mxu0 0.0
      %v2201 = vand.u32 %v2166, 4294901760
      %2202 = vmatpush1.msra.mxu0 %v2201
      %2203 = vmatprep.subr.mxu0 0.0
      %v2204 = vand.u32 %v2167, 4294901760
      %2205 = vmatpush1.msra.mxu0 %v2204
      %2206 = vmatprep.subr.mxu0 0.0
      %v2207 = vand.u32 %v2168, 4294901760
      %2208 = vmatpush1.msra.mxu0 %v2207
      %2209 = vmatprep.subr.mxu0 0.0
      %v2210 = vand.u32 %v2169, 4294901760
      %2211 = vmatpush1.msra.mxu0 %v2210
      %2212 = vmatprep.subr.mxu0 0.0
      %v2213 = vand.u32 %v2170, 4294901760
      %2214 = vmatpush1.msra.mxu0 %v2213
      %2215 = vmatprep.subr.mxu0 0.0
      %v2216 = vand.u32 %v2171, 4294901760
      %2217 = vmatpush1.msra.mxu0 %v2216
      %2218 = vmatprep.subr.mxu0 0.0
      %v2219 = vand.u32 %v2172, 4294901760
      %2220 = vmatpush1.msra.mxu0 %v2219
      %2221 = vmatprep.subr.mxu0 0.0
      %v2222 = vand.u32 %v2173, 4294901760
      %2223 = vmatpush1.msra.mxu0 %v2222
      %2224 = vmatprep.subr.mxu0 0.0
      %2225 = vmatpush1.msra.mxu0 0.0
      %2226 = vmatprep.subr.mxu0 0.0
      %2227 = vmatpush1.msra.mxu0 0.0
      %2228 = vmatprep.subr.mxu0 0.0
      %2229 = vmatpush1.msra.mxu0 0.0
      %2230 = vmatprep.subr.mxu0 0.0
      %2231 = vmatpush1.msra.mxu0 0.0
      %2232 = vmatprep.subr.mxu0 0.0
      %2233 = vmatpush1.msra.mxu0 0.0
      %2234 = vmatprep.subr.mxu0 0.0
      %2235 = vmatpush1.msra.mxu0 0.0
      %2236 = vmatprep.subr.mxu0 0.0
      %2237 = vmatpush1.msra.mxu0 0.0
      %2238 = vmatprep.subr.mxu0 0.0
      %2239 = vmatpush1.msra.mxu0 0.0
      %2240 = vmatprep.subr.mxu0 0.0
      %2241 = vmatpush1.msra.mxu0 0.0
      %2242 = vmatprep.subr.mxu0 0.0
      %2243 = vmatpush1.msra.mxu0 0.0
      %2244 = vmatprep.subr.mxu0 0.0
      %2245 = vmatpush1.msra.mxu0 0.0
      %2246 = vmatprep.subr.mxu0 0.0
      %2247 = vmatpush1.msra.mxu0 0.0
      %2248 = vmatprep.subr.mxu0 0.0
      %2249 = vmatpush1.msra.mxu0 0.0
      %2250 = vmatprep.subr.mxu0 0.0
      %2251 = vmatpush1.msra.mxu0 0.0
      %2252 = vmatprep.subr.mxu0 0.0
      %2253 = vmatpush1.msra.mxu0 0.0
      %2254 = vmatprep.subr.mxu0 0.0
      %2255 = vmatpush1.msra.mxu0 0.0
      %2256 = vmatprep.mubr.f32.mxu0 0.0
      %v2257 = vand.u32 %v2142, 4294901760
      %v2258 = vsub.f32 %v2142, %v2257
      %v2259 = vand.u32 %v2258, 4294901760
      %v2260 = vsub.f32 %v2258, %v2259
      %v2261 = vand.u32 %v2260, 4294901760
      %2262 = vmatmul.mubr.f32.gmra.mrb[0].mxu0 %v2261
      %v2263 = vpop.f32.mrb[0].mxu0
      %v2264 = vadd.f32 %v2175, %v2263
      %v2265 = vpop.f32.mrb[0].mxu0
      %2266 = vmatprep.mubr.f32.mxu0 0.0
      %v2267 = vand.u32 %v2143, 4294901760
      %v2268 = vsub.f32 %v2143, %v2267
      %v2269 = vand.u32 %v2268, 4294901760
      %v2270 = vsub.f32 %v2268, %v2269
      %v2271 = vand.u32 %v2270, 4294901760
      %2272 = vmatmul.mubr.f32.gmra.mrb[0].mxu0 %v2271
      %v2273 = vpop.f32.mrb[0].mxu0
      %v2274 = vadd.f32 %v2175, %v2273
      %v2275 = vpop.f32.mrb[0].mxu0
      %2276 = vmatprep.mubr.f32.mxu0 0.0
      %v2277 = vand.u32 %v2144, 4294901760
      %v2278 = vsub.f32 %v2144, %v2277
      %v2279 = vand.u32 %v2278, 4294901760
      %v2280 = vsub.f32 %v2278, %v2279
      %v2281 = vand.u32 %v2280, 4294901760
      %2282 = vmatmul.mubr.f32.gmra.mrb[0].mxu0 %v2281
      %v2283 = vpop.f32.mrb[0].mxu0
      %v2284 = vadd.f32 %v2175, %v2283
      %v2285 = vpop.f32.mrb[0].mxu0
      %2286 = vmatprep.mubr.f32.mxu0 0.0
      %v2287 = vand.u32 %v2145, 4294901760
      %v2288 = vsub.f32 %v2145, %v2287
      %v2289 = vand.u32 %v2288, 4294901760
      %v2290 = vsub.f32 %v2288, %v2289
      %v2291 = vand.u32 %v2290, 4294901760
      %2292 = vmatmul.mubr.f32.gmra.mrb[0].mxu0 %v2291
      %v2293 = vpop.f32.mrb[0].mxu0
      %v2294 = vadd.f32 %v2175, %v2293
      %v2295 = vpop.f32.mrb[0].mxu0
      %2296 = vmatprep.mubr.f32.mxu0 0.0
      %v2297 = vand.u32 %v2146, 4294901760
      %v2298 = vsub.f32 %v2146, %v2297
      %v2299 = vand.u32 %v2298, 4294901760
      %v2300 = vsub.f32 %v2298, %v2299
      %v2301 = vand.u32 %v2300, 4294901760
      %2302 = vmatmul.mubr.f32.gmra.mrb[0].mxu0 %v2301
      %v2303 = vpop.f32.mrb[0].mxu0
      %v2304 = vadd.f32 %v2175, %v2303
      %v2305 = vpop.f32.mrb[0].mxu0
      %2306 = vmatprep.mubr.f32.mxu0 0.0
      %v2307 = vand.u32 %v2147, 4294901760
      %v2308 = vsub.f32 %v2147, %v2307
      %v2309 = vand.u32 %v2308, 4294901760
      %v2310 = vsub.f32 %v2308, %v2309
      %v2311 = vand.u32 %v2310, 4294901760
      %2312 = vmatmul.mubr.f32.gmra.mrb[0].mxu0 %v2311
      %v2313 = vpop.f32.mrb[0].mxu0
      %v2314 = vadd.f32 %v2175, %v2313
      %v2315 = vpop.f32.mrb[0].mxu0
      %2316 = vmatprep.mubr.f32.mxu0 0.0
      %v2317 = vand.u32 %v2148, 4294901760
      %v2318 = vsub.f32 %v2148, %v2317
      %v2319 = vand.u32 %v2318, 4294901760
      %v2320 = vsub.f32 %v2318, %v2319
      %v2321 = vand.u32 %v2320, 4294901760
      %2322 = vmatmul.mubr.f32.gmra.mrb[0].mxu0 %v2321
      %v2323 = vpop.f32.mrb[0].mxu0
      %v2324 = vadd.f32 %v2175, %v2323
      %v2325 = vpop.f32.mrb[0].mxu0
      %2326 = vmatprep.mubr.f32.mxu0 0.0
      %v2327 = vand.u32 %v2149, 4294901760
      %v2328 = vsub.f32 %v2149, %v2327
      %v2329 = vand.u32 %v2328, 4294901760
      %v2330 = vsub.f32 %v2328, %v2329
      %v2331 = vand.u32 %v2330, 4294901760
      %2332 = vmatmul.mubr.f32.gmra.mrb[0].mxu0 %v2331
      %v2333 = vpop.f32.mrb[0].mxu0
      %v2334 = vadd.f32 %v2175, %v2333
      %v2335 = vpop.f32.mrb[0].mxu0
      %2336 = vmatprep.mubr.f32.mxu0 0.0
      %v2337 = vand.u32 %v2150, 4294901760
      %v2338 = vsub.f32 %v2150, %v2337
      %v2339 = vand.u32 %v2338, 4294901760
      %v2340 = vsub.f32 %v2338, %v2339
      %v2341 = vand.u32 %v2340, 4294901760
      %2342 = vmatmul.mubr.f32.gmra.mrb[0].mxu0 %v2341
      %v2343 = vpop.f32.mrb[0].mxu0
      %v2344 = vadd.f32 %v2175, %v2343
      %v2345 = vpop.f32.mrb[0].mxu0
      %2346 = vmatprep.mubr.f32.mxu0 0.0
      %v2347 = vand.u32 %v2151, 4294901760
      %v2348 = vsub.f32 %v2151, %v2347
      %v2349 = vand.u32 %v2348, 4294901760
      %v2350 = vsub.f32 %v2348, %v2349
      %v2351 = vand.u32 %v2350, 4294901760
      %2352 = vmatmul.mubr.f32.gmra.mrb[0].mxu0 %v2351
      %v2353 = vpop.f32.mrb[0].mxu0
      %v2354 = vadd.f32 %v2175, %v2353
      %v2355 = vpop.f32.mrb[0].mxu0
      %2356 = vmatprep.mubr.f32.mxu0 0.0
      %v2357 = vand.u32 %v2152, 4294901760
      %v2358 = vsub.f32 %v2152, %v2357
      %v2359 = vand.u32 %v2358, 4294901760
      %v2360 = vsub.f32 %v2358, %v2359
      %v2361 = vand.u32 %v2360, 4294901760
      %2362 = vmatmul.mubr.f32.gmra.mrb[0].mxu0 %v2361
      %v2363 = vpop.f32.mrb[0].mxu0
      %v2364 = vadd.f32 %v2175, %v2363
      %v2365 = vpop.f32.mrb[0].mxu0
      %2366 = vmatprep.mubr.f32.mxu0 0.0
      %v2367 = vand.u32 %v2153, 4294901760
      %v2368 = vsub.f32 %v2153, %v2367
      %v2369 = vand.u32 %v2368, 4294901760
      %v2370 = vsub.f32 %v2368, %v2369
      %v2371 = vand.u32 %v2370, 4294901760
      %2372 = vmatmul.mubr.f32.gmra.mrb[0].mxu0 %v2371
      %v2373 = vpop.f32.mrb[0].mxu0
      %v2374 = vadd.f32 %v2175, %v2373
      %v2375 = vpop.f32.mrb[0].mxu0
      %2376 = vmatprep.mubr.f32.mxu0 0.0
      %v2377 = vand.u32 %v2154, 4294901760
      %v2378 = vsub.f32 %v2154, %v2377
      %v2379 = vand.u32 %v2378, 4294901760
      %v2380 = vsub.f32 %v2378, %v2379
      %v2381 = vand.u32 %v2380, 4294901760
      %2382 = vmatmul.mubr.f32.gmra.mrb[0].mxu0 %v2381
      %v2383 = vpop.f32.mrb[0].mxu0
      %v2384 = vadd.f32 %v2175, %v2383
      %v2385 = vpop.f32.mrb[0].mxu0
      %2386 = vmatprep.mubr.f32.mxu0 0.0
      %v2387 = vand.u32 %v2155, 4294901760
      %v2388 = vsub.f32 %v2155, %v2387
      %v2389 = vand.u32 %v2388, 4294901760
      %v2390 = vsub.f32 %v2388, %v2389
      %v2391 = vand.u32 %v2390, 4294901760
      %2392 = vmatmul.mubr.f32.gmra.mrb[0].mxu0 %v2391
      %v2393 = vpop.f32.mrb[0].mxu0
      %v2394 = vadd.f32 %v2175, %v2393
      %v2395 = vpop.f32.mrb[0].mxu0
      %2396 = vmatprep.mubr.f32.mxu0 0.0
      %v2397 = vand.u32 %v2156, 4294901760
      %v2398 = vsub.f32 %v2156, %v2397
      %v2399 = vand.u32 %v2398, 4294901760
      %v2400 = vsub.f32 %v2398, %v2399
      %v2401 = vand.u32 %v2400, 4294901760
      %2402 = vmatmul.mubr.f32.gmra.mrb[0].mxu0 %v2401
      %v2403 = vpop.f32.mrb[0].mxu0
      %v2404 = vadd.f32 %v2175, %v2403
      %v2405 = vpop.f32.mrb[0].mxu0
      %2406 = vmatprep.mubr.f32.mxu0 0.0
      %v2407 = vand.u32 %v2157, 4294901760
      %v2408 = vsub.f32 %v2157, %v2407
      %v2409 = vand.u32 %v2408, 4294901760
      %v2410 = vsub.f32 %v2408, %v2409
      %v2411 = vand.u32 %v2410, 4294901760
      %2412 = vmatmul.mubr.f32.gmra.mrb[0].mxu0 %v2411
      %v2413 = vpop.f32.mrb[0].mxu0
      %v2414 = vadd.f32 %v2175, %v2413
      %v2415 = vpop.f32.mrb[0].mxu0
      %2416 = vdwg.mxu0
      %2417 = vmatprep.subr.mxu0 0.0
      %v2418 = vand.u32 %v2158, 4294901760
      %v2419 = vsub.f32 %v2158, %v2418
      %v2420 = vand.u32 %v2419, 4294901760
      %v2421 = vsub.f32 %v2419, %v2420
      %v2422 = vand.u32 %v2421, 4294901760
      %2423 = vmatpush1.msra.mxu0 %v2422
      %2424 = vmatprep.subr.mxu0 0.0
      %v2425 = vand.u32 %v2159, 4294901760
      %v2426 = vsub.f32 %v2159, %v2425
      %v2427 = vand.u32 %v2426, 4294901760
      %v2428 = vsub.f32 %v2426, %v2427
      %v2429 = vand.u32 %v2428, 4294901760
      %2430 = vmatpush1.msra.mxu0 %v2429
      %2431 = vmatprep.subr.mxu0 0.0
      %v2432 = vand.u32 %v2160, 4294901760
      %v2433 = vsub.f32 %v2160, %v2432
      %v2434 = vand.u32 %v2433, 4294901760
      %v2435 = vsub.f32 %v2433, %v2434
      %v2436 = vand.u32 %v2435, 4294901760
      %2437 = vmatpush1.msra.mxu0 %v2436
      %2438 = vmatprep.subr.mxu0 0.0
      %v2439 = vand.u32 %v2161, 4294901760
      %v2440 = vsub.f32 %v2161, %v2439
      %v2441 = vand.u32 %v2440, 4294901760
      %v2442 = vsub.f32 %v2440, %v2441
      %v2443 = vand.u32 %v2442, 4294901760
      %2444 = vmatpush1.msra.mxu0 %v2443
      %2445 = vmatprep.subr.mxu0 0.0
      %v2446 = vand.u32 %v2162, 4294901760
      %v2447 = vsub.f32 %v2162, %v2446
      %v2448 = vand.u32 %v2447, 4294901760
      %v2449 = vsub.f32 %v2447, %v2448
      %v2450 = vand.u32 %v2449, 4294901760
      %2451 = vmatpush1.msra.mxu0 %v2450
      %2452 = vmatprep.subr.mxu0 0.0
      %v2453 = vand.u32 %v2163, 4294901760
      %v2454 = vsub.f32 %v2163, %v2453
      %v2455 = vand.u32 %v2454, 4294901760
      %v2456 = vsub.f32 %v2454, %v2455
      %v2457 = vand.u32 %v2456, 4294901760
      %2458 = vmatpush1.msra.mxu0 %v2457
      %2459 = vmatprep.subr.mxu0 0.0
      %v2460 = vand.u32 %v2164, 4294901760
      %v2461 = vsub.f32 %v2164, %v2460
      %v2462 = vand.u32 %v2461, 4294901760
      %v2463 = vsub.f32 %v2461, %v2462
      %v2464 = vand.u32 %v2463, 4294901760
      %2465 = vmatpush1.msra.mxu0 %v2464
      %2466 = vmatprep.subr.mxu0 0.0
      %v2467 = vand.u32 %v2165, 4294901760
      %v2468 = vsub.f32 %v2165, %v2467
      %v2469 = vand.u32 %v2468, 4294901760
      %v2470 = vsub.f32 %v2468, %v2469
      %v2471 = vand.u32 %v2470, 4294901760
      %2472 = vmatpush1.msra.mxu0 %v2471
      %2473 = vmatprep.subr.mxu0 0.0
      %v2474 = vand.u32 %v2166, 4294901760
      %v2475 = vsub.f32 %v2166, %v2474
      %v2476 = vand.u32 %v2475, 4294901760
      %v2477 = vsub.f32 %v2475, %v2476
      %v2478 = vand.u32 %v2477, 4294901760
      %2479 = vmatpush1.msra.mxu0 %v2478
      %2480 = vmatprep.subr.mxu0 0.0
      %v2481 = vand.u32 %v2167, 4294901760
      %v2482 = vsub.f32 %v2167, %v2481
      %v2483 = vand.u32 %v2482, 4294901760
      %v2484 = vsub.f32 %v2482, %v2483
      %v2485 = vand.u32 %v2484, 4294901760
      %2486 = vmatpush1.msra.mxu0 %v2485
      %2487 = vmatprep.subr.mxu0 0.0
      %v2488 = vand.u32 %v2168, 4294901760
      %v2489 = vsub.f32 %v2168, %v2488
      %v2490 = vand.u32 %v2489, 4294901760
      %v2491 = vsub.f32 %v2489, %v2490
      %v2492 = vand.u32 %v2491, 4294901760
      %2493 = vmatpush1.msra.mxu0 %v2492
      %2494 = vmatprep.subr.mxu0 0.0
      %v2495 = vand.u32 %v2169, 4294901760
      %v2496 = vsub.f32 %v2169, %v2495
      %v2497 = vand.u32 %v2496, 4294901760
      %v2498 = vsub.f32 %v2496, %v2497
      %v2499 = vand.u32 %v2498, 4294901760
      %2500 = vmatpush1.msra.mxu0 %v2499
      %2501 = vmatprep.subr.mxu0 0.0
      %v2502 = vand.u32 %v2170, 4294901760
      %v2503 = vsub.f32 %v2170, %v2502
      %v2504 = vand.u32 %v2503, 4294901760
      %v2505 = vsub.f32 %v2503, %v2504
      %v2506 = vand.u32 %v2505, 4294901760
      %2507 = vmatpush1.msra.mxu0 %v2506
      %2508 = vmatprep.subr.mxu0 0.0
      %v2509 = vand.u32 %v2171, 4294901760
      %v2510 = vsub.f32 %v2171, %v2509
      %v2511 = vand.u32 %v2510, 4294901760
      %v2512 = vsub.f32 %v2510, %v2511
      %v2513 = vand.u32 %v2512, 4294901760
      %2514 = vmatpush1.msra.mxu0 %v2513
      %2515 = vmatprep.subr.mxu0 0.0
      %v2516 = vand.u32 %v2172, 4294901760
      %v2517 = vsub.f32 %v2172, %v2516
      %v2518 = vand.u32 %v2517, 4294901760
      %v2519 = vsub.f32 %v2517, %v2518
      %v2520 = vand.u32 %v2519, 4294901760
      %2521 = vmatpush1.msra.mxu0 %v2520
      %2522 = vmatprep.subr.mxu0 0.0
      %v2523 = vand.u32 %v2173, 4294901760
      %v2524 = vsub.f32 %v2173, %v2523
      %v2525 = vand.u32 %v2524, 4294901760
      %v2526 = vsub.f32 %v2524, %v2525
      %v2527 = vand.u32 %v2526, 4294901760
      %2528 = vmatpush1.msra.mxu0 %v2527
      %2529 = vmatprep.subr.mxu0 0.0
      %2530 = vmatpush1.msra.mxu0 0.0
      %2531 = vmatprep.subr.mxu0 0.0
      %2532 = vmatpush1.msra.mxu0 0.0
      %2533 = vmatprep.subr.mxu0 0.0
      %2534 = vmatpush1.msra.mxu0 0.0
      %2535 = vmatprep.subr.mxu0 0.0
      %2536 = vmatpush1.msra.mxu0 0.0
      %2537 = vmatprep.subr.mxu0 0.0
      %2538 = vmatpush1.msra.mxu0 0.0
      %2539 = vmatprep.subr.mxu0 0.0
      %2540 = vmatpush1.msra.mxu0 0.0
      %2541 = vmatprep.subr.mxu0 0.0
      %2542 = vmatpush1.msra.mxu0 0.0
      %2543 = vmatprep.subr.mxu0 0.0
      %2544 = vmatpush1.msra.mxu0 0.0
      %2545 = vmatprep.subr.mxu0 0.0
      %2546 = vmatpush1.msra.mxu0 0.0
      %2547 = vmatprep.subr.mxu0 0.0
      %2548 = vmatpush1.msra.mxu0 0.0
      %2549 = vmatprep.subr.mxu0 0.0
      %2550 = vmatpush1.msra.mxu0 0.0
      %2551 = vmatprep.subr.mxu0 0.0
      %2552 = vmatpush1.msra.mxu0 0.0
      %2553 = vmatprep.subr.mxu0 0.0
      %2554 = vmatpush1.msra.mxu0 0.0
      %2555 = vmatprep.subr.mxu0 0.0
      %2556 = vmatpush1.msra.mxu0 0.0
      %2557 = vmatprep.subr.mxu0 0.0
      %2558 = vmatpush1.msra.mxu0 0.0
      %2559 = vmatprep.subr.mxu0 0.0
      %2560 = vmatpush1.msra.mxu0 0.0
      %2561 = vmatprep.mubr.f32.mxu0 0.0
      %v2562 = vand.u32 %v2142, 4294901760
      %2563 = vmatmul.mubr.f32.gmra.mrb[0].mxu0 %v2562
      %v2564 = vpop.f32.mrb[0].mxu0
      %v2565 = vadd.f32 %v2264, %v2564
      %v2566 = vpop.f32.mrb[0].mxu0
      %2567 = vmatprep.mubr.f32.mxu0 0.0
      %v2568 = vand.u32 %v2143, 4294901760
      %2569 = vmatmul.mubr.f32.gmra.mrb[0].mxu0 %v2568
      %v2570 = vpop.f32.mrb[0].mxu0
      %v2571 = vadd.f32 %v2274, %v2570
      %v2572 = vpop.f32.mrb[0].mxu0
      %2573 = vmatprep.mubr.f32.mxu0 0.0
      %v2574 = vand.u32 %v2144, 4294901760
      %2575 = vmatmul.mubr.f32.gmra.mrb[0].mxu0 %v2574
      %v2576 = vpop.f32.mrb[0].mxu0
      %v2577 = vadd.f32 %v2284, %v2576
      %v2578 = vpop.f32.mrb[0].mxu0
      %2579 = vmatprep.mubr.f32.mxu0 0.0
      %v2580 = vand.u32 %v2145, 4294901760
      %2581 = vmatmul.mubr.f32.gmra.mrb[0].mxu0 %v2580
      %v2582 = vpop.f32.mrb[0].mxu0
      %v2583 = vadd.f32 %v2294, %v2582
      %v2584 = vpop.f32.mrb[0].mxu0
      %2585 = vmatprep.mubr.f32.mxu0 0.0
      %v2586 = vand.u32 %v2146, 4294901760
      %2587 = vmatmul.mubr.f32.gmra.mrb[0].mxu0 %v2586
      %v2588 = vpop.f32.mrb[0].mxu0
      %v2589 = vadd.f32 %v2304, %v2588
      %v2590 = vpop.f32.mrb[0].mxu0
      %2591 = vmatprep.mubr.f32.mxu0 0.0
      %v2592 = vand.u32 %v2147, 4294901760
      %2593 = vmatmul.mubr.f32.gmra.mrb[0].mxu0 %v2592
      %v2594 = vpop.f32.mrb[0].mxu0
      %v2595 = vadd.f32 %v2314, %v2594
      %v2596 = vpop.f32.mrb[0].mxu0
      %2597 = vmatprep.mubr.f32.mxu0 0.0
      %v2598 = vand.u32 %v2148, 4294901760
      %2599 = vmatmul.mubr.f32.gmra.mrb[0].mxu0 %v2598
      %v2600 = vpop.f32.mrb[0].mxu0
      %v2601 = vadd.f32 %v2324, %v2600
      %v2602 = vpop.f32.mrb[0].mxu0
      %2603 = vmatprep.mubr.f32.mxu0 0.0
      %v2604 = vand.u32 %v2149, 4294901760
      %2605 = vmatmul.mubr.f32.gmra.mrb[0].mxu0 %v2604
      %v2606 = vpop.f32.mrb[0].mxu0
      %v2607 = vadd.f32 %v2334, %v2606
      %v2608 = vpop.f32.mrb[0].mxu0
      %2609 = vmatprep.mubr.f32.mxu0 0.0
      %v2610 = vand.u32 %v2150, 4294901760
      %2611 = vmatmul.mubr.f32.gmra.mrb[0].mxu0 %v2610
      %v2612 = vpop.f32.mrb[0].mxu0
      %v2613 = vadd.f32 %v2344, %v2612
      %v2614 = vpop.f32.mrb[0].mxu0
      %2615 = vmatprep.mubr.f32.mxu0 0.0
      %v2616 = vand.u32 %v2151, 4294901760
      %2617 = vmatmul.mubr.f32.gmra.mrb[0].mxu0 %v2616
      %v2618 = vpop.f32.mrb[0].mxu0
      %v2619 = vadd.f32 %v2354, %v2618
      %v2620 = vpop.f32.mrb[0].mxu0
      %2621 = vmatprep.mubr.f32.mxu0 0.0
      %v2622 = vand.u32 %v2152, 4294901760
      %2623 = vmatmul.mubr.f32.gmra.mrb[0].mxu0 %v2622
      %v2624 = vpop.f32.mrb[0].mxu0
      %v2625 = vadd.f32 %v2364, %v2624
      %v2626 = vpop.f32.mrb[0].mxu0
      %2627 = vmatprep.mubr.f32.mxu0 0.0
      %v2628 = vand.u32 %v2153, 4294901760
      %2629 = vmatmul.mubr.f32.gmra.mrb[0].mxu0 %v2628
      %v2630 = vpop.f32.mrb[0].mxu0
      %v2631 = vadd.f32 %v2374, %v2630
      %v2632 = vpop.f32.mrb[0].mxu0
      %2633 = vmatprep.mubr.f32.mxu0 0.0
      %v2634 = vand.u32 %v2154, 4294901760
      %2635 = vmatmul.mubr.f32.gmra.mrb[0].mxu0 %v2634
      %v2636 = vpop.f32.mrb[0].mxu0
      %v2637 = vadd.f32 %v2384, %v2636
      %v2638 = vpop.f32.mrb[0].mxu0
      %2639 = vmatprep.mubr.f32.mxu0 0.0
      %v2640 = vand.u32 %v2155, 4294901760
      %2641 = vmatmul.mubr.f32.gmra.mrb[0].mxu0 %v2640
      %v2642 = vpop.f32.mrb[0].mxu0
      %v2643 = vadd.f32 %v2394, %v2642
      %v2644 = vpop.f32.mrb[0].mxu0
      %2645 = vmatprep.mubr.f32.mxu0 0.0
      %v2646 = vand.u32 %v2156, 4294901760
      %2647 = vmatmul.mubr.f32.gmra.mrb[0].mxu0 %v2646
      %v2648 = vpop.f32.mrb[0].mxu0
      %v2649 = vadd.f32 %v2404, %v2648
      %v2650 = vpop.f32.mrb[0].mxu0
      %2651 = vmatprep.mubr.f32.mxu0 0.0
      %v2652 = vand.u32 %v2157, 4294901760
      %2653 = vmatmul.mubr.f32.gmra.mrb[0].mxu0 %v2652
      %v2654 = vpop.f32.mrb[0].mxu0
      %v2655 = vadd.f32 %v2414, %v2654
      %v2656 = vpop.f32.mrb[0].mxu0
      %2657 = vdwg.mxu0
      %2658 = vmatprep.subr.mxu0 0.0
      %v2659 = vand.u32 %v2158, 4294901760
      %v2660 = vsub.f32 %v2158, %v2659
      %2661 = vmatpush1.msra.mxu0 %v2660
      %2662 = vmatprep.subr.mxu0 0.0
      %v2663 = vand.u32 %v2159, 4294901760
      %v2664 = vsub.f32 %v2159, %v2663
      %2665 = vmatpush1.msra.mxu0 %v2664
      %2666 = vmatprep.subr.mxu0 0.0
      %v2667 = vand.u32 %v2160, 4294901760
      %v2668 = vsub.f32 %v2160, %v2667
      %2669 = vmatpush1.msra.mxu0 %v2668
      %2670 = vmatprep.subr.mxu0 0.0
      %v2671 = vand.u32 %v2161, 4294901760
      %v2672 = vsub.f32 %v2161, %v2671
      %2673 = vmatpush1.msra.mxu0 %v2672
      %2674 = vmatprep.subr.mxu0 0.0
      %v2675 = vand.u32 %v2162, 4294901760
      %v2676 = vsub.f32 %v2162, %v2675
      %2677 = vmatpush1.msra.mxu0 %v2676
      %2678 = vmatprep.subr.mxu0 0.0
      %v2679 = vand.u32 %v2163, 4294901760
      %v2680 = vsub.f32 %v2163, %v2679
      %2681 = vmatpush1.msra.mxu0 %v2680
      %2682 = vmatprep.subr.mxu0 0.0
      %v2683 = vand.u32 %v2164, 4294901760
      %v2684 = vsub.f32 %v2164, %v2683
      %2685 = vmatpush1.msra.mxu0 %v2684
      %2686 = vmatprep.subr.mxu0 0.0
      %v2687 = vand.u32 %v2165, 4294901760
      %v2688 = vsub.f32 %v2165, %v2687
      %2689 = vmatpush1.msra.mxu0 %v2688
      %2690 = vmatprep.subr.mxu0 0.0
      %v2691 = vand.u32 %v2166, 4294901760
      %v2692 = vsub.f32 %v2166, %v2691
      %2693 = vmatpush1.msra.mxu0 %v2692
      %2694 = vmatprep.subr.mxu0 0.0
      %v2695 = vand.u32 %v2167, 4294901760
      %v2696 = vsub.f32 %v2167, %v2695
      %2697 = vmatpush1.msra.mxu0 %v2696
      %2698 = vmatprep.subr.mxu0 0.0
      %v2699 = vand.u32 %v2168, 4294901760
      %v2700 = vsub.f32 %v2168, %v2699
      %2701 = vmatpush1.msra.mxu0 %v2700
      %2702 = vmatprep.subr.mxu0 0.0
      %v2703 = vand.u32 %v2169, 4294901760
      %v2704 = vsub.f32 %v2169, %v2703
      %2705 = vmatpush1.msra.mxu0 %v2704
      %2706 = vmatprep.subr.mxu0 0.0
      %v2707 = vand.u32 %v2170, 4294901760
      %v2708 = vsub.f32 %v2170, %v2707
      %2709 = vmatpush1.msra.mxu0 %v2708
      %2710 = vmatprep.subr.mxu0 0.0
      %v2711 = vand.u32 %v2171, 4294901760
      %v2712 = vsub.f32 %v2171, %v2711
      %2713 = vmatpush1.msra.mxu0 %v2712
      %2714 = vmatprep.subr.mxu0 0.0
      %v2715 = vand.u32 %v2172, 4294901760
      %v2716 = vsub.f32 %v2172, %v2715
      %2717 = vmatpush1.msra.mxu0 %v2716
      %2718 = vmatprep.subr.mxu0 0.0
      %v2719 = vand.u32 %v2173, 4294901760
      %v2720 = vsub.f32 %v2173, %v2719
      %2721 = vmatpush1.msra.mxu0 %v2720
      %2722 = vmatprep.subr.mxu0 0.0
      %2723 = vmatpush1.msra.mxu0 0.0
      %2724 = vmatprep.subr.mxu0 0.0
      %2725 = vmatpush1.msra.mxu0 0.0
      %2726 = vmatprep.subr.mxu0 0.0
      %2727 = vmatpush1.msra.mxu0 0.0
      %2728 = vmatprep.subr.mxu0 0.0
      %2729 = vmatpush1.msra.mxu0 0.0
      %2730 = vmatprep.subr.mxu0 0.0
      %2731 = vmatpush1.msra.mxu0 0.0
      %2732 = vmatprep.subr.mxu0 0.0
      %2733 = vmatpush1.msra.mxu0 0.0
      %2734 = vmatprep.subr.mxu0 0.0
      %2735 = vmatpush1.msra.mxu0 0.0
      %2736 = vmatprep.subr.mxu0 0.0
      %2737 = vmatpush1.msra.mxu0 0.0
      %2738 = vmatprep.subr.mxu0 0.0
      %2739 = vmatpush1.msra.mxu0 0.0
      %2740 = vmatprep.subr.mxu0 0.0
      %2741 = vmatpush1.msra.mxu0 0.0
      %2742 = vmatprep.subr.mxu0 0.0
      %2743 = vmatpush1.msra.mxu0 0.0
      %2744 = vmatprep.subr.mxu0 0.0
      %2745 = vmatpush1.msra.mxu0 0.0
      %2746 = vmatprep.subr.mxu0 0.0
      %2747 = vmatpush1.msra.mxu0 0.0
      %2748 = vmatprep.subr.mxu0 0.0
      %2749 = vmatpush1.msra.mxu0 0.0
      %2750 = vmatprep.subr.mxu0 0.0
      %2751 = vmatpush1.msra.mxu0 0.0
      %2752 = vmatprep.subr.mxu0 0.0
      %2753 = vmatpush1.msra.mxu0 0.0
      %2754 = vmatprep.mubr.f32.mxu0 0.0
      %v2755 = vand.u32 %v2142, 4294901760
      %v2756 = vsub.f32 %v2142, %v2755
      %2757 = vmatmul.mubr.f32.gmra.mrb[0].mxu0 %v2756
      %v2758 = vpop.f32.mrb[0].mxu0
      %v2759 = vadd.f32 %v2565, %v2758
      %v2760 = vpop.f32.mrb[0].mxu0
      %2761 = vmatprep.mubr.f32.mxu0 0.0
      %v2762 = vand.u32 %v2143, 4294901760
      %v2763 = vsub.f32 %v2143, %v2762
      %2764 = vmatmul.mubr.f32.gmra.mrb[0].mxu0 %v2763
      %v2765 = vpop.f32.mrb[0].mxu0
      %v2766 = vadd.f32 %v2571, %v2765
      %v2767 = vpop.f32.mrb[0].mxu0
      %2768 = vmatprep.mubr.f32.mxu0 0.0
      %v2769 = vand.u32 %v2144, 4294901760
      %v2770 = vsub.f32 %v2144, %v2769
      %2771 = vmatmul.mubr.f32.gmra.mrb[0].mxu0 %v2770
      %v2772 = vpop.f32.mrb[0].mxu0
      %v2773 = vadd.f32 %v2577, %v2772
      %v2774 = vpop.f32.mrb[0].mxu0
      %2775 = vmatprep.mubr.f32.mxu0 0.0
      %v2776 = vand.u32 %v2145, 4294901760
      %v2777 = vsub.f32 %v2145, %v2776
      %2778 = vmatmul.mubr.f32.gmra.mrb[0].mxu0 %v2777
      %v2779 = vpop.f32.mrb[0].mxu0
      %v2780 = vadd.f32 %v2583, %v2779
      %v2781 = vpop.f32.mrb[0].mxu0
      %2782 = vmatprep.mubr.f32.mxu0 0.0
      %v2783 = vand.u32 %v2146, 4294901760
      %v2784 = vsub.f32 %v2146, %v2783
      %2785 = vmatmul.mubr.f32.gmra.mrb[0].mxu0 %v2784
      %v2786 = vpop.f32.mrb[0].mxu0
      %v2787 = vadd.f32 %v2589, %v2786
      %v2788 = vpop.f32.mrb[0].mxu0
      %2789 = vmatprep.mubr.f32.mxu0 0.0
      %v2790 = vand.u32 %v2147, 4294901760
      %v2791 = vsub.f32 %v2147, %v2790
      %2792 = vmatmul.mubr.f32.gmra.mrb[0].mxu0 %v2791
      %v2793 = vpop.f32.mrb[0].mxu0
      %v2794 = vadd.f32 %v2595, %v2793
      %v2795 = vpop.f32.mrb[0].mxu0
      %2796 = vmatprep.mubr.f32.mxu0 0.0
      %v2797 = vand.u32 %v2148, 4294901760
      %v2798 = vsub.f32 %v2148, %v2797
      %2799 = vmatmul.mubr.f32.gmra.mrb[0].mxu0 %v2798
      %v2800 = vpop.f32.mrb[0].mxu0
      %v2801 = vadd.f32 %v2601, %v2800
      %v2802 = vpop.f32.mrb[0].mxu0
      %2803 = vmatprep.mubr.f32.mxu0 0.0
      %v2804 = vand.u32 %v2149, 4294901760
      %v2805 = vsub.f32 %v2149, %v2804
      %2806 = vmatmul.mubr.f32.gmra.mrb[0].mxu0 %v2805
      %v2807 = vpop.f32.mrb[0].mxu0
      %v2808 = vadd.f32 %v2607, %v2807
      %v2809 = vpop.f32.mrb[0].mxu0
      %2810 = vmatprep.mubr.f32.mxu0 0.0
      %v2811 = vand.u32 %v2150, 4294901760
      %v2812 = vsub.f32 %v2150, %v2811
      %2813 = vmatmul.mubr.f32.gmra.mrb[0].mxu0 %v2812
      %v2814 = vpop.f32.mrb[0].mxu0
      %v2815 = vadd.f32 %v2613, %v2814
      %v2816 = vpop.f32.mrb[0].mxu0
      %2817 = vmatprep.mubr.f32.mxu0 0.0
      %v2818 = vand.u32 %v2151, 4294901760
      %v2819 = vsub.f32 %v2151, %v2818
      %2820 = vmatmul.mubr.f32.gmra.mrb[0].mxu0 %v2819
      %v2821 = vpop.f32.mrb[0].mxu0
      %v2822 = vadd.f32 %v2619, %v2821
      %v2823 = vpop.f32.mrb[0].mxu0
      %2824 = vmatprep.mubr.f32.mxu0 0.0
      %v2825 = vand.u32 %v2152, 4294901760
      %v2826 = vsub.f32 %v2152, %v2825
      %2827 = vmatmul.mubr.f32.gmra.mrb[0].mxu0 %v2826
      %v2828 = vpop.f32.mrb[0].mxu0
      %v2829 = vadd.f32 %v2625, %v2828
      %v2830 = vpop.f32.mrb[0].mxu0
      %2831 = vmatprep.mubr.f32.mxu0 0.0
      %v2832 = vand.u32 %v2153, 4294901760
      %v2833 = vsub.f32 %v2153, %v2832
      %2834 = vmatmul.mubr.f32.gmra.mrb[0].mxu0 %v2833
      %v2835 = vpop.f32.mrb[0].mxu0
      %v2836 = vadd.f32 %v2631, %v2835
      %v2837 = vpop.f32.mrb[0].mxu0
      %2838 = vmatprep.mubr.f32.mxu0 0.0
      %v2839 = vand.u32 %v2154, 4294901760
      %v2840 = vsub.f32 %v2154, %v2839
      %2841 = vmatmul.mubr.f32.gmra.mrb[0].mxu0 %v2840
      %v2842 = vpop.f32.mrb[0].mxu0
      %v2843 = vadd.f32 %v2637, %v2842
      %v2844 = vpop.f32.mrb[0].mxu0
      %2845 = vmatprep.mubr.f32.mxu0 0.0
      %v2846 = vand.u32 %v2155, 4294901760
      %v2847 = vsub.f32 %v2155, %v2846
      %2848 = vmatmul.mubr.f32.gmra.mrb[0].mxu0 %v2847
      %v2849 = vpop.f32.mrb[0].mxu0
      %v2850 = vadd.f32 %v2643, %v2849
      %v2851 = vpop.f32.mrb[0].mxu0
      %2852 = vmatprep.mubr.f32.mxu0 0.0
      %v2853 = vand.u32 %v2156, 4294901760
      %v2854 = vsub.f32 %v2156, %v2853
      %2855 = vmatmul.mubr.f32.gmra.mrb[0].mxu0 %v2854
      %v2856 = vpop.f32.mrb[0].mxu0
      %v2857 = vadd.f32 %v2649, %v2856
      %v2858 = vpop.f32.mrb[0].mxu0
      %2859 = vmatprep.mubr.f32.mxu0 0.0
      %v2860 = vand.u32 %v2157, 4294901760
      %v2861 = vsub.f32 %v2157, %v2860
      %2862 = vmatmul.mubr.f32.gmra.mrb[0].mxu0 %v2861
      %v2863 = vpop.f32.mrb[0].mxu0
      %v2864 = vadd.f32 %v2655, %v2863
      %v2865 = vpop.f32.mrb[0].mxu0
      %2866 = vdwg.mxu0
      %2867 = vmatprep.subr.mxu0 0.0
      %v2868 = vand.u32 %v2158, 4294901760
      %2869 = vmatpush1.msra.mxu0 %v2868
      %2870 = vmatprep.subr.mxu0 0.0
      %v2871 = vand.u32 %v2159, 4294901760
      %2872 = vmatpush1.msra.mxu0 %v2871
      %2873 = vmatprep.subr.mxu0 0.0
      %v2874 = vand.u32 %v2160, 4294901760
      %2875 = vmatpush1.msra.mxu0 %v2874
      %2876 = vmatprep.subr.mxu0 0.0
      %v2877 = vand.u32 %v2161, 4294901760
      %2878 = vmatpush1.msra.mxu0 %v2877
      %2879 = vmatprep.subr.mxu0 0.0
      %v2880 = vand.u32 %v2162, 4294901760
      %2881 = vmatpush1.msra.mxu0 %v2880
      %2882 = vmatprep.subr.mxu0 0.0
      %v2883 = vand.u32 %v2163, 4294901760
      %2884 = vmatpush1.msra.mxu0 %v2883
      %2885 = vmatprep.subr.mxu0 0.0
      %v2886 = vand.u32 %v2164, 4294901760
      %2887 = vmatpush1.msra.mxu0 %v2886
      %2888 = vmatprep.subr.mxu0 0.0
      %v2889 = vand.u32 %v2165, 4294901760
      %2890 = vmatpush1.msra.mxu0 %v2889
      %2891 = vmatprep.subr.mxu0 0.0
      %v2892 = vand.u32 %v2166, 4294901760
      %2893 = vmatpush1.msra.mxu0 %v2892
      %2894 = vmatprep.subr.mxu0 0.0
      %v2895 = vand.u32 %v2167, 4294901760
      %2896 = vmatpush1.msra.mxu0 %v2895
      %2897 = vmatprep.subr.mxu0 0.0
      %v2898 = vand.u32 %v2168, 4294901760
      %2899 = vmatpush1.msra.mxu0 %v2898
      %2900 = vmatprep.subr.mxu0 0.0
      %v2901 = vand.u32 %v2169, 4294901760
      %2902 = vmatpush1.msra.mxu0 %v2901
      %2903 = vmatprep.subr.mxu0 0.0
      %v2904 = vand.u32 %v2170, 4294901760
      %2905 = vmatpush1.msra.mxu0 %v2904
      %2906 = vmatprep.subr.mxu0 0.0
      %v2907 = vand.u32 %v2171, 4294901760
      %2908 = vmatpush1.msra.mxu0 %v2907
      %2909 = vmatprep.subr.mxu0 0.0
      %v2910 = vand.u32 %v2172, 4294901760
      %2911 = vmatpush1.msra.mxu0 %v2910
      %2912 = vmatprep.subr.mxu0 0.0
      %v2913 = vand.u32 %v2173, 4294901760
      %2914 = vmatpush1.msra.mxu0 %v2913
      %2915 = vmatprep.subr.mxu0 0.0
      %2916 = vmatpush1.msra.mxu0 0.0
      %2917 = vmatprep.subr.mxu0 0.0
      %2918 = vmatpush1.msra.mxu0 0.0
      %2919 = vmatprep.subr.mxu0 0.0
      %2920 = vmatpush1.msra.mxu0 0.0
      %2921 = vmatprep.subr.mxu0 0.0
      %2922 = vmatpush1.msra.mxu0 0.0
      %2923 = vmatprep.subr.mxu0 0.0
      %2924 = vmatpush1.msra.mxu0 0.0
      %2925 = vmatprep.subr.mxu0 0.0
      %2926 = vmatpush1.msra.mxu0 0.0
      %2927 = vmatprep.subr.mxu0 0.0
      %2928 = vmatpush1.msra.mxu0 0.0
      %2929 = vmatprep.subr.mxu0 0.0
      %2930 = vmatpush1.msra.mxu0 0.0
      %2931 = vmatprep.subr.mxu0 0.0
      %2932 = vmatpush1.msra.mxu0 0.0
      %2933 = vmatprep.subr.mxu0 0.0
      %2934 = vmatpush1.msra.mxu0 0.0
      %2935 = vmatprep.subr.mxu0 0.0
      %2936 = vmatpush1.msra.mxu0 0.0
      %2937 = vmatprep.subr.mxu0 0.0
      %2938 = vmatpush1.msra.mxu0 0.0
      %2939 = vmatprep.subr.mxu0 0.0
      %2940 = vmatpush1.msra.mxu0 0.0
      %2941 = vmatprep.subr.mxu0 0.0
      %2942 = vmatpush1.msra.mxu0 0.0
      %2943 = vmatprep.subr.mxu0 0.0
      %2944 = vmatpush1.msra.mxu0 0.0
      %2945 = vmatprep.subr.mxu0 0.0
      %2946 = vmatpush1.msra.mxu0 0.0
      %2947 = vmatprep.mubr.f32.mxu0 0.0
      %v2948 = vand.u32 %v2142, 4294901760
      %v2949 = vsub.f32 %v2142, %v2948
      %v2950 = vand.u32 %v2949, 4294901760
      %2951 = vmatmul.mubr.f32.gmra.mrb[0].mxu0 %v2950
      %v2952 = vpop.f32.mrb[0].mxu0
      %v2953 = vadd.f32 %v2759, %v2952
      %v2954 = vpop.f32.mrb[0].mxu0
      %2955 = vmatprep.mubr.f32.mxu0 0.0
      %v2956 = vand.u32 %v2143, 4294901760
      %v2957 = vsub.f32 %v2143, %v2956
      %v2958 = vand.u32 %v2957, 4294901760
      %2959 = vmatmul.mubr.f32.gmra.mrb[0].mxu0 %v2958
      %v2960 = vpop.f32.mrb[0].mxu0
      %v2961 = vadd.f32 %v2766, %v2960
      %v2962 = vpop.f32.mrb[0].mxu0
      %2963 = vmatprep.mubr.f32.mxu0 0.0
      %v2964 = vand.u32 %v2144, 4294901760
      %v2965 = vsub.f32 %v2144, %v2964
      %v2966 = vand.u32 %v2965, 4294901760
      %2967 = vmatmul.mubr.f32.gmra.mrb[0].mxu0 %v2966
      %v2968 = vpop.f32.mrb[0].mxu0
      %v2969 = vadd.f32 %v2773, %v2968
      %v2970 = vpop.f32.mrb[0].mxu0
      %2971 = vmatprep.mubr.f32.mxu0 0.0
      %v2972 = vand.u32 %v2145, 4294901760
      %v2973 = vsub.f32 %v2145, %v2972
      %v2974 = vand.u32 %v2973, 4294901760
      %2975 = vmatmul.mubr.f32.gmra.mrb[0].mxu0 %v2974
      %v2976 = vpop.f32.mrb[0].mxu0
      %v2977 = vadd.f32 %v2780, %v2976
      %v2978 = vpop.f32.mrb[0].mxu0
      %2979 = vmatprep.mubr.f32.mxu0 0.0
      %v2980 = vand.u32 %v2146, 4294901760
      %v2981 = vsub.f32 %v2146, %v2980
      %v2982 = vand.u32 %v2981, 4294901760
      %2983 = vmatmul.mubr.f32.gmra.mrb[0].mxu0 %v2982
      %v2984 = vpop.f32.mrb[0].mxu0
      %v2985 = vadd.f32 %v2787, %v2984
      %v2986 = vpop.f32.mrb[0].mxu0
      %2987 = vmatprep.mubr.f32.mxu0 0.0
      %v2988 = vand.u32 %v2147, 4294901760
      %v2989 = vsub.f32 %v2147, %v2988
      %v2990 = vand.u32 %v2989, 4294901760
      %2991 = vmatmul.mubr.f32.gmra.mrb[0].mxu0 %v2990
      %v2992 = vpop.f32.mrb[0].mxu0
      %v2993 = vadd.f32 %v2794, %v2992
      %v2994 = vpop.f32.mrb[0].mxu0
      %2995 = vmatprep.mubr.f32.mxu0 0.0
      %v2996 = vand.u32 %v2148, 4294901760
      %v2997 = vsub.f32 %v2148, %v2996
      %v2998 = vand.u32 %v2997, 4294901760
      %2999 = vmatmul.mubr.f32.gmra.mrb[0].mxu0 %v2998
      %v3000 = vpop.f32.mrb[0].mxu0
      %v3001 = vadd.f32 %v2801, %v3000
      %v3002 = vpop.f32.mrb[0].mxu0
      %3003 = vmatprep.mubr.f32.mxu0 0.0
      %v3004 = vand.u32 %v2149, 4294901760
      %v3005 = vsub.f32 %v2149, %v3004
      %v3006 = vand.u32 %v3005, 4294901760
      %3007 = vmatmul.mubr.f32.gmra.mrb[0].mxu0 %v3006
      %v3008 = vpop.f32.mrb[0].mxu0
      %v3009 = vadd.f32 %v2808, %v3008
      %v3010 = vpop.f32.mrb[0].mxu0
      %3011 = vmatprep.mubr.f32.mxu0 0.0
      %v3012 = vand.u32 %v2150, 4294901760
      %v3013 = vsub.f32 %v2150, %v3012
      %v3014 = vand.u32 %v3013, 4294901760
      %3015 = vmatmul.mubr.f32.gmra.mrb[0].mxu0 %v3014
      %v3016 = vpop.f32.mrb[0].mxu0
      %v3017 = vadd.f32 %v2815, %v3016
      %v3018 = vpop.f32.mrb[0].mxu0
      %3019 = vmatprep.mubr.f32.mxu0 0.0
      %v3020 = vand.u32 %v2151, 4294901760
      %v3021 = vsub.f32 %v2151, %v3020
      %v3022 = vand.u32 %v3021, 4294901760
      %3023 = vmatmul.mubr.f32.gmra.mrb[0].mxu0 %v3022
      %v3024 = vpop.f32.mrb[0].mxu0
      %v3025 = vadd.f32 %v2822, %v3024
      %v3026 = vpop.f32.mrb[0].mxu0
      %3027 = vmatprep.mubr.f32.mxu0 0.0
      %v3028 = vand.u32 %v2152, 4294901760
      %v3029 = vsub.f32 %v2152, %v3028
      %v3030 = vand.u32 %v3029, 4294901760
      %3031 = vmatmul.mubr.f32.gmra.mrb[0].mxu0 %v3030
      %v3032 = vpop.f32.mrb[0].mxu0
      %v3033 = vadd.f32 %v2829, %v3032
      %v3034 = vpop.f32.mrb[0].mxu0
      %3035 = vmatprep.mubr.f32.mxu0 0.0
      %v3036 = vand.u32 %v2153, 4294901760
      %v3037 = vsub.f32 %v2153, %v3036
      %v3038 = vand.u32 %v3037, 4294901760
      %3039 = vmatmul.mubr.f32.gmra.mrb[0].mxu0 %v3038
      %v3040 = vpop.f32.mrb[0].mxu0
      %v3041 = vadd.f32 %v2836, %v3040
      %v3042 = vpop.f32.mrb[0].mxu0
      %3043 = vmatprep.mubr.f32.mxu0 0.0
      %v3044 = vand.u32 %v2154, 4294901760
      %v3045 = vsub.f32 %v2154, %v3044
      %v3046 = vand.u32 %v3045, 4294901760
      %3047 = vmatmul.mubr.f32.gmra.mrb[0].mxu0 %v3046
      %v3048 = vpop.f32.mrb[0].mxu0
      %v3049 = vadd.f32 %v2843, %v3048
      %v3050 = vpop.f32.mrb[0].mxu0
      %3051 = vmatprep.mubr.f32.mxu0 0.0
      %v3052 = vand.u32 %v2155, 4294901760
      %v3053 = vsub.f32 %v2155, %v3052
      %v3054 = vand.u32 %v3053, 4294901760
      %3055 = vmatmul.mubr.f32.gmra.mrb[0].mxu0 %v3054
      %v3056 = vpop.f32.mrb[0].mxu0
      %v3057 = vadd.f32 %v2850, %v3056
      %v3058 = vpop.f32.mrb[0].mxu0
      %3059 = vmatprep.mubr.f32.mxu0 0.0
      %v3060 = vand.u32 %v2156, 4294901760
      %v3061 = vsub.f32 %v2156, %v3060
      %v3062 = vand.u32 %v3061, 4294901760
      %3063 = vmatmul.mubr.f32.gmra.mrb[0].mxu0 %v3062
      %v3064 = vpop.f32.mrb[0].mxu0
      %v3065 = vadd.f32 %v2857, %v3064
      %v3066 = vpop.f32.mrb[0].mxu0
      %3067 = vmatprep.mubr.f32.mxu0 0.0
      %v3068 = vand.u32 %v2157, 4294901760
      %v3069 = vsub.f32 %v2157, %v3068
      %v3070 = vand.u32 %v3069, 4294901760
      %3071 = vmatmul.mubr.f32.gmra.mrb[0].mxu0 %v3070
      %v3072 = vpop.f32.mrb[0].mxu0
      %v3073 = vadd.f32 %v2864, %v3072
      %v3074 = vpop.f32.mrb[0].mxu0
      %3075 = vdwg.mxu0
      %3076 = vmatprep.subr.mxu0 0.0
      %v3077 = vand.u32 %v2158, 4294901760
      %v3078 = vsub.f32 %v2158, %v3077
      %v3079 = vand.u32 %v3078, 4294901760
      %3080 = vmatpush1.msra.mxu0 %v3079
      %3081 = vmatprep.subr.mxu0 0.0
      %v3082 = vand.u32 %v2159, 4294901760
      %v3083 = vsub.f32 %v2159, %v3082
      %v3084 = vand.u32 %v3083, 4294901760
      %3085 = vmatpush1.msra.mxu0 %v3084
      %3086 = vmatprep.subr.mxu0 0.0
      %v3087 = vand.u32 %v2160, 4294901760
      %v3088 = vsub.f32 %v2160, %v3087
      %v3089 = vand.u32 %v3088, 4294901760
      %3090 = vmatpush1.msra.mxu0 %v3089
      %3091 = vmatprep.subr.mxu0 0.0
      %v3092 = vand.u32 %v2161, 4294901760
      %v3093 = vsub.f32 %v2161, %v3092
      %v3094 = vand.u32 %v3093, 4294901760
      %3095 = vmatpush1.msra.mxu0 %v3094
      %3096 = vmatprep.subr.mxu0 0.0
      %v3097 = vand.u32 %v2162, 4294901760
      %v3098 = vsub.f32 %v2162, %v3097
      %v3099 = vand.u32 %v3098, 4294901760
      %3100 = vmatpush1.msra.mxu0 %v3099
      %3101 = vmatprep.subr.mxu0 0.0
      %v3102 = vand.u32 %v2163, 4294901760
      %v3103 = vsub.f32 %v2163, %v3102
      %v3104 = vand.u32 %v3103, 4294901760
      %3105 = vmatpush1.msra.mxu0 %v3104
      %3106 = vmatprep.subr.mxu0 0.0
      %v3107 = vand.u32 %v2164, 4294901760
      %v3108 = vsub.f32 %v2164, %v3107
      %v3109 = vand.u32 %v3108, 4294901760
      %3110 = vmatpush1.msra.mxu0 %v3109
      %3111 = vmatprep.subr.mxu0 0.0
      %v3112 = vand.u32 %v2165, 4294901760
      %v3113 = vsub.f32 %v2165, %v3112
      %v3114 = vand.u32 %v3113, 4294901760
      %3115 = vmatpush1.msra.mxu0 %v3114
      %3116 = vmatprep.subr.mxu0 0.0
      %v3117 = vand.u32 %v2166, 4294901760
      %v3118 = vsub.f32 %v2166, %v3117
      %v3119 = vand.u32 %v3118, 4294901760
      %3120 = vmatpush1.msra.mxu0 %v3119
      %3121 = vmatprep.subr.mxu0 0.0
      %v3122 = vand.u32 %v2167, 4294901760
      %v3123 = vsub.f32 %v2167, %v3122
      %v3124 = vand.u32 %v3123, 4294901760
      %3125 = vmatpush1.msra.mxu0 %v3124
      %3126 = vmatprep.subr.mxu0 0.0
      %v3127 = vand.u32 %v2168, 4294901760
      %v3128 = vsub.f32 %v2168, %v3127
      %v3129 = vand.u32 %v3128, 4294901760
      %3130 = vmatpush1.msra.mxu0 %v3129
      %3131 = vmatprep.subr.mxu0 0.0
      %v3132 = vand.u32 %v2169, 4294901760
      %v3133 = vsub.f32 %v2169, %v3132
      %v3134 = vand.u32 %v3133, 4294901760
      %3135 = vmatpush1.msra.mxu0 %v3134
      %3136 = vmatprep.subr.mxu0 0.0
      %v3137 = vand.u32 %v2170, 4294901760
      %v3138 = vsub.f32 %v2170, %v3137
      %v3139 = vand.u32 %v3138, 4294901760
      %3140 = vmatpush1.msra.mxu0 %v3139
      %3141 = vmatprep.subr.mxu0 0.0
      %v3142 = vand.u32 %v2171, 4294901760
      %v3143 = vsub.f32 %v2171, %v3142
      %v3144 = vand.u32 %v3143, 4294901760
      %3145 = vmatpush1.msra.mxu0 %v3144
      %3146 = vmatprep.subr.mxu0 0.0
      %v3147 = vand.u32 %v2172, 4294901760
      %v3148 = vsub.f32 %v2172, %v3147
      %v3149 = vand.u32 %v3148, 4294901760
      %3150 = vmatpush1.msra.mxu0 %v3149
      %3151 = vmatprep.subr.mxu0 0.0
      %v3152 = vand.u32 %v2173, 4294901760
      %v3153 = vsub.f32 %v2173, %v3152
      %v3154 = vand.u32 %v3153, 4294901760
      %3155 = vmatpush1.msra.mxu0 %v3154
      %3156 = vmatprep.subr.mxu0 0.0
      %3157 = vmatpush1.msra.mxu0 0.0
      %3158 = vmatprep.subr.mxu0 0.0
      %3159 = vmatpush1.msra.mxu0 0.0
      %3160 = vmatprep.subr.mxu0 0.0
      %3161 = vmatpush1.msra.mxu0 0.0
      %3162 = vmatprep.subr.mxu0 0.0
      %3163 = vmatpush1.msra.mxu0 0.0
      %3164 = vmatprep.subr.mxu0 0.0
      %3165 = vmatpush1.msra.mxu0 0.0
      %3166 = vmatprep.subr.mxu0 0.0
      %3167 = vmatpush1.msra.mxu0 0.0
      %3168 = vmatprep.subr.mxu0 0.0
      %3169 = vmatpush1.msra.mxu0 0.0
      %3170 = vmatprep.subr.mxu0 0.0
      %3171 = vmatpush1.msra.mxu0 0.0
      %3172 = vmatprep.subr.mxu0 0.0
      %3173 = vmatpush1.msra.mxu0 0.0
      %3174 = vmatprep.subr.mxu0 0.0
      %3175 = vmatpush1.msra.mxu0 0.0
      %3176 = vmatprep.subr.mxu0 0.0
      %3177 = vmatpush1.msra.mxu0 0.0
      %3178 = vmatprep.subr.mxu0 0.0
      %3179 = vmatpush1.msra.mxu0 0.0
      %3180 = vmatprep.subr.mxu0 0.0
      %3181 = vmatpush1.msra.mxu0 0.0
      %3182 = vmatprep.subr.mxu0 0.0
      %3183 = vmatpush1.msra.mxu0 0.0
      %3184 = vmatprep.subr.mxu0 0.0
      %3185 = vmatpush1.msra.mxu0 0.0
      %3186 = vmatprep.subr.mxu0 0.0
      %3187 = vmatpush1.msra.mxu0 0.0
      %3188 = vmatprep.mubr.f32.mxu0 0.0
      %v3189 = vand.u32 %v2142, 4294901760
      %3190 = vmatmul.mubr.f32.gmra.mrb[0].mxu0 %v3189
      %v3191 = vpop.f32.mrb[0].mxu0
      %v3192 = vadd.f32 %v2953, %v3191
      %v3193 = vpop.f32.mrb[0].mxu0
      %3194 = vmatprep.mubr.f32.mxu0 0.0
      %v3195 = vand.u32 %v2143, 4294901760
      %3196 = vmatmul.mubr.f32.gmra.mrb[0].mxu0 %v3195
      %v3197 = vpop.f32.mrb[0].mxu0
      %v3198 = vadd.f32 %v2961, %v3197
      %v3199 = vpop.f32.mrb[0].mxu0
      %3200 = vmatprep.mubr.f32.mxu0 0.0
      %v3201 = vand.u32 %v2144, 4294901760
      %3202 = vmatmul.mubr.f32.gmra.mrb[0].mxu0 %v3201
      %v3203 = vpop.f32.mrb[0].mxu0
      %v3204 = vadd.f32 %v2969, %v3203
      %v3205 = vpop.f32.mrb[0].mxu0
      %3206 = vmatprep.mubr.f32.mxu0 0.0
      %v3207 = vand.u32 %v2145, 4294901760
      %3208 = vmatmul.mubr.f32.gmra.mrb[0].mxu0 %v3207
      %v3209 = vpop.f32.mrb[0].mxu0
      %v3210 = vadd.f32 %v2977, %v3209
      %v3211 = vpop.f32.mrb[0].mxu0
      %3212 = vmatprep.mubr.f32.mxu0 0.0
      %v3213 = vand.u32 %v2146, 4294901760
      %3214 = vmatmul.mubr.f32.gmra.mrb[0].mxu0 %v3213
      %v3215 = vpop.f32.mrb[0].mxu0
      %v3216 = vadd.f32 %v2985, %v3215
      %v3217 = vpop.f32.mrb[0].mxu0
      %3218 = vmatprep.mubr.f32.mxu0 0.0
      %v3219 = vand.u32 %v2147, 4294901760
      %3220 = vmatmul.mubr.f32.gmra.mrb[0].mxu0 %v3219
      %v3221 = vpop.f32.mrb[0].mxu0
      %v3222 = vadd.f32 %v2993, %v3221
      %v3223 = vpop.f32.mrb[0].mxu0
      %3224 = vmatprep.mubr.f32.mxu0 0.0
      %v3225 = vand.u32 %v2148, 4294901760
      %3226 = vmatmul.mubr.f32.gmra.mrb[0].mxu0 %v3225
      %v3227 = vpop.f32.mrb[0].mxu0
      %v3228 = vadd.f32 %v3001, %v3227
      %v3229 = vpop.f32.mrb[0].mxu0
      %3230 = vmatprep.mubr.f32.mxu0 0.0
      %v3231 = vand.u32 %v2149, 4294901760
      %3232 = vmatmul.mubr.f32.gmra.mrb[0].mxu0 %v3231
      %v3233 = vpop.f32.mrb[0].mxu0
      %v3234 = vadd.f32 %v3009, %v3233
      %v3235 = vpop.f32.mrb[0].mxu0
      %3236 = vmatprep.mubr.f32.mxu0 0.0
      %v3237 = vand.u32 %v2150, 4294901760
      %3238 = vmatmul.mubr.f32.gmra.mrb[0].mxu0 %v3237
      %v3239 = vpop.f32.mrb[0].mxu0
      %v3240 = vadd.f32 %v3017, %v3239
      %v3241 = vpop.f32.mrb[0].mxu0
      %3242 = vmatprep.mubr.f32.mxu0 0.0
      %v3243 = vand.u32 %v2151, 4294901760
      %3244 = vmatmul.mubr.f32.gmra.mrb[0].mxu0 %v3243
      %v3245 = vpop.f32.mrb[0].mxu0
      %v3246 = vadd.f32 %v3025, %v3245
      %v3247 = vpop.f32.mrb[0].mxu0
      %3248 = vmatprep.mubr.f32.mxu0 0.0
      %v3249 = vand.u32 %v2152, 4294901760
      %3250 = vmatmul.mubr.f32.gmra.mrb[0].mxu0 %v3249
      %v3251 = vpop.f32.mrb[0].mxu0
      %v3252 = vadd.f32 %v3033, %v3251
      %v3253 = vpop.f32.mrb[0].mxu0
      %3254 = vmatprep.mubr.f32.mxu0 0.0
      %v3255 = vand.u32 %v2153, 4294901760
      %3256 = vmatmul.mubr.f32.gmra.mrb[0].mxu0 %v3255
      %v3257 = vpop.f32.mrb[0].mxu0
      %v3258 = vadd.f32 %v3041, %v3257
      %v3259 = vpop.f32.mrb[0].mxu0
      %3260 = vmatprep.mubr.f32.mxu0 0.0
      %v3261 = vand.u32 %v2154, 4294901760
      %3262 = vmatmul.mubr.f32.gmra.mrb[0].mxu0 %v3261
      %v3263 = vpop.f32.mrb[0].mxu0
      %v3264 = vadd.f32 %v3049, %v3263
      %v3265 = vpop.f32.mrb[0].mxu0
      %3266 = vmatprep.mubr.f32.mxu0 0.0
      %v3267 = vand.u32 %v2155, 4294901760
      %3268 = vmatmul.mubr.f32.gmra.mrb[0].mxu0 %v3267
      %v3269 = vpop.f32.mrb[0].mxu0
      %v3270 = vadd.f32 %v3057, %v3269
      %v3271 = vpop.f32.mrb[0].mxu0
      %3272 = vmatprep.mubr.f32.mxu0 0.0
      %v3273 = vand.u32 %v2156, 4294901760
      %3274 = vmatmul.mubr.f32.gmra.mrb[0].mxu0 %v3273
      %v3275 = vpop.f32.mrb[0].mxu0
      %v3276 = vadd.f32 %v3065, %v3275
      %v3277 = vpop.f32.mrb[0].mxu0
      %3278 = vmatprep.mubr.f32.mxu0 0.0
      %v3279 = vand.u32 %v2157, 4294901760
      %3280 = vmatmul.mubr.f32.gmra.mrb[0].mxu0 %v3279
      %v3281 = vpop.f32.mrb[0].mxu0
      %v3282 = vadd.f32 %v3073, %v3281
      %v3283 = vpop.f32.mrb[0].mxu0
      %3284 = vdwg.mxu0
      %3285 = vmatprep.subr.mxu0 0.0
      %v3286 = vand.u32 %v2158, 4294901760
      %3287 = vmatpush1.msra.mxu0 %v3286
      %3288 = vmatprep.subr.mxu0 0.0
      %v3289 = vand.u32 %v2159, 4294901760
      %3290 = vmatpush1.msra.mxu0 %v3289
      %3291 = vmatprep.subr.mxu0 0.0
      %v3292 = vand.u32 %v2160, 4294901760
      %3293 = vmatpush1.msra.mxu0 %v3292
      %3294 = vmatprep.subr.mxu0 0.0
      %v3295 = vand.u32 %v2161, 4294901760
      %3296 = vmatpush1.msra.mxu0 %v3295
      %3297 = vmatprep.subr.mxu0 0.0
      %v3298 = vand.u32 %v2162, 4294901760
      %3299 = vmatpush1.msra.mxu0 %v3298
      %3300 = vmatprep.subr.mxu0 0.0
      %v3301 = vand.u32 %v2163, 4294901760
      %3302 = vmatpush1.msra.mxu0 %v3301
      %3303 = vmatprep.subr.mxu0 0.0
      %v3304 = vand.u32 %v2164, 4294901760
      %3305 = vmatpush1.msra.mxu0 %v3304
      %3306 = vmatprep.subr.mxu0 0.0
      %v3307 = vand.u32 %v2165, 4294901760
      %3308 = vmatpush1.msra.mxu0 %v3307
      %3309 = vmatprep.subr.mxu0 0.0
      %v3310 = vand.u32 %v2166, 4294901760
      %3311 = vmatpush1.msra.mxu0 %v3310
      %3312 = vmatprep.subr.mxu0 0.0
      %v3313 = vand.u32 %v2167, 4294901760
      %3314 = vmatpush1.msra.mxu0 %v3313
      %3315 = vmatprep.subr.mxu0 0.0
      %v3316 = vand.u32 %v2168, 4294901760
      %3317 = vmatpush1.msra.mxu0 %v3316
      %3318 = vmatprep.subr.mxu0 0.0
      %v3319 = vand.u32 %v2169, 4294901760
      %3320 = vmatpush1.msra.mxu0 %v3319
      %3321 = vmatprep.subr.mxu0 0.0
      %v3322 = vand.u32 %v2170, 4294901760
      %3323 = vmatpush1.msra.mxu0 %v3322
      %3324 = vmatprep.subr.mxu0 0.0
      %v3325 = vand.u32 %v2171, 4294901760
      %3326 = vmatpush1.msra.mxu0 %v3325
      %3327 = vmatprep.subr.mxu0 0.0
      %v3328 = vand.u32 %v2172, 4294901760
      %3329 = vmatpush1.msra.mxu0 %v3328
      %3330 = vmatprep.subr.mxu0 0.0
      %v3331 = vand.u32 %v2173, 4294901760
      %3332 = vmatpush1.msra.mxu0 %v3331
      %3333 = vmatprep.subr.mxu0 0.0
      %3334 = vmatpush1.msra.mxu0 0.0
      %3335 = vmatprep.subr.mxu0 0.0
      %3336 = vmatpush1.msra.mxu0 0.0
      %3337 = vmatprep.subr.mxu0 0.0
      %3338 = vmatpush1.msra.mxu0 0.0
      %3339 = vmatprep.subr.mxu0 0.0
      %3340 = vmatpush1.msra.mxu0 0.0
      %3341 = vmatprep.subr.mxu0 0.0
      %3342 = vmatpush1.msra.mxu0 0.0
      %3343 = vmatprep.subr.mxu0 0.0
      %3344 = vmatpush1.msra.mxu0 0.0
      %3345 = vmatprep.subr.mxu0 0.0
      %3346 = vmatpush1.msra.mxu0 0.0
      %3347 = vmatprep.subr.mxu0 0.0
      %3348 = vmatpush1.msra.mxu0 0.0
      %3349 = vmatprep.subr.mxu0 0.0
      %3350 = vmatpush1.msra.mxu0 0.0
      %3351 = vmatprep.subr.mxu0 0.0
      %3352 = vmatpush1.msra.mxu0 0.0
      %3353 = vmatprep.subr.mxu0 0.0
      %3354 = vmatpush1.msra.mxu0 0.0
      %3355 = vmatprep.subr.mxu0 0.0
      %3356 = vmatpush1.msra.mxu0 0.0
      %3357 = vmatprep.subr.mxu0 0.0
      %3358 = vmatpush1.msra.mxu0 0.0
      %3359 = vmatprep.subr.mxu0 0.0
      %3360 = vmatpush1.msra.mxu0 0.0
      %3361 = vmatprep.subr.mxu0 0.0
      %3362 = vmatpush1.msra.mxu0 0.0
      %3363 = vmatprep.subr.mxu0 0.0
      %3364 = vmatpush1.msra.mxu0 0.0
      %3365 = vmatprep.mubr.f32.mxu0 0.0
      %v3366 = vand.u32 %v2142, 4294901760
      %3367 = vmatmul.mubr.f32.gmra.mrb[0].mxu0 %v3366
      %v3368 = vpop.f32.mrb[0].mxu0
      %v3369 = vadd.f32 %v3192, %v3368
      %v3370 = vpop.f32.mrb[0].mxu0
      %3371 = vmatprep.mubr.f32.mxu0 0.0
      %v3372 = vand.u32 %v2143, 4294901760
      %3373 = vmatmul.mubr.f32.gmra.mrb[0].mxu0 %v3372
      %v3374 = vpop.f32.mrb[0].mxu0
      %v3375 = vadd.f32 %v3198, %v3374
      %v3376 = vpop.f32.mrb[0].mxu0
      %3377 = vmatprep.mubr.f32.mxu0 0.0
      %v3378 = vand.u32 %v2144, 4294901760
      %3379 = vmatmul.mubr.f32.gmra.mrb[0].mxu0 %v3378
      %v3380 = vpop.f32.mrb[0].mxu0
      %v3381 = vadd.f32 %v3204, %v3380
      %v3382 = vpop.f32.mrb[0].mxu0
      %3383 = vmatprep.mubr.f32.mxu0 0.0
      %v3384 = vand.u32 %v2145, 4294901760
      %3385 = vmatmul.mubr.f32.gmra.mrb[0].mxu0 %v3384
      %v3386 = vpop.f32.mrb[0].mxu0
      %v3387 = vadd.f32 %v3210, %v3386
      %v3388 = vpop.f32.mrb[0].mxu0
      %3389 = vmatprep.mubr.f32.mxu0 0.0
      %v3390 = vand.u32 %v2146, 4294901760
      %3391 = vmatmul.mubr.f32.gmra.mrb[0].mxu0 %v3390
      %v3392 = vpop.f32.mrb[0].mxu0
      %v3393 = vadd.f32 %v3216, %v3392
      %v3394 = vpop.f32.mrb[0].mxu0
      %3395 = vmatprep.mubr.f32.mxu0 0.0
      %v3396 = vand.u32 %v2147, 4294901760
      %3397 = vmatmul.mubr.f32.gmra.mrb[0].mxu0 %v3396
      %v3398 = vpop.f32.mrb[0].mxu0
      %v3399 = vadd.f32 %v3222, %v3398
      %v3400 = vpop.f32.mrb[0].mxu0
      %3401 = vmatprep.mubr.f32.mxu0 0.0
      %v3402 = vand.u32 %v2148, 4294901760
      %3403 = vmatmul.mubr.f32.gmra.mrb[0].mxu0 %v3402
      %v3404 = vpop.f32.mrb[0].mxu0
      %v3405 = vadd.f32 %v3228, %v3404
      %v3406 = vpop.f32.mrb[0].mxu0
      %3407 = vmatprep.mubr.f32.mxu0 0.0
      %v3408 = vand.u32 %v2149, 4294901760
      %3409 = vmatmul.mubr.f32.gmra.mrb[0].mxu0 %v3408
      %v3410 = vpop.f32.mrb[0].mxu0
      %v3411 = vadd.f32 %v3234, %v3410
      %v3412 = vpop.f32.mrb[0].mxu0
      %3413 = vmatprep.mubr.f32.mxu0 0.0
      %v3414 = vand.u32 %v2150, 4294901760
      %3415 = vmatmul.mubr.f32.gmra.mrb[0].mxu0 %v3414
      %v3416 = vpop.f32.mrb[0].mxu0
      %v3417 = vadd.f32 %v3240, %v3416
      %v3418 = vpop.f32.mrb[0].mxu0
      %3419 = vmatprep.mubr.f32.mxu0 0.0
      %v3420 = vand.u32 %v2151, 4294901760
      %3421 = vmatmul.mubr.f32.gmra.mrb[0].mxu0 %v3420
      %v3422 = vpop.f32.mrb[0].mxu0
      %v3423 = vadd.f32 %v3246, %v3422
      %v3424 = vpop.f32.mrb[0].mxu0
      %3425 = vmatprep.mubr.f32.mxu0 0.0
      %v3426 = vand.u32 %v2152, 4294901760
      %3427 = vmatmul.mubr.f32.gmra.mrb[0].mxu0 %v3426
      %v3428 = vpop.f32.mrb[0].mxu0
      %v3429 = vadd.f32 %v3252, %v3428
      %v3430 = vpop.f32.mrb[0].mxu0
      %3431 = vmatprep.mubr.f32.mxu0 0.0
      %v3432 = vand.u32 %v2153, 4294901760
      %3433 = vmatmul.mubr.f32.gmra.mrb[0].mxu0 %v3432
      %v3434 = vpop.f32.mrb[0].mxu0
      %v3435 = vadd.f32 %v3258, %v3434
      %v3436 = vpop.f32.mrb[0].mxu0
      %3437 = vmatprep.mubr.f32.mxu0 0.0
      %v3438 = vand.u32 %v2154, 4294901760
      %3439 = vmatmul.mubr.f32.gmra.mrb[0].mxu0 %v3438
      %v3440 = vpop.f32.mrb[0].mxu0
      %v3441 = vadd.f32 %v3264, %v3440
      %v3442 = vpop.f32.mrb[0].mxu0
      %3443 = vmatprep.mubr.f32.mxu0 0.0
      %v3444 = vand.u32 %v2155, 4294901760
      %3445 = vmatmul.mubr.f32.gmra.mrb[0].mxu0 %v3444
      %v3446 = vpop.f32.mrb[0].mxu0
      %v3447 = vadd.f32 %v3270, %v3446
      %v3448 = vpop.f32.mrb[0].mxu0
      %3449 = vmatprep.mubr.f32.mxu0 0.0
      %v3450 = vand.u32 %v2156, 4294901760
      %3451 = vmatmul.mubr.f32.gmra.mrb[0].mxu0 %v3450
      %v3452 = vpop.f32.mrb[0].mxu0
      %v3453 = vadd.f32 %v3276, %v3452
      %v3454 = vpop.f32.mrb[0].mxu0
      %3455 = vmatprep.mubr.f32.mxu0 0.0
      %v3456 = vand.u32 %v2157, 4294901760
      %3457 = vmatmul.mubr.f32.gmra.mrb[0].mxu0 %v3456
      %v3458 = vpop.f32.mrb[0].mxu0
      %v3459 = vadd.f32 %v3282, %v3458
      %v3460 = vpop.f32.mrb[0].mxu0
      %3461 = vdwg.mxu0
      %vm3462 = vcmask 64512
      %v3463 = vsel %vm3462, %v3369, -inf
      %3464 = vmax.xlane.f32.xlu0 %v3463
      %v3465 = vpop.xlane.xlu0 %3464
      %v3466 = vsel %vm3462, %v3375, -inf
      %3467 = vmax.xlane.f32.xlu0 %v3466
      %v3468 = vpop.xlane.xlu0 %3467
      %v3469 = vsel %vm3462, %v3381, -inf
      %3470 = vmax.xlane.f32.xlu0 %v3469
      %v3471 = vpop.xlane.xlu0 %3470
      %v3472 = vsel %vm3462, %v3387, -inf
      %3473 = vmax.xlane.f32.xlu0 %v3472
      %v3474 = vpop.xlane.xlu0 %3473
      %v3475 = vsel %vm3462, %v3393, -inf
      %3476 = vmax.xlane.f32.xlu0 %v3475
      %v3477 = vpop.xlane.xlu0 %3476
      %v3478 = vsel %vm3462, %v3399, -inf
      %3479 = vmax.xlane.f32.xlu0 %v3478
      %v3480 = vpop.xlane.xlu0 %3479
      %v3481 = vsel %vm3462, %v3405, -inf
      %3482 = vmax.xlane.f32.xlu0 %v3481
      %v3483 = vpop.xlane.xlu0 %3482
      %v3484 = vsel %vm3462, %v3411, -inf
      %3485 = vmax.xlane.f32.xlu0 %v3484
      %v3486 = vpop.xlane.xlu0 %3485
      %v3487 = vsel %vm3462, %v3417, -inf
      %3488 = vmax.xlane.f32.xlu0 %v3487
      %v3489 = vpop.xlane.xlu0 %3488
      %v3490 = vsel %vm3462, %v3423, -inf
      %3491 = vmax.xlane.f32.xlu0 %v3490
      %v3492 = vpop.xlane.xlu0 %3491
      %v3493 = vsel %vm3462, %v3429, -inf
      %3494 = vmax.xlane.f32.xlu0 %v3493
      %v3495 = vpop.xlane.xlu0 %3494
      %v3496 = vsel %vm3462, %v3435, -inf
      %3497 = vmax.xlane.f32.xlu0 %v3496
      %v3498 = vpop.xlane.xlu0 %3497
      %v3499 = vsel %vm3462, %v3441, -inf
      %3500 = vmax.xlane.f32.xlu0 %v3499
      %v3501 = vpop.xlane.xlu0 %3500
      %v3502 = vsel %vm3462, %v3447, -inf
      %3503 = vmax.xlane.f32.xlu0 %v3502
      %v3504 = vpop.xlane.xlu0 %3503
      %v3505 = vsel %vm3462, %v3453, -inf
      %3506 = vmax.xlane.f32.xlu0 %v3505
      %v3507 = vpop.xlane.xlu0 %3506
      %v3508 = vsel %vm3462, %v3459, -inf
      %3509 = vmax.xlane.f32.xlu0 %v3508
      %v3510 = vpop.xlane.xlu0 %3509
      %v3511 = vsub.f32 %v3369, %v3465
      %v3512 = vsub.f32 %v3375, %v3468
      %v3513 = vsub.f32 %v3381, %v3471
      %v3514 = vsub.f32 %v3387, %v3474
      %v3515 = vsub.f32 %v3393, %v3477
      %v3516 = vsub.f32 %v3399, %v3480
      %v3517 = vsub.f32 %v3405, %v3483
      %v3518 = vsub.f32 %v3411, %v3486
      %v3519 = vsub.f32 %v3417, %v3489
      %v3520 = vsub.f32 %v3423, %v3492
      %v3521 = vsub.f32 %v3429, %v3495
      %v3522 = vsub.f32 %v3435, %v3498
      %v3523 = vsub.f32 %v3441, %v3501
      %v3524 = vsub.f32 %v3447, %v3504
      %v3525 = vsub.f32 %v3453, %v3507
      %v3526 = vsub.f32 %v3459, %v3510
      %v3527 = vmul.f32 %v3511, 1.442695
      %v3528 = vpow.pop %v3527
      %v3529 = vmul.f32 %v3512, 1.442695
      %v3530 = vpow.pop %v3529
      %v3531 = vmul.f32 %v3513, 1.442695
      %v3532 = vpow.pop %v3531
      %v3533 = vmul.f32 %v3514, 1.442695
      %v3534 = vpow.pop %v3533
      %v3535 = vmul.f32 %v3515, 1.442695
      %v3536 = vpow.pop %v3535
      %v3537 = vmul.f32 %v3516, 1.442695
      %v3538 = vpow.pop %v3537
      %v3539 = vmul.f32 %v3517, 1.442695
      %v3540 = vpow.pop %v3539
      %v3541 = vmul.f32 %v3518, 1.442695
      %v3542 = vpow.pop %v3541
      %v3543 = vmul.f32 %v3519, 1.442695
      %v3544 = vpow.pop %v3543
      %v3545 = vmul.f32 %v3520, 1.442695
      %v3546 = vpow.pop %v3545
      %v3547 = vmul.f32 %v3521, 1.442695
      %v3548 = vpow.pop %v3547
      %v3549 = vmul.f32 %v3522, 1.442695
      %v3550 = vpow.pop %v3549
      %v3551 = vmul.f32 %v3523, 1.442695
      %v3552 = vpow.pop %v3551
      %v3553 = vmul.f32 %v3524, 1.442695
      %v3554 = vpow.pop %v3553
      %v3555 = vmul.f32 %v3525, 1.442695
      %v3556 = vpow.pop %v3555
      %v3557 = vmul.f32 %v3526, 1.442695
      %v3558 = vpow.pop %v3557
      %v3559 = vld [vmem:[%s4] sm:$0xff]
      %v3560 = vld [vmem:[%s4 + $0x8] sm:$0xff]
      %v3562 = vsel %vm3462, %v3528, 0
      %v3565 = vsel %vm3462, %v3530, 0
      %v3568 = vsel %vm3462, %v3532, 0
      %v3571 = vsel %vm3462, %v3534, 0
      %v3574 = vsel %vm3462, %v3536, 0
      %v3577 = vsel %vm3462, %v3538, 0
      %v3580 = vsel %vm3462, %v3540, 0
      %v3583 = vsel %vm3462, %v3542, 0
      %v3586 = vsel %vm3462, %v3544, 0
      %v3589 = vsel %vm3462, %v3546, 0
      %v3592 = vsel %vm3462, %v3548, 0
      %v3595 = vsel %vm3462, %v3550, 0
      %v3598 = vsel %vm3462, %v3552, 0
      %v3601 = vsel %vm3462, %v3554, 0
      %v3604 = vsel %vm3462, %v3556, 0
      %v3607 = vsel %vm3462, %v3558, 0
      %v3609 = vand.u32 %v3560, 4294901760
      %3610 = vmatprep.subr.mxu0 %v3609
      %v3611 = vand.u32 %v3559, 4294901760
      %3612 = vmatpush1.msra.mxu0 %v3611
      %3613 = vmatprep.subr.mxu0 0.0
      %3614 = vmatpush1.msra.mxu0 0.0
      %3615 = vmatprep.subr.mxu0 0.0
      %3616 = vmatpush1.msra.mxu0 0.0
      %3617 = vmatprep.subr.mxu0 0.0
      %3618 = vmatpush1.msra.mxu0 0.0
      %3619 = vmatprep.subr.mxu0 0.0
      %3620 = vmatpush1.msra.mxu0 0.0
      %3621 = vmatprep.subr.mxu0 0.0
      %3622 = vmatpush1.msra.mxu0 0.0
      %3623 = vmatprep.subr.mxu0 0.0
      %3624 = vmatpush1.msra.mxu0 0.0
      %3625 = vmatprep.subr.mxu0 0.0
      %3626 = vmatpush1.msra.mxu0 0.0
      %3627 = vmatprep.subr.mxu0 0.0
      %3628 = vmatpush1.msra.mxu0 0.0
      %3629 = vmatprep.subr.mxu0 0.0
      %3630 = vmatpush1.msra.mxu0 0.0
      %3631 = vmatprep.subr.mxu0 0.0
      %3632 = vmatpush1.msra.mxu0 0.0
      %3633 = vmatprep.subr.mxu0 0.0
      %3634 = vmatpush1.msra.mxu0 0.0
      %3635 = vmatprep.subr.mxu0 0.0
      %3636 = vmatpush1.msra.mxu0 0.0
      %3637 = vmatprep.subr.mxu0 0.0
      %3638 = vmatpush1.msra.mxu0 0.0
      %3639 = vmatprep.subr.mxu0 0.0
      %3640 = vmatpush1.msra.mxu0 0.0
      %3641 = vmatprep.subr.mxu0 0.0
      %3642 = vmatpush1.msra.mxu0 0.0
      %3643 = vmatprep.subr.mxu0 0.0
      %3644 = vmatpush1.msra.mxu0 0.0
      %3645 = vmatprep.subr.mxu0 0.0
      %3646 = vmatpush1.msra.mxu0 0.0
      %3647 = vmatprep.subr.mxu0 0.0
      %3648 = vmatpush1.msra.mxu0 0.0
      %3649 = vmatprep.subr.mxu0 0.0
      %3650 = vmatpush1.msra.mxu0 0.0
      %3651 = vmatprep.subr.mxu0 0.0
      %3652 = vmatpush1.msra.mxu0 0.0
      %3653 = vmatprep.subr.mxu0 0.0
      %3654 = vmatpush1.msra.mxu0 0.0
      %3655 = vmatprep.subr.mxu0 0.0
      %3656 = vmatpush1.msra.mxu0 0.0
      %3657 = vmatprep.subr.mxu0 0.0
      %3658 = vmatpush1.msra.mxu0 0.0
      %3659 = vmatprep.subr.mxu0 0.0
      %3660 = vmatpush1.msra.mxu0 0.0
      %3661 = vmatprep.subr.mxu0 0.0
      %3662 = vmatpush1.msra.mxu0 0.0
      %3663 = vmatprep.subr.mxu0 0.0
      %3664 = vmatpush1.msra.mxu0 0.0
      %3665 = vmatprep.subr.mxu0 0.0
      %3666 = vmatpush1.msra.mxu0 0.0
      %3667 = vmatprep.subr.mxu0 0.0
      %3668 = vmatpush1.msra.mxu0 0.0
      %3669 = vmatprep.subr.mxu0 0.0
      %3670 = vmatpush1.msra.mxu0 0.0
      %3671 = vmatprep.subr.mxu0 0.0
      %3672 = vmatpush1.msra.mxu0 0.0
      %3673 = vmatprep.subr.mxu0 0.0
      %3674 = vmatpush1.msra.mxu0 0.0
      %3675 = vmatprep.mubr.f32.mxu0 0.0
      %v3676 = vand.u32 %v3562, 4294901760
      %v3677 = vsub.f32 %v3562, %v3676
      %v3678 = vand.u32 %v3677, 4294901760
      %v3679 = vsub.f32 %v3677, %v3678
      %v3680 = vand.u32 %v3679, 4294901760
      %3681 = vmatmul.mubr.f32.gmra.mrb[0].mxu0 %v3680
      %v3682 = vpop.f32.mrb[0].mxu0
      %v3683 = vadd.f32 0.0, %v3682
      %v3684 = vpop.f32.mrb[0].mxu0
      %v3685 = vadd.f32 0.0, %v3684
      %3686 = vmatprep.mubr.f32.mxu0 0.0
      %v3687 = vand.u32 %v3565, 4294901760
      %v3688 = vsub.f32 %v3565, %v3687
      %v3689 = vand.u32 %v3688, 4294901760
      %v3690 = vsub.f32 %v3688, %v3689
      %v3691 = vand.u32 %v3690, 4294901760
      %3692 = vmatmul.mubr.f32.gmra.mrb[0].mxu0 %v3691
      %v3693 = vpop.f32.mrb[0].mxu0
      %v3694 = vadd.f32 0.0, %v3693
      %v3695 = vpop.f32.mrb[0].mxu0
      %v3696 = vadd.f32 0.0, %v3695
      %3697 = vmatprep.mubr.f32.mxu0 0.0
      %v3698 = vand.u32 %v3568, 4294901760
      %v3699 = vsub.f32 %v3568, %v3698
      %v3700 = vand.u32 %v3699, 4294901760
      %v3701 = vsub.f32 %v3699, %v3700
      %v3702 = vand.u32 %v3701, 4294901760
      %3703 = vmatmul.mubr.f32.gmra.mrb[0].mxu0 %v3702
      %v3704 = vpop.f32.mrb[0].mxu0
      %v3705 = vadd.f32 0.0, %v3704
      %v3706 = vpop.f32.mrb[0].mxu0
      %v3707 = vadd.f32 0.0, %v3706
      %3708 = vmatprep.mubr.f32.mxu0 0.0
      %v3709 = vand.u32 %v3571, 4294901760
      %v3710 = vsub.f32 %v3571, %v3709
      %v3711 = vand.u32 %v3710, 4294901760
      %v3712 = vsub.f32 %v3710, %v3711
      %v3713 = vand.u32 %v3712, 4294901760
      %3714 = vmatmul.mubr.f32.gmra.mrb[0].mxu0 %v3713
      %v3715 = vpop.f32.mrb[0].mxu0
      %v3716 = vadd.f32 0.0, %v3715
      %v3717 = vpop.f32.mrb[0].mxu0
      %v3718 = vadd.f32 0.0, %v3717
      %3719 = vmatprep.mubr.f32.mxu0 0.0
      %v3720 = vand.u32 %v3574, 4294901760
      %v3721 = vsub.f32 %v3574, %v3720
      %v3722 = vand.u32 %v3721, 4294901760
      %v3723 = vsub.f32 %v3721, %v3722
      %v3724 = vand.u32 %v3723, 4294901760
      %3725 = vmatmul.mubr.f32.gmra.mrb[0].mxu0 %v3724
      %v3726 = vpop.f32.mrb[0].mxu0
      %v3727 = vadd.f32 0.0, %v3726
      %v3728 = vpop.f32.mrb[0].mxu0
      %v3729 = vadd.f32 0.0, %v3728
      %3730 = vmatprep.mubr.f32.mxu0 0.0
      %v3731 = vand.u32 %v3577, 4294901760
      %v3732 = vsub.f32 %v3577, %v3731
      %v3733 = vand.u32 %v3732, 4294901760
      %v3734 = vsub.f32 %v3732, %v3733
      %v3735 = vand.u32 %v3734, 4294901760
      %3736 = vmatmul.mubr.f32.gmra.mrb[0].mxu0 %v3735
      %v3737 = vpop.f32.mrb[0].mxu0
      %v3738 = vadd.f32 0.0, %v3737
      %v3739 = vpop.f32.mrb[0].mxu0
      %v3740 = vadd.f32 0.0, %v3739
      %3741 = vmatprep.mubr.f32.mxu0 0.0
      %v3742 = vand.u32 %v3580, 4294901760
      %v3743 = vsub.f32 %v3580, %v3742
      %v3744 = vand.u32 %v3743, 4294901760
      %v3745 = vsub.f32 %v3743, %v3744
      %v3746 = vand.u32 %v3745, 4294901760
      %3747 = vmatmul.mubr.f32.gmra.mrb[0].mxu0 %v3746
      %v3748 = vpop.f32.mrb[0].mxu0
      %v3749 = vadd.f32 0.0, %v3748
      %v3750 = vpop.f32.mrb[0].mxu0
      %v3751 = vadd.f32 0.0, %v3750
      %3752 = vmatprep.mubr.f32.mxu0 0.0
      %v3753 = vand.u32 %v3583, 4294901760
      %v3754 = vsub.f32 %v3583, %v3753
      %v3755 = vand.u32 %v3754, 4294901760
      %v3756 = vsub.f32 %v3754, %v3755
      %v3757 = vand.u32 %v3756, 4294901760
      %3758 = vmatmul.mubr.f32.gmra.mrb[0].mxu0 %v3757
      %v3759 = vpop.f32.mrb[0].mxu0
      %v3760 = vadd.f32 0.0, %v3759
      %v3761 = vpop.f32.mrb[0].mxu0
      %v3762 = vadd.f32 0.0, %v3761
      %3763 = vmatprep.mubr.f32.mxu0 0.0
      %v3764 = vand.u32 %v3586, 4294901760
      %v3765 = vsub.f32 %v3586, %v3764
      %v3766 = vand.u32 %v3765, 4294901760
      %v3767 = vsub.f32 %v3765, %v3766
      %v3768 = vand.u32 %v3767, 4294901760
      %3769 = vmatmul.mubr.f32.gmra.mrb[0].mxu0 %v3768
      %v3770 = vpop.f32.mrb[0].mxu0
      %v3771 = vadd.f32 0.0, %v3770
      %v3772 = vpop.f32.mrb[0].mxu0
      %v3773 = vadd.f32 0.0, %v3772
      %3774 = vmatprep.mubr.f32.mxu0 0.0
      %v3775 = vand.u32 %v3589, 4294901760
      %v3776 = vsub.f32 %v3589, %v3775
      %v3777 = vand.u32 %v3776, 4294901760
      %v3778 = vsub.f32 %v3776, %v3777
      %v3779 = vand.u32 %v3778, 4294901760
      %3780 = vmatmul.mubr.f32.gmra.mrb[0].mxu0 %v3779
      %v3781 = vpop.f32.mrb[0].mxu0
      %v3782 = vadd.f32 0.0, %v3781
      %v3783 = vpop.f32.mrb[0].mxu0
      %v3784 = vadd.f32 0.0, %v3783
      %3785 = vmatprep.mubr.f32.mxu0 0.0
      %v3786 = vand.u32 %v3592, 4294901760
      %v3787 = vsub.f32 %v3592, %v3786
      %v3788 = vand.u32 %v3787, 4294901760
      %v3789 = vsub.f32 %v3787, %v3788
      %v3790 = vand.u32 %v3789, 4294901760
      %3791 = vmatmul.mubr.f32.gmra.mrb[0].mxu0 %v3790
      %v3792 = vpop.f32.mrb[0].mxu0
      %v3793 = vadd.f32 0.0, %v3792
      %v3794 = vpop.f32.mrb[0].mxu0
      %v3795 = vadd.f32 0.0, %v3794
      %3796 = vmatprep.mubr.f32.mxu0 0.0
      %v3797 = vand.u32 %v3595, 4294901760
      %v3798 = vsub.f32 %v3595, %v3797
      %v3799 = vand.u32 %v3798, 4294901760
      %v3800 = vsub.f32 %v3798, %v3799
      %v3801 = vand.u32 %v3800, 4294901760
      %3802 = vmatmul.mubr.f32.gmra.mrb[0].mxu0 %v3801
      %v3803 = vpop.f32.mrb[0].mxu0
      %v3804 = vadd.f32 0.0, %v3803
      %v3805 = vpop.f32.mrb[0].mxu0
      %v3806 = vadd.f32 0.0, %v3805
      %3807 = vmatprep.mubr.f32.mxu0 0.0
      %v3808 = vand.u32 %v3598, 4294901760
      %v3809 = vsub.f32 %v3598, %v3808
      %v3810 = vand.u32 %v3809, 4294901760
      %v3811 = vsub.f32 %v3809, %v3810
      %v3812 = vand.u32 %v3811, 4294901760
      %3813 = vmatmul.mubr.f32.gmra.mrb[0].mxu0 %v3812
      %v3814 = vpop.f32.mrb[0].mxu0
      %v3815 = vadd.f32 0.0, %v3814
      %v3816 = vpop.f32.mrb[0].mxu0
      %v3817 = vadd.f32 0.0, %v3816
      %3818 = vmatprep.mubr.f32.mxu0 0.0
      %v3819 = vand.u32 %v3601, 4294901760
      %v3820 = vsub.f32 %v3601, %v3819
      %v3821 = vand.u32 %v3820, 4294901760
      %v3822 = vsub.f32 %v3820, %v3821
      %v3823 = vand.u32 %v3822, 4294901760
      %3824 = vmatmul.mubr.f32.gmra.mrb[0].mxu0 %v3823
      %v3825 = vpop.f32.mrb[0].mxu0
      %v3826 = vadd.f32 0.0, %v3825
      %v3827 = vpop.f32.mrb[0].mxu0
      %v3828 = vadd.f32 0.0, %v3827
      %3829 = vmatprep.mubr.f32.mxu0 0.0
      %v3830 = vand.u32 %v3604, 4294901760
      %v3831 = vsub.f32 %v3604, %v3830
      %v3832 = vand.u32 %v3831, 4294901760
      %v3833 = vsub.f32 %v3831, %v3832
      %v3834 = vand.u32 %v3833, 4294901760
      %3835 = vmatmul.mubr.f32.gmra.mrb[0].mxu0 %v3834
      %v3836 = vpop.f32.mrb[0].mxu0
      %v3837 = vadd.f32 0.0, %v3836
      %v3838 = vpop.f32.mrb[0].mxu0
      %v3839 = vadd.f32 0.0, %v3838
      %3840 = vmatprep.mubr.f32.mxu0 0.0
      %v3841 = vand.u32 %v3607, 4294901760
      %v3842 = vsub.f32 %v3607, %v3841
      %v3843 = vand.u32 %v3842, 4294901760
      %v3844 = vsub.f32 %v3842, %v3843
      %v3845 = vand.u32 %v3844, 4294901760
      %3846 = vmatmul.mubr.f32.gmra.mrb[0].mxu0 %v3845
      %v3847 = vpop.f32.mrb[0].mxu0
      %v3848 = vadd.f32 0.0, %v3847
      %v3849 = vpop.f32.mrb[0].mxu0
      %v3850 = vadd.f32 0.0, %v3849
      %3851 = vdwg.mxu0
      %v3852 = vand.u32 %v3560, 4294901760
      %v3853 = vsub.f32 %v3560, %v3852
      %v3854 = vand.u32 %v3853, 4294901760
      %v3855 = vsub.f32 %v3853, %v3854
      %v3856 = vand.u32 %v3855, 4294901760
      %3857 = vmatprep.subr.mxu0 %v3856
      %v3858 = vand.u32 %v3559, 4294901760
      %v3859 = vsub.f32 %v3559, %v3858
      %v3860 = vand.u32 %v3859, 4294901760
      %v3861 = vsub.f32 %v3859, %v3860
      %v3862 = vand.u32 %v3861, 4294901760
      %3863 = vmatpush1.msra.mxu0 %v3862
      %3864 = vmatprep.subr.mxu0 0.0
      %3865 = vmatpush1.msra.mxu0 0.0
      %3866 = vmatprep.subr.mxu0 0.0
      %3867 = vmatpush1.msra.mxu0 0.0
      %3868 = vmatprep.subr.mxu0 0.0
      %3869 = vmatpush1.msra.mxu0 0.0
      %3870 = vmatprep.subr.mxu0 0.0
      %3871 = vmatpush1.msra.mxu0 0.0
      %3872 = vmatprep.subr.mxu0 0.0
      %3873 = vmatpush1.msra.mxu0 0.0
      %3874 = vmatprep.subr.mxu0 0.0
      %3875 = vmatpush1.msra.mxu0 0.0
      %3876 = vmatprep.subr.mxu0 0.0
      %3877 = vmatpush1.msra.mxu0 0.0
      %3878 = vmatprep.subr.mxu0 0.0
      %3879 = vmatpush1.msra.mxu0 0.0
      %3880 = vmatprep.subr.mxu0 0.0
      %3881 = vmatpush1.msra.mxu0 0.0
      %3882 = vmatprep.subr.mxu0 0.0
      %3883 = vmatpush1.msra.mxu0 0.0
      %3884 = vmatprep.subr.mxu0 0.0
      %3885 = vmatpush1.msra.mxu0 0.0
      %3886 = vmatprep.subr.mxu0 0.0
      %3887 = vmatpush1.msra.mxu0 0.0
      %3888 = vmatprep.subr.mxu0 0.0
      %3889 = vmatpush1.msra.mxu0 0.0
      %3890 = vmatprep.subr.mxu0 0.0
      %3891 = vmatpush1.msra.mxu0 0.0
      %3892 = vmatprep.subr.mxu0 0.0
      %3893 = vmatpush1.msra.mxu0 0.0
      %3894 = vmatprep.subr.mxu0 0.0
      %3895 = vmatpush1.msra.mxu0 0.0
      %3896 = vmatprep.subr.mxu0 0.0
      %3897 = vmatpush1.msra.mxu0 0.0
      %3898 = vmatprep.subr.mxu0 0.0
      %3899 = vmatpush1.msra.mxu0 0.0
      %3900 = vmatprep.subr.mxu0 0.0
      %3901 = vmatpush1.msra.mxu0 0.0
      %3902 = vmatprep.subr.mxu0 0.0
      %3903 = vmatpush1.msra.mxu0 0.0
      %3904 = vmatprep.subr.mxu0 0.0
      %3905 = vmatpush1.msra.mxu0 0.0
      %3906 = vmatprep.subr.mxu0 0.0
      %3907 = vmatpush1.msra.mxu0 0.0
      %3908 = vmatprep.subr.mxu0 0.0
      %3909 = vmatpush1.msra.mxu0 0.0
      %3910 = vmatprep.subr.mxu0 0.0
      %3911 = vmatpush1.msra.mxu0 0.0
      %3912 = vmatprep.subr.mxu0 0.0
      %3913 = vmatpush1.msra.mxu0 0.0
      %3914 = vmatprep.subr.mxu0 0.0
      %3915 = vmatpush1.msra.mxu0 0.0
      %3916 = vmatprep.subr.mxu0 0.0
      %3917 = vmatpush1.msra.mxu0 0.0
      %3918 = vmatprep.subr.mxu0 0.0
      %3919 = vmatpush1.msra.mxu0 0.0
      %3920 = vmatprep.subr.mxu0 0.0
      %3921 = vmatpush1.msra.mxu0 0.0
      %3922 = vmatprep.subr.mxu0 0.0
      %3923 = vmatpush1.msra.mxu0 0.0
      %3924 = vmatprep.subr.mxu0 0.0
      %3925 = vmatpush1.msra.mxu0 0.0
      %3926 = vmatprep.mubr.f32.mxu0 0.0
      %v3927 = vand.u32 %v3562, 4294901760
      %3928 = vmatmul.mubr.f32.gmra.mrb[0].mxu0 %v3927
      %v3929 = vpop.f32.mrb[0].mxu0
      %v3930 = vadd.f32 %v3683, %v3929
      %v3931 = vpop.f32.mrb[0].mxu0
      %v3932 = vadd.f32 %v3685, %v3931
      %3933 = vmatprep.mubr.f32.mxu0 0.0
      %v3934 = vand.u32 %v3565, 4294901760
      %3935 = vmatmul.mubr.f32.gmra.mrb[0].mxu0 %v3934
      %v3936 = vpop.f32.mrb[0].mxu0
      %v3937 = vadd.f32 %v3694, %v3936
      %v3938 = vpop.f32.mrb[0].mxu0
      %v3939 = vadd.f32 %v3696, %v3938
      %3940 = vmatprep.mubr.f32.mxu0 0.0
      %v3941 = vand.u32 %v3568, 4294901760
      %3942 = vmatmul.mubr.f32.gmra.mrb[0].mxu0 %v3941
      %v3943 = vpop.f32.mrb[0].mxu0
      %v3944 = vadd.f32 %v3705, %v3943
      %v3945 = vpop.f32.mrb[0].mxu0
      %v3946 = vadd.f32 %v3707, %v3945
      %3947 = vmatprep.mubr.f32.mxu0 0.0
      %v3948 = vand.u32 %v3571, 4294901760
      %3949 = vmatmul.mubr.f32.gmra.mrb[0].mxu0 %v3948
      %v3950 = vpop.f32.mrb[0].mxu0
      %v3951 = vadd.f32 %v3716, %v3950
      %v3952 = vpop.f32.mrb[0].mxu0
      %v3953 = vadd.f32 %v3718, %v3952
      %3954 = vmatprep.mubr.f32.mxu0 0.0
      %v3955 = vand.u32 %v3574, 4294901760
      %3956 = vmatmul.mubr.f32.gmra.mrb[0].mxu0 %v3955
      %v3957 = vpop.f32.mrb[0].mxu0
      %v3958 = vadd.f32 %v3727, %v3957
      %v3959 = vpop.f32.mrb[0].mxu0
      %v3960 = vadd.f32 %v3729, %v3959
      %3961 = vmatprep.mubr.f32.mxu0 0.0
      %v3962 = vand.u32 %v3577, 4294901760
      %3963 = vmatmul.mubr.f32.gmra.mrb[0].mxu0 %v3962
      %v3964 = vpop.f32.mrb[0].mxu0
      %v3965 = vadd.f32 %v3738, %v3964
      %v3966 = vpop.f32.mrb[0].mxu0
      %v3967 = vadd.f32 %v3740, %v3966
      %3968 = vmatprep.mubr.f32.mxu0 0.0
      %v3969 = vand.u32 %v3580, 4294901760
      %3970 = vmatmul.mubr.f32.gmra.mrb[0].mxu0 %v3969
      %v3971 = vpop.f32.mrb[0].mxu0
      %v3972 = vadd.f32 %v3749, %v3971
      %v3973 = vpop.f32.mrb[0].mxu0
      %v3974 = vadd.f32 %v3751, %v3973
      %3975 = vmatprep.mubr.f32.mxu0 0.0
      %v3976 = vand.u32 %v3583, 4294901760
      %3977 = vmatmul.mubr.f32.gmra.mrb[0].mxu0 %v3976
      %v3978 = vpop.f32.mrb[0].mxu0
      %v3979 = vadd.f32 %v3760, %v3978
      %v3980 = vpop.f32.mrb[0].mxu0
      %v3981 = vadd.f32 %v3762, %v3980
      %3982 = vmatprep.mubr.f32.mxu0 0.0
      %v3983 = vand.u32 %v3586, 4294901760
      %3984 = vmatmul.mubr.f32.gmra.mrb[0].mxu0 %v3983
      %v3985 = vpop.f32.mrb[0].mxu0
      %v3986 = vadd.f32 %v3771, %v3985
      %v3987 = vpop.f32.mrb[0].mxu0
      %v3988 = vadd.f32 %v3773, %v3987
      %3989 = vmatprep.mubr.f32.mxu0 0.0
      %v3990 = vand.u32 %v3589, 4294901760
      %3991 = vmatmul.mubr.f32.gmra.mrb[0].mxu0 %v3990
      %v3992 = vpop.f32.mrb[0].mxu0
      %v3993 = vadd.f32 %v3782, %v3992
      %v3994 = vpop.f32.mrb[0].mxu0
      %v3995 = vadd.f32 %v3784, %v3994
      %3996 = vmatprep.mubr.f32.mxu0 0.0
      %v3997 = vand.u32 %v3592, 4294901760
      %3998 = vmatmul.mubr.f32.gmra.mrb[0].mxu0 %v3997
      %v3999 = vpop.f32.mrb[0].mxu0
      %v4000 = vadd.f32 %v3793, %v3999
      %v4001 = vpop.f32.mrb[0].mxu0
      %v4002 = vadd.f32 %v3795, %v4001
      %4003 = vmatprep.mubr.f32.mxu0 0.0
      %v4004 = vand.u32 %v3595, 4294901760
      %4005 = vmatmul.mubr.f32.gmra.mrb[0].mxu0 %v4004
      %v4006 = vpop.f32.mrb[0].mxu0
      %v4007 = vadd.f32 %v3804, %v4006
      %v4008 = vpop.f32.mrb[0].mxu0
      %v4009 = vadd.f32 %v3806, %v4008
      %4010 = vmatprep.mubr.f32.mxu0 0.0
      %v4011 = vand.u32 %v3598, 4294901760
      %4012 = vmatmul.mubr.f32.gmra.mrb[0].mxu0 %v4011
      %v4013 = vpop.f32.mrb[0].mxu0
      %v4014 = vadd.f32 %v3815, %v4013
      %v4015 = vpop.f32.mrb[0].mxu0
      %v4016 = vadd.f32 %v3817, %v4015
      %4017 = vmatprep.mubr.f32.mxu0 0.0
      %v4018 = vand.u32 %v3601, 4294901760
      %4019 = vmatmul.mubr.f32.gmra.mrb[0].mxu0 %v4018
      %v4020 = vpop.f32.mrb[0].mxu0
      %v4021 = vadd.f32 %v3826, %v4020
      %v4022 = vpop.f32.mrb[0].mxu0
      %v4023 = vadd.f32 %v3828, %v4022
      %4024 = vmatprep.mubr.f32.mxu0 0.0
      %v4025 = vand.u32 %v3604, 4294901760
      %4026 = vmatmul.mubr.f32.gmra.mrb[0].mxu0 %v4025
      %v4027 = vpop.f32.mrb[0].mxu0
      %v4028 = vadd.f32 %v3837, %v4027
      %v4029 = vpop.f32.mrb[0].mxu0
      %v4030 = vadd.f32 %v3839, %v4029
      %4031 = vmatprep.mubr.f32.mxu0 0.0
      %v4032 = vand.u32 %v3607, 4294901760
      %4033 = vmatmul.mubr.f32.gmra.mrb[0].mxu0 %v4032
      %v4034 = vpop.f32.mrb[0].mxu0
      %v4035 = vadd.f32 %v3848, %v4034
      %v4036 = vpop.f32.mrb[0].mxu0
      %v4037 = vadd.f32 %v3850, %v4036
      %4038 = vdwg.mxu0
      %v4039 = vand.u32 %v3560, 4294901760
      %v4040 = vsub.f32 %v3560, %v4039
      %4041 = vmatprep.subr.mxu0 %v4040
      %v4042 = vand.u32 %v3559, 4294901760
      %v4043 = vsub.f32 %v3559, %v4042
      %4044 = vmatpush1.msra.mxu0 %v4043
      %4045 = vmatprep.subr.mxu0 0.0
      %4046 = vmatpush1.msra.mxu0 0.0
      %4047 = vmatprep.subr.mxu0 0.0
      %4048 = vmatpush1.msra.mxu0 0.0
      %4049 = vmatprep.subr.mxu0 0.0
      %4050 = vmatpush1.msra.mxu0 0.0
      %4051 = vmatprep.subr.mxu0 0.0
      %4052 = vmatpush1.msra.mxu0 0.0
      %4053 = vmatprep.subr.mxu0 0.0
      %4054 = vmatpush1.msra.mxu0 0.0
      %4055 = vmatprep.subr.mxu0 0.0
      %4056 = vmatpush1.msra.mxu0 0.0
      %4057 = vmatprep.subr.mxu0 0.0
      %4058 = vmatpush1.msra.mxu0 0.0
      %4059 = vmatprep.subr.mxu0 0.0
      %4060 = vmatpush1.msra.mxu0 0.0
      %4061 = vmatprep.subr.mxu0 0.0
      %4062 = vmatpush1.msra.mxu0 0.0
      %4063 = vmatprep.subr.mxu0 0.0
      %4064 = vmatpush1.msra.mxu0 0.0
      %4065 = vmatprep.subr.mxu0 0.0
      %4066 = vmatpush1.msra.mxu0 0.0
      %4067 = vmatprep.subr.mxu0 0.0
      %4068 = vmatpush1.msra.mxu0 0.0
      %4069 = vmatprep.subr.mxu0 0.0
      %4070 = vmatpush1.msra.mxu0 0.0
      %4071 = vmatprep.subr.mxu0 0.0
      %4072 = vmatpush1.msra.mxu0 0.0
      %4073 = vmatprep.subr.mxu0 0.0
      %4074 = vmatpush1.msra.mxu0 0.0
      %4075 = vmatprep.subr.mxu0 0.0
      %4076 = vmatpush1.msra.mxu0 0.0
      %4077 = vmatprep.subr.mxu0 0.0
      %4078 = vmatpush1.msra.mxu0 0.0
      %4079 = vmatprep.subr.mxu0 0.0
      %4080 = vmatpush1.msra.mxu0 0.0
      %4081 = vmatprep.subr.mxu0 0.0
      %4082 = vmatpush1.msra.mxu0 0.0
      %4083 = vmatprep.subr.mxu0 0.0
      %4084 = vmatpush1.msra.mxu0 0.0
      %4085 = vmatprep.subr.mxu0 0.0
      %4086 = vmatpush1.msra.mxu0 0.0
      %4087 = vmatprep.subr.mxu0 0.0
      %4088 = vmatpush1.msra.mxu0 0.0
      %4089 = vmatprep.subr.mxu0 0.0
      %4090 = vmatpush1.msra.mxu0 0.0
      %4091 = vmatprep.subr.mxu0 0.0
      %4092 = vmatpush1.msra.mxu0 0.0
      %4093 = vmatprep.subr.mxu0 0.0
      %4094 = vmatpush1.msra.mxu0 0.0
      %4095 = vmatprep.subr.mxu0 0.0
      %4096 = vmatpush1.msra.mxu0 0.0
      %4097 = vmatprep.subr.mxu0 0.0
      %4098 = vmatpush1.msra.mxu0 0.0
      %4099 = vmatprep.subr.mxu0 0.0
      %4100 = vmatpush1.msra.mxu0 0.0
      %4101 = vmatprep.subr.mxu0 0.0
      %4102 = vmatpush1.msra.mxu0 0.0
      %4103 = vmatprep.subr.mxu0 0.0
      %4104 = vmatpush1.msra.mxu0 0.0
      %4105 = vmatprep.subr.mxu0 0.0
      %4106 = vmatpush1.msra.mxu0 0.0
      %4107 = vmatprep.mubr.f32.mxu0 0.0
      %v4108 = vand.u32 %v3562, 4294901760
      %v4109 = vsub.f32 %v3562, %v4108
      %4110 = vmatmul.mubr.f32.gmra.mrb[0].mxu0 %v4109
      %v4111 = vpop.f32.mrb[0].mxu0
      %v4112 = vadd.f32 %v3930, %v4111
      %v4113 = vpop.f32.mrb[0].mxu0
      %v4114 = vadd.f32 %v3932, %v4113
      %4115 = vmatprep.mubr.f32.mxu0 0.0
      %v4116 = vand.u32 %v3565, 4294901760
      %v4117 = vsub.f32 %v3565, %v4116
      %4118 = vmatmul.mubr.f32.gmra.mrb[0].mxu0 %v4117
      %v4119 = vpop.f32.mrb[0].mxu0
      %v4120 = vadd.f32 %v3937, %v4119
      %v4121 = vpop.f32.mrb[0].mxu0
      %v4122 = vadd.f32 %v3939, %v4121
      %4123 = vmatprep.mubr.f32.mxu0 0.0
      %v4124 = vand.u32 %v3568, 4294901760
      %v4125 = vsub.f32 %v3568, %v4124
      %4126 = vmatmul.mubr.f32.gmra.mrb[0].mxu0 %v4125
      %v4127 = vpop.f32.mrb[0].mxu0
      %v4128 = vadd.f32 %v3944, %v4127
      %v4129 = vpop.f32.mrb[0].mxu0
      %v4130 = vadd.f32 %v3946, %v4129
      %4131 = vmatprep.mubr.f32.mxu0 0.0
      %v4132 = vand.u32 %v3571, 4294901760
      %v4133 = vsub.f32 %v3571, %v4132
      %4134 = vmatmul.mubr.f32.gmra.mrb[0].mxu0 %v4133
      %v4135 = vpop.f32.mrb[0].mxu0
      %v4136 = vadd.f32 %v3951, %v4135
      %v4137 = vpop.f32.mrb[0].mxu0
      %v4138 = vadd.f32 %v3953, %v4137
      %4139 = vmatprep.mubr.f32.mxu0 0.0
      %v4140 = vand.u32 %v3574, 4294901760
      %v4141 = vsub.f32 %v3574, %v4140
      %4142 = vmatmul.mubr.f32.gmra.mrb[0].mxu0 %v4141
      %v4143 = vpop.f32.mrb[0].mxu0
      %v4144 = vadd.f32 %v3958, %v4143
      %v4145 = vpop.f32.mrb[0].mxu0
      %v4146 = vadd.f32 %v3960, %v4145
      %4147 = vmatprep.mubr.f32.mxu0 0.0
      %v4148 = vand.u32 %v3577, 4294901760
      %v4149 = vsub.f32 %v3577, %v4148
      %4150 = vmatmul.mubr.f32.gmra.mrb[0].mxu0 %v4149
      %v4151 = vpop.f32.mrb[0].mxu0
      %v4152 = vadd.f32 %v3965, %v4151
      %v4153 = vpop.f32.mrb[0].mxu0
      %v4154 = vadd.f32 %v3967, %v4153
      %4155 = vmatprep.mubr.f32.mxu0 0.0
      %v4156 = vand.u32 %v3580, 4294901760
      %v4157 = vsub.f32 %v3580, %v4156
      %4158 = vmatmul.mubr.f32.gmra.mrb[0].mxu0 %v4157
      %v4159 = vpop.f32.mrb[0].mxu0
      %v4160 = vadd.f32 %v3972, %v4159
      %v4161 = vpop.f32.mrb[0].mxu0
      %v4162 = vadd.f32 %v3974, %v4161
      %4163 = vmatprep.mubr.f32.mxu0 0.0
      %v4164 = vand.u32 %v3583, 4294901760
      %v4165 = vsub.f32 %v3583, %v4164
      %4166 = vmatmul.mubr.f32.gmra.mrb[0].mxu0 %v4165
      %v4167 = vpop.f32.mrb[0].mxu0
      %v4168 = vadd.f32 %v3979, %v4167
      %v4169 = vpop.f32.mrb[0].mxu0
      %v4170 = vadd.f32 %v3981, %v4169
      %4171 = vmatprep.mubr.f32.mxu0 0.0
      %v4172 = vand.u32 %v3586, 4294901760
      %v4173 = vsub.f32 %v3586, %v4172
      %4174 = vmatmul.mubr.f32.gmra.mrb[0].mxu0 %v4173
      %v4175 = vpop.f32.mrb[0].mxu0
      %v4176 = vadd.f32 %v3986, %v4175
      %v4177 = vpop.f32.mrb[0].mxu0
      %v4178 = vadd.f32 %v3988, %v4177
      %4179 = vmatprep.mubr.f32.mxu0 0.0
      %v4180 = vand.u32 %v3589, 4294901760
      %v4181 = vsub.f32 %v3589, %v4180
      %4182 = vmatmul.mubr.f32.gmra.mrb[0].mxu0 %v4181
      %v4183 = vpop.f32.mrb[0].mxu0
      %v4184 = vadd.f32 %v3993, %v4183
      %v4185 = vpop.f32.mrb[0].mxu0
      %v4186 = vadd.f32 %v3995, %v4185
      %4187 = vmatprep.mubr.f32.mxu0 0.0
      %v4188 = vand.u32 %v3592, 4294901760
      %v4189 = vsub.f32 %v3592, %v4188
      %4190 = vmatmul.mubr.f32.gmra.mrb[0].mxu0 %v4189
      %v4191 = vpop.f32.mrb[0].mxu0
      %v4192 = vadd.f32 %v4000, %v4191
      %v4193 = vpop.f32.mrb[0].mxu0
      %v4194 = vadd.f32 %v4002, %v4193
      %4195 = vmatprep.mubr.f32.mxu0 0.0
      %v4196 = vand.u32 %v3595, 4294901760
      %v4197 = vsub.f32 %v3595, %v4196
      %4198 = vmatmul.mubr.f32.gmra.mrb[0].mxu0 %v4197
      %v4199 = vpop.f32.mrb[0].mxu0
      %v4200 = vadd.f32 %v4007, %v4199
      %v4201 = vpop.f32.mrb[0].mxu0
      %v4202 = vadd.f32 %v4009, %v4201
      %4203 = vmatprep.mubr.f32.mxu0 0.0
      %v4204 = vand.u32 %v3598, 4294901760
      %v4205 = vsub.f32 %v3598, %v4204
      %4206 = vmatmul.mubr.f32.gmra.mrb[0].mxu0 %v4205
      %v4207 = vpop.f32.mrb[0].mxu0
      %v4208 = vadd.f32 %v4014, %v4207
      %v4209 = vpop.f32.mrb[0].mxu0
      %v4210 = vadd.f32 %v4016, %v4209
      %4211 = vmatprep.mubr.f32.mxu0 0.0
      %v4212 = vand.u32 %v3601, 4294901760
      %v4213 = vsub.f32 %v3601, %v4212
      %4214 = vmatmul.mubr.f32.gmra.mrb[0].mxu0 %v4213
      %v4215 = vpop.f32.mrb[0].mxu0
      %v4216 = vadd.f32 %v4021, %v4215
      %v4217 = vpop.f32.mrb[0].mxu0
      %v4218 = vadd.f32 %v4023, %v4217
      %4219 = vmatprep.mubr.f32.mxu0 0.0
      %v4220 = vand.u32 %v3604, 4294901760
      %v4221 = vsub.f32 %v3604, %v4220
      %4222 = vmatmul.mubr.f32.gmra.mrb[0].mxu0 %v4221
      %v4223 = vpop.f32.mrb[0].mxu0
      %v4224 = vadd.f32 %v4028, %v4223
      %v4225 = vpop.f32.mrb[0].mxu0
      %v4226 = vadd.f32 %v4030, %v4225
      %4227 = vmatprep.mubr.f32.mxu0 0.0
      %v4228 = vand.u32 %v3607, 4294901760
      %v4229 = vsub.f32 %v3607, %v4228
      %4230 = vmatmul.mubr.f32.gmra.mrb[0].mxu0 %v4229
      %v4231 = vpop.f32.mrb[0].mxu0
      %v4232 = vadd.f32 %v4035, %v4231
      %v4233 = vpop.f32.mrb[0].mxu0
      %v4234 = vadd.f32 %v4037, %v4233
      %4235 = vdwg.mxu0
      %v4236 = vand.u32 %v3560, 4294901760
      %4237 = vmatprep.subr.mxu0 %v4236
      %v4238 = vand.u32 %v3559, 4294901760
      %4239 = vmatpush1.msra.mxu0 %v4238
      %4240 = vmatprep.subr.mxu0 0.0
      %4241 = vmatpush1.msra.mxu0 0.0
      %4242 = vmatprep.subr.mxu0 0.0
      %4243 = vmatpush1.msra.mxu0 0.0
      %4244 = vmatprep.subr.mxu0 0.0
      %4245 = vmatpush1.msra.mxu0 0.0
      %4246 = vmatprep.subr.mxu0 0.0
      %4247 = vmatpush1.msra.mxu0 0.0
      %4248 = vmatprep.subr.mxu0 0.0
      %4249 = vmatpush1.msra.mxu0 0.0
      %4250 = vmatprep.subr.mxu0 0.0
      %4251 = vmatpush1.msra.mxu0 0.0
      %4252 = vmatprep.subr.mxu0 0.0
      %4253 = vmatpush1.msra.mxu0 0.0
      %4254 = vmatprep.subr.mxu0 0.0
      %4255 = vmatpush1.msra.mxu0 0.0
      %4256 = vmatprep.subr.mxu0 0.0
      %4257 = vmatpush1.msra.mxu0 0.0
      %4258 = vmatprep.subr.mxu0 0.0
      %4259 = vmatpush1.msra.mxu0 0.0
      %4260 = vmatprep.subr.mxu0 0.0
      %4261 = vmatpush1.msra.mxu0 0.0
      %4262 = vmatprep.subr.mxu0 0.0
      %4263 = vmatpush1.msra.mxu0 0.0
      %4264 = vmatprep.subr.mxu0 0.0
      %4265 = vmatpush1.msra.mxu0 0.0
      %4266 = vmatprep.subr.mxu0 0.0
      %4267 = vmatpush1.msra.mxu0 0.0
      %4268 = vmatprep.subr.mxu0 0.0
      %4269 = vmatpush1.msra.mxu0 0.0
      %4270 = vmatprep.subr.mxu0 0.0
      %4271 = vmatpush1.msra.mxu0 0.0
      %4272 = vmatprep.subr.mxu0 0.0
      %4273 = vmatpush1.msra.mxu0 0.0
      %4274 = vmatprep.subr.mxu0 0.0
      %4275 = vmatpush1.msra.mxu0 0.0
      %4276 = vmatprep.subr.mxu0 0.0
      %4277 = vmatpush1.msra.mxu0 0.0
      %4278 = vmatprep.subr.mxu0 0.0
      %4279 = vmatpush1.msra.mxu0 0.0
      %4280 = vmatprep.subr.mxu0 0.0
      %4281 = vmatpush1.msra.mxu0 0.0
      %4282 = vmatprep.subr.mxu0 0.0
      %4283 = vmatpush1.msra.mxu0 0.0
      %4284 = vmatprep.subr.mxu0 0.0
      %4285 = vmatpush1.msra.mxu0 0.0
      %4286 = vmatprep.subr.mxu0 0.0
      %4287 = vmatpush1.msra.mxu0 0.0
      %4288 = vmatprep.subr.mxu0 0.0
      %4289 = vmatpush1.msra.mxu0 0.0
      %4290 = vmatprep.subr.mxu0 0.0
      %4291 = vmatpush1.msra.mxu0 0.0
      %4292 = vmatprep.subr.mxu0 0.0
      %4293 = vmatpush1.msra.mxu0 0.0
      %4294 = vmatprep.subr.mxu0 0.0
      %4295 = vmatpush1.msra.mxu0 0.0
      %4296 = vmatprep.subr.mxu0 0.0
      %4297 = vmatpush1.msra.mxu0 0.0
      %4298 = vmatprep.subr.mxu0 0.0
      %4299 = vmatpush1.msra.mxu0 0.0
      %4300 = vmatprep.subr.mxu0 0.0
      %4301 = vmatpush1.msra.mxu0 0.0
      %4302 = vmatprep.mubr.f32.mxu0 0.0
      %v4303 = vand.u32 %v3562, 4294901760
      %v4304 = vsub.f32 %v3562, %v4303
      %v4305 = vand.u32 %v4304, 4294901760
      %4306 = vmatmul.mubr.f32.gmra.mrb[0].mxu0 %v4305
      %v4307 = vpop.f32.mrb[0].mxu0
      %v4308 = vadd.f32 %v4112, %v4307
      %v4309 = vpop.f32.mrb[0].mxu0
      %v4310 = vadd.f32 %v4114, %v4309
      %4311 = vmatprep.mubr.f32.mxu0 0.0
      %v4312 = vand.u32 %v3565, 4294901760
      %v4313 = vsub.f32 %v3565, %v4312
      %v4314 = vand.u32 %v4313, 4294901760
      %4315 = vmatmul.mubr.f32.gmra.mrb[0].mxu0 %v4314
      %v4316 = vpop.f32.mrb[0].mxu0
      %v4317 = vadd.f32 %v4120, %v4316
      %v4318 = vpop.f32.mrb[0].mxu0
      %v4319 = vadd.f32 %v4122, %v4318
      %4320 = vmatprep.mubr.f32.mxu0 0.0
      %v4321 = vand.u32 %v3568, 4294901760
      %v4322 = vsub.f32 %v3568, %v4321
      %v4323 = vand.u32 %v4322, 4294901760
      %4324 = vmatmul.mubr.f32.gmra.mrb[0].mxu0 %v4323
      %v4325 = vpop.f32.mrb[0].mxu0
      %v4326 = vadd.f32 %v4128, %v4325
      %v4327 = vpop.f32.mrb[0].mxu0
      %v4328 = vadd.f32 %v4130, %v4327
      %4329 = vmatprep.mubr.f32.mxu0 0.0
      %v4330 = vand.u32 %v3571, 4294901760
      %v4331 = vsub.f32 %v3571, %v4330
      %v4332 = vand.u32 %v4331, 4294901760
      %4333 = vmatmul.mubr.f32.gmra.mrb[0].mxu0 %v4332
      %v4334 = vpop.f32.mrb[0].mxu0
      %v4335 = vadd.f32 %v4136, %v4334
      %v4336 = vpop.f32.mrb[0].mxu0
      %v4337 = vadd.f32 %v4138, %v4336
      %4338 = vmatprep.mubr.f32.mxu0 0.0
      %v4339 = vand.u32 %v3574, 4294901760
      %v4340 = vsub.f32 %v3574, %v4339
      %v4341 = vand.u32 %v4340, 4294901760
      %4342 = vmatmul.mubr.f32.gmra.mrb[0].mxu0 %v4341
      %v4343 = vpop.f32.mrb[0].mxu0
      %v4344 = vadd.f32 %v4144, %v4343
      %v4345 = vpop.f32.mrb[0].mxu0
      %v4346 = vadd.f32 %v4146, %v4345
      %4347 = vmatprep.mubr.f32.mxu0 0.0
      %v4348 = vand.u32 %v3577, 4294901760
      %v4349 = vsub.f32 %v3577, %v4348
      %v4350 = vand.u32 %v4349, 4294901760
      %4351 = vmatmul.mubr.f32.gmra.mrb[0].mxu0 %v4350
      %v4352 = vpop.f32.mrb[0].mxu0
      %v4353 = vadd.f32 %v4152, %v4352
      %v4354 = vpop.f32.mrb[0].mxu0
      %v4355 = vadd.f32 %v4154, %v4354
      %4356 = vmatprep.mubr.f32.mxu0 0.0
      %v4357 = vand.u32 %v3580, 4294901760
      %v4358 = vsub.f32 %v3580, %v4357
      %v4359 = vand.u32 %v4358, 4294901760
      %4360 = vmatmul.mubr.f32.gmra.mrb[0].mxu0 %v4359
      %v4361 = vpop.f32.mrb[0].mxu0
      %v4362 = vadd.f32 %v4160, %v4361
      %v4363 = vpop.f32.mrb[0].mxu0
      %v4364 = vadd.f32 %v4162, %v4363
      %4365 = vmatprep.mubr.f32.mxu0 0.0
      %v4366 = vand.u32 %v3583, 4294901760
      %v4367 = vsub.f32 %v3583, %v4366
      %v4368 = vand.u32 %v4367, 4294901760
      %4369 = vmatmul.mubr.f32.gmra.mrb[0].mxu0 %v4368
      %v4370 = vpop.f32.mrb[0].mxu0
      %v4371 = vadd.f32 %v4168, %v4370
      %v4372 = vpop.f32.mrb[0].mxu0
      %v4373 = vadd.f32 %v4170, %v4372
      %4374 = vmatprep.mubr.f32.mxu0 0.0
      %v4375 = vand.u32 %v3586, 4294901760
      %v4376 = vsub.f32 %v3586, %v4375
      %v4377 = vand.u32 %v4376, 4294901760
      %4378 = vmatmul.mubr.f32.gmra.mrb[0].mxu0 %v4377
      %v4379 = vpop.f32.mrb[0].mxu0
      %v4380 = vadd.f32 %v4176, %v4379
      %v4381 = vpop.f32.mrb[0].mxu0
      %v4382 = vadd.f32 %v4178, %v4381
      %4383 = vmatprep.mubr.f32.mxu0 0.0
      %v4384 = vand.u32 %v3589, 4294901760
      %v4385 = vsub.f32 %v3589, %v4384
      %v4386 = vand.u32 %v4385, 4294901760
      %4387 = vmatmul.mubr.f32.gmra.mrb[0].mxu0 %v4386
      %v4388 = vpop.f32.mrb[0].mxu0
      %v4389 = vadd.f32 %v4184, %v4388
      %v4390 = vpop.f32.mrb[0].mxu0
      %v4391 = vadd.f32 %v4186, %v4390
      %4392 = vmatprep.mubr.f32.mxu0 0.0
      %v4393 = vand.u32 %v3592, 4294901760
      %v4394 = vsub.f32 %v3592, %v4393
      %v4395 = vand.u32 %v4394, 4294901760
      %4396 = vmatmul.mubr.f32.gmra.mrb[0].mxu0 %v4395
      %v4397 = vpop.f32.mrb[0].mxu0
      %v4398 = vadd.f32 %v4192, %v4397
      %v4399 = vpop.f32.mrb[0].mxu0
      %v4400 = vadd.f32 %v4194, %v4399
      %4401 = vmatprep.mubr.f32.mxu0 0.0
      %v4402 = vand.u32 %v3595, 4294901760
      %v4403 = vsub.f32 %v3595, %v4402
      %v4404 = vand.u32 %v4403, 4294901760
      %4405 = vmatmul.mubr.f32.gmra.mrb[0].mxu0 %v4404
      %v4406 = vpop.f32.mrb[0].mxu0
      %v4407 = vadd.f32 %v4200, %v4406
      %v4408 = vpop.f32.mrb[0].mxu0
      %v4409 = vadd.f32 %v4202, %v4408
      %4410 = vmatprep.mubr.f32.mxu0 0.0
      %v4411 = vand.u32 %v3598, 4294901760
      %v4412 = vsub.f32 %v3598, %v4411
      %v4413 = vand.u32 %v4412, 4294901760
      %4414 = vmatmul.mubr.f32.gmra.mrb[0].mxu0 %v4413
      %v4415 = vpop.f32.mrb[0].mxu0
      %v4416 = vadd.f32 %v4208, %v4415
      %v4417 = vpop.f32.mrb[0].mxu0
      %v4418 = vadd.f32 %v4210, %v4417
      %4419 = vmatprep.mubr.f32.mxu0 0.0
      %v4420 = vand.u32 %v3601, 4294901760
      %v4421 = vsub.f32 %v3601, %v4420
      %v4422 = vand.u32 %v4421, 4294901760
      %4423 = vmatmul.mubr.f32.gmra.mrb[0].mxu0 %v4422
      %v4424 = vpop.f32.mrb[0].mxu0
      %v4425 = vadd.f32 %v4216, %v4424
      %v4426 = vpop.f32.mrb[0].mxu0
      %v4427 = vadd.f32 %v4218, %v4426
      %4428 = vmatprep.mubr.f32.mxu0 0.0
      %v4429 = vand.u32 %v3604, 4294901760
      %v4430 = vsub.f32 %v3604, %v4429
      %v4431 = vand.u32 %v4430, 4294901760
      %4432 = vmatmul.mubr.f32.gmra.mrb[0].mxu0 %v4431
      %v4433 = vpop.f32.mrb[0].mxu0
      %v4434 = vadd.f32 %v4224, %v4433
      %v4435 = vpop.f32.mrb[0].mxu0
      %v4436 = vadd.f32 %v4226, %v4435
      %4437 = vmatprep.mubr.f32.mxu0 0.0
      %v4438 = vand.u32 %v3607, 4294901760
      %v4439 = vsub.f32 %v3607, %v4438
      %v4440 = vand.u32 %v4439, 4294901760
      %4441 = vmatmul.mubr.f32.gmra.mrb[0].mxu0 %v4440
      %v4442 = vpop.f32.mrb[0].mxu0
      %v4443 = vadd.f32 %v4232, %v4442
      %v4444 = vpop.f32.mrb[0].mxu0
      %v4445 = vadd.f32 %v4234, %v4444
      %4446 = vdwg.mxu0
      %v4447 = vand.u32 %v3560, 4294901760
      %v4448 = vsub.f32 %v3560, %v4447
      %v4449 = vand.u32 %v4448, 4294901760
      %4450 = vmatprep.subr.mxu0 %v4449
      %v4451 = vand.u32 %v3559, 4294901760
      %v4452 = vsub.f32 %v3559, %v4451
      %v4453 = vand.u32 %v4452, 4294901760
      %4454 = vmatpush1.msra.mxu0 %v4453
      %4455 = vmatprep.subr.mxu0 0.0
      %4456 = vmatpush1.msra.mxu0 0.0
      %4457 = vmatprep.subr.mxu0 0.0
      %4458 = vmatpush1.msra.mxu0 0.0
      %4459 = vmatprep.subr.mxu0 0.0
      %4460 = vmatpush1.msra.mxu0 0.0
      %4461 = vmatprep.subr.mxu0 0.0
      %4462 = vmatpush1.msra.mxu0 0.0
      %4463 = vmatprep.subr.mxu0 0.0
      %4464 = vmatpush1.msra.mxu0 0.0
      %4465 = vmatprep.subr.mxu0 0.0
      %4466 = vmatpush1.msra.mxu0 0.0
      %4467 = vmatprep.subr.mxu0 0.0
      %4468 = vmatpush1.msra.mxu0 0.0
      %4469 = vmatprep.subr.mxu0 0.0
      %4470 = vmatpush1.msra.mxu0 0.0
      %4471 = vmatprep.subr.mxu0 0.0
      %4472 = vmatpush1.msra.mxu0 0.0
      %4473 = vmatprep.subr.mxu0 0.0
      %4474 = vmatpush1.msra.mxu0 0.0
      %4475 = vmatprep.subr.mxu0 0.0
      %4476 = vmatpush1.msra.mxu0 0.0
      %4477 = vmatprep.subr.mxu0 0.0
      %4478 = vmatpush1.msra.mxu0 0.0
      %4479 = vmatprep.subr.mxu0 0.0
      %4480 = vmatpush1.msra.mxu0 0.0
      %4481 = vmatprep.subr.mxu0 0.0
      %4482 = vmatpush1.msra.mxu0 0.0
      %4483 = vmatprep.subr.mxu0 0.0
      %4484 = vmatpush1.msra.mxu0 0.0
      %4485 = vmatprep.subr.mxu0 0.0
      %4486 = vmatpush1.msra.mxu0 0.0
      %4487 = vmatprep.subr.mxu0 0.0
      %4488 = vmatpush1.msra.mxu0 0.0
      %4489 = vmatprep.subr.mxu0 0.0
      %4490 = vmatpush1.msra.mxu0 0.0
      %4491 = vmatprep.subr.mxu0 0.0
      %4492 = vmatpush1.msra.mxu0 0.0
      %4493 = vmatprep.subr.mxu0 0.0
      %4494 = vmatpush1.msra.mxu0 0.0
      %4495 = vmatprep.subr.mxu0 0.0
      %4496 = vmatpush1.msra.mxu0 0.0
      %4497 = vmatprep.subr.mxu0 0.0
      %4498 = vmatpush1.msra.mxu0 0.0
      %4499 = vmatprep.subr.mxu0 0.0
      %4500 = vmatpush1.msra.mxu0 0.0
      %4501 = vmatprep.subr.mxu0 0.0
      %4502 = vmatpush1.msra.mxu0 0.0
      %4503 = vmatprep.subr.mxu0 0.0
      %4504 = vmatpush1.msra.mxu0 0.0
      %4505 = vmatprep.subr.mxu0 0.0
      %4506 = vmatpush1.msra.mxu0 0.0
      %4507 = vmatprep.subr.mxu0 0.0
      %4508 = vmatpush1.msra.mxu0 0.0
      %4509 = vmatprep.subr.mxu0 0.0
      %4510 = vmatpush1.msra.mxu0 0.0
      %4511 = vmatprep.subr.mxu0 0.0
      %4512 = vmatpush1.msra.mxu0 0.0
      %4513 = vmatprep.subr.mxu0 0.0
      %4514 = vmatpush1.msra.mxu0 0.0
      %4515 = vmatprep.subr.mxu0 0.0
      %4516 = vmatpush1.msra.mxu0 0.0
      %4517 = vmatprep.mubr.f32.mxu0 0.0
      %v4518 = vand.u32 %v3562, 4294901760
      %4519 = vmatmul.mubr.f32.gmra.mrb[0].mxu0 %v4518
      %v4520 = vpop.f32.mrb[0].mxu0
      %v4521 = vadd.f32 %v4308, %v4520
      %v4522 = vpop.f32.mrb[0].mxu0
      %v4523 = vadd.f32 %v4310, %v4522
      %4524 = vmatprep.mubr.f32.mxu0 0.0
      %v4525 = vand.u32 %v3565, 4294901760
      %4526 = vmatmul.mubr.f32.gmra.mrb[0].mxu0 %v4525
      %v4527 = vpop.f32.mrb[0].mxu0
      %v4528 = vadd.f32 %v4317, %v4527
      %v4529 = vpop.f32.mrb[0].mxu0
      %v4530 = vadd.f32 %v4319, %v4529
      %4531 = vmatprep.mubr.f32.mxu0 0.0
      %v4532 = vand.u32 %v3568, 4294901760
      %4533 = vmatmul.mubr.f32.gmra.mrb[0].mxu0 %v4532
      %v4534 = vpop.f32.mrb[0].mxu0
      %v4535 = vadd.f32 %v4326, %v4534
      %v4536 = vpop.f32.mrb[0].mxu0
      %v4537 = vadd.f32 %v4328, %v4536
      %4538 = vmatprep.mubr.f32.mxu0 0.0
      %v4539 = vand.u32 %v3571, 4294901760
      %4540 = vmatmul.mubr.f32.gmra.mrb[0].mxu0 %v4539
      %v4541 = vpop.f32.mrb[0].mxu0
      %v4542 = vadd.f32 %v4335, %v4541
      %v4543 = vpop.f32.mrb[0].mxu0
      %v4544 = vadd.f32 %v4337, %v4543
      %4545 = vmatprep.mubr.f32.mxu0 0.0
      %v4546 = vand.u32 %v3574, 4294901760
      %4547 = vmatmul.mubr.f32.gmra.mrb[0].mxu0 %v4546
      %v4548 = vpop.f32.mrb[0].mxu0
      %v4549 = vadd.f32 %v4344, %v4548
      %v4550 = vpop.f32.mrb[0].mxu0
      %v4551 = vadd.f32 %v4346, %v4550
      %4552 = vmatprep.mubr.f32.mxu0 0.0
      %v4553 = vand.u32 %v3577, 4294901760
      %4554 = vmatmul.mubr.f32.gmra.mrb[0].mxu0 %v4553
      %v4555 = vpop.f32.mrb[0].mxu0
      %v4556 = vadd.f32 %v4353, %v4555
      %v4557 = vpop.f32.mrb[0].mxu0
      %v4558 = vadd.f32 %v4355, %v4557
      %4559 = vmatprep.mubr.f32.mxu0 0.0
      %v4560 = vand.u32 %v3580, 4294901760
      %4561 = vmatmul.mubr.f32.gmra.mrb[0].mxu0 %v4560
      %v4562 = vpop.f32.mrb[0].mxu0
      %v4563 = vadd.f32 %v4362, %v4562
      %v4564 = vpop.f32.mrb[0].mxu0
      %v4565 = vadd.f32 %v4364, %v4564
      %4566 = vmatprep.mubr.f32.mxu0 0.0
      %v4567 = vand.u32 %v3583, 4294901760
      %4568 = vmatmul.mubr.f32.gmra.mrb[0].mxu0 %v4567
      %v4569 = vpop.f32.mrb[0].mxu0
      %v4570 = vadd.f32 %v4371, %v4569
      %v4571 = vpop.f32.mrb[0].mxu0
      %v4572 = vadd.f32 %v4373, %v4571
      %4573 = vmatprep.mubr.f32.mxu0 0.0
      %v4574 = vand.u32 %v3586, 4294901760
      %4575 = vmatmul.mubr.f32.gmra.mrb[0].mxu0 %v4574
      %v4576 = vpop.f32.mrb[0].mxu0
      %v4577 = vadd.f32 %v4380, %v4576
      %v4578 = vpop.f32.mrb[0].mxu0
      %v4579 = vadd.f32 %v4382, %v4578
      %4580 = vmatprep.mubr.f32.mxu0 0.0
      %v4581 = vand.u32 %v3589, 4294901760
      %4582 = vmatmul.mubr.f32.gmra.mrb[0].mxu0 %v4581
      %v4583 = vpop.f32.mrb[0].mxu0
      %v4584 = vadd.f32 %v4389, %v4583
      %v4585 = vpop.f32.mrb[0].mxu0
      %v4586 = vadd.f32 %v4391, %v4585
      %4587 = vmatprep.mubr.f32.mxu0 0.0
      %v4588 = vand.u32 %v3592, 4294901760
      %4589 = vmatmul.mubr.f32.gmra.mrb[0].mxu0 %v4588
      %v4590 = vpop.f32.mrb[0].mxu0
      %v4591 = vadd.f32 %v4398, %v4590
      %v4592 = vpop.f32.mrb[0].mxu0
      %v4593 = vadd.f32 %v4400, %v4592
      %4594 = vmatprep.mubr.f32.mxu0 0.0
      %v4595 = vand.u32 %v3595, 4294901760
      %4596 = vmatmul.mubr.f32.gmra.mrb[0].mxu0 %v4595
      %v4597 = vpop.f32.mrb[0].mxu0
      %v4598 = vadd.f32 %v4407, %v4597
      %v4599 = vpop.f32.mrb[0].mxu0
      %v4600 = vadd.f32 %v4409, %v4599
      %4601 = vmatprep.mubr.f32.mxu0 0.0
      %v4602 = vand.u32 %v3598, 4294901760
      %4603 = vmatmul.mubr.f32.gmra.mrb[0].mxu0 %v4602
      %v4604 = vpop.f32.mrb[0].mxu0
      %v4605 = vadd.f32 %v4416, %v4604
      %v4606 = vpop.f32.mrb[0].mxu0
      %v4607 = vadd.f32 %v4418, %v4606
      %4608 = vmatprep.mubr.f32.mxu0 0.0
      %v4609 = vand.u32 %v3601, 4294901760
      %4610 = vmatmul.mubr.f32.gmra.mrb[0].mxu0 %v4609
      %v4611 = vpop.f32.mrb[0].mxu0
      %v4612 = vadd.f32 %v4425, %v4611
      %v4613 = vpop.f32.mrb[0].mxu0
      %v4614 = vadd.f32 %v4427, %v4613
      %4615 = vmatprep.mubr.f32.mxu0 0.0
      %v4616 = vand.u32 %v3604, 4294901760
      %4617 = vmatmul.mubr.f32.gmra.mrb[0].mxu0 %v4616
      %v4618 = vpop.f32.mrb[0].mxu0
      %v4619 = vadd.f32 %v4434, %v4618
      %v4620 = vpop.f32.mrb[0].mxu0
      %v4621 = vadd.f32 %v4436, %v4620
      %4622 = vmatprep.mubr.f32.mxu0 0.0
      %v4623 = vand.u32 %v3607, 4294901760
      %4624 = vmatmul.mubr.f32.gmra.mrb[0].mxu0 %v4623
      %v4625 = vpop.f32.mrb[0].mxu0
      %v4626 = vadd.f32 %v4443, %v4625
      %v4627 = vpop.f32.mrb[0].mxu0
      %v4628 = vadd.f32 %v4445, %v4627
      %4629 = vdwg.mxu0
      %v4630 = vand.u32 %v3560, 4294901760
      %4631 = vmatprep.subr.mxu0 %v4630
      %v4632 = vand.u32 %v3559, 4294901760
      %4633 = vmatpush1.msra.mxu0 %v4632
      %4634 = vmatprep.subr.mxu0 0.0
      %4635 = vmatpush1.msra.mxu0 0.0
      %4636 = vmatprep.subr.mxu0 0.0
      %4637 = vmatpush1.msra.mxu0 0.0
      %4638 = vmatprep.subr.mxu0 0.0
      %4639 = vmatpush1.msra.mxu0 0.0
      %4640 = vmatprep.subr.mxu0 0.0
      %4641 = vmatpush1.msra.mxu0 0.0
      %4642 = vmatprep.subr.mxu0 0.0
      %4643 = vmatpush1.msra.mxu0 0.0
      %4644 = vmatprep.subr.mxu0 0.0
      %4645 = vmatpush1.msra.mxu0 0.0
      %4646 = vmatprep.subr.mxu0 0.0
      %4647 = vmatpush1.msra.mxu0 0.0
      %4648 = vmatprep.subr.mxu0 0.0
      %4649 = vmatpush1.msra.mxu0 0.0
      %4650 = vmatprep.subr.mxu0 0.0
      %4651 = vmatpush1.msra.mxu0 0.0
      %4652 = vmatprep.subr.mxu0 0.0
      %4653 = vmatpush1.msra.mxu0 0.0
      %4654 = vmatprep.subr.mxu0 0.0
      %4655 = vmatpush1.msra.mxu0 0.0
      %4656 = vmatprep.subr.mxu0 0.0
      %4657 = vmatpush1.msra.mxu0 0.0
      %4658 = vmatprep.subr.mxu0 0.0
      %4659 = vmatpush1.msra.mxu0 0.0
      %4660 = vmatprep.subr.mxu0 0.0
      %4661 = vmatpush1.msra.mxu0 0.0
      %4662 = vmatprep.subr.mxu0 0.0
      %4663 = vmatpush1.msra.mxu0 0.0
      %4664 = vmatprep.subr.mxu0 0.0
      %4665 = vmatpush1.msra.mxu0 0.0
      %4666 = vmatprep.subr.mxu0 0.0
      %4667 = vmatpush1.msra.mxu0 0.0
      %4668 = vmatprep.subr.mxu0 0.0
      %4669 = vmatpush1.msra.mxu0 0.0
      %4670 = vmatprep.subr.mxu0 0.0
      %4671 = vmatpush1.msra.mxu0 0.0
      %4672 = vmatprep.subr.mxu0 0.0
      %4673 = vmatpush1.msra.mxu0 0.0
      %4674 = vmatprep.subr.mxu0 0.0
      %4675 = vmatpush1.msra.mxu0 0.0
      %4676 = vmatprep.subr.mxu0 0.0
      %4677 = vmatpush1.msra.mxu0 0.0
      %4678 = vmatprep.subr.mxu0 0.0
      %4679 = vmatpush1.msra.mxu0 0.0
      %4680 = vmatprep.subr.mxu0 0.0
      %4681 = vmatpush1.msra.mxu0 0.0
      %4682 = vmatprep.subr.mxu0 0.0
      %4683 = vmatpush1.msra.mxu0 0.0
      %4684 = vmatprep.subr.mxu0 0.0
      %4685 = vmatpush1.msra.mxu0 0.0
      %4686 = vmatprep.subr.mxu0 0.0
      %4687 = vmatpush1.msra.mxu0 0.0
      %4688 = vmatprep.subr.mxu0 0.0
      %4689 = vmatpush1.msra.mxu0 0.0
      %4690 = vmatprep.subr.mxu0 0.0
      %4691 = vmatpush1.msra.mxu0 0.0
      %4692 = vmatprep.subr.mxu0 0.0
      %4693 = vmatpush1.msra.mxu0 0.0
      %4694 = vmatprep.subr.mxu0 0.0
      %4695 = vmatpush1.msra.mxu0 0.0
      %4696 = vmatprep.mubr.f32.mxu0 0.0
      %v4697 = vand.u32 %v3562, 4294901760
      %4698 = vmatmul.mubr.f32.gmra.mrb[0].mxu0 %v4697
      %v4699 = vpop.f32.mrb[0].mxu0
      %v4700 = vadd.f32 %v4521, %v4699
      %v4701 = vpop.f32.mrb[0].mxu0
      %v4702 = vadd.f32 %v4523, %v4701
      %4703 = vmatprep.mubr.f32.mxu0 0.0
      %v4704 = vand.u32 %v3565, 4294901760
      %4705 = vmatmul.mubr.f32.gmra.mrb[0].mxu0 %v4704
      %v4706 = vpop.f32.mrb[0].mxu0
      %v4707 = vadd.f32 %v4528, %v4706
      %v4708 = vpop.f32.mrb[0].mxu0
      %v4709 = vadd.f32 %v4530, %v4708
      %4710 = vmatprep.mubr.f32.mxu0 0.0
      %v4711 = vand.u32 %v3568, 4294901760
      %4712 = vmatmul.mubr.f32.gmra.mrb[0].mxu0 %v4711
      %v4713 = vpop.f32.mrb[0].mxu0
      %v4714 = vadd.f32 %v4535, %v4713
      %v4715 = vpop.f32.mrb[0].mxu0
      %v4716 = vadd.f32 %v4537, %v4715
      %4717 = vmatprep.mubr.f32.mxu0 0.0
      %v4718 = vand.u32 %v3571, 4294901760
      %4719 = vmatmul.mubr.f32.gmra.mrb[0].mxu0 %v4718
      %v4720 = vpop.f32.mrb[0].mxu0
      %v4721 = vadd.f32 %v4542, %v4720
      %v4722 = vpop.f32.mrb[0].mxu0
      %v4723 = vadd.f32 %v4544, %v4722
      %4724 = vmatprep.mubr.f32.mxu0 0.0
      %v4725 = vand.u32 %v3574, 4294901760
      %4726 = vmatmul.mubr.f32.gmra.mrb[0].mxu0 %v4725
      %v4727 = vpop.f32.mrb[0].mxu0
      %v4728 = vadd.f32 %v4549, %v4727
      %v4729 = vpop.f32.mrb[0].mxu0
      %v4730 = vadd.f32 %v4551, %v4729
      %4731 = vmatprep.mubr.f32.mxu0 0.0
      %v4732 = vand.u32 %v3577, 4294901760
      %4733 = vmatmul.mubr.f32.gmra.mrb[0].mxu0 %v4732
      %v4734 = vpop.f32.mrb[0].mxu0
      %v4735 = vadd.f32 %v4556, %v4734
      %v4736 = vpop.f32.mrb[0].mxu0
      %v4737 = vadd.f32 %v4558, %v4736
      %4738 = vmatprep.mubr.f32.mxu0 0.0
      %v4739 = vand.u32 %v3580, 4294901760
      %4740 = vmatmul.mubr.f32.gmra.mrb[0].mxu0 %v4739
      %v4741 = vpop.f32.mrb[0].mxu0
      %v4742 = vadd.f32 %v4563, %v4741
      %v4743 = vpop.f32.mrb[0].mxu0
      %v4744 = vadd.f32 %v4565, %v4743
      %4745 = vmatprep.mubr.f32.mxu0 0.0
      %v4746 = vand.u32 %v3583, 4294901760
      %4747 = vmatmul.mubr.f32.gmra.mrb[0].mxu0 %v4746
      %v4748 = vpop.f32.mrb[0].mxu0
      %v4749 = vadd.f32 %v4570, %v4748
      %v4750 = vpop.f32.mrb[0].mxu0
      %v4751 = vadd.f32 %v4572, %v4750
      %4752 = vmatprep.mubr.f32.mxu0 0.0
      %v4753 = vand.u32 %v3586, 4294901760
      %4754 = vmatmul.mubr.f32.gmra.mrb[0].mxu0 %v4753
      %v4755 = vpop.f32.mrb[0].mxu0
      %v4756 = vadd.f32 %v4577, %v4755
      %v4757 = vpop.f32.mrb[0].mxu0
      %v4758 = vadd.f32 %v4579, %v4757
      %4759 = vmatprep.mubr.f32.mxu0 0.0
      %v4760 = vand.u32 %v3589, 4294901760
      %4761 = vmatmul.mubr.f32.gmra.mrb[0].mxu0 %v4760
      %v4762 = vpop.f32.mrb[0].mxu0
      %v4763 = vadd.f32 %v4584, %v4762
      %v4764 = vpop.f32.mrb[0].mxu0
      %v4765 = vadd.f32 %v4586, %v4764
      %4766 = vmatprep.mubr.f32.mxu0 0.0
      %v4767 = vand.u32 %v3592, 4294901760
      %4768 = vmatmul.mubr.f32.gmra.mrb[0].mxu0 %v4767
      %v4769 = vpop.f32.mrb[0].mxu0
      %v4770 = vadd.f32 %v4591, %v4769
      %v4771 = vpop.f32.mrb[0].mxu0
      %v4772 = vadd.f32 %v4593, %v4771
      %4773 = vmatprep.mubr.f32.mxu0 0.0
      %v4774 = vand.u32 %v3595, 4294901760
      %4775 = vmatmul.mubr.f32.gmra.mrb[0].mxu0 %v4774
      %v4776 = vpop.f32.mrb[0].mxu0
      %v4777 = vadd.f32 %v4598, %v4776
      %v4778 = vpop.f32.mrb[0].mxu0
      %v4779 = vadd.f32 %v4600, %v4778
      %4780 = vmatprep.mubr.f32.mxu0 0.0
      %v4781 = vand.u32 %v3598, 4294901760
      %4782 = vmatmul.mubr.f32.gmra.mrb[0].mxu0 %v4781
      %v4783 = vpop.f32.mrb[0].mxu0
      %v4784 = vadd.f32 %v4605, %v4783
      %v4785 = vpop.f32.mrb[0].mxu0
      %v4786 = vadd.f32 %v4607, %v4785
      %4787 = vmatprep.mubr.f32.mxu0 0.0
      %v4788 = vand.u32 %v3601, 4294901760
      %4789 = vmatmul.mubr.f32.gmra.mrb[0].mxu0 %v4788
      %v4790 = vpop.f32.mrb[0].mxu0
      %v4791 = vadd.f32 %v4612, %v4790
      %v4792 = vpop.f32.mrb[0].mxu0
      %v4793 = vadd.f32 %v4614, %v4792
      %4794 = vmatprep.mubr.f32.mxu0 0.0
      %v4795 = vand.u32 %v3604, 4294901760
      %4796 = vmatmul.mubr.f32.gmra.mrb[0].mxu0 %v4795
      %v4797 = vpop.f32.mrb[0].mxu0
      %v4798 = vadd.f32 %v4619, %v4797
      %v4799 = vpop.f32.mrb[0].mxu0
      %v4800 = vadd.f32 %v4621, %v4799
      %4801 = vmatprep.mubr.f32.mxu0 0.0
      %v4802 = vand.u32 %v3607, 4294901760
      %4803 = vmatmul.mubr.f32.gmra.mrb[0].mxu0 %v4802
      %v4804 = vpop.f32.mrb[0].mxu0
      %v4805 = vadd.f32 %v4626, %v4804
      %v4806 = vpop.f32.mrb[0].mxu0
      %v4807 = vadd.f32 %v4628, %v4806
      %4808 = vdwg.mxu0
      %v4809 = vmul.f32 %v4700, %v369
      %v4810 = vmul.f32 %v4702, %v370
      %v4811 = vmul.f32 %v4707, %v371
      %v4812 = vmul.f32 %v4709, %v372
      %v4813 = vmul.f32 %v4714, %v373
      %v4814 = vmul.f32 %v4716, %v374
      %v4815 = vmul.f32 %v4721, %v375
      %v4816 = vmul.f32 %v4723, %v376
      %v4817 = vmul.f32 %v4728, %v377
      %v4818 = vmul.f32 %v4730, %v378
      %v4819 = vmul.f32 %v4735, %v379
      %v4820 = vmul.f32 %v4737, %v380
      %v4821 = vmul.f32 %v4742, %v381
      %v4822 = vmul.f32 %v4744, %v382
      %v4823 = vmul.f32 %v4749, %v383
      %v4824 = vmul.f32 %v4751, %v384
      %v4825 = vmul.f32 %v4756, %v385
      %v4826 = vmul.f32 %v4758, %v386
      %v4827 = vmul.f32 %v4763, %v387
      %v4828 = vmul.f32 %v4765, %v388
      %v4829 = vmul.f32 %v4770, %v389
      %v4830 = vmul.f32 %v4772, %v390
      %v4831 = vmul.f32 %v4777, %v391
      %v4832 = vmul.f32 %v4779, %v392
      %v4833 = vmul.f32 %v4784, %v393
      %v4834 = vmul.f32 %v4786, %v394
      %v4835 = vmul.f32 %v4791, %v395
      %v4836 = vmul.f32 %v4793, %v396
      %v4837 = vmul.f32 %v4798, %v397
      %v4838 = vmul.f32 %v4800, %v398
      %v4839 = vmul.f32 %v4805, %v399
      %v4840 = vmul.f32 %v4807, %v400
      %v4841 = vld [vmem:[%s6] sm:$0xff]
      %v4842 = vld [vmem:[%s6 + $0x8] sm:$0xff]
      %v4843 = vld [vmem:[%s6 + $0x10] sm:$0xff]
      %v4844 = vld [vmem:[%s6 + $0x18] sm:$0xff]
      %v4845 = vld [vmem:[%s6 + $0x20] sm:$0xff]
      %v4846 = vld [vmem:[%s6 + $0x28] sm:$0xff]
      %v4847 = vld [vmem:[%s6 + $0x30] sm:$0xff]
      %v4848 = vld [vmem:[%s6 + $0x38] sm:$0xff]
      %v4849 = vld [vmem:[%s6 + $0x40] sm:$0xff]
      %v4850 = vld [vmem:[%s6 + $0x48] sm:$0xff]
      %v4851 = vld [vmem:[%s6 + $0x50] sm:$0xff]
      %v4852 = vld [vmem:[%s6 + $0x58] sm:$0xff]
      %v4853 = vld [vmem:[%s6 + $0x60] sm:$0xff]
      %v4854 = vld [vmem:[%s6 + $0x68] sm:$0xff]
      %v4855 = vld [vmem:[%s6 + $0x70] sm:$0xff]
      %v4856 = vld [vmem:[%s6 + $0x78] sm:$0xff]
      %v4857 = vld [vmem:[%s6 + $0x80] sm:$0xff]
      %v4858 = vld [vmem:[%s6 + $0x88] sm:$0xff]
      %v4859 = vld [vmem:[%s6 + $0x90] sm:$0xff]
      %v4860 = vld [vmem:[%s6 + $0x98] sm:$0xff]
      %v4861 = vld [vmem:[%s6 + $0xa0] sm:$0xff]
      %v4862 = vld [vmem:[%s6 + $0xa8] sm:$0xff]
      %v4863 = vld [vmem:[%s6 + $0xb0] sm:$0xff]
      %v4864 = vld [vmem:[%s6 + $0xb8] sm:$0xff]
      %v4865 = vld [vmem:[%s6 + $0xc0] sm:$0xff]
      %v4866 = vld [vmem:[%s6 + $0xc8] sm:$0xff]
      %v4867 = vld [vmem:[%s6 + $0xd0] sm:$0xff]
      %v4868 = vld [vmem:[%s6 + $0xd8] sm:$0xff]
      %v4869 = vld [vmem:[%s6 + $0xe0] sm:$0xff]
      %v4870 = vld [vmem:[%s6 + $0xe8] sm:$0xff]
      %v4871 = vld [vmem:[%s6 + $0xf0] sm:$0xff]
      %v4872 = vld [vmem:[%s6 + $0xf8] sm:$0xff]
      %v4873 = vld [vmem:[%s6 + $0x100] sm:$0xff]
      %v4874 = vld [vmem:[%s6 + $0x108] sm:$0xff]
      %v4875 = vld [vmem:[%s6 + $0x110] sm:$0xff]
      %v4876 = vld [vmem:[%s6 + $0x118] sm:$0xff]
      %v4877 = vld [vmem:[%s6 + $0x120] sm:$0xff]
      %v4878 = vld [vmem:[%s6 + $0x128] sm:$0xff]
      %v4879 = vld [vmem:[%s6 + $0x130] sm:$0xff]
      %v4880 = vld [vmem:[%s6 + $0x138] sm:$0xff]
      %v4881 = vld [vmem:[%s6 + $0x140] sm:$0xff]
      %v4882 = vld [vmem:[%s6 + $0x148] sm:$0xff]
      %v4883 = vld [vmem:[%s6 + $0x150] sm:$0xff]
      %v4884 = vld [vmem:[%s6 + $0x158] sm:$0xff]
      %v4885 = vld [vmem:[%s6 + $0x160] sm:$0xff]
      %v4886 = vld [vmem:[%s6 + $0x168] sm:$0xff]
      %v4887 = vld [vmem:[%s6 + $0x170] sm:$0xff]
      %v4888 = vld [vmem:[%s6 + $0x178] sm:$0xff]
      %v4889 = vld [vmem:[%s6 + $0x180] sm:$0xff]
      %v4890 = vld [vmem:[%s6 + $0x188] sm:$0xff]
      %v4891 = vld [vmem:[%s6 + $0x190] sm:$0xff]
      %v4892 = vld [vmem:[%s6 + $0x198] sm:$0xff]
      %v4893 = vld [vmem:[%s6 + $0x1a0] sm:$0xff]
      %v4894 = vld [vmem:[%s6 + $0x1a8] sm:$0xff]
      %v4895 = vld [vmem:[%s6 + $0x1b0] sm:$0xff]
      %v4896 = vld [vmem:[%s6 + $0x1b8] sm:$0xff]
      %v4897 = vld [vmem:[%s6 + $0x1c0] sm:$0xff]
      %v4898 = vld [vmem:[%s6 + $0x1c8] sm:$0xff]
      %v4899 = vld [vmem:[%s6 + $0x1d0] sm:$0xff]
      %v4900 = vld [vmem:[%s6 + $0x1d8] sm:$0xff]
      %v4901 = vld [vmem:[%s6 + $0x1e0] sm:$0xff]
      %v4902 = vld [vmem:[%s6 + $0x1e8] sm:$0xff]
      %v4903 = vld [vmem:[%s6 + $0x1f0] sm:$0xff]
      %v4904 = vld [vmem:[%s6 + $0x1f8] sm:$0xff]
      %v4905 = vld [vmem:[%s5] sm:$0x3]
      %4906 = vset.pattern.permute.xlu0 0
      %4907 = vperm.xlu0 %4906, %v3528
      %v4908 = vpop.permute.xlu0 %4907
      %4910 = vset.pattern.permute.xlu0 0
      %4911 = vperm.xlu0 %4910, %v3530
      %v4912 = vpop.permute.xlu0 %4911
      %4914 = vset.pattern.permute.xlu0 0
      %4915 = vperm.xlu0 %4914, %v3532
      %v4916 = vpop.permute.xlu0 %4915
      %4918 = vset.pattern.permute.xlu0 0
      %4919 = vperm.xlu0 %4918, %v3534
      %v4920 = vpop.permute.xlu0 %4919
      %4922 = vset.pattern.permute.xlu0 0
      %4923 = vperm.xlu0 %4922, %v3536
      %v4924 = vpop.permute.xlu0 %4923
      %4926 = vset.pattern.permute.xlu0 0
      %4927 = vperm.xlu0 %4926, %v3538
      %v4928 = vpop.permute.xlu0 %4927
      %4930 = vset.pattern.permute.xlu0 0
      %4931 = vperm.xlu0 %4930, %v3540
      %v4932 = vpop.permute.xlu0 %4931
      %4934 = vset.pattern.permute.xlu0 0
      %4935 = vperm.xlu0 %4934, %v3542
      %v4936 = vpop.permute.xlu0 %4935
      %4938 = vset.pattern.permute.xlu0 0
      %4939 = vperm.xlu0 %4938, %v3544
      %v4940 = vpop.permute.xlu0 %4939
      %4942 = vset.pattern.permute.xlu0 0
      %4943 = vperm.xlu0 %4942, %v3546
      %v4944 = vpop.permute.xlu0 %4943
      %4946 = vset.pattern.permute.xlu0 0
      %4947 = vperm.xlu0 %4946, %v3548
      %v4948 = vpop.permute.xlu0 %4947
      %4950 = vset.pattern.permute.xlu0 0
      %4951 = vperm.xlu0 %4950, %v3550
      %v4952 = vpop.permute.xlu0 %4951
      %4954 = vset.pattern.permute.xlu0 0
      %4955 = vperm.xlu0 %4954, %v3552
      %v4956 = vpop.permute.xlu0 %4955
      %4958 = vset.pattern.permute.xlu0 0
      %4959 = vperm.xlu0 %4958, %v3554
      %v4960 = vpop.permute.xlu0 %4959
      %4962 = vset.pattern.permute.xlu0 0
      %4963 = vperm.xlu0 %4962, %v3556
      %v4964 = vpop.permute.xlu0 %4963
      %4966 = vset.pattern.permute.xlu0 0
      %4967 = vperm.xlu0 %4966, %v3558
      %v4968 = vpop.permute.xlu0 %4967
      %v4971 = vlaneseq
      %v4972 = vshrl.u32 %v4971, 7
      %v4973 = vsub.s32 0, %v4972
      %v4974 = vrot.slane %v4905, %v4973
      %v4975 = vlaneseq
      %v4976 = vshrl.u32 %v4975, 7
      %v4977 = vsub.s32 1, %v4976
      %v4978 = vrot.slane %v4905, %v4977
      %v4981 = vmul.f32 %v4908, %v4974
      %v4982 = vmul.f32 %v4908, %v4978
      %v4983 = vmul.f32 %v4912, %v4974
      %v4984 = vmul.f32 %v4912, %v4978
      %v4985 = vmul.f32 %v4916, %v4974
      %v4986 = vmul.f32 %v4916, %v4978
      %v4987 = vmul.f32 %v4920, %v4974
      %v4988 = vmul.f32 %v4920, %v4978
      %v4989 = vmul.f32 %v4924, %v4974
      %v4990 = vmul.f32 %v4924, %v4978
      %v4991 = vmul.f32 %v4928, %v4974
      %v4992 = vmul.f32 %v4928, %v4978
      %v4993 = vmul.f32 %v4932, %v4974
      %v4994 = vmul.f32 %v4932, %v4978
      %v4995 = vmul.f32 %v4936, %v4974
      %v4996 = vmul.f32 %v4936, %v4978
      %v4997 = vmul.f32 %v4940, %v4974
      %v4998 = vmul.f32 %v4940, %v4978
      %v4999 = vmul.f32 %v4944, %v4974
      %v5000 = vmul.f32 %v4944, %v4978
      %v5001 = vmul.f32 %v4948, %v4974
      %v5002 = vmul.f32 %v4948, %v4978
      %v5003 = vmul.f32 %v4952, %v4974
      %v5004 = vmul.f32 %v4952, %v4978
      %v5005 = vmul.f32 %v4956, %v4974
      %v5006 = vmul.f32 %v4956, %v4978
      %v5007 = vmul.f32 %v4960, %v4974
      %v5008 = vmul.f32 %v4960, %v4978
      %v5009 = vmul.f32 %v4964, %v4974
      %v5010 = vmul.f32 %v4964, %v4978
      %v5011 = vmul.f32 %v4968, %v4974
      %v5012 = vmul.f32 %v4968, %v4978
      %v5013 = vand.u32 %v4842, 4294901760
      %5014 = vmatprep.subr.mxu0 %v5013
      %v5015 = vand.u32 %v4841, 4294901760
      %5016 = vmatpush1.msra.mxu0 %v5015
      %v5017 = vand.u32 %v4844, 4294901760
      %5018 = vmatprep.subr.mxu0 %v5017
      %v5019 = vand.u32 %v4843, 4294901760
      %5020 = vmatpush1.msra.mxu0 %v5019
      %v5021 = vand.u32 %v4846, 4294901760
      %5022 = vmatprep.subr.mxu0 %v5021
      %v5023 = vand.u32 %v4845, 4294901760
      %5024 = vmatpush1.msra.mxu0 %v5023
      %v5025 = vand.u32 %v4848, 4294901760
      %5026 = vmatprep.subr.mxu0 %v5025
      %v5027 = vand.u32 %v4847, 4294901760
      %5028 = vmatpush1.msra.mxu0 %v5027
      %v5029 = vand.u32 %v4850, 4294901760
      %5030 = vmatprep.subr.mxu0 %v5029
      %v5031 = vand.u32 %v4849, 4294901760
      %5032 = vmatpush1.msra.mxu0 %v5031
      %v5033 = vand.u32 %v4852, 4294901760
      %5034 = vmatprep.subr.mxu0 %v5033
      %v5035 = vand.u32 %v4851, 4294901760
      %5036 = vmatpush1.msra.mxu0 %v5035
      %v5037 = vand.u32 %v4854, 4294901760
      %5038 = vmatprep.subr.mxu0 %v5037
      %v5039 = vand.u32 %v4853, 4294901760
      %5040 = vmatpush1.msra.mxu0 %v5039
      %v5041 = vand.u32 %v4856, 4294901760
      %5042 = vmatprep.subr.mxu0 %v5041
      %v5043 = vand.u32 %v4855, 4294901760
      %5044 = vmatpush1.msra.mxu0 %v5043
      %v5045 = vand.u32 %v4858, 4294901760
      %5046 = vmatprep.subr.mxu0 %v5045
      %v5047 = vand.u32 %v4857, 4294901760
      %5048 = vmatpush1.msra.mxu0 %v5047
      %v5049 = vand.u32 %v4860, 4294901760
      %5050 = vmatprep.subr.mxu0 %v5049
      %v5051 = vand.u32 %v4859, 4294901760
      %5052 = vmatpush1.msra.mxu0 %v5051
      %v5053 = vand.u32 %v4862, 4294901760
      %5054 = vmatprep.subr.mxu0 %v5053
      %v5055 = vand.u32 %v4861, 4294901760
      %5056 = vmatpush1.msra.mxu0 %v5055
      %v5057 = vand.u32 %v4864, 4294901760
      %5058 = vmatprep.subr.mxu0 %v5057
      %v5059 = vand.u32 %v4863, 4294901760
      %5060 = vmatpush1.msra.mxu0 %v5059
      %v5061 = vand.u32 %v4866, 4294901760
      %5062 = vmatprep.subr.mxu0 %v5061
      %v5063 = vand.u32 %v4865, 4294901760
      %5064 = vmatpush1.msra.mxu0 %v5063
      %v5065 = vand.u32 %v4868, 4294901760
      %5066 = vmatprep.subr.mxu0 %v5065
      %v5067 = vand.u32 %v4867, 4294901760
      %5068 = vmatpush1.msra.mxu0 %v5067
      %v5069 = vand.u32 %v4870, 4294901760
      %5070 = vmatprep.subr.mxu0 %v5069
      %v5071 = vand.u32 %v4869, 4294901760
      %5072 = vmatpush1.msra.mxu0 %v5071
      %v5073 = vand.u32 %v4872, 4294901760
      %5074 = vmatprep.subr.mxu0 %v5073
      %v5075 = vand.u32 %v4871, 4294901760
      %5076 = vmatpush1.msra.mxu0 %v5075
      %v5077 = vand.u32 %v4874, 4294901760
      %5078 = vmatprep.subr.mxu0 %v5077
      %v5079 = vand.u32 %v4873, 4294901760
      %5080 = vmatpush1.msra.mxu0 %v5079
      %v5081 = vand.u32 %v4876, 4294901760
      %5082 = vmatprep.subr.mxu0 %v5081
      %v5083 = vand.u32 %v4875, 4294901760
      %5084 = vmatpush1.msra.mxu0 %v5083
      %v5085 = vand.u32 %v4878, 4294901760
      %5086 = vmatprep.subr.mxu0 %v5085
      %v5087 = vand.u32 %v4877, 4294901760
      %5088 = vmatpush1.msra.mxu0 %v5087
      %v5089 = vand.u32 %v4880, 4294901760
      %5090 = vmatprep.subr.mxu0 %v5089
      %v5091 = vand.u32 %v4879, 4294901760
      %5092 = vmatpush1.msra.mxu0 %v5091
      %v5093 = vand.u32 %v4882, 4294901760
      %5094 = vmatprep.subr.mxu0 %v5093
      %v5095 = vand.u32 %v4881, 4294901760
      %5096 = vmatpush1.msra.mxu0 %v5095
      %v5097 = vand.u32 %v4884, 4294901760
      %5098 = vmatprep.subr.mxu0 %v5097
      %v5099 = vand.u32 %v4883, 4294901760
      %5100 = vmatpush1.msra.mxu0 %v5099
      %v5101 = vand.u32 %v4886, 4294901760
      %5102 = vmatprep.subr.mxu0 %v5101
      %v5103 = vand.u32 %v4885, 4294901760
      %5104 = vmatpush1.msra.mxu0 %v5103
      %v5105 = vand.u32 %v4888, 4294901760
      %5106 = vmatprep.subr.mxu0 %v5105
      %v5107 = vand.u32 %v4887, 4294901760
      %5108 = vmatpush1.msra.mxu0 %v5107
      %v5109 = vand.u32 %v4890, 4294901760
      %5110 = vmatprep.subr.mxu0 %v5109
      %v5111 = vand.u32 %v4889, 4294901760
      %5112 = vmatpush1.msra.mxu0 %v5111
      %v5113 = vand.u32 %v4892, 4294901760
      %5114 = vmatprep.subr.mxu0 %v5113
      %v5115 = vand.u32 %v4891, 4294901760
      %5116 = vmatpush1.msra.mxu0 %v5115
      %v5117 = vand.u32 %v4894, 4294901760
      %5118 = vmatprep.subr.mxu0 %v5117
      %v5119 = vand.u32 %v4893, 4294901760
      %5120 = vmatpush1.msra.mxu0 %v5119
      %v5121 = vand.u32 %v4896, 4294901760
      %5122 = vmatprep.subr.mxu0 %v5121
      %v5123 = vand.u32 %v4895, 4294901760
      %5124 = vmatpush1.msra.mxu0 %v5123
      %v5125 = vand.u32 %v4898, 4294901760
      %5126 = vmatprep.subr.mxu0 %v5125
      %v5127 = vand.u32 %v4897, 4294901760
      %5128 = vmatpush1.msra.mxu0 %v5127
      %v5129 = vand.u32 %v4900, 4294901760
      %5130 = vmatprep.subr.mxu0 %v5129
      %v5131 = vand.u32 %v4899, 4294901760
      %5132 = vmatpush1.msra.mxu0 %v5131
      %v5133 = vand.u32 %v4902, 4294901760
      %5134 = vmatprep.subr.mxu0 %v5133
      %v5135 = vand.u32 %v4901, 4294901760
      %5136 = vmatpush1.msra.mxu0 %v5135
      %v5137 = vand.u32 %v4904, 4294901760
      %5138 = vmatprep.subr.mxu0 %v5137
      %v5139 = vand.u32 %v4903, 4294901760
      %5140 = vmatpush1.msra.mxu0 %v5139
      %v5141 = vand.u32 %v4810, 4294901760
      %v5142 = vsub.f32 %v4810, %v5141
      %v5143 = vand.u32 %v5142, 4294901760
      %v5144 = vsub.f32 %v5142, %v5143
      %v5145 = vand.u32 %v5144, 4294901760
      %5146 = vmatprep.mubr.f32.mxu0 %v5145
      %v5147 = vand.u32 %v4809, 4294901760
      %v5148 = vsub.f32 %v4809, %v5147
      %v5149 = vand.u32 %v5148, 4294901760
      %v5150 = vsub.f32 %v5148, %v5149
      %v5151 = vand.u32 %v5150, 4294901760
      %5152 = vmatmul.mubr.f32.gmra.mrb[0].mxu0 %v5151
      %v5153 = vpop.f32.mrb[0].mxu0
      %v5154 = vadd.f32 %v4981, %v5153
      %v5155 = vpop.f32.mrb[0].mxu0
      %v5156 = vadd.f32 %v4982, %v5155
      %v5157 = vand.u32 %v4812, 4294901760
      %v5158 = vsub.f32 %v4812, %v5157
      %v5159 = vand.u32 %v5158, 4294901760
      %v5160 = vsub.f32 %v5158, %v5159
      %v5161 = vand.u32 %v5160, 4294901760
      %5162 = vmatprep.mubr.f32.mxu0 %v5161
      %v5163 = vand.u32 %v4811, 4294901760
      %v5164 = vsub.f32 %v4811, %v5163
      %v5165 = vand.u32 %v5164, 4294901760
      %v5166 = vsub.f32 %v5164, %v5165
      %v5167 = vand.u32 %v5166, 4294901760
      %5168 = vmatmul.mubr.f32.gmra.mrb[0].mxu0 %v5167
      %v5169 = vpop.f32.mrb[0].mxu0
      %v5170 = vadd.f32 %v4983, %v5169
      %v5171 = vpop.f32.mrb[0].mxu0
      %v5172 = vadd.f32 %v4984, %v5171
      %v5173 = vand.u32 %v4814, 4294901760
      %v5174 = vsub.f32 %v4814, %v5173
      %v5175 = vand.u32 %v5174, 4294901760
      %v5176 = vsub.f32 %v5174, %v5175
      %v5177 = vand.u32 %v5176, 4294901760
      %5178 = vmatprep.mubr.f32.mxu0 %v5177
      %v5179 = vand.u32 %v4813, 4294901760
      %v5180 = vsub.f32 %v4813, %v5179
      %v5181 = vand.u32 %v5180, 4294901760
      %v5182 = vsub.f32 %v5180, %v5181
      %v5183 = vand.u32 %v5182, 4294901760
      %5184 = vmatmul.mubr.f32.gmra.mrb[0].mxu0 %v5183
      %v5185 = vpop.f32.mrb[0].mxu0
      %v5186 = vadd.f32 %v4985, %v5185
      %v5187 = vpop.f32.mrb[0].mxu0
      %v5188 = vadd.f32 %v4986, %v5187
      %v5189 = vand.u32 %v4816, 4294901760
      %v5190 = vsub.f32 %v4816, %v5189
      %v5191 = vand.u32 %v5190, 4294901760
      %v5192 = vsub.f32 %v5190, %v5191
      %v5193 = vand.u32 %v5192, 4294901760
      %5194 = vmatprep.mubr.f32.mxu0 %v5193
      %v5195 = vand.u32 %v4815, 4294901760
      %v5196 = vsub.f32 %v4815, %v5195
      %v5197 = vand.u32 %v5196, 4294901760
      %v5198 = vsub.f32 %v5196, %v5197
      %v5199 = vand.u32 %v5198, 4294901760
      %5200 = vmatmul.mubr.f32.gmra.mrb[0].mxu0 %v5199
      %v5201 = vpop.f32.mrb[0].mxu0
      %v5202 = vadd.f32 %v4987, %v5201
      %v5203 = vpop.f32.mrb[0].mxu0
      %v5204 = vadd.f32 %v4988, %v5203
      %v5205 = vand.u32 %v4818, 4294901760
      %v5206 = vsub.f32 %v4818, %v5205
      %v5207 = vand.u32 %v5206, 4294901760
      %v5208 = vsub.f32 %v5206, %v5207
      %v5209 = vand.u32 %v5208, 4294901760
      %5210 = vmatprep.mubr.f32.mxu0 %v5209
      %v5211 = vand.u32 %v4817, 4294901760
      %v5212 = vsub.f32 %v4817, %v5211
      %v5213 = vand.u32 %v5212, 4294901760
      %v5214 = vsub.f32 %v5212, %v5213
      %v5215 = vand.u32 %v5214, 4294901760
      %5216 = vmatmul.mubr.f32.gmra.mrb[0].mxu0 %v5215
      %v5217 = vpop.f32.mrb[0].mxu0
      %v5218 = vadd.f32 %v4989, %v5217
      %v5219 = vpop.f32.mrb[0].mxu0
      %v5220 = vadd.f32 %v4990, %v5219
      %v5221 = vand.u32 %v4820, 4294901760
      %v5222 = vsub.f32 %v4820, %v5221
      %v5223 = vand.u32 %v5222, 4294901760
      %v5224 = vsub.f32 %v5222, %v5223
      %v5225 = vand.u32 %v5224, 4294901760
      %5226 = vmatprep.mubr.f32.mxu0 %v5225
      %v5227 = vand.u32 %v4819, 4294901760
      %v5228 = vsub.f32 %v4819, %v5227
      %v5229 = vand.u32 %v5228, 4294901760
      %v5230 = vsub.f32 %v5228, %v5229
      %v5231 = vand.u32 %v5230, 4294901760
      %5232 = vmatmul.mubr.f32.gmra.mrb[0].mxu0 %v5231
      %v5233 = vpop.f32.mrb[0].mxu0
      %v5234 = vadd.f32 %v4991, %v5233
      %v5235 = vpop.f32.mrb[0].mxu0
      %v5236 = vadd.f32 %v4992, %v5235
      %v5237 = vand.u32 %v4822, 4294901760
      %v5238 = vsub.f32 %v4822, %v5237
      %v5239 = vand.u32 %v5238, 4294901760
      %v5240 = vsub.f32 %v5238, %v5239
      %v5241 = vand.u32 %v5240, 4294901760
      %5242 = vmatprep.mubr.f32.mxu0 %v5241
      %v5243 = vand.u32 %v4821, 4294901760
      %v5244 = vsub.f32 %v4821, %v5243
      %v5245 = vand.u32 %v5244, 4294901760
      %v5246 = vsub.f32 %v5244, %v5245
      %v5247 = vand.u32 %v5246, 4294901760
      %5248 = vmatmul.mubr.f32.gmra.mrb[0].mxu0 %v5247
      %v5249 = vpop.f32.mrb[0].mxu0
      %v5250 = vadd.f32 %v4993, %v5249
      %v5251 = vpop.f32.mrb[0].mxu0
      %v5252 = vadd.f32 %v4994, %v5251
      %v5253 = vand.u32 %v4824, 4294901760
      %v5254 = vsub.f32 %v4824, %v5253
      %v5255 = vand.u32 %v5254, 4294901760
      %v5256 = vsub.f32 %v5254, %v5255
      %v5257 = vand.u32 %v5256, 4294901760
      %5258 = vmatprep.mubr.f32.mxu0 %v5257
      %v5259 = vand.u32 %v4823, 4294901760
      %v5260 = vsub.f32 %v4823, %v5259
      %v5261 = vand.u32 %v5260, 4294901760
      %v5262 = vsub.f32 %v5260, %v5261
      %v5263 = vand.u32 %v5262, 4294901760
      %5264 = vmatmul.mubr.f32.gmra.mrb[0].mxu0 %v5263
      %v5265 = vpop.f32.mrb[0].mxu0
      %v5266 = vadd.f32 %v4995, %v5265
      %v5267 = vpop.f32.mrb[0].mxu0
      %v5268 = vadd.f32 %v4996, %v5267
      %v5269 = vand.u32 %v4826, 4294901760
      %v5270 = vsub.f32 %v4826, %v5269
      %v5271 = vand.u32 %v5270, 4294901760
      %v5272 = vsub.f32 %v5270, %v5271
      %v5273 = vand.u32 %v5272, 4294901760
      %5274 = vmatprep.mubr.f32.mxu0 %v5273
      %v5275 = vand.u32 %v4825, 4294901760
      %v5276 = vsub.f32 %v4825, %v5275
      %v5277 = vand.u32 %v5276, 4294901760
      %v5278 = vsub.f32 %v5276, %v5277
      %v5279 = vand.u32 %v5278, 4294901760
      %5280 = vmatmul.mubr.f32.gmra.mrb[0].mxu0 %v5279
      %v5281 = vpop.f32.mrb[0].mxu0
      %v5282 = vadd.f32 %v4997, %v5281
      %v5283 = vpop.f32.mrb[0].mxu0
      %v5284 = vadd.f32 %v4998, %v5283
      %v5285 = vand.u32 %v4828, 4294901760
      %v5286 = vsub.f32 %v4828, %v5285
      %v5287 = vand.u32 %v5286, 4294901760
      %v5288 = vsub.f32 %v5286, %v5287
      %v5289 = vand.u32 %v5288, 4294901760
      %5290 = vmatprep.mubr.f32.mxu0 %v5289
      %v5291 = vand.u32 %v4827, 4294901760
      %v5292 = vsub.f32 %v4827, %v5291
      %v5293 = vand.u32 %v5292, 4294901760
      %v5294 = vsub.f32 %v5292, %v5293
      %v5295 = vand.u32 %v5294, 4294901760
      %5296 = vmatmul.mubr.f32.gmra.mrb[0].mxu0 %v5295
      %v5297 = vpop.f32.mrb[0].mxu0
      %v5298 = vadd.f32 %v4999, %v5297
      %v5299 = vpop.f32.mrb[0].mxu0
      %v5300 = vadd.f32 %v5000, %v5299
      %v5301 = vand.u32 %v4830, 4294901760
      %v5302 = vsub.f32 %v4830, %v5301
      %v5303 = vand.u32 %v5302, 4294901760
      %v5304 = vsub.f32 %v5302, %v5303
      %v5305 = vand.u32 %v5304, 4294901760
      %5306 = vmatprep.mubr.f32.mxu0 %v5305
      %v5307 = vand.u32 %v4829, 4294901760
      %v5308 = vsub.f32 %v4829, %v5307
      %v5309 = vand.u32 %v5308, 4294901760
      %v5310 = vsub.f32 %v5308, %v5309
      %v5311 = vand.u32 %v5310, 4294901760
      %5312 = vmatmul.mubr.f32.gmra.mrb[0].mxu0 %v5311
      %v5313 = vpop.f32.mrb[0].mxu0
      %v5314 = vadd.f32 %v5001, %v5313
      %v5315 = vpop.f32.mrb[0].mxu0
      %v5316 = vadd.f32 %v5002, %v5315
      %v5317 = vand.u32 %v4832, 4294901760
      %v5318 = vsub.f32 %v4832, %v5317
      %v5319 = vand.u32 %v5318, 4294901760
      %v5320 = vsub.f32 %v5318, %v5319
      %v5321 = vand.u32 %v5320, 4294901760
      %5322 = vmatprep.mubr.f32.mxu0 %v5321
      %v5323 = vand.u32 %v4831, 4294901760
      %v5324 = vsub.f32 %v4831, %v5323
      %v5325 = vand.u32 %v5324, 4294901760
      %v5326 = vsub.f32 %v5324, %v5325
      %v5327 = vand.u32 %v5326, 4294901760
      %5328 = vmatmul.mubr.f32.gmra.mrb[0].mxu0 %v5327
      %v5329 = vpop.f32.mrb[0].mxu0
      %v5330 = vadd.f32 %v5003, %v5329
      %v5331 = vpop.f32.mrb[0].mxu0
      %v5332 = vadd.f32 %v5004, %v5331
      %v5333 = vand.u32 %v4834, 4294901760
      %v5334 = vsub.f32 %v4834, %v5333
      %v5335 = vand.u32 %v5334, 4294901760
      %v5336 = vsub.f32 %v5334, %v5335
      %v5337 = vand.u32 %v5336, 4294901760
      %5338 = vmatprep.mubr.f32.mxu0 %v5337
      %v5339 = vand.u32 %v4833, 4294901760
      %v5340 = vsub.f32 %v4833, %v5339
      %v5341 = vand.u32 %v5340, 4294901760
      %v5342 = vsub.f32 %v5340, %v5341
      %v5343 = vand.u32 %v5342, 4294901760
      %5344 = vmatmul.mubr.f32.gmra.mrb[0].mxu0 %v5343
      %v5345 = vpop.f32.mrb[0].mxu0
      %v5346 = vadd.f32 %v5005, %v5345
      %v5347 = vpop.f32.mrb[0].mxu0
      %v5348 = vadd.f32 %v5006, %v5347
      %v5349 = vand.u32 %v4836, 4294901760
      %v5350 = vsub.f32 %v4836, %v5349
      %v5351 = vand.u32 %v5350, 4294901760
      %v5352 = vsub.f32 %v5350, %v5351
      %v5353 = vand.u32 %v5352, 4294901760
      %5354 = vmatprep.mubr.f32.mxu0 %v5353
      %v5355 = vand.u32 %v4835, 4294901760
      %v5356 = vsub.f32 %v4835, %v5355
      %v5357 = vand.u32 %v5356, 4294901760
      %v5358 = vsub.f32 %v5356, %v5357
      %v5359 = vand.u32 %v5358, 4294901760
      %5360 = vmatmul.mubr.f32.gmra.mrb[0].mxu0 %v5359
      %v5361 = vpop.f32.mrb[0].mxu0
      %v5362 = vadd.f32 %v5007, %v5361
      %v5363 = vpop.f32.mrb[0].mxu0
      %v5364 = vadd.f32 %v5008, %v5363
      %v5365 = vand.u32 %v4838, 4294901760
      %v5366 = vsub.f32 %v4838, %v5365
      %v5367 = vand.u32 %v5366, 4294901760
      %v5368 = vsub.f32 %v5366, %v5367
      %v5369 = vand.u32 %v5368, 4294901760
      %5370 = vmatprep.mubr.f32.mxu0 %v5369
      %v5371 = vand.u32 %v4837, 4294901760
      %v5372 = vsub.f32 %v4837, %v5371
      %v5373 = vand.u32 %v5372, 4294901760
      %v5374 = vsub.f32 %v5372, %v5373
      %v5375 = vand.u32 %v5374, 4294901760
      %5376 = vmatmul.mubr.f32.gmra.mrb[0].mxu0 %v5375
      %v5377 = vpop.f32.mrb[0].mxu0
      %v5378 = vadd.f32 %v5009, %v5377
      %v5379 = vpop.f32.mrb[0].mxu0
      %v5380 = vadd.f32 %v5010, %v5379
      %v5381 = vand.u32 %v4840, 4294901760
      %v5382 = vsub.f32 %v4840, %v5381
      %v5383 = vand.u32 %v5382, 4294901760
      %v5384 = vsub.f32 %v5382, %v5383
      %v5385 = vand.u32 %v5384, 4294901760
      %5386 = vmatprep.mubr.f32.mxu0 %v5385
      %v5387 = vand.u32 %v4839, 4294901760
      %v5388 = vsub.f32 %v4839, %v5387
      %v5389 = vand.u32 %v5388, 4294901760
      %v5390 = vsub.f32 %v5388, %v5389
      %v5391 = vand.u32 %v5390, 4294901760
      %5392 = vmatmul.mubr.f32.gmra.mrb[0].mxu0 %v5391
      %v5393 = vpop.f32.mrb[0].mxu0
      %v5394 = vadd.f32 %v5011, %v5393
      %v5395 = vpop.f32.mrb[0].mxu0
      %v5396 = vadd.f32 %v5012, %v5395
      %5397 = vdwg.mxu0
      %v5398 = vand.u32 %v4842, 4294901760
      %v5399 = vsub.f32 %v4842, %v5398
      %v5400 = vand.u32 %v5399, 4294901760
      %v5401 = vsub.f32 %v5399, %v5400
      %v5402 = vand.u32 %v5401, 4294901760
      %5403 = vmatprep.subr.mxu0 %v5402
      %v5404 = vand.u32 %v4841, 4294901760
      %v5405 = vsub.f32 %v4841, %v5404
      %v5406 = vand.u32 %v5405, 4294901760
      %v5407 = vsub.f32 %v5405, %v5406
      %v5408 = vand.u32 %v5407, 4294901760
      %5409 = vmatpush1.msra.mxu0 %v5408
      %v5410 = vand.u32 %v4844, 4294901760
      %v5411 = vsub.f32 %v4844, %v5410
      %v5412 = vand.u32 %v5411, 4294901760
      %v5413 = vsub.f32 %v5411, %v5412
      %v5414 = vand.u32 %v5413, 4294901760
      %5415 = vmatprep.subr.mxu0 %v5414
      %v5416 = vand.u32 %v4843, 4294901760
      %v5417 = vsub.f32 %v4843, %v5416
      %v5418 = vand.u32 %v5417, 4294901760
      %v5419 = vsub.f32 %v5417, %v5418
      %v5420 = vand.u32 %v5419, 4294901760
      %5421 = vmatpush1.msra.mxu0 %v5420
      %v5422 = vand.u32 %v4846, 4294901760
      %v5423 = vsub.f32 %v4846, %v5422
      %v5424 = vand.u32 %v5423, 4294901760
      %v5425 = vsub.f32 %v5423, %v5424
      %v5426 = vand.u32 %v5425, 4294901760
      %5427 = vmatprep.subr.mxu0 %v5426
      %v5428 = vand.u32 %v4845, 4294901760
      %v5429 = vsub.f32 %v4845, %v5428
      %v5430 = vand.u32 %v5429, 4294901760
      %v5431 = vsub.f32 %v5429, %v5430
      %v5432 = vand.u32 %v5431, 4294901760
      %5433 = vmatpush1.msra.mxu0 %v5432
      %v5434 = vand.u32 %v4848, 4294901760
      %v5435 = vsub.f32 %v4848, %v5434
      %v5436 = vand.u32 %v5435, 4294901760
      %v5437 = vsub.f32 %v5435, %v5436
      %v5438 = vand.u32 %v5437, 4294901760
      %5439 = vmatprep.subr.mxu0 %v5438
      %v5440 = vand.u32 %v4847, 4294901760
      %v5441 = vsub.f32 %v4847, %v5440
      %v5442 = vand.u32 %v5441, 4294901760
      %v5443 = vsub.f32 %v5441, %v5442
      %v5444 = vand.u32 %v5443, 4294901760
      %5445 = vmatpush1.msra.mxu0 %v5444
      %v5446 = vand.u32 %v4850, 4294901760
      %v5447 = vsub.f32 %v4850, %v5446
      %v5448 = vand.u32 %v5447, 4294901760
      %v5449 = vsub.f32 %v5447, %v5448
      %v5450 = vand.u32 %v5449, 4294901760
      %5451 = vmatprep.subr.mxu0 %v5450
      %v5452 = vand.u32 %v4849, 4294901760
      %v5453 = vsub.f32 %v4849, %v5452
      %v5454 = vand.u32 %v5453, 4294901760
      %v5455 = vsub.f32 %v5453, %v5454
      %v5456 = vand.u32 %v5455, 4294901760
      %5457 = vmatpush1.msra.mxu0 %v5456
      %v5458 = vand.u32 %v4852, 4294901760
      %v5459 = vsub.f32 %v4852, %v5458
      %v5460 = vand.u32 %v5459, 4294901760
      %v5461 = vsub.f32 %v5459, %v5460
      %v5462 = vand.u32 %v5461, 4294901760
      %5463 = vmatprep.subr.mxu0 %v5462
      %v5464 = vand.u32 %v4851, 4294901760
      %v5465 = vsub.f32 %v4851, %v5464
      %v5466 = vand.u32 %v5465, 4294901760
      %v5467 = vsub.f32 %v5465, %v5466
      %v5468 = vand.u32 %v5467, 4294901760
      %5469 = vmatpush1.msra.mxu0 %v5468
      %v5470 = vand.u32 %v4854, 4294901760
      %v5471 = vsub.f32 %v4854, %v5470
      %v5472 = vand.u32 %v5471, 4294901760
      %v5473 = vsub.f32 %v5471, %v5472
      %v5474 = vand.u32 %v5473, 4294901760
      %5475 = vmatprep.subr.mxu0 %v5474
      %v5476 = vand.u32 %v4853, 4294901760
      %v5477 = vsub.f32 %v4853, %v5476
      %v5478 = vand.u32 %v5477, 4294901760
      %v5479 = vsub.f32 %v5477, %v5478
      %v5480 = vand.u32 %v5479, 4294901760
      %5481 = vmatpush1.msra.mxu0 %v5480
      %v5482 = vand.u32 %v4856, 4294901760
      %v5483 = vsub.f32 %v4856, %v5482
      %v5484 = vand.u32 %v5483, 4294901760
      %v5485 = vsub.f32 %v5483, %v5484
      %v5486 = vand.u32 %v5485, 4294901760
      %5487 = vmatprep.subr.mxu0 %v5486
      %v5488 = vand.u32 %v4855, 4294901760
      %v5489 = vsub.f32 %v4855, %v5488
      %v5490 = vand.u32 %v5489, 4294901760
      %v5491 = vsub.f32 %v5489, %v5490
      %v5492 = vand.u32 %v5491, 4294901760
      %5493 = vmatpush1.msra.mxu0 %v5492
      %v5494 = vand.u32 %v4858, 4294901760
      %v5495 = vsub.f32 %v4858, %v5494
      %v5496 = vand.u32 %v5495, 4294901760
      %v5497 = vsub.f32 %v5495, %v5496
      %v5498 = vand.u32 %v5497, 4294901760
      %5499 = vmatprep.subr.mxu0 %v5498
      %v5500 = vand.u32 %v4857, 4294901760
      %v5501 = vsub.f32 %v4857, %v5500
      %v5502 = vand.u32 %v5501, 4294901760
      %v5503 = vsub.f32 %v5501, %v5502
      %v5504 = vand.u32 %v5503, 4294901760
      %5505 = vmatpush1.msra.mxu0 %v5504
      %v5506 = vand.u32 %v4860, 4294901760
      %v5507 = vsub.f32 %v4860, %v5506
      %v5508 = vand.u32 %v5507, 4294901760
      %v5509 = vsub.f32 %v5507, %v5508
      %v5510 = vand.u32 %v5509, 4294901760
      %5511 = vmatprep.subr.mxu0 %v5510
      %v5512 = vand.u32 %v4859, 4294901760
      %v5513 = vsub.f32 %v4859, %v5512
      %v5514 = vand.u32 %v5513, 4294901760
      %v5515 = vsub.f32 %v5513, %v5514
      %v5516 = vand.u32 %v5515, 4294901760
      %5517 = vmatpush1.msra.mxu0 %v5516
      %v5518 = vand.u32 %v4862, 4294901760
      %v5519 = vsub.f32 %v4862, %v5518
      %v5520 = vand.u32 %v5519, 4294901760
      %v5521 = vsub.f32 %v5519, %v5520
      %v5522 = vand.u32 %v5521, 4294901760
      %5523 = vmatprep.subr.mxu0 %v5522
      %v5524 = vand.u32 %v4861, 4294901760
      %v5525 = vsub.f32 %v4861, %v5524
      %v5526 = vand.u32 %v5525, 4294901760
      %v5527 = vsub.f32 %v5525, %v5526
      %v5528 = vand.u32 %v5527, 4294901760
      %5529 = vmatpush1.msra.mxu0 %v5528
      %v5530 = vand.u32 %v4864, 4294901760
      %v5531 = vsub.f32 %v4864, %v5530
      %v5532 = vand.u32 %v5531, 4294901760
      %v5533 = vsub.f32 %v5531, %v5532
      %v5534 = vand.u32 %v5533, 4294901760
      %5535 = vmatprep.subr.mxu0 %v5534
      %v5536 = vand.u32 %v4863, 4294901760
      %v5537 = vsub.f32 %v4863, %v5536
      %v5538 = vand.u32 %v5537, 4294901760
      %v5539 = vsub.f32 %v5537, %v5538
      %v5540 = vand.u32 %v5539, 4294901760
      %5541 = vmatpush1.msra.mxu0 %v5540
      %v5542 = vand.u32 %v4866, 4294901760
      %v5543 = vsub.f32 %v4866, %v5542
      %v5544 = vand.u32 %v5543, 4294901760
      %v5545 = vsub.f32 %v5543, %v5544
      %v5546 = vand.u32 %v5545, 4294901760
      %5547 = vmatprep.subr.mxu0 %v5546
      %v5548 = vand.u32 %v4865, 4294901760
      %v5549 = vsub.f32 %v4865, %v5548
      %v5550 = vand.u32 %v5549, 4294901760
      %v5551 = vsub.f32 %v5549, %v5550
      %v5552 = vand.u32 %v5551, 4294901760
      %5553 = vmatpush1.msra.mxu0 %v5552
      %v5554 = vand.u32 %v4868, 4294901760
      %v5555 = vsub.f32 %v4868, %v5554
      %v5556 = vand.u32 %v5555, 4294901760
      %v5557 = vsub.f32 %v5555, %v5556
      %v5558 = vand.u32 %v5557, 4294901760
      %5559 = vmatprep.subr.mxu0 %v5558
      %v5560 = vand.u32 %v4867, 4294901760
      %v5561 = vsub.f32 %v4867, %v5560
      %v5562 = vand.u32 %v5561, 4294901760
      %v5563 = vsub.f32 %v5561, %v5562
      %v5564 = vand.u32 %v5563, 4294901760
      %5565 = vmatpush1.msra.mxu0 %v5564
      %v5566 = vand.u32 %v4870, 4294901760
      %v5567 = vsub.f32 %v4870, %v5566
      %v5568 = vand.u32 %v5567, 4294901760
      %v5569 = vsub.f32 %v5567, %v5568
      %v5570 = vand.u32 %v5569, 4294901760
      %5571 = vmatprep.subr.mxu0 %v5570
      %v5572 = vand.u32 %v4869, 4294901760
      %v5573 = vsub.f32 %v4869, %v5572
      %v5574 = vand.u32 %v5573, 4294901760
      %v5575 = vsub.f32 %v5573, %v5574
      %v5576 = vand.u32 %v5575, 4294901760
      %5577 = vmatpush1.msra.mxu0 %v5576
      %v5578 = vand.u32 %v4872, 4294901760
      %v5579 = vsub.f32 %v4872, %v5578
      %v5580 = vand.u32 %v5579, 4294901760
      %v5581 = vsub.f32 %v5579, %v5580
      %v5582 = vand.u32 %v5581, 4294901760
      %5583 = vmatprep.subr.mxu0 %v5582
      %v5584 = vand.u32 %v4871, 4294901760
      %v5585 = vsub.f32 %v4871, %v5584
      %v5586 = vand.u32 %v5585, 4294901760
      %v5587 = vsub.f32 %v5585, %v5586
      %v5588 = vand.u32 %v5587, 4294901760
      %5589 = vmatpush1.msra.mxu0 %v5588
      %v5590 = vand.u32 %v4874, 4294901760
      %v5591 = vsub.f32 %v4874, %v5590
      %v5592 = vand.u32 %v5591, 4294901760
      %v5593 = vsub.f32 %v5591, %v5592
      %v5594 = vand.u32 %v5593, 4294901760
      %5595 = vmatprep.subr.mxu0 %v5594
      %v5596 = vand.u32 %v4873, 4294901760
      %v5597 = vsub.f32 %v4873, %v5596
      %v5598 = vand.u32 %v5597, 4294901760
      %v5599 = vsub.f32 %v5597, %v5598
      %v5600 = vand.u32 %v5599, 4294901760
      %5601 = vmatpush1.msra.mxu0 %v5600
      %v5602 = vand.u32 %v4876, 4294901760
      %v5603 = vsub.f32 %v4876, %v5602
      %v5604 = vand.u32 %v5603, 4294901760
      %v5605 = vsub.f32 %v5603, %v5604
      %v5606 = vand.u32 %v5605, 4294901760
      %5607 = vmatprep.subr.mxu0 %v5606
      %v5608 = vand.u32 %v4875, 4294901760
      %v5609 = vsub.f32 %v4875, %v5608
      %v5610 = vand.u32 %v5609, 4294901760
      %v5611 = vsub.f32 %v5609, %v5610
      %v5612 = vand.u32 %v5611, 4294901760
      %5613 = vmatpush1.msra.mxu0 %v5612
      %v5614 = vand.u32 %v4878, 4294901760
      %v5615 = vsub.f32 %v4878, %v5614
      %v5616 = vand.u32 %v5615, 4294901760
      %v5617 = vsub.f32 %v5615, %v5616
      %v5618 = vand.u32 %v5617, 4294901760
      %5619 = vmatprep.subr.mxu0 %v5618
      %v5620 = vand.u32 %v4877, 4294901760
      %v5621 = vsub.f32 %v4877, %v5620
      %v5622 = vand.u32 %v5621, 4294901760
      %v5623 = vsub.f32 %v5621, %v5622
      %v5624 = vand.u32 %v5623, 4294901760
      %5625 = vmatpush1.msra.mxu0 %v5624
      %v5626 = vand.u32 %v4880, 4294901760
      %v5627 = vsub.f32 %v4880, %v5626
      %v5628 = vand.u32 %v5627, 4294901760
      %v5629 = vsub.f32 %v5627, %v5628
      %v5630 = vand.u32 %v5629, 4294901760
      %5631 = vmatprep.subr.mxu0 %v5630
      %v5632 = vand.u32 %v4879, 4294901760
      %v5633 = vsub.f32 %v4879, %v5632
      %v5634 = vand.u32 %v5633, 4294901760
      %v5635 = vsub.f32 %v5633, %v5634
      %v5636 = vand.u32 %v5635, 4294901760
      %5637 = vmatpush1.msra.mxu0 %v5636
      %v5638 = vand.u32 %v4882, 4294901760
      %v5639 = vsub.f32 %v4882, %v5638
      %v5640 = vand.u32 %v5639, 4294901760
      %v5641 = vsub.f32 %v5639, %v5640
      %v5642 = vand.u32 %v5641, 4294901760
      %5643 = vmatprep.subr.mxu0 %v5642
      %v5644 = vand.u32 %v4881, 4294901760
      %v5645 = vsub.f32 %v4881, %v5644
      %v5646 = vand.u32 %v5645, 4294901760
      %v5647 = vsub.f32 %v5645, %v5646
      %v5648 = vand.u32 %v5647, 4294901760
      %5649 = vmatpush1.msra.mxu0 %v5648
      %v5650 = vand.u32 %v4884, 4294901760
      %v5651 = vsub.f32 %v4884, %v5650
      %v5652 = vand.u32 %v5651, 4294901760
      %v5653 = vsub.f32 %v5651, %v5652
      %v5654 = vand.u32 %v5653, 4294901760
      %5655 = vmatprep.subr.mxu0 %v5654
      %v5656 = vand.u32 %v4883, 4294901760
      %v5657 = vsub.f32 %v4883, %v5656
      %v5658 = vand.u32 %v5657, 4294901760
      %v5659 = vsub.f32 %v5657, %v5658
      %v5660 = vand.u32 %v5659, 4294901760
      %5661 = vmatpush1.msra.mxu0 %v5660
      %v5662 = vand.u32 %v4886, 4294901760
      %v5663 = vsub.f32 %v4886, %v5662
      %v5664 = vand.u32 %v5663, 4294901760
      %v5665 = vsub.f32 %v5663, %v5664
      %v5666 = vand.u32 %v5665, 4294901760
      %5667 = vmatprep.subr.mxu0 %v5666
      %v5668 = vand.u32 %v4885, 4294901760
      %v5669 = vsub.f32 %v4885, %v5668
      %v5670 = vand.u32 %v5669, 4294901760
      %v5671 = vsub.f32 %v5669, %v5670
      %v5672 = vand.u32 %v5671, 4294901760
      %5673 = vmatpush1.msra.mxu0 %v5672
      %v5674 = vand.u32 %v4888, 4294901760
      %v5675 = vsub.f32 %v4888, %v5674
      %v5676 = vand.u32 %v5675, 4294901760
      %v5677 = vsub.f32 %v5675, %v5676
      %v5678 = vand.u32 %v5677, 4294901760
      %5679 = vmatprep.subr.mxu0 %v5678
      %v5680 = vand.u32 %v4887, 4294901760
      %v5681 = vsub.f32 %v4887, %v5680
      %v5682 = vand.u32 %v5681, 4294901760
      %v5683 = vsub.f32 %v5681, %v5682
      %v5684 = vand.u32 %v5683, 4294901760
      %5685 = vmatpush1.msra.mxu0 %v5684
      %v5686 = vand.u32 %v4890, 4294901760
      %v5687 = vsub.f32 %v4890, %v5686
      %v5688 = vand.u32 %v5687, 4294901760
      %v5689 = vsub.f32 %v5687, %v5688
      %v5690 = vand.u32 %v5689, 4294901760
      %5691 = vmatprep.subr.mxu0 %v5690
      %v5692 = vand.u32 %v4889, 4294901760
      %v5693 = vsub.f32 %v4889, %v5692
      %v5694 = vand.u32 %v5693, 4294901760
      %v5695 = vsub.f32 %v5693, %v5694
      %v5696 = vand.u32 %v5695, 4294901760
      %5697 = vmatpush1.msra.mxu0 %v5696
      %v5698 = vand.u32 %v4892, 4294901760
      %v5699 = vsub.f32 %v4892, %v5698
      %v5700 = vand.u32 %v5699, 4294901760
      %v5701 = vsub.f32 %v5699, %v5700
      %v5702 = vand.u32 %v5701, 4294901760
      %5703 = vmatprep.subr.mxu0 %v5702
      %v5704 = vand.u32 %v4891, 4294901760
      %v5705 = vsub.f32 %v4891, %v5704
      %v5706 = vand.u32 %v5705, 4294901760
      %v5707 = vsub.f32 %v5705, %v5706
      %v5708 = vand.u32 %v5707, 4294901760
      %5709 = vmatpush1.msra.mxu0 %v5708
      %v5710 = vand.u32 %v4894, 4294901760
      %v5711 = vsub.f32 %v4894, %v5710
      %v5712 = vand.u32 %v5711, 4294901760
      %v5713 = vsub.f32 %v5711, %v5712
      %v5714 = vand.u32 %v5713, 4294901760
      %5715 = vmatprep.subr.mxu0 %v5714
      %v5716 = vand.u32 %v4893, 4294901760
      %v5717 = vsub.f32 %v4893, %v5716
      %v5718 = vand.u32 %v5717, 4294901760
      %v5719 = vsub.f32 %v5717, %v5718
      %v5720 = vand.u32 %v5719, 4294901760
      %5721 = vmatpush1.msra.mxu0 %v5720
      %v5722 = vand.u32 %v4896, 4294901760
      %v5723 = vsub.f32 %v4896, %v5722
      %v5724 = vand.u32 %v5723, 4294901760
      %v5725 = vsub.f32 %v5723, %v5724
      %v5726 = vand.u32 %v5725, 4294901760
      %5727 = vmatprep.subr.mxu0 %v5726
      %v5728 = vand.u32 %v4895, 4294901760
      %v5729 = vsub.f32 %v4895, %v5728
      %v5730 = vand.u32 %v5729, 4294901760
      %v5731 = vsub.f32 %v5729, %v5730
      %v5732 = vand.u32 %v5731, 4294901760
      %5733 = vmatpush1.msra.mxu0 %v5732
      %v5734 = vand.u32 %v4898, 4294901760
      %v5735 = vsub.f32 %v4898, %v5734
      %v5736 = vand.u32 %v5735, 4294901760
      %v5737 = vsub.f32 %v5735, %v5736
      %v5738 = vand.u32 %v5737, 4294901760
      %5739 = vmatprep.subr.mxu0 %v5738
      %v5740 = vand.u32 %v4897, 4294901760
      %v5741 = vsub.f32 %v4897, %v5740
      %v5742 = vand.u32 %v5741, 4294901760
      %v5743 = vsub.f32 %v5741, %v5742
      %v5744 = vand.u32 %v5743, 4294901760
      %5745 = vmatpush1.msra.mxu0 %v5744
      %v5746 = vand.u32 %v4900, 4294901760
      %v5747 = vsub.f32 %v4900, %v5746
      %v5748 = vand.u32 %v5747, 4294901760
      %v5749 = vsub.f32 %v5747, %v5748
      %v5750 = vand.u32 %v5749, 4294901760
      %5751 = vmatprep.subr.mxu0 %v5750
      %v5752 = vand.u32 %v4899, 4294901760
      %v5753 = vsub.f32 %v4899, %v5752
      %v5754 = vand.u32 %v5753, 4294901760
      %v5755 = vsub.f32 %v5753, %v5754
      %v5756 = vand.u32 %v5755, 4294901760
      %5757 = vmatpush1.msra.mxu0 %v5756
      %v5758 = vand.u32 %v4902, 4294901760
      %v5759 = vsub.f32 %v4902, %v5758
      %v5760 = vand.u32 %v5759, 4294901760
      %v5761 = vsub.f32 %v5759, %v5760
      %v5762 = vand.u32 %v5761, 4294901760
      %5763 = vmatprep.subr.mxu0 %v5762
      %v5764 = vand.u32 %v4901, 4294901760
      %v5765 = vsub.f32 %v4901, %v5764
      %v5766 = vand.u32 %v5765, 4294901760
      %v5767 = vsub.f32 %v5765, %v5766
      %v5768 = vand.u32 %v5767, 4294901760
      %5769 = vmatpush1.msra.mxu0 %v5768
      %v5770 = vand.u32 %v4904, 4294901760
      %v5771 = vsub.f32 %v4904, %v5770
      %v5772 = vand.u32 %v5771, 4294901760
      %v5773 = vsub.f32 %v5771, %v5772
      %v5774 = vand.u32 %v5773, 4294901760
      %5775 = vmatprep.subr.mxu0 %v5774
      %v5776 = vand.u32 %v4903, 4294901760
      %v5777 = vsub.f32 %v4903, %v5776
      %v5778 = vand.u32 %v5777, 4294901760
      %v5779 = vsub.f32 %v5777, %v5778
      %v5780 = vand.u32 %v5779, 4294901760
      %5781 = vmatpush1.msra.mxu0 %v5780
      %v5782 = vand.u32 %v4810, 4294901760
      %5783 = vmatprep.mubr.f32.mxu0 %v5782
      %v5784 = vand.u32 %v4809, 4294901760
      %5785 = vmatmul.mubr.f32.gmra.mrb[0].mxu0 %v5784
      %v5786 = vpop.f32.mrb[0].mxu0
      %v5787 = vadd.f32 %v5154, %v5786
      %v5788 = vpop.f32.mrb[0].mxu0
      %v5789 = vadd.f32 %v5156, %v5788
      %v5790 = vand.u32 %v4812, 4294901760
      %5791 = vmatprep.mubr.f32.mxu0 %v5790
      %v5792 = vand.u32 %v4811, 4294901760
      %5793 = vmatmul.mubr.f32.gmra.mrb[0].mxu0 %v5792
      %v5794 = vpop.f32.mrb[0].mxu0
      %v5795 = vadd.f32 %v5170, %v5794
      %v5796 = vpop.f32.mrb[0].mxu0
      %v5797 = vadd.f32 %v5172, %v5796
      %v5798 = vand.u32 %v4814, 4294901760
      %5799 = vmatprep.mubr.f32.mxu0 %v5798
      %v5800 = vand.u32 %v4813, 4294901760
      %5801 = vmatmul.mubr.f32.gmra.mrb[0].mxu0 %v5800
      %v5802 = vpop.f32.mrb[0].mxu0
      %v5803 = vadd.f32 %v5186, %v5802
      %v5804 = vpop.f32.mrb[0].mxu0
      %v5805 = vadd.f32 %v5188, %v5804
      %v5806 = vand.u32 %v4816, 4294901760
      %5807 = vmatprep.mubr.f32.mxu0 %v5806
      %v5808 = vand.u32 %v4815, 4294901760
      %5809 = vmatmul.mubr.f32.gmra.mrb[0].mxu0 %v5808
      %v5810 = vpop.f32.mrb[0].mxu0
      %v5811 = vadd.f32 %v5202, %v5810
      %v5812 = vpop.f32.mrb[0].mxu0
      %v5813 = vadd.f32 %v5204, %v5812
      %v5814 = vand.u32 %v4818, 4294901760
      %5815 = vmatprep.mubr.f32.mxu0 %v5814
      %v5816 = vand.u32 %v4817, 4294901760
      %5817 = vmatmul.mubr.f32.gmra.mrb[0].mxu0 %v5816
      %v5818 = vpop.f32.mrb[0].mxu0
      %v5819 = vadd.f32 %v5218, %v5818
      %v5820 = vpop.f32.mrb[0].mxu0
      %v5821 = vadd.f32 %v5220, %v5820
      %v5822 = vand.u32 %v4820, 4294901760
      %5823 = vmatprep.mubr.f32.mxu0 %v5822
      %v5824 = vand.u32 %v4819, 4294901760
      %5825 = vmatmul.mubr.f32.gmra.mrb[0].mxu0 %v5824
      %v5826 = vpop.f32.mrb[0].mxu0
      %v5827 = vadd.f32 %v5234, %v5826
      %v5828 = vpop.f32.mrb[0].mxu0
      %v5829 = vadd.f32 %v5236, %v5828
      %v5830 = vand.u32 %v4822, 4294901760
      %5831 = vmatprep.mubr.f32.mxu0 %v5830
      %v5832 = vand.u32 %v4821, 4294901760
      %5833 = vmatmul.mubr.f32.gmra.mrb[0].mxu0 %v5832
      %v5834 = vpop.f32.mrb[0].mxu0
      %v5835 = vadd.f32 %v5250, %v5834
      %v5836 = vpop.f32.mrb[0].mxu0
      %v5837 = vadd.f32 %v5252, %v5836
      %v5838 = vand.u32 %v4824, 4294901760
      %5839 = vmatprep.mubr.f32.mxu0 %v5838
      %v5840 = vand.u32 %v4823, 4294901760
      %5841 = vmatmul.mubr.f32.gmra.mrb[0].mxu0 %v5840
      %v5842 = vpop.f32.mrb[0].mxu0
      %v5843 = vadd.f32 %v5266, %v5842
      %v5844 = vpop.f32.mrb[0].mxu0
      %v5845 = vadd.f32 %v5268, %v5844
      %v5846 = vand.u32 %v4826, 4294901760
      %5847 = vmatprep.mubr.f32.mxu0 %v5846
      %v5848 = vand.u32 %v4825, 4294901760
      %5849 = vmatmul.mubr.f32.gmra.mrb[0].mxu0 %v5848
      %v5850 = vpop.f32.mrb[0].mxu0
      %v5851 = vadd.f32 %v5282, %v5850
      %v5852 = vpop.f32.mrb[0].mxu0
      %v5853 = vadd.f32 %v5284, %v5852
      %v5854 = vand.u32 %v4828, 4294901760
      %5855 = vmatprep.mubr.f32.mxu0 %v5854
      %v5856 = vand.u32 %v4827, 4294901760
      %5857 = vmatmul.mubr.f32.gmra.mrb[0].mxu0 %v5856
      %v5858 = vpop.f32.mrb[0].mxu0
      %v5859 = vadd.f32 %v5298, %v5858
      %v5860 = vpop.f32.mrb[0].mxu0
      %v5861 = vadd.f32 %v5300, %v5860
      %v5862 = vand.u32 %v4830, 4294901760
      %5863 = vmatprep.mubr.f32.mxu0 %v5862
      %v5864 = vand.u32 %v4829, 4294901760
      %5865 = vmatmul.mubr.f32.gmra.mrb[0].mxu0 %v5864
      %v5866 = vpop.f32.mrb[0].mxu0
      %v5867 = vadd.f32 %v5314, %v5866
      %v5868 = vpop.f32.mrb[0].mxu0
      %v5869 = vadd.f32 %v5316, %v5868
      %v5870 = vand.u32 %v4832, 4294901760
      %5871 = vmatprep.mubr.f32.mxu0 %v5870
      %v5872 = vand.u32 %v4831, 4294901760
      %5873 = vmatmul.mubr.f32.gmra.mrb[0].mxu0 %v5872
      %v5874 = vpop.f32.mrb[0].mxu0
      %v5875 = vadd.f32 %v5330, %v5874
      %v5876 = vpop.f32.mrb[0].mxu0
      %v5877 = vadd.f32 %v5332, %v5876
      %v5878 = vand.u32 %v4834, 4294901760
      %5879 = vmatprep.mubr.f32.mxu0 %v5878
      %v5880 = vand.u32 %v4833, 4294901760
      %5881 = vmatmul.mubr.f32.gmra.mrb[0].mxu0 %v5880
      %v5882 = vpop.f32.mrb[0].mxu0
      %v5883 = vadd.f32 %v5346, %v5882
      %v5884 = vpop.f32.mrb[0].mxu0
      %v5885 = vadd.f32 %v5348, %v5884
      %v5886 = vand.u32 %v4836, 4294901760
      %5887 = vmatprep.mubr.f32.mxu0 %v5886
      %v5888 = vand.u32 %v4835, 4294901760
      %5889 = vmatmul.mubr.f32.gmra.mrb[0].mxu0 %v5888
      %v5890 = vpop.f32.mrb[0].mxu0
      %v5891 = vadd.f32 %v5362, %v5890
      %v5892 = vpop.f32.mrb[0].mxu0
      %v5893 = vadd.f32 %v5364, %v5892
      %v5894 = vand.u32 %v4838, 4294901760
      %5895 = vmatprep.mubr.f32.mxu0 %v5894
      %v5896 = vand.u32 %v4837, 4294901760
      %5897 = vmatmul.mubr.f32.gmra.mrb[0].mxu0 %v5896
      %v5898 = vpop.f32.mrb[0].mxu0
      %v5899 = vadd.f32 %v5378, %v5898
      %v5900 = vpop.f32.mrb[0].mxu0
      %v5901 = vadd.f32 %v5380, %v5900
      %v5902 = vand.u32 %v4840, 4294901760
      %5903 = vmatprep.mubr.f32.mxu0 %v5902
      %v5904 = vand.u32 %v4839, 4294901760
      %5905 = vmatmul.mubr.f32.gmra.mrb[0].mxu0 %v5904
      %v5906 = vpop.f32.mrb[0].mxu0
      %v5907 = vadd.f32 %v5394, %v5906
      %v5908 = vpop.f32.mrb[0].mxu0
      %v5909 = vadd.f32 %v5396, %v5908
      %5910 = vdwg.mxu0
      %v5911 = vand.u32 %v4842, 4294901760
      %v5912 = vsub.f32 %v4842, %v5911
      %5913 = vmatprep.subr.mxu0 %v5912
      %v5914 = vand.u32 %v4841, 4294901760
      %v5915 = vsub.f32 %v4841, %v5914
      %5916 = vmatpush1.msra.mxu0 %v5915
      %v5917 = vand.u32 %v4844, 4294901760
      %v5918 = vsub.f32 %v4844, %v5917
      %5919 = vmatprep.subr.mxu0 %v5918
      %v5920 = vand.u32 %v4843, 4294901760
      %v5921 = vsub.f32 %v4843, %v5920
      %5922 = vmatpush1.msra.mxu0 %v5921
      %v5923 = vand.u32 %v4846, 4294901760
      %v5924 = vsub.f32 %v4846, %v5923
      %5925 = vmatprep.subr.mxu0 %v5924
      %v5926 = vand.u32 %v4845, 4294901760
      %v5927 = vsub.f32 %v4845, %v5926
      %5928 = vmatpush1.msra.mxu0 %v5927
      %v5929 = vand.u32 %v4848, 4294901760
      %v5930 = vsub.f32 %v4848, %v5929
      %5931 = vmatprep.subr.mxu0 %v5930
      %v5932 = vand.u32 %v4847, 4294901760
      %v5933 = vsub.f32 %v4847, %v5932
      %5934 = vmatpush1.msra.mxu0 %v5933
      %v5935 = vand.u32 %v4850, 4294901760
      %v5936 = vsub.f32 %v4850, %v5935
      %5937 = vmatprep.subr.mxu0 %v5936
      %v5938 = vand.u32 %v4849, 4294901760
      %v5939 = vsub.f32 %v4849, %v5938
      %5940 = vmatpush1.msra.mxu0 %v5939
      %v5941 = vand.u32 %v4852, 4294901760
      %v5942 = vsub.f32 %v4852, %v5941
      %5943 = vmatprep.subr.mxu0 %v5942
      %v5944 = vand.u32 %v4851, 4294901760
      %v5945 = vsub.f32 %v4851, %v5944
      %5946 = vmatpush1.msra.mxu0 %v5945
      %v5947 = vand.u32 %v4854, 4294901760
      %v5948 = vsub.f32 %v4854, %v5947
      %5949 = vmatprep.subr.mxu0 %v5948
      %v5950 = vand.u32 %v4853, 4294901760
      %v5951 = vsub.f32 %v4853, %v5950
      %5952 = vmatpush1.msra.mxu0 %v5951
      %v5953 = vand.u32 %v4856, 4294901760
      %v5954 = vsub.f32 %v4856, %v5953
      %5955 = vmatprep.subr.mxu0 %v5954
      %v5956 = vand.u32 %v4855, 4294901760
      %v5957 = vsub.f32 %v4855, %v5956
      %5958 = vmatpush1.msra.mxu0 %v5957
      %v5959 = vand.u32 %v4858, 4294901760
      %v5960 = vsub.f32 %v4858, %v5959
      %5961 = vmatprep.subr.mxu0 %v5960
      %v5962 = vand.u32 %v4857, 4294901760
      %v5963 = vsub.f32 %v4857, %v5962
      %5964 = vmatpush1.msra.mxu0 %v5963
      %v5965 = vand.u32 %v4860, 4294901760
      %v5966 = vsub.f32 %v4860, %v5965
      %5967 = vmatprep.subr.mxu0 %v5966
      %v5968 = vand.u32 %v4859, 4294901760
      %v5969 = vsub.f32 %v4859, %v5968
      %5970 = vmatpush1.msra.mxu0 %v5969
      %v5971 = vand.u32 %v4862, 4294901760
      %v5972 = vsub.f32 %v4862, %v5971
      %5973 = vmatprep.subr.mxu0 %v5972
      %v5974 = vand.u32 %v4861, 4294901760
      %v5975 = vsub.f32 %v4861, %v5974
      %5976 = vmatpush1.msra.mxu0 %v5975
      %v5977 = vand.u32 %v4864, 4294901760
      %v5978 = vsub.f32 %v4864, %v5977
      %5979 = vmatprep.subr.mxu0 %v5978
      %v5980 = vand.u32 %v4863, 4294901760
      %v5981 = vsub.f32 %v4863, %v5980
      %5982 = vmatpush1.msra.mxu0 %v5981
      %v5983 = vand.u32 %v4866, 4294901760
      %v5984 = vsub.f32 %v4866, %v5983
      %5985 = vmatprep.subr.mxu0 %v5984
      %v5986 = vand.u32 %v4865, 4294901760
      %v5987 = vsub.f32 %v4865, %v5986
      %5988 = vmatpush1.msra.mxu0 %v5987
      %v5989 = vand.u32 %v4868, 4294901760
      %v5990 = vsub.f32 %v4868, %v5989
      %5991 = vmatprep.subr.mxu0 %v5990
      %v5992 = vand.u32 %v4867, 4294901760
      %v5993 = vsub.f32 %v4867, %v5992
      %5994 = vmatpush1.msra.mxu0 %v5993
      %v5995 = vand.u32 %v4870, 4294901760
      %v5996 = vsub.f32 %v4870, %v5995
      %5997 = vmatprep.subr.mxu0 %v5996
      %v5998 = vand.u32 %v4869, 4294901760
      %v5999 = vsub.f32 %v4869, %v5998
      %6000 = vmatpush1.msra.mxu0 %v5999
      %v6001 = vand.u32 %v4872, 4294901760
      %v6002 = vsub.f32 %v4872, %v6001
      %6003 = vmatprep.subr.mxu0 %v6002
      %v6004 = vand.u32 %v4871, 4294901760
      %v6005 = vsub.f32 %v4871, %v6004
      %6006 = vmatpush1.msra.mxu0 %v6005
      %v6007 = vand.u32 %v4874, 4294901760
      %v6008 = vsub.f32 %v4874, %v6007
      %6009 = vmatprep.subr.mxu0 %v6008
      %v6010 = vand.u32 %v4873, 4294901760
      %v6011 = vsub.f32 %v4873, %v6010
      %6012 = vmatpush1.msra.mxu0 %v6011
      %v6013 = vand.u32 %v4876, 4294901760
      %v6014 = vsub.f32 %v4876, %v6013
      %6015 = vmatprep.subr.mxu0 %v6014
      %v6016 = vand.u32 %v4875, 4294901760
      %v6017 = vsub.f32 %v4875, %v6016
      %6018 = vmatpush1.msra.mxu0 %v6017
      %v6019 = vand.u32 %v4878, 4294901760
      %v6020 = vsub.f32 %v4878, %v6019
      %6021 = vmatprep.subr.mxu0 %v6020
      %v6022 = vand.u32 %v4877, 4294901760
      %v6023 = vsub.f32 %v4877, %v6022
      %6024 = vmatpush1.msra.mxu0 %v6023
      %v6025 = vand.u32 %v4880, 4294901760
      %v6026 = vsub.f32 %v4880, %v6025
      %6027 = vmatprep.subr.mxu0 %v6026
      %v6028 = vand.u32 %v4879, 4294901760
      %v6029 = vsub.f32 %v4879, %v6028
      %6030 = vmatpush1.msra.mxu0 %v6029
      %v6031 = vand.u32 %v4882, 4294901760
      %v6032 = vsub.f32 %v4882, %v6031
      %6033 = vmatprep.subr.mxu0 %v6032
      %v6034 = vand.u32 %v4881, 4294901760
      %v6035 = vsub.f32 %v4881, %v6034
      %6036 = vmatpush1.msra.mxu0 %v6035
      %v6037 = vand.u32 %v4884, 4294901760
      %v6038 = vsub.f32 %v4884, %v6037
      %6039 = vmatprep.subr.mxu0 %v6038
      %v6040 = vand.u32 %v4883, 4294901760
      %v6041 = vsub.f32 %v4883, %v6040
      %6042 = vmatpush1.msra.mxu0 %v6041
      %v6043 = vand.u32 %v4886, 4294901760
      %v6044 = vsub.f32 %v4886, %v6043
      %6045 = vmatprep.subr.mxu0 %v6044
      %v6046 = vand.u32 %v4885, 4294901760
      %v6047 = vsub.f32 %v4885, %v6046
      %6048 = vmatpush1.msra.mxu0 %v6047
      %v6049 = vand.u32 %v4888, 4294901760
      %v6050 = vsub.f32 %v4888, %v6049
      %6051 = vmatprep.subr.mxu0 %v6050
      %v6052 = vand.u32 %v4887, 4294901760
      %v6053 = vsub.f32 %v4887, %v6052
      %6054 = vmatpush1.msra.mxu0 %v6053
      %v6055 = vand.u32 %v4890, 4294901760
      %v6056 = vsub.f32 %v4890, %v6055
      %6057 = vmatprep.subr.mxu0 %v6056
      %v6058 = vand.u32 %v4889, 4294901760
      %v6059 = vsub.f32 %v4889, %v6058
      %6060 = vmatpush1.msra.mxu0 %v6059
      %v6061 = vand.u32 %v4892, 4294901760
      %v6062 = vsub.f32 %v4892, %v6061
      %6063 = vmatprep.subr.mxu0 %v6062
      %v6064 = vand.u32 %v4891, 4294901760
      %v6065 = vsub.f32 %v4891, %v6064
      %6066 = vmatpush1.msra.mxu0 %v6065
      %v6067 = vand.u32 %v4894, 4294901760
      %v6068 = vsub.f32 %v4894, %v6067
      %6069 = vmatprep.subr.mxu0 %v6068
      %v6070 = vand.u32 %v4893, 4294901760
      %v6071 = vsub.f32 %v4893, %v6070
      %6072 = vmatpush1.msra.mxu0 %v6071
      %v6073 = vand.u32 %v4896, 4294901760
      %v6074 = vsub.f32 %v4896, %v6073
      %6075 = vmatprep.subr.mxu0 %v6074
      %v6076 = vand.u32 %v4895, 4294901760
      %v6077 = vsub.f32 %v4895, %v6076
      %6078 = vmatpush1.msra.mxu0 %v6077
      %v6079 = vand.u32 %v4898, 4294901760
      %v6080 = vsub.f32 %v4898, %v6079
      %6081 = vmatprep.subr.mxu0 %v6080
      %v6082 = vand.u32 %v4897, 4294901760
      %v6083 = vsub.f32 %v4897, %v6082
      %6084 = vmatpush1.msra.mxu0 %v6083
      %v6085 = vand.u32 %v4900, 4294901760
      %v6086 = vsub.f32 %v4900, %v6085
      %6087 = vmatprep.subr.mxu0 %v6086
      %v6088 = vand.u32 %v4899, 4294901760
      %v6089 = vsub.f32 %v4899, %v6088
      %6090 = vmatpush1.msra.mxu0 %v6089
      %v6091 = vand.u32 %v4902, 4294901760
      %v6092 = vsub.f32 %v4902, %v6091
      %6093 = vmatprep.subr.mxu0 %v6092
      %v6094 = vand.u32 %v4901, 4294901760
      %v6095 = vsub.f32 %v4901, %v6094
      %6096 = vmatpush1.msra.mxu0 %v6095
      %v6097 = vand.u32 %v4904, 4294901760
      %v6098 = vsub.f32 %v4904, %v6097
      %6099 = vmatprep.subr.mxu0 %v6098
      %v6100 = vand.u32 %v4903, 4294901760
      %v6101 = vsub.f32 %v4903, %v6100
      %6102 = vmatpush1.msra.mxu0 %v6101
      %v6103 = vand.u32 %v4810, 4294901760
      %v6104 = vsub.f32 %v4810, %v6103
      %6105 = vmatprep.mubr.f32.mxu0 %v6104
      %v6106 = vand.u32 %v4809, 4294901760
      %v6107 = vsub.f32 %v4809, %v6106
      %6108 = vmatmul.mubr.f32.gmra.mrb[0].mxu0 %v6107
      %v6109 = vpop.f32.mrb[0].mxu0
      %v6110 = vadd.f32 %v5787, %v6109
      %v6111 = vpop.f32.mrb[0].mxu0
      %v6112 = vadd.f32 %v5789, %v6111
      %v6113 = vand.u32 %v4812, 4294901760
      %v6114 = vsub.f32 %v4812, %v6113
      %6115 = vmatprep.mubr.f32.mxu0 %v6114
      %v6116 = vand.u32 %v4811, 4294901760
      %v6117 = vsub.f32 %v4811, %v6116
      %6118 = vmatmul.mubr.f32.gmra.mrb[0].mxu0 %v6117
      %v6119 = vpop.f32.mrb[0].mxu0
      %v6120 = vadd.f32 %v5795, %v6119
      %v6121 = vpop.f32.mrb[0].mxu0
      %v6122 = vadd.f32 %v5797, %v6121
      %v6123 = vand.u32 %v4814, 4294901760
      %v6124 = vsub.f32 %v4814, %v6123
      %6125 = vmatprep.mubr.f32.mxu0 %v6124
      %v6126 = vand.u32 %v4813, 4294901760
      %v6127 = vsub.f32 %v4813, %v6126
      %6128 = vmatmul.mubr.f32.gmra.mrb[0].mxu0 %v6127
      %v6129 = vpop.f32.mrb[0].mxu0
      %v6130 = vadd.f32 %v5803, %v6129
      %v6131 = vpop.f32.mrb[0].mxu0
      %v6132 = vadd.f32 %v5805, %v6131
      %v6133 = vand.u32 %v4816, 4294901760
      %v6134 = vsub.f32 %v4816, %v6133
      %6135 = vmatprep.mubr.f32.mxu0 %v6134
      %v6136 = vand.u32 %v4815, 4294901760
      %v6137 = vsub.f32 %v4815, %v6136
      %6138 = vmatmul.mubr.f32.gmra.mrb[0].mxu0 %v6137
      %v6139 = vpop.f32.mrb[0].mxu0
      %v6140 = vadd.f32 %v5811, %v6139
      %v6141 = vpop.f32.mrb[0].mxu0
      %v6142 = vadd.f32 %v5813, %v6141
      %v6143 = vand.u32 %v4818, 4294901760
      %v6144 = vsub.f32 %v4818, %v6143
      %6145 = vmatprep.mubr.f32.mxu0 %v6144
      %v6146 = vand.u32 %v4817, 4294901760
      %v6147 = vsub.f32 %v4817, %v6146
      %6148 = vmatmul.mubr.f32.gmra.mrb[0].mxu0 %v6147
      %v6149 = vpop.f32.mrb[0].mxu0
      %v6150 = vadd.f32 %v5819, %v6149
      %v6151 = vpop.f32.mrb[0].mxu0
      %v6152 = vadd.f32 %v5821, %v6151
      %v6153 = vand.u32 %v4820, 4294901760
      %v6154 = vsub.f32 %v4820, %v6153
      %6155 = vmatprep.mubr.f32.mxu0 %v6154
      %v6156 = vand.u32 %v4819, 4294901760
      %v6157 = vsub.f32 %v4819, %v6156
      %6158 = vmatmul.mubr.f32.gmra.mrb[0].mxu0 %v6157
      %v6159 = vpop.f32.mrb[0].mxu0
      %v6160 = vadd.f32 %v5827, %v6159
      %v6161 = vpop.f32.mrb[0].mxu0
      %v6162 = vadd.f32 %v5829, %v6161
      %v6163 = vand.u32 %v4822, 4294901760
      %v6164 = vsub.f32 %v4822, %v6163
      %6165 = vmatprep.mubr.f32.mxu0 %v6164
      %v6166 = vand.u32 %v4821, 4294901760
      %v6167 = vsub.f32 %v4821, %v6166
      %6168 = vmatmul.mubr.f32.gmra.mrb[0].mxu0 %v6167
      %v6169 = vpop.f32.mrb[0].mxu0
      %v6170 = vadd.f32 %v5835, %v6169
      %v6171 = vpop.f32.mrb[0].mxu0
      %v6172 = vadd.f32 %v5837, %v6171
      %v6173 = vand.u32 %v4824, 4294901760
      %v6174 = vsub.f32 %v4824, %v6173
      %6175 = vmatprep.mubr.f32.mxu0 %v6174
      %v6176 = vand.u32 %v4823, 4294901760
      %v6177 = vsub.f32 %v4823, %v6176
      %6178 = vmatmul.mubr.f32.gmra.mrb[0].mxu0 %v6177
      %v6179 = vpop.f32.mrb[0].mxu0
      %v6180 = vadd.f32 %v5843, %v6179
      %v6181 = vpop.f32.mrb[0].mxu0
      %v6182 = vadd.f32 %v5845, %v6181
      %v6183 = vand.u32 %v4826, 4294901760
      %v6184 = vsub.f32 %v4826, %v6183
      %6185 = vmatprep.mubr.f32.mxu0 %v6184
      %v6186 = vand.u32 %v4825, 4294901760
      %v6187 = vsub.f32 %v4825, %v6186
      %6188 = vmatmul.mubr.f32.gmra.mrb[0].mxu0 %v6187
      %v6189 = vpop.f32.mrb[0].mxu0
      %v6190 = vadd.f32 %v5851, %v6189
      %v6191 = vpop.f32.mrb[0].mxu0
      %v6192 = vadd.f32 %v5853, %v6191
      %v6193 = vand.u32 %v4828, 4294901760
      %v6194 = vsub.f32 %v4828, %v6193
      %6195 = vmatprep.mubr.f32.mxu0 %v6194
      %v6196 = vand.u32 %v4827, 4294901760
      %v6197 = vsub.f32 %v4827, %v6196
      %6198 = vmatmul.mubr.f32.gmra.mrb[0].mxu0 %v6197
      %v6199 = vpop.f32.mrb[0].mxu0
      %v6200 = vadd.f32 %v5859, %v6199
      %v6201 = vpop.f32.mrb[0].mxu0
      %v6202 = vadd.f32 %v5861, %v6201
      %v6203 = vand.u32 %v4830, 4294901760
      %v6204 = vsub.f32 %v4830, %v6203
      %6205 = vmatprep.mubr.f32.mxu0 %v6204
      %v6206 = vand.u32 %v4829, 4294901760
      %v6207 = vsub.f32 %v4829, %v6206
      %6208 = vmatmul.mubr.f32.gmra.mrb[0].mxu0 %v6207
      %v6209 = vpop.f32.mrb[0].mxu0
      %v6210 = vadd.f32 %v5867, %v6209
      %v6211 = vpop.f32.mrb[0].mxu0
      %v6212 = vadd.f32 %v5869, %v6211
      %v6213 = vand.u32 %v4832, 4294901760
      %v6214 = vsub.f32 %v4832, %v6213
      %6215 = vmatprep.mubr.f32.mxu0 %v6214
      %v6216 = vand.u32 %v4831, 4294901760
      %v6217 = vsub.f32 %v4831, %v6216
      %6218 = vmatmul.mubr.f32.gmra.mrb[0].mxu0 %v6217
      %v6219 = vpop.f32.mrb[0].mxu0
      %v6220 = vadd.f32 %v5875, %v6219
      %v6221 = vpop.f32.mrb[0].mxu0
      %v6222 = vadd.f32 %v5877, %v6221
      %v6223 = vand.u32 %v4834, 4294901760
      %v6224 = vsub.f32 %v4834, %v6223
      %6225 = vmatprep.mubr.f32.mxu0 %v6224
      %v6226 = vand.u32 %v4833, 4294901760
      %v6227 = vsub.f32 %v4833, %v6226
      %6228 = vmatmul.mubr.f32.gmra.mrb[0].mxu0 %v6227
      %v6229 = vpop.f32.mrb[0].mxu0
      %v6230 = vadd.f32 %v5883, %v6229
      %v6231 = vpop.f32.mrb[0].mxu0
      %v6232 = vadd.f32 %v5885, %v6231
      %v6233 = vand.u32 %v4836, 4294901760
      %v6234 = vsub.f32 %v4836, %v6233
      %6235 = vmatprep.mubr.f32.mxu0 %v6234
      %v6236 = vand.u32 %v4835, 4294901760
      %v6237 = vsub.f32 %v4835, %v6236
      %6238 = vmatmul.mubr.f32.gmra.mrb[0].mxu0 %v6237
      %v6239 = vpop.f32.mrb[0].mxu0
      %v6240 = vadd.f32 %v5891, %v6239
      %v6241 = vpop.f32.mrb[0].mxu0
      %v6242 = vadd.f32 %v5893, %v6241
      %v6243 = vand.u32 %v4838, 4294901760
      %v6244 = vsub.f32 %v4838, %v6243
      %6245 = vmatprep.mubr.f32.mxu0 %v6244
      %v6246 = vand.u32 %v4837, 4294901760
      %v6247 = vsub.f32 %v4837, %v6246
      %6248 = vmatmul.mubr.f32.gmra.mrb[0].mxu0 %v6247
      %v6249 = vpop.f32.mrb[0].mxu0
      %v6250 = vadd.f32 %v5899, %v6249
      %v6251 = vpop.f32.mrb[0].mxu0
      %v6252 = vadd.f32 %v5901, %v6251
      %v6253 = vand.u32 %v4840, 4294901760
      %v6254 = vsub.f32 %v4840, %v6253
      %6255 = vmatprep.mubr.f32.mxu0 %v6254
      %v6256 = vand.u32 %v4839, 4294901760
      %v6257 = vsub.f32 %v4839, %v6256
      %6258 = vmatmul.mubr.f32.gmra.mrb[0].mxu0 %v6257
      %v6259 = vpop.f32.mrb[0].mxu0
      %v6260 = vadd.f32 %v5907, %v6259
      %v6261 = vpop.f32.mrb[0].mxu0
      %v6262 = vadd.f32 %v5909, %v6261
      %6263 = vdwg.mxu0
      %v6264 = vand.u32 %v4842, 4294901760
      %6265 = vmatprep.subr.mxu0 %v6264
      %v6266 = vand.u32 %v4841, 4294901760
      %6267 = vmatpush1.msra.mxu0 %v6266
      %v6268 = vand.u32 %v4844, 4294901760
      %6269 = vmatprep.subr.mxu0 %v6268
      %v6270 = vand.u32 %v4843, 4294901760
      %6271 = vmatpush1.msra.mxu0 %v6270
      %v6272 = vand.u32 %v4846, 4294901760
      %6273 = vmatprep.subr.mxu0 %v6272
      %v6274 = vand.u32 %v4845, 4294901760
      %6275 = vmatpush1.msra.mxu0 %v6274
      %v6276 = vand.u32 %v4848, 4294901760
      %6277 = vmatprep.subr.mxu0 %v6276
      %v6278 = vand.u32 %v4847, 4294901760
      %6279 = vmatpush1.msra.mxu0 %v6278
      %v6280 = vand.u32 %v4850, 4294901760
      %6281 = vmatprep.subr.mxu0 %v6280
      %v6282 = vand.u32 %v4849, 4294901760
      %6283 = vmatpush1.msra.mxu0 %v6282
      %v6284 = vand.u32 %v4852, 4294901760
      %6285 = vmatprep.subr.mxu0 %v6284
      %v6286 = vand.u32 %v4851, 4294901760
      %6287 = vmatpush1.msra.mxu0 %v6286
      %v6288 = vand.u32 %v4854, 4294901760
      %6289 = vmatprep.subr.mxu0 %v6288
      %v6290 = vand.u32 %v4853, 4294901760
      %6291 = vmatpush1.msra.mxu0 %v6290
      %v6292 = vand.u32 %v4856, 4294901760
      %6293 = vmatprep.subr.mxu0 %v6292
      %v6294 = vand.u32 %v4855, 4294901760
      %6295 = vmatpush1.msra.mxu0 %v6294
      %v6296 = vand.u32 %v4858, 4294901760
      %6297 = vmatprep.subr.mxu0 %v6296
      %v6298 = vand.u32 %v4857, 4294901760
      %6299 = vmatpush1.msra.mxu0 %v6298
      %v6300 = vand.u32 %v4860, 4294901760
      %6301 = vmatprep.subr.mxu0 %v6300
      %v6302 = vand.u32 %v4859, 4294901760
      %6303 = vmatpush1.msra.mxu0 %v6302
      %v6304 = vand.u32 %v4862, 4294901760
      %6305 = vmatprep.subr.mxu0 %v6304
      %v6306 = vand.u32 %v4861, 4294901760
      %6307 = vmatpush1.msra.mxu0 %v6306
      %v6308 = vand.u32 %v4864, 4294901760
      %6309 = vmatprep.subr.mxu0 %v6308
      %v6310 = vand.u32 %v4863, 4294901760
      %6311 = vmatpush1.msra.mxu0 %v6310
      %v6312 = vand.u32 %v4866, 4294901760
      %6313 = vmatprep.subr.mxu0 %v6312
      %v6314 = vand.u32 %v4865, 4294901760
      %6315 = vmatpush1.msra.mxu0 %v6314
      %v6316 = vand.u32 %v4868, 4294901760
      %6317 = vmatprep.subr.mxu0 %v6316
      %v6318 = vand.u32 %v4867, 4294901760
      %6319 = vmatpush1.msra.mxu0 %v6318
      %v6320 = vand.u32 %v4870, 4294901760
      %6321 = vmatprep.subr.mxu0 %v6320
      %v6322 = vand.u32 %v4869, 4294901760
      %6323 = vmatpush1.msra.mxu0 %v6322
      %v6324 = vand.u32 %v4872, 4294901760
      %6325 = vmatprep.subr.mxu0 %v6324
      %v6326 = vand.u32 %v4871, 4294901760
      %6327 = vmatpush1.msra.mxu0 %v6326
      %v6328 = vand.u32 %v4874, 4294901760
      %6329 = vmatprep.subr.mxu0 %v6328
      %v6330 = vand.u32 %v4873, 4294901760
      %6331 = vmatpush1.msra.mxu0 %v6330
      %v6332 = vand.u32 %v4876, 4294901760
      %6333 = vmatprep.subr.mxu0 %v6332
      %v6334 = vand.u32 %v4875, 4294901760
      %6335 = vmatpush1.msra.mxu0 %v6334
      %v6336 = vand.u32 %v4878, 4294901760
      %6337 = vmatprep.subr.mxu0 %v6336
      %v6338 = vand.u32 %v4877, 4294901760
      %6339 = vmatpush1.msra.mxu0 %v6338
      %v6340 = vand.u32 %v4880, 4294901760
      %6341 = vmatprep.subr.mxu0 %v6340
      %v6342 = vand.u32 %v4879, 4294901760
      %6343 = vmatpush1.msra.mxu0 %v6342
      %v6344 = vand.u32 %v4882, 4294901760
      %6345 = vmatprep.subr.mxu0 %v6344
      %v6346 = vand.u32 %v4881, 4294901760
      %6347 = vmatpush1.msra.mxu0 %v6346
      %v6348 = vand.u32 %v4884, 4294901760
      %6349 = vmatprep.subr.mxu0 %v6348
      %v6350 = vand.u32 %v4883, 4294901760
      %6351 = vmatpush1.msra.mxu0 %v6350
      %v6352 = vand.u32 %v4886, 4294901760
      %6353 = vmatprep.subr.mxu0 %v6352
      %v6354 = vand.u32 %v4885, 4294901760
      %6355 = vmatpush1.msra.mxu0 %v6354
      %v6356 = vand.u32 %v4888, 4294901760
      %6357 = vmatprep.subr.mxu0 %v6356
      %v6358 = vand.u32 %v4887, 4294901760
      %6359 = vmatpush1.msra.mxu0 %v6358
      %v6360 = vand.u32 %v4890, 4294901760
      %6361 = vmatprep.subr.mxu0 %v6360
      %v6362 = vand.u32 %v4889, 4294901760
      %6363 = vmatpush1.msra.mxu0 %v6362
      %v6364 = vand.u32 %v4892, 4294901760
      %6365 = vmatprep.subr.mxu0 %v6364
      %v6366 = vand.u32 %v4891, 4294901760
      %6367 = vmatpush1.msra.mxu0 %v6366
      %v6368 = vand.u32 %v4894, 4294901760
      %6369 = vmatprep.subr.mxu0 %v6368
      %v6370 = vand.u32 %v4893, 4294901760
      %6371 = vmatpush1.msra.mxu0 %v6370
      %v6372 = vand.u32 %v4896, 4294901760
      %6373 = vmatprep.subr.mxu0 %v6372
      %v6374 = vand.u32 %v4895, 4294901760
      %6375 = vmatpush1.msra.mxu0 %v6374
      %v6376 = vand.u32 %v4898, 4294901760
      %6377 = vmatprep.subr.mxu0 %v6376
      %v6378 = vand.u32 %v4897, 4294901760
      %6379 = vmatpush1.msra.mxu0 %v6378
      %v6380 = vand.u32 %v4900, 4294901760
      %6381 = vmatprep.subr.mxu0 %v6380
      %v6382 = vand.u32 %v4899, 4294901760
      %6383 = vmatpush1.msra.mxu0 %v6382
      %v6384 = vand.u32 %v4902, 4294901760
      %6385 = vmatprep.subr.mxu0 %v6384
      %v6386 = vand.u32 %v4901, 4294901760
      %6387 = vmatpush1.msra.mxu0 %v6386
      %v6388 = vand.u32 %v4904, 4294901760
      %6389 = vmatprep.subr.mxu0 %v6388
      %v6390 = vand.u32 %v4903, 4294901760
      %6391 = vmatpush1.msra.mxu0 %v6390
      %v6392 = vand.u32 %v4810, 4294901760
      %v6393 = vsub.f32 %v4810, %v6392
      %v6394 = vand.u32 %v6393, 4294901760
      %6395 = vmatprep.mubr.f32.mxu0 %v6394
      %v6396 = vand.u32 %v4809, 4294901760
      %v6397 = vsub.f32 %v4809, %v6396
      %v6398 = vand.u32 %v6397, 4294901760
      %6399 = vmatmul.mubr.f32.gmra.mrb[0].mxu0 %v6398
      %v6400 = vpop.f32.mrb[0].mxu0
      %v6401 = vadd.f32 %v6110, %v6400
      %v6402 = vpop.f32.mrb[0].mxu0
      %v6403 = vadd.f32 %v6112, %v6402
      %v6404 = vand.u32 %v4812, 4294901760
      %v6405 = vsub.f32 %v4812, %v6404
      %v6406 = vand.u32 %v6405, 4294901760
      %6407 = vmatprep.mubr.f32.mxu0 %v6406
      %v6408 = vand.u32 %v4811, 4294901760
      %v6409 = vsub.f32 %v4811, %v6408
      %v6410 = vand.u32 %v6409, 4294901760
      %6411 = vmatmul.mubr.f32.gmra.mrb[0].mxu0 %v6410
      %v6412 = vpop.f32.mrb[0].mxu0
      %v6413 = vadd.f32 %v6120, %v6412
      %v6414 = vpop.f32.mrb[0].mxu0
      %v6415 = vadd.f32 %v6122, %v6414
      %v6416 = vand.u32 %v4814, 4294901760
      %v6417 = vsub.f32 %v4814, %v6416
      %v6418 = vand.u32 %v6417, 4294901760
      %6419 = vmatprep.mubr.f32.mxu0 %v6418
      %v6420 = vand.u32 %v4813, 4294901760
      %v6421 = vsub.f32 %v4813, %v6420
      %v6422 = vand.u32 %v6421, 4294901760
      %6423 = vmatmul.mubr.f32.gmra.mrb[0].mxu0 %v6422
      %v6424 = vpop.f32.mrb[0].mxu0
      %v6425 = vadd.f32 %v6130, %v6424
      %v6426 = vpop.f32.mrb[0].mxu0
      %v6427 = vadd.f32 %v6132, %v6426
      %v6428 = vand.u32 %v4816, 4294901760
      %v6429 = vsub.f32 %v4816, %v6428
      %v6430 = vand.u32 %v6429, 4294901760
      %6431 = vmatprep.mubr.f32.mxu0 %v6430
      %v6432 = vand.u32 %v4815, 4294901760
      %v6433 = vsub.f32 %v4815, %v6432
      %v6434 = vand.u32 %v6433, 4294901760
      %6435 = vmatmul.mubr.f32.gmra.mrb[0].mxu0 %v6434
      %v6436 = vpop.f32.mrb[0].mxu0
      %v6437 = vadd.f32 %v6140, %v6436
      %v6438 = vpop.f32.mrb[0].mxu0
      %v6439 = vadd.f32 %v6142, %v6438
      %v6440 = vand.u32 %v4818, 4294901760
      %v6441 = vsub.f32 %v4818, %v6440
      %v6442 = vand.u32 %v6441, 4294901760
      %6443 = vmatprep.mubr.f32.mxu0 %v6442
      %v6444 = vand.u32 %v4817, 4294901760
      %v6445 = vsub.f32 %v4817, %v6444
      %v6446 = vand.u32 %v6445, 4294901760
      %6447 = vmatmul.mubr.f32.gmra.mrb[0].mxu0 %v6446
      %v6448 = vpop.f32.mrb[0].mxu0
      %v6449 = vadd.f32 %v6150, %v6448
      %v6450 = vpop.f32.mrb[0].mxu0
      %v6451 = vadd.f32 %v6152, %v6450
      %v6452 = vand.u32 %v4820, 4294901760
      %v6453 = vsub.f32 %v4820, %v6452
      %v6454 = vand.u32 %v6453, 4294901760
      %6455 = vmatprep.mubr.f32.mxu0 %v6454
      %v6456 = vand.u32 %v4819, 4294901760
      %v6457 = vsub.f32 %v4819, %v6456
      %v6458 = vand.u32 %v6457, 4294901760
      %6459 = vmatmul.mubr.f32.gmra.mrb[0].mxu0 %v6458
      %v6460 = vpop.f32.mrb[0].mxu0
      %v6461 = vadd.f32 %v6160, %v6460
      %v6462 = vpop.f32.mrb[0].mxu0
      %v6463 = vadd.f32 %v6162, %v6462
      %v6464 = vand.u32 %v4822, 4294901760
      %v6465 = vsub.f32 %v4822, %v6464
      %v6466 = vand.u32 %v6465, 4294901760
      %6467 = vmatprep.mubr.f32.mxu0 %v6466
      %v6468 = vand.u32 %v4821, 4294901760
      %v6469 = vsub.f32 %v4821, %v6468
      %v6470 = vand.u32 %v6469, 4294901760
      %6471 = vmatmul.mubr.f32.gmra.mrb[0].mxu0 %v6470
      %v6472 = vpop.f32.mrb[0].mxu0
      %v6473 = vadd.f32 %v6170, %v6472
      %v6474 = vpop.f32.mrb[0].mxu0
      %v6475 = vadd.f32 %v6172, %v6474
      %v6476 = vand.u32 %v4824, 4294901760
      %v6477 = vsub.f32 %v4824, %v6476
      %v6478 = vand.u32 %v6477, 4294901760
      %6479 = vmatprep.mubr.f32.mxu0 %v6478
      %v6480 = vand.u32 %v4823, 4294901760
      %v6481 = vsub.f32 %v4823, %v6480
      %v6482 = vand.u32 %v6481, 4294901760
      %6483 = vmatmul.mubr.f32.gmra.mrb[0].mxu0 %v6482
      %v6484 = vpop.f32.mrb[0].mxu0
      %v6485 = vadd.f32 %v6180, %v6484
      %v6486 = vpop.f32.mrb[0].mxu0
      %v6487 = vadd.f32 %v6182, %v6486
      %v6488 = vand.u32 %v4826, 4294901760
      %v6489 = vsub.f32 %v4826, %v6488
      %v6490 = vand.u32 %v6489, 4294901760
      %6491 = vmatprep.mubr.f32.mxu0 %v6490
      %v6492 = vand.u32 %v4825, 4294901760
      %v6493 = vsub.f32 %v4825, %v6492
      %v6494 = vand.u32 %v6493, 4294901760
      %6495 = vmatmul.mubr.f32.gmra.mrb[0].mxu0 %v6494
      %v6496 = vpop.f32.mrb[0].mxu0
      %v6497 = vadd.f32 %v6190, %v6496
      %v6498 = vpop.f32.mrb[0].mxu0
      %v6499 = vadd.f32 %v6192, %v6498
      %v6500 = vand.u32 %v4828, 4294901760
      %v6501 = vsub.f32 %v4828, %v6500
      %v6502 = vand.u32 %v6501, 4294901760
      %6503 = vmatprep.mubr.f32.mxu0 %v6502
      %v6504 = vand.u32 %v4827, 4294901760
      %v6505 = vsub.f32 %v4827, %v6504
      %v6506 = vand.u32 %v6505, 4294901760
      %6507 = vmatmul.mubr.f32.gmra.mrb[0].mxu0 %v6506
      %v6508 = vpop.f32.mrb[0].mxu0
      %v6509 = vadd.f32 %v6200, %v6508
      %v6510 = vpop.f32.mrb[0].mxu0
      %v6511 = vadd.f32 %v6202, %v6510
      %v6512 = vand.u32 %v4830, 4294901760
      %v6513 = vsub.f32 %v4830, %v6512
      %v6514 = vand.u32 %v6513, 4294901760
      %6515 = vmatprep.mubr.f32.mxu0 %v6514
      %v6516 = vand.u32 %v4829, 4294901760
      %v6517 = vsub.f32 %v4829, %v6516
      %v6518 = vand.u32 %v6517, 4294901760
      %6519 = vmatmul.mubr.f32.gmra.mrb[0].mxu0 %v6518
      %v6520 = vpop.f32.mrb[0].mxu0
      %v6521 = vadd.f32 %v6210, %v6520
      %v6522 = vpop.f32.mrb[0].mxu0
      %v6523 = vadd.f32 %v6212, %v6522
      %v6524 = vand.u32 %v4832, 4294901760
      %v6525 = vsub.f32 %v4832, %v6524
      %v6526 = vand.u32 %v6525, 4294901760
      %6527 = vmatprep.mubr.f32.mxu0 %v6526
      %v6528 = vand.u32 %v4831, 4294901760
      %v6529 = vsub.f32 %v4831, %v6528
      %v6530 = vand.u32 %v6529, 4294901760
      %6531 = vmatmul.mubr.f32.gmra.mrb[0].mxu0 %v6530
      %v6532 = vpop.f32.mrb[0].mxu0
      %v6533 = vadd.f32 %v6220, %v6532
      %v6534 = vpop.f32.mrb[0].mxu0
      %v6535 = vadd.f32 %v6222, %v6534
      %v6536 = vand.u32 %v4834, 4294901760
      %v6537 = vsub.f32 %v4834, %v6536
      %v6538 = vand.u32 %v6537, 4294901760
      %6539 = vmatprep.mubr.f32.mxu0 %v6538
      %v6540 = vand.u32 %v4833, 4294901760
      %v6541 = vsub.f32 %v4833, %v6540
      %v6542 = vand.u32 %v6541, 4294901760
      %6543 = vmatmul.mubr.f32.gmra.mrb[0].mxu0 %v6542
      %v6544 = vpop.f32.mrb[0].mxu0
      %v6545 = vadd.f32 %v6230, %v6544
      %v6546 = vpop.f32.mrb[0].mxu0
      %v6547 = vadd.f32 %v6232, %v6546
      %v6548 = vand.u32 %v4836, 4294901760
      %v6549 = vsub.f32 %v4836, %v6548
      %v6550 = vand.u32 %v6549, 4294901760
      %6551 = vmatprep.mubr.f32.mxu0 %v6550
      %v6552 = vand.u32 %v4835, 4294901760
      %v6553 = vsub.f32 %v4835, %v6552
      %v6554 = vand.u32 %v6553, 4294901760
      %6555 = vmatmul.mubr.f32.gmra.mrb[0].mxu0 %v6554
      %v6556 = vpop.f32.mrb[0].mxu0
      %v6557 = vadd.f32 %v6240, %v6556
      %v6558 = vpop.f32.mrb[0].mxu0
      %v6559 = vadd.f32 %v6242, %v6558
      %v6560 = vand.u32 %v4838, 4294901760
      %v6561 = vsub.f32 %v4838, %v6560
      %v6562 = vand.u32 %v6561, 4294901760
      %6563 = vmatprep.mubr.f32.mxu0 %v6562
      %v6564 = vand.u32 %v4837, 4294901760
      %v6565 = vsub.f32 %v4837, %v6564
      %v6566 = vand.u32 %v6565, 4294901760
      %6567 = vmatmul.mubr.f32.gmra.mrb[0].mxu0 %v6566
      %v6568 = vpop.f32.mrb[0].mxu0
      %v6569 = vadd.f32 %v6250, %v6568
      %v6570 = vpop.f32.mrb[0].mxu0
      %v6571 = vadd.f32 %v6252, %v6570
      %v6572 = vand.u32 %v4840, 4294901760
      %v6573 = vsub.f32 %v4840, %v6572
      %v6574 = vand.u32 %v6573, 4294901760
      %6575 = vmatprep.mubr.f32.mxu0 %v6574
      %v6576 = vand.u32 %v4839, 4294901760
      %v6577 = vsub.f32 %v4839, %v6576
      %v6578 = vand.u32 %v6577, 4294901760
      %6579 = vmatmul.mubr.f32.gmra.mrb[0].mxu0 %v6578
      %v6580 = vpop.f32.mrb[0].mxu0
      %v6581 = vadd.f32 %v6260, %v6580
      %v6582 = vpop.f32.mrb[0].mxu0
      %v6583 = vadd.f32 %v6262, %v6582
      %6584 = vdwg.mxu0
      %v6585 = vand.u32 %v4842, 4294901760
      %v6586 = vsub.f32 %v4842, %v6585
      %v6587 = vand.u32 %v6586, 4294901760
      %6588 = vmatprep.subr.mxu0 %v6587
      %v6589 = vand.u32 %v4841, 4294901760
      %v6590 = vsub.f32 %v4841, %v6589
      %v6591 = vand.u32 %v6590, 4294901760
      %6592 = vmatpush1.msra.mxu0 %v6591
      %v6593 = vand.u32 %v4844, 4294901760
      %v6594 = vsub.f32 %v4844, %v6593
      %v6595 = vand.u32 %v6594, 4294901760
      %6596 = vmatprep.subr.mxu0 %v6595
      %v6597 = vand.u32 %v4843, 4294901760
      %v6598 = vsub.f32 %v4843, %v6597
      %v6599 = vand.u32 %v6598, 4294901760
      %6600 = vmatpush1.msra.mxu0 %v6599
      %v6601 = vand.u32 %v4846, 4294901760
      %v6602 = vsub.f32 %v4846, %v6601
      %v6603 = vand.u32 %v6602, 4294901760
      %6604 = vmatprep.subr.mxu0 %v6603
      %v6605 = vand.u32 %v4845, 4294901760
      %v6606 = vsub.f32 %v4845, %v6605
      %v6607 = vand.u32 %v6606, 4294901760
      %6608 = vmatpush1.msra.mxu0 %v6607
      %v6609 = vand.u32 %v4848, 4294901760
      %v6610 = vsub.f32 %v4848, %v6609
      %v6611 = vand.u32 %v6610, 4294901760
      %6612 = vmatprep.subr.mxu0 %v6611
      %v6613 = vand.u32 %v4847, 4294901760
      %v6614 = vsub.f32 %v4847, %v6613
      %v6615 = vand.u32 %v6614, 4294901760
      %6616 = vmatpush1.msra.mxu0 %v6615
      %v6617 = vand.u32 %v4850, 4294901760
      %v6618 = vsub.f32 %v4850, %v6617
      %v6619 = vand.u32 %v6618, 4294901760
      %6620 = vmatprep.subr.mxu0 %v6619
      %v6621 = vand.u32 %v4849, 4294901760
      %v6622 = vsub.f32 %v4849, %v6621
      %v6623 = vand.u32 %v6622, 4294901760
      %6624 = vmatpush1.msra.mxu0 %v6623
      %v6625 = vand.u32 %v4852, 4294901760
      %v6626 = vsub.f32 %v4852, %v6625
      %v6627 = vand.u32 %v6626, 4294901760
      %6628 = vmatprep.subr.mxu0 %v6627
      %v6629 = vand.u32 %v4851, 4294901760
      %v6630 = vsub.f32 %v4851, %v6629
      %v6631 = vand.u32 %v6630, 4294901760
      %6632 = vmatpush1.msra.mxu0 %v6631
      %v6633 = vand.u32 %v4854, 4294901760
      %v6634 = vsub.f32 %v4854, %v6633
      %v6635 = vand.u32 %v6634, 4294901760
      %6636 = vmatprep.subr.mxu0 %v6635
      %v6637 = vand.u32 %v4853, 4294901760
      %v6638 = vsub.f32 %v4853, %v6637
      %v6639 = vand.u32 %v6638, 4294901760
      %6640 = vmatpush1.msra.mxu0 %v6639
      %v6641 = vand.u32 %v4856, 4294901760
      %v6642 = vsub.f32 %v4856, %v6641
      %v6643 = vand.u32 %v6642, 4294901760
      %6644 = vmatprep.subr.mxu0 %v6643
      %v6645 = vand.u32 %v4855, 4294901760
      %v6646 = vsub.f32 %v4855, %v6645
      %v6647 = vand.u32 %v6646, 4294901760
      %6648 = vmatpush1.msra.mxu0 %v6647
      %v6649 = vand.u32 %v4858, 4294901760
      %v6650 = vsub.f32 %v4858, %v6649
      %v6651 = vand.u32 %v6650, 4294901760
      %6652 = vmatprep.subr.mxu0 %v6651
      %v6653 = vand.u32 %v4857, 4294901760
      %v6654 = vsub.f32 %v4857, %v6653
      %v6655 = vand.u32 %v6654, 4294901760
      %6656 = vmatpush1.msra.mxu0 %v6655
      %v6657 = vand.u32 %v4860, 4294901760
      %v6658 = vsub.f32 %v4860, %v6657
      %v6659 = vand.u32 %v6658, 4294901760
      %6660 = vmatprep.subr.mxu0 %v6659
      %v6661 = vand.u32 %v4859, 4294901760
      %v6662 = vsub.f32 %v4859, %v6661
      %v6663 = vand.u32 %v6662, 4294901760
      %6664 = vmatpush1.msra.mxu0 %v6663
      %v6665 = vand.u32 %v4862, 4294901760
      %v6666 = vsub.f32 %v4862, %v6665
      %v6667 = vand.u32 %v6666, 4294901760
      %6668 = vmatprep.subr.mxu0 %v6667
      %v6669 = vand.u32 %v4861, 4294901760
      %v6670 = vsub.f32 %v4861, %v6669
      %v6671 = vand.u32 %v6670, 4294901760
      %6672 = vmatpush1.msra.mxu0 %v6671
      %v6673 = vand.u32 %v4864, 4294901760
      %v6674 = vsub.f32 %v4864, %v6673
      %v6675 = vand.u32 %v6674, 4294901760
      %6676 = vmatprep.subr.mxu0 %v6675
      %v6677 = vand.u32 %v4863, 4294901760
      %v6678 = vsub.f32 %v4863, %v6677
      %v6679 = vand.u32 %v6678, 4294901760
      %6680 = vmatpush1.msra.mxu0 %v6679
      %v6681 = vand.u32 %v4866, 4294901760
      %v6682 = vsub.f32 %v4866, %v6681
      %v6683 = vand.u32 %v6682, 4294901760
      %6684 = vmatprep.subr.mxu0 %v6683
      %v6685 = vand.u32 %v4865, 4294901760
      %v6686 = vsub.f32 %v4865, %v6685
      %v6687 = vand.u32 %v6686, 4294901760
      %6688 = vmatpush1.msra.mxu0 %v6687
      %v6689 = vand.u32 %v4868, 4294901760
      %v6690 = vsub.f32 %v4868, %v6689
      %v6691 = vand.u32 %v6690, 4294901760
      %6692 = vmatprep.subr.mxu0 %v6691
      %v6693 = vand.u32 %v4867, 4294901760
      %v6694 = vsub.f32 %v4867, %v6693
      %v6695 = vand.u32 %v6694, 4294901760
      %6696 = vmatpush1.msra.mxu0 %v6695
      %v6697 = vand.u32 %v4870, 4294901760
      %v6698 = vsub.f32 %v4870, %v6697
      %v6699 = vand.u32 %v6698, 4294901760
      %6700 = vmatprep.subr.mxu0 %v6699
      %v6701 = vand.u32 %v4869, 4294901760
      %v6702 = vsub.f32 %v4869, %v6701
      %v6703 = vand.u32 %v6702, 4294901760
      %6704 = vmatpush1.msra.mxu0 %v6703
      %v6705 = vand.u32 %v4872, 4294901760
      %v6706 = vsub.f32 %v4872, %v6705
      %v6707 = vand.u32 %v6706, 4294901760
      %6708 = vmatprep.subr.mxu0 %v6707
      %v6709 = vand.u32 %v4871, 4294901760
      %v6710 = vsub.f32 %v4871, %v6709
      %v6711 = vand.u32 %v6710, 4294901760
      %6712 = vmatpush1.msra.mxu0 %v6711
      %v6713 = vand.u32 %v4874, 4294901760
      %v6714 = vsub.f32 %v4874, %v6713
      %v6715 = vand.u32 %v6714, 4294901760
      %6716 = vmatprep.subr.mxu0 %v6715
      %v6717 = vand.u32 %v4873, 4294901760
      %v6718 = vsub.f32 %v4873, %v6717
      %v6719 = vand.u32 %v6718, 4294901760
      %6720 = vmatpush1.msra.mxu0 %v6719
      %v6721 = vand.u32 %v4876, 4294901760
      %v6722 = vsub.f32 %v4876, %v6721
      %v6723 = vand.u32 %v6722, 4294901760
      %6724 = vmatprep.subr.mxu0 %v6723
      %v6725 = vand.u32 %v4875, 4294901760
      %v6726 = vsub.f32 %v4875, %v6725
      %v6727 = vand.u32 %v6726, 4294901760
      %6728 = vmatpush1.msra.mxu0 %v6727
      %v6729 = vand.u32 %v4878, 4294901760
      %v6730 = vsub.f32 %v4878, %v6729
      %v6731 = vand.u32 %v6730, 4294901760
      %6732 = vmatprep.subr.mxu0 %v6731
      %v6733 = vand.u32 %v4877, 4294901760
      %v6734 = vsub.f32 %v4877, %v6733
      %v6735 = vand.u32 %v6734, 4294901760
      %6736 = vmatpush1.msra.mxu0 %v6735
      %v6737 = vand.u32 %v4880, 4294901760
      %v6738 = vsub.f32 %v4880, %v6737
      %v6739 = vand.u32 %v6738, 4294901760
      %6740 = vmatprep.subr.mxu0 %v6739
      %v6741 = vand.u32 %v4879, 4294901760
      %v6742 = vsub.f32 %v4879, %v6741
      %v6743 = vand.u32 %v6742, 4294901760
      %6744 = vmatpush1.msra.mxu0 %v6743
      %v6745 = vand.u32 %v4882, 4294901760
      %v6746 = vsub.f32 %v4882, %v6745
      %v6747 = vand.u32 %v6746, 4294901760
      %6748 = vmatprep.subr.mxu0 %v6747
      %v6749 = vand.u32 %v4881, 4294901760
      %v6750 = vsub.f32 %v4881, %v6749
      %v6751 = vand.u32 %v6750, 4294901760
      %6752 = vmatpush1.msra.mxu0 %v6751
      %v6753 = vand.u32 %v4884, 4294901760
      %v6754 = vsub.f32 %v4884, %v6753
      %v6755 = vand.u32 %v6754, 4294901760
      %6756 = vmatprep.subr.mxu0 %v6755
      %v6757 = vand.u32 %v4883, 4294901760
      %v6758 = vsub.f32 %v4883, %v6757
      %v6759 = vand.u32 %v6758, 4294901760
      %6760 = vmatpush1.msra.mxu0 %v6759
      %v6761 = vand.u32 %v4886, 4294901760
      %v6762 = vsub.f32 %v4886, %v6761
      %v6763 = vand.u32 %v6762, 4294901760
      %6764 = vmatprep.subr.mxu0 %v6763
      %v6765 = vand.u32 %v4885, 4294901760
      %v6766 = vsub.f32 %v4885, %v6765
      %v6767 = vand.u32 %v6766, 4294901760
      %6768 = vmatpush1.msra.mxu0 %v6767
      %v6769 = vand.u32 %v4888, 4294901760
      %v6770 = vsub.f32 %v4888, %v6769
      %v6771 = vand.u32 %v6770, 4294901760
      %6772 = vmatprep.subr.mxu0 %v6771
      %v6773 = vand.u32 %v4887, 4294901760
      %v6774 = vsub.f32 %v4887, %v6773
      %v6775 = vand.u32 %v6774, 4294901760
      %6776 = vmatpush1.msra.mxu0 %v6775
      %v6777 = vand.u32 %v4890, 4294901760
      %v6778 = vsub.f32 %v4890, %v6777
      %v6779 = vand.u32 %v6778, 4294901760
      %6780 = vmatprep.subr.mxu0 %v6779
      %v6781 = vand.u32 %v4889, 4294901760
      %v6782 = vsub.f32 %v4889, %v6781
      %v6783 = vand.u32 %v6782, 4294901760
      %6784 = vmatpush1.msra.mxu0 %v6783
      %v6785 = vand.u32 %v4892, 4294901760
      %v6786 = vsub.f32 %v4892, %v6785
      %v6787 = vand.u32 %v6786, 4294901760
      %6788 = vmatprep.subr.mxu0 %v6787
      %v6789 = vand.u32 %v4891, 4294901760
      %v6790 = vsub.f32 %v4891, %v6789
      %v6791 = vand.u32 %v6790, 4294901760
      %6792 = vmatpush1.msra.mxu0 %v6791
      %v6793 = vand.u32 %v4894, 4294901760
      %v6794 = vsub.f32 %v4894, %v6793
      %v6795 = vand.u32 %v6794, 4294901760
      %6796 = vmatprep.subr.mxu0 %v6795
      %v6797 = vand.u32 %v4893, 4294901760
      %v6798 = vsub.f32 %v4893, %v6797
      %v6799 = vand.u32 %v6798, 4294901760
      %6800 = vmatpush1.msra.mxu0 %v6799
      %v6801 = vand.u32 %v4896, 4294901760
      %v6802 = vsub.f32 %v4896, %v6801
      %v6803 = vand.u32 %v6802, 4294901760
      %6804 = vmatprep.subr.mxu0 %v6803
      %v6805 = vand.u32 %v4895, 4294901760
      %v6806 = vsub.f32 %v4895, %v6805
      %v6807 = vand.u32 %v6806, 4294901760
      %6808 = vmatpush1.msra.mxu0 %v6807
      %v6809 = vand.u32 %v4898, 4294901760
      %v6810 = vsub.f32 %v4898, %v6809
      %v6811 = vand.u32 %v6810, 4294901760
      %6812 = vmatprep.subr.mxu0 %v6811
      %v6813 = vand.u32 %v4897, 4294901760
      %v6814 = vsub.f32 %v4897, %v6813
      %v6815 = vand.u32 %v6814, 4294901760
      %6816 = vmatpush1.msra.mxu0 %v6815
      %v6817 = vand.u32 %v4900, 4294901760
      %v6818 = vsub.f32 %v4900, %v6817
      %v6819 = vand.u32 %v6818, 4294901760
      %6820 = vmatprep.subr.mxu0 %v6819
      %v6821 = vand.u32 %v4899, 4294901760
      %v6822 = vsub.f32 %v4899, %v6821
      %v6823 = vand.u32 %v6822, 4294901760
      %6824 = vmatpush1.msra.mxu0 %v6823
      %v6825 = vand.u32 %v4902, 4294901760
      %v6826 = vsub.f32 %v4902, %v6825
      %v6827 = vand.u32 %v6826, 4294901760
      %6828 = vmatprep.subr.mxu0 %v6827
      %v6829 = vand.u32 %v4901, 4294901760
      %v6830 = vsub.f32 %v4901, %v6829
      %v6831 = vand.u32 %v6830, 4294901760
      %6832 = vmatpush1.msra.mxu0 %v6831
      %v6833 = vand.u32 %v4904, 4294901760
      %v6834 = vsub.f32 %v4904, %v6833
      %v6835 = vand.u32 %v6834, 4294901760
      %6836 = vmatprep.subr.mxu0 %v6835
      %v6837 = vand.u32 %v4903, 4294901760
      %v6838 = vsub.f32 %v4903, %v6837
      %v6839 = vand.u32 %v6838, 4294901760
      %6840 = vmatpush1.msra.mxu0 %v6839
      %v6841 = vand.u32 %v4810, 4294901760
      %6842 = vmatprep.mubr.f32.mxu0 %v6841
      %v6843 = vand.u32 %v4809, 4294901760
      %6844 = vmatmul.mubr.f32.gmra.mrb[0].mxu0 %v6843
      %v6845 = vpop.f32.mrb[0].mxu0
      %v6846 = vadd.f32 %v6401, %v6845
      %v6847 = vpop.f32.mrb[0].mxu0
      %v6848 = vadd.f32 %v6403, %v6847
      %v6849 = vand.u32 %v4812, 4294901760
      %6850 = vmatprep.mubr.f32.mxu0 %v6849
      %v6851 = vand.u32 %v4811, 4294901760
      %6852 = vmatmul.mubr.f32.gmra.mrb[0].mxu0 %v6851
      %v6853 = vpop.f32.mrb[0].mxu0
      %v6854 = vadd.f32 %v6413, %v6853
      %v6855 = vpop.f32.mrb[0].mxu0
      %v6856 = vadd.f32 %v6415, %v6855
      %v6857 = vand.u32 %v4814, 4294901760
      %6858 = vmatprep.mubr.f32.mxu0 %v6857
      %v6859 = vand.u32 %v4813, 4294901760
      %6860 = vmatmul.mubr.f32.gmra.mrb[0].mxu0 %v6859
      %v6861 = vpop.f32.mrb[0].mxu0
      %v6862 = vadd.f32 %v6425, %v6861
      %v6863 = vpop.f32.mrb[0].mxu0
      %v6864 = vadd.f32 %v6427, %v6863
      %v6865 = vand.u32 %v4816, 4294901760
      %6866 = vmatprep.mubr.f32.mxu0 %v6865
      %v6867 = vand.u32 %v4815, 4294901760
      %6868 = vmatmul.mubr.f32.gmra.mrb[0].mxu0 %v6867
      %v6869 = vpop.f32.mrb[0].mxu0
      %v6870 = vadd.f32 %v6437, %v6869
      %v6871 = vpop.f32.mrb[0].mxu0
      %v6872 = vadd.f32 %v6439, %v6871
      %v6873 = vand.u32 %v4818, 4294901760
      %6874 = vmatprep.mubr.f32.mxu0 %v6873
      %v6875 = vand.u32 %v4817, 4294901760
      %6876 = vmatmul.mubr.f32.gmra.mrb[0].mxu0 %v6875
      %v6877 = vpop.f32.mrb[0].mxu0
      %v6878 = vadd.f32 %v6449, %v6877
      %v6879 = vpop.f32.mrb[0].mxu0
      %v6880 = vadd.f32 %v6451, %v6879
      %v6881 = vand.u32 %v4820, 4294901760
      %6882 = vmatprep.mubr.f32.mxu0 %v6881
      %v6883 = vand.u32 %v4819, 4294901760
      %6884 = vmatmul.mubr.f32.gmra.mrb[0].mxu0 %v6883
      %v6885 = vpop.f32.mrb[0].mxu0
      %v6886 = vadd.f32 %v6461, %v6885
      %v6887 = vpop.f32.mrb[0].mxu0
      %v6888 = vadd.f32 %v6463, %v6887
      %v6889 = vand.u32 %v4822, 4294901760
      %6890 = vmatprep.mubr.f32.mxu0 %v6889
      %v6891 = vand.u32 %v4821, 4294901760
      %6892 = vmatmul.mubr.f32.gmra.mrb[0].mxu0 %v6891
      %v6893 = vpop.f32.mrb[0].mxu0
      %v6894 = vadd.f32 %v6473, %v6893
      %v6895 = vpop.f32.mrb[0].mxu0
      %v6896 = vadd.f32 %v6475, %v6895
      %v6897 = vand.u32 %v4824, 4294901760
      %6898 = vmatprep.mubr.f32.mxu0 %v6897
      %v6899 = vand.u32 %v4823, 4294901760
      %6900 = vmatmul.mubr.f32.gmra.mrb[0].mxu0 %v6899
      %v6901 = vpop.f32.mrb[0].mxu0
      %v6902 = vadd.f32 %v6485, %v6901
      %v6903 = vpop.f32.mrb[0].mxu0
      %v6904 = vadd.f32 %v6487, %v6903
      %v6905 = vand.u32 %v4826, 4294901760
      %6906 = vmatprep.mubr.f32.mxu0 %v6905
      %v6907 = vand.u32 %v4825, 4294901760
      %6908 = vmatmul.mubr.f32.gmra.mrb[0].mxu0 %v6907
      %v6909 = vpop.f32.mrb[0].mxu0
      %v6910 = vadd.f32 %v6497, %v6909
      %v6911 = vpop.f32.mrb[0].mxu0
      %v6912 = vadd.f32 %v6499, %v6911
      %v6913 = vand.u32 %v4828, 4294901760
      %6914 = vmatprep.mubr.f32.mxu0 %v6913
      %v6915 = vand.u32 %v4827, 4294901760
      %6916 = vmatmul.mubr.f32.gmra.mrb[0].mxu0 %v6915
      %v6917 = vpop.f32.mrb[0].mxu0
      %v6918 = vadd.f32 %v6509, %v6917
      %v6919 = vpop.f32.mrb[0].mxu0
      %v6920 = vadd.f32 %v6511, %v6919
      %v6921 = vand.u32 %v4830, 4294901760
      %6922 = vmatprep.mubr.f32.mxu0 %v6921
      %v6923 = vand.u32 %v4829, 4294901760
      %6924 = vmatmul.mubr.f32.gmra.mrb[0].mxu0 %v6923
      %v6925 = vpop.f32.mrb[0].mxu0
      %v6926 = vadd.f32 %v6521, %v6925
      %v6927 = vpop.f32.mrb[0].mxu0
      %v6928 = vadd.f32 %v6523, %v6927
      %v6929 = vand.u32 %v4832, 4294901760
      %6930 = vmatprep.mubr.f32.mxu0 %v6929
      %v6931 = vand.u32 %v4831, 4294901760
      %6932 = vmatmul.mubr.f32.gmra.mrb[0].mxu0 %v6931
      %v6933 = vpop.f32.mrb[0].mxu0
      %v6934 = vadd.f32 %v6533, %v6933
      %v6935 = vpop.f32.mrb[0].mxu0
      %v6936 = vadd.f32 %v6535, %v6935
      %v6937 = vand.u32 %v4834, 4294901760
      %6938 = vmatprep.mubr.f32.mxu0 %v6937
      %v6939 = vand.u32 %v4833, 4294901760
      %6940 = vmatmul.mubr.f32.gmra.mrb[0].mxu0 %v6939
      %v6941 = vpop.f32.mrb[0].mxu0
      %v6942 = vadd.f32 %v6545, %v6941
      %v6943 = vpop.f32.mrb[0].mxu0
      %v6944 = vadd.f32 %v6547, %v6943
      %v6945 = vand.u32 %v4836, 4294901760
      %6946 = vmatprep.mubr.f32.mxu0 %v6945
      %v6947 = vand.u32 %v4835, 4294901760
      %6948 = vmatmul.mubr.f32.gmra.mrb[0].mxu0 %v6947
      %v6949 = vpop.f32.mrb[0].mxu0
      %v6950 = vadd.f32 %v6557, %v6949
      %v6951 = vpop.f32.mrb[0].mxu0
      %v6952 = vadd.f32 %v6559, %v6951
      %v6953 = vand.u32 %v4838, 4294901760
      %6954 = vmatprep.mubr.f32.mxu0 %v6953
      %v6955 = vand.u32 %v4837, 4294901760
      %6956 = vmatmul.mubr.f32.gmra.mrb[0].mxu0 %v6955
      %v6957 = vpop.f32.mrb[0].mxu0
      %v6958 = vadd.f32 %v6569, %v6957
      %v6959 = vpop.f32.mrb[0].mxu0
      %v6960 = vadd.f32 %v6571, %v6959
      %v6961 = vand.u32 %v4840, 4294901760
      %6962 = vmatprep.mubr.f32.mxu0 %v6961
      %v6963 = vand.u32 %v4839, 4294901760
      %6964 = vmatmul.mubr.f32.gmra.mrb[0].mxu0 %v6963
      %v6965 = vpop.f32.mrb[0].mxu0
      %v6966 = vadd.f32 %v6581, %v6965
      %v6967 = vpop.f32.mrb[0].mxu0
      %v6968 = vadd.f32 %v6583, %v6967
      %6969 = vdwg.mxu0
      %v6970 = vand.u32 %v4842, 4294901760
      %6971 = vmatprep.subr.mxu0 %v6970
      %v6972 = vand.u32 %v4841, 4294901760
      %6973 = vmatpush1.msra.mxu0 %v6972
      %v6974 = vand.u32 %v4844, 4294901760
      %6975 = vmatprep.subr.mxu0 %v6974
      %v6976 = vand.u32 %v4843, 4294901760
      %6977 = vmatpush1.msra.mxu0 %v6976
      %v6978 = vand.u32 %v4846, 4294901760
      %6979 = vmatprep.subr.mxu0 %v6978
      %v6980 = vand.u32 %v4845, 4294901760
      %6981 = vmatpush1.msra.mxu0 %v6980
      %v6982 = vand.u32 %v4848, 4294901760
      %6983 = vmatprep.subr.mxu0 %v6982
      %v6984 = vand.u32 %v4847, 4294901760
      %6985 = vmatpush1.msra.mxu0 %v6984
      %v6986 = vand.u32 %v4850, 4294901760
      %6987 = vmatprep.subr.mxu0 %v6986
      %v6988 = vand.u32 %v4849, 4294901760
      %6989 = vmatpush1.msra.mxu0 %v6988
      %v6990 = vand.u32 %v4852, 4294901760
      %6991 = vmatprep.subr.mxu0 %v6990
      %v6992 = vand.u32 %v4851, 4294901760
      %6993 = vmatpush1.msra.mxu0 %v6992
      %v6994 = vand.u32 %v4854, 4294901760
      %6995 = vmatprep.subr.mxu0 %v6994
      %v6996 = vand.u32 %v4853, 4294901760
      %6997 = vmatpush1.msra.mxu0 %v6996
      %v6998 = vand.u32 %v4856, 4294901760
      %6999 = vmatprep.subr.mxu0 %v6998
      %v7000 = vand.u32 %v4855, 4294901760
      %7001 = vmatpush1.msra.mxu0 %v7000
      %v7002 = vand.u32 %v4858, 4294901760
      %7003 = vmatprep.subr.mxu0 %v7002
      %v7004 = vand.u32 %v4857, 4294901760
      %7005 = vmatpush1.msra.mxu0 %v7004
      %v7006 = vand.u32 %v4860, 4294901760
      %7007 = vmatprep.subr.mxu0 %v7006
      %v7008 = vand.u32 %v4859, 4294901760
      %7009 = vmatpush1.msra.mxu0 %v7008
      %v7010 = vand.u32 %v4862, 4294901760
      %7011 = vmatprep.subr.mxu0 %v7010
      %v7012 = vand.u32 %v4861, 4294901760
      %7013 = vmatpush1.msra.mxu0 %v7012
      %v7014 = vand.u32 %v4864, 4294901760
      %7015 = vmatprep.subr.mxu0 %v7014
      %v7016 = vand.u32 %v4863, 4294901760
      %7017 = vmatpush1.msra.mxu0 %v7016
      %v7018 = vand.u32 %v4866, 4294901760
      %7019 = vmatprep.subr.mxu0 %v7018
      %v7020 = vand.u32 %v4865, 4294901760
      %7021 = vmatpush1.msra.mxu0 %v7020
      %v7022 = vand.u32 %v4868, 4294901760
      %7023 = vmatprep.subr.mxu0 %v7022
      %v7024 = vand.u32 %v4867, 4294901760
      %7025 = vmatpush1.msra.mxu0 %v7024
      %v7026 = vand.u32 %v4870, 4294901760
      %7027 = vmatprep.subr.mxu0 %v7026
      %v7028 = vand.u32 %v4869, 4294901760
      %7029 = vmatpush1.msra.mxu0 %v7028
      %v7030 = vand.u32 %v4872, 4294901760
      %7031 = vmatprep.subr.mxu0 %v7030
      %v7032 = vand.u32 %v4871, 4294901760
      %7033 = vmatpush1.msra.mxu0 %v7032
      %v7034 = vand.u32 %v4874, 4294901760
      %7035 = vmatprep.subr.mxu0 %v7034
      %v7036 = vand.u32 %v4873, 4294901760
      %7037 = vmatpush1.msra.mxu0 %v7036
      %v7038 = vand.u32 %v4876, 4294901760
      %7039 = vmatprep.subr.mxu0 %v7038
      %v7040 = vand.u32 %v4875, 4294901760
      %7041 = vmatpush1.msra.mxu0 %v7040
      %v7042 = vand.u32 %v4878, 4294901760
      %7043 = vmatprep.subr.mxu0 %v7042
      %v7044 = vand.u32 %v4877, 4294901760
      %7045 = vmatpush1.msra.mxu0 %v7044
      %v7046 = vand.u32 %v4880, 4294901760
      %7047 = vmatprep.subr.mxu0 %v7046
      %v7048 = vand.u32 %v4879, 4294901760
      %7049 = vmatpush1.msra.mxu0 %v7048
      %v7050 = vand.u32 %v4882, 4294901760
      %7051 = vmatprep.subr.mxu0 %v7050
      %v7052 = vand.u32 %v4881, 4294901760
      %7053 = vmatpush1.msra.mxu0 %v7052
      %v7054 = vand.u32 %v4884, 4294901760
      %7055 = vmatprep.subr.mxu0 %v7054
      %v7056 = vand.u32 %v4883, 4294901760
      %7057 = vmatpush1.msra.mxu0 %v7056
      %v7058 = vand.u32 %v4886, 4294901760
      %7059 = vmatprep.subr.mxu0 %v7058
      %v7060 = vand.u32 %v4885, 4294901760
      %7061 = vmatpush1.msra.mxu0 %v7060
      %v7062 = vand.u32 %v4888, 4294901760
      %7063 = vmatprep.subr.mxu0 %v7062
      %v7064 = vand.u32 %v4887, 4294901760
      %7065 = vmatpush1.msra.mxu0 %v7064
      %v7066 = vand.u32 %v4890, 4294901760
      %7067 = vmatprep.subr.mxu0 %v7066
      %v7068 = vand.u32 %v4889, 4294901760
      %7069 = vmatpush1.msra.mxu0 %v7068
      %v7070 = vand.u32 %v4892, 4294901760
      %7071 = vmatprep.subr.mxu0 %v7070
      %v7072 = vand.u32 %v4891, 4294901760
      %7073 = vmatpush1.msra.mxu0 %v7072
      %v7074 = vand.u32 %v4894, 4294901760
      %7075 = vmatprep.subr.mxu0 %v7074
      %v7076 = vand.u32 %v4893, 4294901760
      %7077 = vmatpush1.msra.mxu0 %v7076
      %v7078 = vand.u32 %v4896, 4294901760
      %7079 = vmatprep.subr.mxu0 %v7078
      %v7080 = vand.u32 %v4895, 4294901760
      %7081 = vmatpush1.msra.mxu0 %v7080
      %v7082 = vand.u32 %v4898, 4294901760
      %7083 = vmatprep.subr.mxu0 %v7082
      %v7084 = vand.u32 %v4897, 4294901760
      %7085 = vmatpush1.msra.mxu0 %v7084
      %v7086 = vand.u32 %v4900, 4294901760
      %7087 = vmatprep.subr.mxu0 %v7086
      %v7088 = vand.u32 %v4899, 4294901760
      %7089 = vmatpush1.msra.mxu0 %v7088
      %v7090 = vand.u32 %v4902, 4294901760
      %7091 = vmatprep.subr.mxu0 %v7090
      %v7092 = vand.u32 %v4901, 4294901760
      %7093 = vmatpush1.msra.mxu0 %v7092
      %v7094 = vand.u32 %v4904, 4294901760
      %7095 = vmatprep.subr.mxu0 %v7094
      %v7096 = vand.u32 %v4903, 4294901760
      %7097 = vmatpush1.msra.mxu0 %v7096
      %v7098 = vand.u32 %v4810, 4294901760
      %7099 = vmatprep.mubr.f32.mxu0 %v7098
      %v7100 = vand.u32 %v4809, 4294901760
      %7101 = vmatmul.mubr.f32.gmra.mrb[0].mxu0 %v7100
      %v7102 = vpop.f32.mrb[0].mxu0
      %v7103 = vadd.f32 %v6846, %v7102
      %v7104 = vpop.f32.mrb[0].mxu0
      %v7105 = vadd.f32 %v6848, %v7104
      %v7106 = vand.u32 %v4812, 4294901760
      %7107 = vmatprep.mubr.f32.mxu0 %v7106
      %v7108 = vand.u32 %v4811, 4294901760
      %7109 = vmatmul.mubr.f32.gmra.mrb[0].mxu0 %v7108
      %v7110 = vpop.f32.mrb[0].mxu0
      %v7111 = vadd.f32 %v6854, %v7110
      %v7112 = vpop.f32.mrb[0].mxu0
      %v7113 = vadd.f32 %v6856, %v7112
      %v7114 = vand.u32 %v4814, 4294901760
      %7115 = vmatprep.mubr.f32.mxu0 %v7114
      %v7116 = vand.u32 %v4813, 4294901760
      %7117 = vmatmul.mubr.f32.gmra.mrb[0].mxu0 %v7116
      %v7118 = vpop.f32.mrb[0].mxu0
      %v7119 = vadd.f32 %v6862, %v7118
      %v7120 = vpop.f32.mrb[0].mxu0
      %v7121 = vadd.f32 %v6864, %v7120
      %v7122 = vand.u32 %v4816, 4294901760
      %7123 = vmatprep.mubr.f32.mxu0 %v7122
      %v7124 = vand.u32 %v4815, 4294901760
      %7125 = vmatmul.mubr.f32.gmra.mrb[0].mxu0 %v7124
      %v7126 = vpop.f32.mrb[0].mxu0
      %v7127 = vadd.f32 %v6870, %v7126
      %v7128 = vpop.f32.mrb[0].mxu0
      %v7129 = vadd.f32 %v6872, %v7128
      %v7130 = vand.u32 %v4818, 4294901760
      %7131 = vmatprep.mubr.f32.mxu0 %v7130
      %v7132 = vand.u32 %v4817, 4294901760
      %7133 = vmatmul.mubr.f32.gmra.mrb[0].mxu0 %v7132
      %v7134 = vpop.f32.mrb[0].mxu0
      %v7135 = vadd.f32 %v6878, %v7134
      %v7136 = vpop.f32.mrb[0].mxu0
      %v7137 = vadd.f32 %v6880, %v7136
      %v7138 = vand.u32 %v4820, 4294901760
      %7139 = vmatprep.mubr.f32.mxu0 %v7138
      %v7140 = vand.u32 %v4819, 4294901760
      %7141 = vmatmul.mubr.f32.gmra.mrb[0].mxu0 %v7140
      %v7142 = vpop.f32.mrb[0].mxu0
      %v7143 = vadd.f32 %v6886, %v7142
      %v7144 = vpop.f32.mrb[0].mxu0
      %v7145 = vadd.f32 %v6888, %v7144
      %v7146 = vand.u32 %v4822, 4294901760
      %7147 = vmatprep.mubr.f32.mxu0 %v7146
      %v7148 = vand.u32 %v4821, 4294901760
      %7149 = vmatmul.mubr.f32.gmra.mrb[0].mxu0 %v7148
      %v7150 = vpop.f32.mrb[0].mxu0
      %v7151 = vadd.f32 %v6894, %v7150
      %v7152 = vpop.f32.mrb[0].mxu0
      %v7153 = vadd.f32 %v6896, %v7152
      %v7154 = vand.u32 %v4824, 4294901760
      %7155 = vmatprep.mubr.f32.mxu0 %v7154
      %v7156 = vand.u32 %v4823, 4294901760
      %7157 = vmatmul.mubr.f32.gmra.mrb[0].mxu0 %v7156
      %v7158 = vpop.f32.mrb[0].mxu0
      %v7159 = vadd.f32 %v6902, %v7158
      %v7160 = vpop.f32.mrb[0].mxu0
      %v7161 = vadd.f32 %v6904, %v7160
      %v7162 = vand.u32 %v4826, 4294901760
      %7163 = vmatprep.mubr.f32.mxu0 %v7162
      %v7164 = vand.u32 %v4825, 4294901760
      %7165 = vmatmul.mubr.f32.gmra.mrb[0].mxu0 %v7164
      %v7166 = vpop.f32.mrb[0].mxu0
      %v7167 = vadd.f32 %v6910, %v7166
      %v7168 = vpop.f32.mrb[0].mxu0
      %v7169 = vadd.f32 %v6912, %v7168
      %v7170 = vand.u32 %v4828, 4294901760
      %7171 = vmatprep.mubr.f32.mxu0 %v7170
      %v7172 = vand.u32 %v4827, 4294901760
      %7173 = vmatmul.mubr.f32.gmra.mrb[0].mxu0 %v7172
      %v7174 = vpop.f32.mrb[0].mxu0
      %v7175 = vadd.f32 %v6918, %v7174
      %v7176 = vpop.f32.mrb[0].mxu0
      %v7177 = vadd.f32 %v6920, %v7176
      %v7178 = vand.u32 %v4830, 4294901760
      %7179 = vmatprep.mubr.f32.mxu0 %v7178
      %v7180 = vand.u32 %v4829, 4294901760
      %7181 = vmatmul.mubr.f32.gmra.mrb[0].mxu0 %v7180
      %v7182 = vpop.f32.mrb[0].mxu0
      %v7183 = vadd.f32 %v6926, %v7182
      %v7184 = vpop.f32.mrb[0].mxu0
      %v7185 = vadd.f32 %v6928, %v7184
      %v7186 = vand.u32 %v4832, 4294901760
      %7187 = vmatprep.mubr.f32.mxu0 %v7186
      %v7188 = vand.u32 %v4831, 4294901760
      %7189 = vmatmul.mubr.f32.gmra.mrb[0].mxu0 %v7188
      %v7190 = vpop.f32.mrb[0].mxu0
      %v7191 = vadd.f32 %v6934, %v7190
      %v7192 = vpop.f32.mrb[0].mxu0
      %v7193 = vadd.f32 %v6936, %v7192
      %v7194 = vand.u32 %v4834, 4294901760
      %7195 = vmatprep.mubr.f32.mxu0 %v7194
      %v7196 = vand.u32 %v4833, 4294901760
      %7197 = vmatmul.mubr.f32.gmra.mrb[0].mxu0 %v7196
      %v7198 = vpop.f32.mrb[0].mxu0
      %v7199 = vadd.f32 %v6942, %v7198
      %v7200 = vpop.f32.mrb[0].mxu0
      %v7201 = vadd.f32 %v6944, %v7200
      %v7202 = vand.u32 %v4836, 4294901760
      %7203 = vmatprep.mubr.f32.mxu0 %v7202
      %v7204 = vand.u32 %v4835, 4294901760
      %7205 = vmatmul.mubr.f32.gmra.mrb[0].mxu0 %v7204
      %v7206 = vpop.f32.mrb[0].mxu0
      %v7207 = vadd.f32 %v6950, %v7206
      %v7208 = vpop.f32.mrb[0].mxu0
      %v7209 = vadd.f32 %v6952, %v7208
      %v7210 = vand.u32 %v4838, 4294901760
      %7211 = vmatprep.mubr.f32.mxu0 %v7210
      %v7212 = vand.u32 %v4837, 4294901760
      %7213 = vmatmul.mubr.f32.gmra.mrb[0].mxu0 %v7212
      %v7214 = vpop.f32.mrb[0].mxu0
      %v7215 = vadd.f32 %v6958, %v7214
      %v7216 = vpop.f32.mrb[0].mxu0
      %v7217 = vadd.f32 %v6960, %v7216
      %v7218 = vand.u32 %v4840, 4294901760
      %7219 = vmatprep.mubr.f32.mxu0 %v7218
      %v7220 = vand.u32 %v4839, 4294901760
      %7221 = vmatmul.mubr.f32.gmra.mrb[0].mxu0 %v7220
      %v7222 = vpop.f32.mrb[0].mxu0
      %v7223 = vadd.f32 %v6966, %v7222
      %v7224 = vpop.f32.mrb[0].mxu0
      %v7225 = vadd.f32 %v6968, %v7224
      %7226 = vdwg.mxu0
      %v7227 = vld [vmem:[%s7] sm:$0xff]
      %7228 = vmatprep.subr.mxu0 0.0
      %v7229 = vand.u32 %v7227, 4294901760
      %7230 = vmatpush1.msra.mxu0 %v7229
      %7231 = vmatprep.subr.mxu0 0.0
      %7232 = vmatpush1.msra.mxu0 0.0
      %7233 = vmatprep.subr.mxu0 0.0
      %7234 = vmatpush1.msra.mxu0 0.0
      %7235 = vmatprep.subr.mxu0 0.0
      %7236 = vmatpush1.msra.mxu0 0.0
      %7237 = vmatprep.subr.mxu0 0.0
      %7238 = vmatpush1.msra.mxu0 0.0
      %7239 = vmatprep.subr.mxu0 0.0
      %7240 = vmatpush1.msra.mxu0 0.0
      %7241 = vmatprep.subr.mxu0 0.0
      %7242 = vmatpush1.msra.mxu0 0.0
      %7243 = vmatprep.subr.mxu0 0.0
      %7244 = vmatpush1.msra.mxu0 0.0
      %7245 = vmatprep.subr.mxu0 0.0
      %7246 = vmatpush1.msra.mxu0 0.0
      %7247 = vmatprep.subr.mxu0 0.0
      %7248 = vmatpush1.msra.mxu0 0.0
      %7249 = vmatprep.subr.mxu0 0.0
      %7250 = vmatpush1.msra.mxu0 0.0
      %7251 = vmatprep.subr.mxu0 0.0
      %7252 = vmatpush1.msra.mxu0 0.0
      %7253 = vmatprep.subr.mxu0 0.0
      %7254 = vmatpush1.msra.mxu0 0.0
      %7255 = vmatprep.subr.mxu0 0.0
      %7256 = vmatpush1.msra.mxu0 0.0
      %7257 = vmatprep.subr.mxu0 0.0
      %7258 = vmatpush1.msra.mxu0 0.0
      %7259 = vmatprep.subr.mxu0 0.0
      %7260 = vmatpush1.msra.mxu0 0.0
      %7261 = vmatprep.subr.mxu0 0.0
      %7262 = vmatpush1.msra.mxu0 0.0
      %7263 = vmatprep.subr.mxu0 0.0
      %7264 = vmatpush1.msra.mxu0 0.0
      %7265 = vmatprep.subr.mxu0 0.0
      %7266 = vmatpush1.msra.mxu0 0.0
      %7267 = vmatprep.subr.mxu0 0.0
      %7268 = vmatpush1.msra.mxu0 0.0
      %7269 = vmatprep.subr.mxu0 0.0
      %7270 = vmatpush1.msra.mxu0 0.0
      %7271 = vmatprep.subr.mxu0 0.0
      %7272 = vmatpush1.msra.mxu0 0.0
      %7273 = vmatprep.subr.mxu0 0.0
      %7274 = vmatpush1.msra.mxu0 0.0
      %7275 = vmatprep.subr.mxu0 0.0
      %7276 = vmatpush1.msra.mxu0 0.0
      %7277 = vmatprep.subr.mxu0 0.0
      %7278 = vmatpush1.msra.mxu0 0.0
      %7279 = vmatprep.subr.mxu0 0.0
      %7280 = vmatpush1.msra.mxu0 0.0
      %7281 = vmatprep.subr.mxu0 0.0
      %7282 = vmatpush1.msra.mxu0 0.0
      %7283 = vmatprep.subr.mxu0 0.0
      %7284 = vmatpush1.msra.mxu0 0.0
      %7285 = vmatprep.subr.mxu0 0.0
      %7286 = vmatpush1.msra.mxu0 0.0
      %7287 = vmatprep.subr.mxu0 0.0
      %7288 = vmatpush1.msra.mxu0 0.0
      %7289 = vmatprep.subr.mxu0 0.0
      %7290 = vmatpush1.msra.mxu0 0.0
      %7291 = vmatprep.subr.mxu0 0.0
      %7292 = vmatpush1.msra.mxu0 0.0
      %7293 = vmatprep.mubr.f32.mxu0 0.0
      %v7294 = vand.u32 %v3562, 4294901760
      %v7295 = vsub.f32 %v3562, %v7294
      %v7296 = vand.u32 %v7295, 4294901760
      %v7297 = vsub.f32 %v7295, %v7296
      %v7298 = vand.u32 %v7297, 4294901760
      %7299 = vmatmul.mubr.f32.gmra.mrb[0].mxu0 %v7298
      %v7300 = vpop.f32.mrb[0].mxu0
      %v7301 = vadd.f32 0.0, %v7300
      %v7302 = vpop.f32.mrb[0].mxu0
      %7303 = vmatprep.mubr.f32.mxu0 0.0
      %v7304 = vand.u32 %v3565, 4294901760
      %v7305 = vsub.f32 %v3565, %v7304
      %v7306 = vand.u32 %v7305, 4294901760
      %v7307 = vsub.f32 %v7305, %v7306
      %v7308 = vand.u32 %v7307, 4294901760
      %7309 = vmatmul.mubr.f32.gmra.mrb[0].mxu0 %v7308
      %v7310 = vpop.f32.mrb[0].mxu0
      %v7311 = vadd.f32 0.0, %v7310
      %v7312 = vpop.f32.mrb[0].mxu0
      %7313 = vmatprep.mubr.f32.mxu0 0.0
      %v7314 = vand.u32 %v3568, 4294901760
      %v7315 = vsub.f32 %v3568, %v7314
      %v7316 = vand.u32 %v7315, 4294901760
      %v7317 = vsub.f32 %v7315, %v7316
      %v7318 = vand.u32 %v7317, 4294901760
      %7319 = vmatmul.mubr.f32.gmra.mrb[0].mxu0 %v7318
      %v7320 = vpop.f32.mrb[0].mxu0
      %v7321 = vadd.f32 0.0, %v7320
      %v7322 = vpop.f32.mrb[0].mxu0
      %7323 = vmatprep.mubr.f32.mxu0 0.0
      %v7324 = vand.u32 %v3571, 4294901760
      %v7325 = vsub.f32 %v3571, %v7324
      %v7326 = vand.u32 %v7325, 4294901760
      %v7327 = vsub.f32 %v7325, %v7326
      %v7328 = vand.u32 %v7327, 4294901760
      %7329 = vmatmul.mubr.f32.gmra.mrb[0].mxu0 %v7328
      %v7330 = vpop.f32.mrb[0].mxu0
      %v7331 = vadd.f32 0.0, %v7330
      %v7332 = vpop.f32.mrb[0].mxu0
      %7333 = vmatprep.mubr.f32.mxu0 0.0
      %v7334 = vand.u32 %v3574, 4294901760
      %v7335 = vsub.f32 %v3574, %v7334
      %v7336 = vand.u32 %v7335, 4294901760
      %v7337 = vsub.f32 %v7335, %v7336
      %v7338 = vand.u32 %v7337, 4294901760
      %7339 = vmatmul.mubr.f32.gmra.mrb[0].mxu0 %v7338
      %v7340 = vpop.f32.mrb[0].mxu0
      %v7341 = vadd.f32 0.0, %v7340
      %v7342 = vpop.f32.mrb[0].mxu0
      %7343 = vmatprep.mubr.f32.mxu0 0.0
      %v7344 = vand.u32 %v3577, 4294901760
      %v7345 = vsub.f32 %v3577, %v7344
      %v7346 = vand.u32 %v7345, 4294901760
      %v7347 = vsub.f32 %v7345, %v7346
      %v7348 = vand.u32 %v7347, 4294901760
      %7349 = vmatmul.mubr.f32.gmra.mrb[0].mxu0 %v7348
      %v7350 = vpop.f32.mrb[0].mxu0
      %v7351 = vadd.f32 0.0, %v7350
      %v7352 = vpop.f32.mrb[0].mxu0
      %7353 = vmatprep.mubr.f32.mxu0 0.0
      %v7354 = vand.u32 %v3580, 4294901760
      %v7355 = vsub.f32 %v3580, %v7354
      %v7356 = vand.u32 %v7355, 4294901760
      %v7357 = vsub.f32 %v7355, %v7356
      %v7358 = vand.u32 %v7357, 4294901760
      %7359 = vmatmul.mubr.f32.gmra.mrb[0].mxu0 %v7358
      %v7360 = vpop.f32.mrb[0].mxu0
      %v7361 = vadd.f32 0.0, %v7360
      %v7362 = vpop.f32.mrb[0].mxu0
      %7363 = vmatprep.mubr.f32.mxu0 0.0
      %v7364 = vand.u32 %v3583, 4294901760
      %v7365 = vsub.f32 %v3583, %v7364
      %v7366 = vand.u32 %v7365, 4294901760
      %v7367 = vsub.f32 %v7365, %v7366
      %v7368 = vand.u32 %v7367, 4294901760
      %7369 = vmatmul.mubr.f32.gmra.mrb[0].mxu0 %v7368
      %v7370 = vpop.f32.mrb[0].mxu0
      %v7371 = vadd.f32 0.0, %v7370
      %v7372 = vpop.f32.mrb[0].mxu0
      %7373 = vmatprep.mubr.f32.mxu0 0.0
      %v7374 = vand.u32 %v3586, 4294901760
      %v7375 = vsub.f32 %v3586, %v7374
      %v7376 = vand.u32 %v7375, 4294901760
      %v7377 = vsub.f32 %v7375, %v7376
      %v7378 = vand.u32 %v7377, 4294901760
      %7379 = vmatmul.mubr.f32.gmra.mrb[0].mxu0 %v7378
      %v7380 = vpop.f32.mrb[0].mxu0
      %v7381 = vadd.f32 0.0, %v7380
      %v7382 = vpop.f32.mrb[0].mxu0
      %7383 = vmatprep.mubr.f32.mxu0 0.0
      %v7384 = vand.u32 %v3589, 4294901760
      %v7385 = vsub.f32 %v3589, %v7384
      %v7386 = vand.u32 %v7385, 4294901760
      %v7387 = vsub.f32 %v7385, %v7386
      %v7388 = vand.u32 %v7387, 4294901760
      %7389 = vmatmul.mubr.f32.gmra.mrb[0].mxu0 %v7388
      %v7390 = vpop.f32.mrb[0].mxu0
      %v7391 = vadd.f32 0.0, %v7390
      %v7392 = vpop.f32.mrb[0].mxu0
      %7393 = vmatprep.mubr.f32.mxu0 0.0
      %v7394 = vand.u32 %v3592, 4294901760
      %v7395 = vsub.f32 %v3592, %v7394
      %v7396 = vand.u32 %v7395, 4294901760
      %v7397 = vsub.f32 %v7395, %v7396
      %v7398 = vand.u32 %v7397, 4294901760
      %7399 = vmatmul.mubr.f32.gmra.mrb[0].mxu0 %v7398
      %v7400 = vpop.f32.mrb[0].mxu0
      %v7401 = vadd.f32 0.0, %v7400
      %v7402 = vpop.f32.mrb[0].mxu0
      %7403 = vmatprep.mubr.f32.mxu0 0.0
      %v7404 = vand.u32 %v3595, 4294901760
      %v7405 = vsub.f32 %v3595, %v7404
      %v7406 = vand.u32 %v7405, 4294901760
      %v7407 = vsub.f32 %v7405, %v7406
      %v7408 = vand.u32 %v7407, 4294901760
      %7409 = vmatmul.mubr.f32.gmra.mrb[0].mxu0 %v7408
      %v7410 = vpop.f32.mrb[0].mxu0
      %v7411 = vadd.f32 0.0, %v7410
      %v7412 = vpop.f32.mrb[0].mxu0
      %7413 = vmatprep.mubr.f32.mxu0 0.0
      %v7414 = vand.u32 %v3598, 4294901760
      %v7415 = vsub.f32 %v3598, %v7414
      %v7416 = vand.u32 %v7415, 4294901760
      %v7417 = vsub.f32 %v7415, %v7416
      %v7418 = vand.u32 %v7417, 4294901760
      %7419 = vmatmul.mubr.f32.gmra.mrb[0].mxu0 %v7418
      %v7420 = vpop.f32.mrb[0].mxu0
      %v7421 = vadd.f32 0.0, %v7420
      %v7422 = vpop.f32.mrb[0].mxu0
      %7423 = vmatprep.mubr.f32.mxu0 0.0
      %v7424 = vand.u32 %v3601, 4294901760
      %v7425 = vsub.f32 %v3601, %v7424
      %v7426 = vand.u32 %v7425, 4294901760
      %v7427 = vsub.f32 %v7425, %v7426
      %v7428 = vand.u32 %v7427, 4294901760
      %7429 = vmatmul.mubr.f32.gmra.mrb[0].mxu0 %v7428
      %v7430 = vpop.f32.mrb[0].mxu0
      %v7431 = vadd.f32 0.0, %v7430
      %v7432 = vpop.f32.mrb[0].mxu0
      %7433 = vmatprep.mubr.f32.mxu0 0.0
      %v7434 = vand.u32 %v3604, 4294901760
      %v7435 = vsub.f32 %v3604, %v7434
      %v7436 = vand.u32 %v7435, 4294901760
      %v7437 = vsub.f32 %v7435, %v7436
      %v7438 = vand.u32 %v7437, 4294901760
      %7439 = vmatmul.mubr.f32.gmra.mrb[0].mxu0 %v7438
      %v7440 = vpop.f32.mrb[0].mxu0
      %v7441 = vadd.f32 0.0, %v7440
      %v7442 = vpop.f32.mrb[0].mxu0
      %7443 = vmatprep.mubr.f32.mxu0 0.0
      %v7444 = vand.u32 %v3607, 4294901760
      %v7445 = vsub.f32 %v3607, %v7444
      %v7446 = vand.u32 %v7445, 4294901760
      %v7447 = vsub.f32 %v7445, %v7446
      %v7448 = vand.u32 %v7447, 4294901760
      %7449 = vmatmul.mubr.f32.gmra.mrb[0].mxu0 %v7448
      %v7450 = vpop.f32.mrb[0].mxu0
      %v7451 = vadd.f32 0.0, %v7450
      %v7452 = vpop.f32.mrb[0].mxu0
      %7453 = vdwg.mxu0
      %7454 = vmatprep.subr.mxu0 0.0
      %v7455 = vand.u32 %v7227, 4294901760
      %v7456 = vsub.f32 %v7227, %v7455
      %v7457 = vand.u32 %v7456, 4294901760
      %v7458 = vsub.f32 %v7456, %v7457
      %v7459 = vand.u32 %v7458, 4294901760
      %7460 = vmatpush1.msra.mxu0 %v7459
      %7461 = vmatprep.subr.mxu0 0.0
      %7462 = vmatpush1.msra.mxu0 0.0
      %7463 = vmatprep.subr.mxu0 0.0
      %7464 = vmatpush1.msra.mxu0 0.0
      %7465 = vmatprep.subr.mxu0 0.0
      %7466 = vmatpush1.msra.mxu0 0.0
      %7467 = vmatprep.subr.mxu0 0.0
      %7468 = vmatpush1.msra.mxu0 0.0
      %7469 = vmatprep.subr.mxu0 0.0
      %7470 = vmatpush1.msra.mxu0 0.0
      %7471 = vmatprep.subr.mxu0 0.0
      %7472 = vmatpush1.msra.mxu0 0.0
      %7473 = vmatprep.subr.mxu0 0.0
      %7474 = vmatpush1.msra.mxu0 0.0
      %7475 = vmatprep.subr.mxu0 0.0
      %7476 = vmatpush1.msra.mxu0 0.0
      %7477 = vmatprep.subr.mxu0 0.0
      %7478 = vmatpush1.msra.mxu0 0.0
      %7479 = vmatprep.subr.mxu0 0.0
      %7480 = vmatpush1.msra.mxu0 0.0
      %7481 = vmatprep.subr.mxu0 0.0
      %7482 = vmatpush1.msra.mxu0 0.0
      %7483 = vmatprep.subr.mxu0 0.0
      %7484 = vmatpush1.msra.mxu0 0.0
      %7485 = vmatprep.subr.mxu0 0.0
      %7486 = vmatpush1.msra.mxu0 0.0
      %7487 = vmatprep.subr.mxu0 0.0
      %7488 = vmatpush1.msra.mxu0 0.0
      %7489 = vmatprep.subr.mxu0 0.0
      %7490 = vmatpush1.msra.mxu0 0.0
      %7491 = vmatprep.subr.mxu0 0.0
      %7492 = vmatpush1.msra.mxu0 0.0
      %7493 = vmatprep.subr.mxu0 0.0
      %7494 = vmatpush1.msra.mxu0 0.0
      %7495 = vmatprep.subr.mxu0 0.0
      %7496 = vmatpush1.msra.mxu0 0.0
      %7497 = vmatprep.subr.mxu0 0.0
      %7498 = vmatpush1.msra.mxu0 0.0
      %7499 = vmatprep.subr.mxu0 0.0
      %7500 = vmatpush1.msra.mxu0 0.0
      %7501 = vmatprep.subr.mxu0 0.0
      %7502 = vmatpush1.msra.mxu0 0.0
      %7503 = vmatprep.subr.mxu0 0.0
      %7504 = vmatpush1.msra.mxu0 0.0
      %7505 = vmatprep.subr.mxu0 0.0
      %7506 = vmatpush1.msra.mxu0 0.0
      %7507 = vmatprep.subr.mxu0 0.0
      %7508 = vmatpush1.msra.mxu0 0.0
      %7509 = vmatprep.subr.mxu0 0.0
      %7510 = vmatpush1.msra.mxu0 0.0
      %7511 = vmatprep.subr.mxu0 0.0
      %7512 = vmatpush1.msra.mxu0 0.0
      %7513 = vmatprep.subr.mxu0 0.0
      %7514 = vmatpush1.msra.mxu0 0.0
      %7515 = vmatprep.subr.mxu0 0.0
      %7516 = vmatpush1.msra.mxu0 0.0
      %7517 = vmatprep.subr.mxu0 0.0
      %7518 = vmatpush1.msra.mxu0 0.0
      %7519 = vmatprep.subr.mxu0 0.0
      %7520 = vmatpush1.msra.mxu0 0.0
      %7521 = vmatprep.subr.mxu0 0.0
      %7522 = vmatpush1.msra.mxu0 0.0
      %7523 = vmatprep.mubr.f32.mxu0 0.0
      %v7524 = vand.u32 %v3562, 4294901760
      %7525 = vmatmul.mubr.f32.gmra.mrb[0].mxu0 %v7524
      %v7526 = vpop.f32.mrb[0].mxu0
      %v7527 = vadd.f32 %v7301, %v7526
      %v7528 = vpop.f32.mrb[0].mxu0
      %7529 = vmatprep.mubr.f32.mxu0 0.0
      %v7530 = vand.u32 %v3565, 4294901760
      %7531 = vmatmul.mubr.f32.gmra.mrb[0].mxu0 %v7530
      %v7532 = vpop.f32.mrb[0].mxu0
      %v7533 = vadd.f32 %v7311, %v7532
      %v7534 = vpop.f32.mrb[0].mxu0
      %7535 = vmatprep.mubr.f32.mxu0 0.0
      %v7536 = vand.u32 %v3568, 4294901760
      %7537 = vmatmul.mubr.f32.gmra.mrb[0].mxu0 %v7536
      %v7538 = vpop.f32.mrb[0].mxu0
      %v7539 = vadd.f32 %v7321, %v7538
      %v7540 = vpop.f32.mrb[0].mxu0
      %7541 = vmatprep.mubr.f32.mxu0 0.0
      %v7542 = vand.u32 %v3571, 4294901760
      %7543 = vmatmul.mubr.f32.gmra.mrb[0].mxu0 %v7542
      %v7544 = vpop.f32.mrb[0].mxu0
      %v7545 = vadd.f32 %v7331, %v7544
      %v7546 = vpop.f32.mrb[0].mxu0
      %7547 = vmatprep.mubr.f32.mxu0 0.0
      %v7548 = vand.u32 %v3574, 4294901760
      %7549 = vmatmul.mubr.f32.gmra.mrb[0].mxu0 %v7548
      %v7550 = vpop.f32.mrb[0].mxu0
      %v7551 = vadd.f32 %v7341, %v7550
      %v7552 = vpop.f32.mrb[0].mxu0
      %7553 = vmatprep.mubr.f32.mxu0 0.0
      %v7554 = vand.u32 %v3577, 4294901760
      %7555 = vmatmul.mubr.f32.gmra.mrb[0].mxu0 %v7554
      %v7556 = vpop.f32.mrb[0].mxu0
      %v7557 = vadd.f32 %v7351, %v7556
      %v7558 = vpop.f32.mrb[0].mxu0
      %7559 = vmatprep.mubr.f32.mxu0 0.0
      %v7560 = vand.u32 %v3580, 4294901760
      %7561 = vmatmul.mubr.f32.gmra.mrb[0].mxu0 %v7560
      %v7562 = vpop.f32.mrb[0].mxu0
      %v7563 = vadd.f32 %v7361, %v7562
      %v7564 = vpop.f32.mrb[0].mxu0
      %7565 = vmatprep.mubr.f32.mxu0 0.0
      %v7566 = vand.u32 %v3583, 4294901760
      %7567 = vmatmul.mubr.f32.gmra.mrb[0].mxu0 %v7566
      %v7568 = vpop.f32.mrb[0].mxu0
      %v7569 = vadd.f32 %v7371, %v7568
      %v7570 = vpop.f32.mrb[0].mxu0
      %7571 = vmatprep.mubr.f32.mxu0 0.0
      %v7572 = vand.u32 %v3586, 4294901760
      %7573 = vmatmul.mubr.f32.gmra.mrb[0].mxu0 %v7572
      %v7574 = vpop.f32.mrb[0].mxu0
      %v7575 = vadd.f32 %v7381, %v7574
      %v7576 = vpop.f32.mrb[0].mxu0
      %7577 = vmatprep.mubr.f32.mxu0 0.0
      %v7578 = vand.u32 %v3589, 4294901760
      %7579 = vmatmul.mubr.f32.gmra.mrb[0].mxu0 %v7578
      %v7580 = vpop.f32.mrb[0].mxu0
      %v7581 = vadd.f32 %v7391, %v7580
      %v7582 = vpop.f32.mrb[0].mxu0
      %7583 = vmatprep.mubr.f32.mxu0 0.0
      %v7584 = vand.u32 %v3592, 4294901760
      %7585 = vmatmul.mubr.f32.gmra.mrb[0].mxu0 %v7584
      %v7586 = vpop.f32.mrb[0].mxu0
      %v7587 = vadd.f32 %v7401, %v7586
      %v7588 = vpop.f32.mrb[0].mxu0
      %7589 = vmatprep.mubr.f32.mxu0 0.0
      %v7590 = vand.u32 %v3595, 4294901760
      %7591 = vmatmul.mubr.f32.gmra.mrb[0].mxu0 %v7590
      %v7592 = vpop.f32.mrb[0].mxu0
      %v7593 = vadd.f32 %v7411, %v7592
      %v7594 = vpop.f32.mrb[0].mxu0
      %7595 = vmatprep.mubr.f32.mxu0 0.0
      %v7596 = vand.u32 %v3598, 4294901760
      %7597 = vmatmul.mubr.f32.gmra.mrb[0].mxu0 %v7596
      %v7598 = vpop.f32.mrb[0].mxu0
      %v7599 = vadd.f32 %v7421, %v7598
      %v7600 = vpop.f32.mrb[0].mxu0
      %7601 = vmatprep.mubr.f32.mxu0 0.0
      %v7602 = vand.u32 %v3601, 4294901760
      %7603 = vmatmul.mubr.f32.gmra.mrb[0].mxu0 %v7602
      %v7604 = vpop.f32.mrb[0].mxu0
      %v7605 = vadd.f32 %v7431, %v7604
      %v7606 = vpop.f32.mrb[0].mxu0
      %7607 = vmatprep.mubr.f32.mxu0 0.0
      %v7608 = vand.u32 %v3604, 4294901760
      %7609 = vmatmul.mubr.f32.gmra.mrb[0].mxu0 %v7608
      %v7610 = vpop.f32.mrb[0].mxu0
      %v7611 = vadd.f32 %v7441, %v7610
      %v7612 = vpop.f32.mrb[0].mxu0
      %7613 = vmatprep.mubr.f32.mxu0 0.0
      %v7614 = vand.u32 %v3607, 4294901760
      %7615 = vmatmul.mubr.f32.gmra.mrb[0].mxu0 %v7614
      %v7616 = vpop.f32.mrb[0].mxu0
      %v7617 = vadd.f32 %v7451, %v7616
      %v7618 = vpop.f32.mrb[0].mxu0
      %7619 = vdwg.mxu0
      %7620 = vmatprep.subr.mxu0 0.0
      %v7621 = vand.u32 %v7227, 4294901760
      %v7622 = vsub.f32 %v7227, %v7621
      %7623 = vmatpush1.msra.mxu0 %v7622
      %7624 = vmatprep.subr.mxu0 0.0
      %7625 = vmatpush1.msra.mxu0 0.0
      %7626 = vmatprep.subr.mxu0 0.0
      %7627 = vmatpush1.msra.mxu0 0.0
      %7628 = vmatprep.subr.mxu0 0.0
      %7629 = vmatpush1.msra.mxu0 0.0
      %7630 = vmatprep.subr.mxu0 0.0
      %7631 = vmatpush1.msra.mxu0 0.0
      %7632 = vmatprep.subr.mxu0 0.0
      %7633 = vmatpush1.msra.mxu0 0.0
      %7634 = vmatprep.subr.mxu0 0.0
      %7635 = vmatpush1.msra.mxu0 0.0
      %7636 = vmatprep.subr.mxu0 0.0
      %7637 = vmatpush1.msra.mxu0 0.0
      %7638 = vmatprep.subr.mxu0 0.0
      %7639 = vmatpush1.msra.mxu0 0.0
      %7640 = vmatprep.subr.mxu0 0.0
      %7641 = vmatpush1.msra.mxu0 0.0
      %7642 = vmatprep.subr.mxu0 0.0
      %7643 = vmatpush1.msra.mxu0 0.0
      %7644 = vmatprep.subr.mxu0 0.0
      %7645 = vmatpush1.msra.mxu0 0.0
      %7646 = vmatprep.subr.mxu0 0.0
      %7647 = vmatpush1.msra.mxu0 0.0
      %7648 = vmatprep.subr.mxu0 0.0
      %7649 = vmatpush1.msra.mxu0 0.0
      %7650 = vmatprep.subr.mxu0 0.0
      %7651 = vmatpush1.msra.mxu0 0.0
      %7652 = vmatprep.subr.mxu0 0.0
      %7653 = vmatpush1.msra.mxu0 0.0
      %7654 = vmatprep.subr.mxu0 0.0
      %7655 = vmatpush1.msra.mxu0 0.0
      %7656 = vmatprep.subr.mxu0 0.0
      %7657 = vmatpush1.msra.mxu0 0.0
      %7658 = vmatprep.subr.mxu0 0.0
      %7659 = vmatpush1.msra.mxu0 0.0
      %7660 = vmatprep.subr.mxu0 0.0
      %7661 = vmatpush1.msra.mxu0 0.0
      %7662 = vmatprep.subr.mxu0 0.0
      %7663 = vmatpush1.msra.mxu0 0.0
      %7664 = vmatprep.subr.mxu0 0.0
      %7665 = vmatpush1.msra.mxu0 0.0
      %7666 = vmatprep.subr.mxu0 0.0
      %7667 = vmatpush1.msra.mxu0 0.0
      %7668 = vmatprep.subr.mxu0 0.0
      %7669 = vmatpush1.msra.mxu0 0.0
      %7670 = vmatprep.subr.mxu0 0.0
      %7671 = vmatpush1.msra.mxu0 0.0
      %7672 = vmatprep.subr.mxu0 0.0
      %7673 = vmatpush1.msra.mxu0 0.0
      %7674 = vmatprep.subr.mxu0 0.0
      %7675 = vmatpush1.msra.mxu0 0.0
      %7676 = vmatprep.subr.mxu0 0.0
      %7677 = vmatpush1.msra.mxu0 0.0
      %7678 = vmatprep.subr.mxu0 0.0
      %7679 = vmatpush1.msra.mxu0 0.0
      %7680 = vmatprep.subr.mxu0 0.0
      %7681 = vmatpush1.msra.mxu0 0.0
      %7682 = vmatprep.subr.mxu0 0.0
      %7683 = vmatpush1.msra.mxu0 0.0
      %7684 = vmatprep.subr.mxu0 0.0
      %7685 = vmatpush1.msra.mxu0 0.0
      %7686 = vmatprep.mubr.f32.mxu0 0.0
      %v7687 = vand.u32 %v3562, 4294901760
      %v7688 = vsub.f32 %v3562, %v7687
      %7689 = vmatmul.mubr.f32.gmra.mrb[0].mxu0 %v7688
      %v7690 = vpop.f32.mrb[0].mxu0
      %v7691 = vadd.f32 %v7527, %v7690
      %v7692 = vpop.f32.mrb[0].mxu0
      %7693 = vmatprep.mubr.f32.mxu0 0.0
      %v7694 = vand.u32 %v3565, 4294901760
      %v7695 = vsub.f32 %v3565, %v7694
      %7696 = vmatmul.mubr.f32.gmra.mrb[0].mxu0 %v7695
      %v7697 = vpop.f32.mrb[0].mxu0
      %v7698 = vadd.f32 %v7533, %v7697
      %v7699 = vpop.f32.mrb[0].mxu0
      %7700 = vmatprep.mubr.f32.mxu0 0.0
      %v7701 = vand.u32 %v3568, 4294901760
      %v7702 = vsub.f32 %v3568, %v7701
      %7703 = vmatmul.mubr.f32.gmra.mrb[0].mxu0 %v7702
      %v7704 = vpop.f32.mrb[0].mxu0
      %v7705 = vadd.f32 %v7539, %v7704
      %v7706 = vpop.f32.mrb[0].mxu0
      %7707 = vmatprep.mubr.f32.mxu0 0.0
      %v7708 = vand.u32 %v3571, 4294901760
      %v7709 = vsub.f32 %v3571, %v7708
      %7710 = vmatmul.mubr.f32.gmra.mrb[0].mxu0 %v7709
      %v7711 = vpop.f32.mrb[0].mxu0
      %v7712 = vadd.f32 %v7545, %v7711
      %v7713 = vpop.f32.mrb[0].mxu0
      %7714 = vmatprep.mubr.f32.mxu0 0.0
      %v7715 = vand.u32 %v3574, 4294901760
      %v7716 = vsub.f32 %v3574, %v7715
      %7717 = vmatmul.mubr.f32.gmra.mrb[0].mxu0 %v7716
      %v7718 = vpop.f32.mrb[0].mxu0
      %v7719 = vadd.f32 %v7551, %v7718
      %v7720 = vpop.f32.mrb[0].mxu0
      %7721 = vmatprep.mubr.f32.mxu0 0.0
      %v7722 = vand.u32 %v3577, 4294901760
      %v7723 = vsub.f32 %v3577, %v7722
      %7724 = vmatmul.mubr.f32.gmra.mrb[0].mxu0 %v7723
      %v7725 = vpop.f32.mrb[0].mxu0
      %v7726 = vadd.f32 %v7557, %v7725
      %v7727 = vpop.f32.mrb[0].mxu0
      %7728 = vmatprep.mubr.f32.mxu0 0.0
      %v7729 = vand.u32 %v3580, 4294901760
      %v7730 = vsub.f32 %v3580, %v7729
      %7731 = vmatmul.mubr.f32.gmra.mrb[0].mxu0 %v7730
      %v7732 = vpop.f32.mrb[0].mxu0
      %v7733 = vadd.f32 %v7563, %v7732
      %v7734 = vpop.f32.mrb[0].mxu0
      %7735 = vmatprep.mubr.f32.mxu0 0.0
      %v7736 = vand.u32 %v3583, 4294901760
      %v7737 = vsub.f32 %v3583, %v7736
      %7738 = vmatmul.mubr.f32.gmra.mrb[0].mxu0 %v7737
      %v7739 = vpop.f32.mrb[0].mxu0
      %v7740 = vadd.f32 %v7569, %v7739
      %v7741 = vpop.f32.mrb[0].mxu0
      %7742 = vmatprep.mubr.f32.mxu0 0.0
      %v7743 = vand.u32 %v3586, 4294901760
      %v7744 = vsub.f32 %v3586, %v7743
      %7745 = vmatmul.mubr.f32.gmra.mrb[0].mxu0 %v7744
      %v7746 = vpop.f32.mrb[0].mxu0
      %v7747 = vadd.f32 %v7575, %v7746
      %v7748 = vpop.f32.mrb[0].mxu0
      %7749 = vmatprep.mubr.f32.mxu0 0.0
      %v7750 = vand.u32 %v3589, 4294901760
      %v7751 = vsub.f32 %v3589, %v7750
      %7752 = vmatmul.mubr.f32.gmra.mrb[0].mxu0 %v7751
      %v7753 = vpop.f32.mrb[0].mxu0
      %v7754 = vadd.f32 %v7581, %v7753
      %v7755 = vpop.f32.mrb[0].mxu0
      %7756 = vmatprep.mubr.f32.mxu0 0.0
      %v7757 = vand.u32 %v3592, 4294901760
      %v7758 = vsub.f32 %v3592, %v7757
      %7759 = vmatmul.mubr.f32.gmra.mrb[0].mxu0 %v7758
      %v7760 = vpop.f32.mrb[0].mxu0
      %v7761 = vadd.f32 %v7587, %v7760
      %v7762 = vpop.f32.mrb[0].mxu0
      %7763 = vmatprep.mubr.f32.mxu0 0.0
      %v7764 = vand.u32 %v3595, 4294901760
      %v7765 = vsub.f32 %v3595, %v7764
      %7766 = vmatmul.mubr.f32.gmra.mrb[0].mxu0 %v7765
      %v7767 = vpop.f32.mrb[0].mxu0
      %v7768 = vadd.f32 %v7593, %v7767
      %v7769 = vpop.f32.mrb[0].mxu0
      %7770 = vmatprep.mubr.f32.mxu0 0.0
      %v7771 = vand.u32 %v3598, 4294901760
      %v7772 = vsub.f32 %v3598, %v7771
      %7773 = vmatmul.mubr.f32.gmra.mrb[0].mxu0 %v7772
      %v7774 = vpop.f32.mrb[0].mxu0
      %v7775 = vadd.f32 %v7599, %v7774
      %v7776 = vpop.f32.mrb[0].mxu0
      %7777 = vmatprep.mubr.f32.mxu0 0.0
      %v7778 = vand.u32 %v3601, 4294901760
      %v7779 = vsub.f32 %v3601, %v7778
      %7780 = vmatmul.mubr.f32.gmra.mrb[0].mxu0 %v7779
      %v7781 = vpop.f32.mrb[0].mxu0
      %v7782 = vadd.f32 %v7605, %v7781
      %v7783 = vpop.f32.mrb[0].mxu0
      %7784 = vmatprep.mubr.f32.mxu0 0.0
      %v7785 = vand.u32 %v3604, 4294901760
      %v7786 = vsub.f32 %v3604, %v7785
      %7787 = vmatmul.mubr.f32.gmra.mrb[0].mxu0 %v7786
      %v7788 = vpop.f32.mrb[0].mxu0
      %v7789 = vadd.f32 %v7611, %v7788
      %v7790 = vpop.f32.mrb[0].mxu0
      %7791 = vmatprep.mubr.f32.mxu0 0.0
      %v7792 = vand.u32 %v3607, 4294901760
      %v7793 = vsub.f32 %v3607, %v7792
      %7794 = vmatmul.mubr.f32.gmra.mrb[0].mxu0 %v7793
      %v7795 = vpop.f32.mrb[0].mxu0
      %v7796 = vadd.f32 %v7617, %v7795
      %v7797 = vpop.f32.mrb[0].mxu0
      %7798 = vdwg.mxu0
      %7799 = vmatprep.subr.mxu0 0.0
      %v7800 = vand.u32 %v7227, 4294901760
      %7801 = vmatpush1.msra.mxu0 %v7800
      %7802 = vmatprep.subr.mxu0 0.0
      %7803 = vmatpush1.msra.mxu0 0.0
      %7804 = vmatprep.subr.mxu0 0.0
      %7805 = vmatpush1.msra.mxu0 0.0
      %7806 = vmatprep.subr.mxu0 0.0
      %7807 = vmatpush1.msra.mxu0 0.0
      %7808 = vmatprep.subr.mxu0 0.0
      %7809 = vmatpush1.msra.mxu0 0.0
      %7810 = vmatprep.subr.mxu0 0.0
      %7811 = vmatpush1.msra.mxu0 0.0
      %7812 = vmatprep.subr.mxu0 0.0
      %7813 = vmatpush1.msra.mxu0 0.0
      %7814 = vmatprep.subr.mxu0 0.0
      %7815 = vmatpush1.msra.mxu0 0.0
      %7816 = vmatprep.subr.mxu0 0.0
      %7817 = vmatpush1.msra.mxu0 0.0
      %7818 = vmatprep.subr.mxu0 0.0
      %7819 = vmatpush1.msra.mxu0 0.0
      %7820 = vmatprep.subr.mxu0 0.0
      %7821 = vmatpush1.msra.mxu0 0.0
      %7822 = vmatprep.subr.mxu0 0.0
      %7823 = vmatpush1.msra.mxu0 0.0
      %7824 = vmatprep.subr.mxu0 0.0
      %7825 = vmatpush1.msra.mxu0 0.0
      %7826 = vmatprep.subr.mxu0 0.0
      %7827 = vmatpush1.msra.mxu0 0.0
      %7828 = vmatprep.subr.mxu0 0.0
      %7829 = vmatpush1.msra.mxu0 0.0
      %7830 = vmatprep.subr.mxu0 0.0
      %7831 = vmatpush1.msra.mxu0 0.0
      %7832 = vmatprep.subr.mxu0 0.0
      %7833 = vmatpush1.msra.mxu0 0.0
      %7834 = vmatprep.subr.mxu0 0.0
      %7835 = vmatpush1.msra.mxu0 0.0
      %7836 = vmatprep.subr.mxu0 0.0
      %7837 = vmatpush1.msra.mxu0 0.0
      %7838 = vmatprep.subr.mxu0 0.0
      %7839 = vmatpush1.msra.mxu0 0.0
      %7840 = vmatprep.subr.mxu0 0.0
      %7841 = vmatpush1.msra.mxu0 0.0
      %7842 = vmatprep.subr.mxu0 0.0
      %7843 = vmatpush1.msra.mxu0 0.0
      %7844 = vmatprep.subr.mxu0 0.0
      %7845 = vmatpush1.msra.mxu0 0.0
      %7846 = vmatprep.subr.mxu0 0.0
      %7847 = vmatpush1.msra.mxu0 0.0
      %7848 = vmatprep.subr.mxu0 0.0
      %7849 = vmatpush1.msra.mxu0 0.0
      %7850 = vmatprep.subr.mxu0 0.0
      %7851 = vmatpush1.msra.mxu0 0.0
      %7852 = vmatprep.subr.mxu0 0.0
      %7853 = vmatpush1.msra.mxu0 0.0
      %7854 = vmatprep.subr.mxu0 0.0
      %7855 = vmatpush1.msra.mxu0 0.0
      %7856 = vmatprep.subr.mxu0 0.0
      %7857 = vmatpush1.msra.mxu0 0.0
      %7858 = vmatprep.subr.mxu0 0.0
      %7859 = vmatpush1.msra.mxu0 0.0
      %7860 = vmatprep.subr.mxu0 0.0
      %7861 = vmatpush1.msra.mxu0 0.0
      %7862 = vmatprep.subr.mxu0 0.0
      %7863 = vmatpush1.msra.mxu0 0.0
      %7864 = vmatprep.mubr.f32.mxu0 0.0
      %v7865 = vand.u32 %v3562, 4294901760
      %v7866 = vsub.f32 %v3562, %v7865
      %v7867 = vand.u32 %v7866, 4294901760
      %7868 = vmatmul.mubr.f32.gmra.mrb[0].mxu0 %v7867
      %v7869 = vpop.f32.mrb[0].mxu0
      %v7870 = vadd.f32 %v7691, %v7869
      %v7871 = vpop.f32.mrb[0].mxu0
      %7872 = vmatprep.mubr.f32.mxu0 0.0
      %v7873 = vand.u32 %v3565, 4294901760
      %v7874 = vsub.f32 %v3565, %v7873
      %v7875 = vand.u32 %v7874, 4294901760
      %7876 = vmatmul.mubr.f32.gmra.mrb[0].mxu0 %v7875
      %v7877 = vpop.f32.mrb[0].mxu0
      %v7878 = vadd.f32 %v7698, %v7877
      %v7879 = vpop.f32.mrb[0].mxu0
      %7880 = vmatprep.mubr.f32.mxu0 0.0
      %v7881 = vand.u32 %v3568, 4294901760
      %v7882 = vsub.f32 %v3568, %v7881
      %v7883 = vand.u32 %v7882, 4294901760
      %7884 = vmatmul.mubr.f32.gmra.mrb[0].mxu0 %v7883
      %v7885 = vpop.f32.mrb[0].mxu0
      %v7886 = vadd.f32 %v7705, %v7885
      %v7887 = vpop.f32.mrb[0].mxu0
      %7888 = vmatprep.mubr.f32.mxu0 0.0
      %v7889 = vand.u32 %v3571, 4294901760
      %v7890 = vsub.f32 %v3571, %v7889
      %v7891 = vand.u32 %v7890, 4294901760
      %7892 = vmatmul.mubr.f32.gmra.mrb[0].mxu0 %v7891
      %v7893 = vpop.f32.mrb[0].mxu0
      %v7894 = vadd.f32 %v7712, %v7893
      %v7895 = vpop.f32.mrb[0].mxu0
      %7896 = vmatprep.mubr.f32.mxu0 0.0
      %v7897 = vand.u32 %v3574, 4294901760
      %v7898 = vsub.f32 %v3574, %v7897
      %v7899 = vand.u32 %v7898, 4294901760
      %7900 = vmatmul.mubr.f32.gmra.mrb[0].mxu0 %v7899
      %v7901 = vpop.f32.mrb[0].mxu0
      %v7902 = vadd.f32 %v7719, %v7901
      %v7903 = vpop.f32.mrb[0].mxu0
      %7904 = vmatprep.mubr.f32.mxu0 0.0
      %v7905 = vand.u32 %v3577, 4294901760
      %v7906 = vsub.f32 %v3577, %v7905
      %v7907 = vand.u32 %v7906, 4294901760
      %7908 = vmatmul.mubr.f32.gmra.mrb[0].mxu0 %v7907
      %v7909 = vpop.f32.mrb[0].mxu0
      %v7910 = vadd.f32 %v7726, %v7909
      %v7911 = vpop.f32.mrb[0].mxu0
      %7912 = vmatprep.mubr.f32.mxu0 0.0
      %v7913 = vand.u32 %v3580, 4294901760
      %v7914 = vsub.f32 %v3580, %v7913
      %v7915 = vand.u32 %v7914, 4294901760
      %7916 = vmatmul.mubr.f32.gmra.mrb[0].mxu0 %v7915
      %v7917 = vpop.f32.mrb[0].mxu0
      %v7918 = vadd.f32 %v7733, %v7917
      %v7919 = vpop.f32.mrb[0].mxu0
      %7920 = vmatprep.mubr.f32.mxu0 0.0
      %v7921 = vand.u32 %v3583, 4294901760
      %v7922 = vsub.f32 %v3583, %v7921
      %v7923 = vand.u32 %v7922, 4294901760
      %7924 = vmatmul.mubr.f32.gmra.mrb[0].mxu0 %v7923
      %v7925 = vpop.f32.mrb[0].mxu0
      %v7926 = vadd.f32 %v7740, %v7925
      %v7927 = vpop.f32.mrb[0].mxu0
      %7928 = vmatprep.mubr.f32.mxu0 0.0
      %v7929 = vand.u32 %v3586, 4294901760
      %v7930 = vsub.f32 %v3586, %v7929
      %v7931 = vand.u32 %v7930, 4294901760
      %7932 = vmatmul.mubr.f32.gmra.mrb[0].mxu0 %v7931
      %v7933 = vpop.f32.mrb[0].mxu0
      %v7934 = vadd.f32 %v7747, %v7933
      %v7935 = vpop.f32.mrb[0].mxu0
      %7936 = vmatprep.mubr.f32.mxu0 0.0
      %v7937 = vand.u32 %v3589, 4294901760
      %v7938 = vsub.f32 %v3589, %v7937
      %v7939 = vand.u32 %v7938, 4294901760
      %7940 = vmatmul.mubr.f32.gmra.mrb[0].mxu0 %v7939
      %v7941 = vpop.f32.mrb[0].mxu0
      %v7942 = vadd.f32 %v7754, %v7941
      %v7943 = vpop.f32.mrb[0].mxu0
      %7944 = vmatprep.mubr.f32.mxu0 0.0
      %v7945 = vand.u32 %v3592, 4294901760
      %v7946 = vsub.f32 %v3592, %v7945
      %v7947 = vand.u32 %v7946, 4294901760
      %7948 = vmatmul.mubr.f32.gmra.mrb[0].mxu0 %v7947
      %v7949 = vpop.f32.mrb[0].mxu0
      %v7950 = vadd.f32 %v7761, %v7949
      %v7951 = vpop.f32.mrb[0].mxu0
      %7952 = vmatprep.mubr.f32.mxu0 0.0
      %v7953 = vand.u32 %v3595, 4294901760
      %v7954 = vsub.f32 %v3595, %v7953
      %v7955 = vand.u32 %v7954, 4294901760
      %7956 = vmatmul.mubr.f32.gmra.mrb[0].mxu0 %v7955
      %v7957 = vpop.f32.mrb[0].mxu0
      %v7958 = vadd.f32 %v7768, %v7957
      %v7959 = vpop.f32.mrb[0].mxu0
      %7960 = vmatprep.mubr.f32.mxu0 0.0
      %v7961 = vand.u32 %v3598, 4294901760
      %v7962 = vsub.f32 %v3598, %v7961
      %v7963 = vand.u32 %v7962, 4294901760
      %7964 = vmatmul.mubr.f32.gmra.mrb[0].mxu0 %v7963
      %v7965 = vpop.f32.mrb[0].mxu0
      %v7966 = vadd.f32 %v7775, %v7965
      %v7967 = vpop.f32.mrb[0].mxu0
      %7968 = vmatprep.mubr.f32.mxu0 0.0
      %v7969 = vand.u32 %v3601, 4294901760
      %v7970 = vsub.f32 %v3601, %v7969
      %v7971 = vand.u32 %v7970, 4294901760
      %7972 = vmatmul.mubr.f32.gmra.mrb[0].mxu0 %v7971
      %v7973 = vpop.f32.mrb[0].mxu0
      %v7974 = vadd.f32 %v7782, %v7973
      %v7975 = vpop.f32.mrb[0].mxu0
      %7976 = vmatprep.mubr.f32.mxu0 0.0
      %v7977 = vand.u32 %v3604, 4294901760
      %v7978 = vsub.f32 %v3604, %v7977
      %v7979 = vand.u32 %v7978, 4294901760
      %7980 = vmatmul.mubr.f32.gmra.mrb[0].mxu0 %v7979
      %v7981 = vpop.f32.mrb[0].mxu0
      %v7982 = vadd.f32 %v7789, %v7981
      %v7983 = vpop.f32.mrb[0].mxu0
      %7984 = vmatprep.mubr.f32.mxu0 0.0
      %v7985 = vand.u32 %v3607, 4294901760
      %v7986 = vsub.f32 %v3607, %v7985
      %v7987 = vand.u32 %v7986, 4294901760
      %7988 = vmatmul.mubr.f32.gmra.mrb[0].mxu0 %v7987
      %v7989 = vpop.f32.mrb[0].mxu0
      %v7990 = vadd.f32 %v7796, %v7989
      %v7991 = vpop.f32.mrb[0].mxu0
      %7992 = vdwg.mxu0
      %7993 = vmatprep.subr.mxu0 0.0
      %v7994 = vand.u32 %v7227, 4294901760
      %v7995 = vsub.f32 %v7227, %v7994
      %v7996 = vand.u32 %v7995, 4294901760
      %7997 = vmatpush1.msra.mxu0 %v7996
      %7998 = vmatprep.subr.mxu0 0.0
      %7999 = vmatpush1.msra.mxu0 0.0
      %8000 = vmatprep.subr.mxu0 0.0
      %8001 = vmatpush1.msra.mxu0 0.0
      %8002 = vmatprep.subr.mxu0 0.0
      %8003 = vmatpush1.msra.mxu0 0.0
      %8004 = vmatprep.subr.mxu0 0.0
      %8005 = vmatpush1.msra.mxu0 0.0
      %8006 = vmatprep.subr.mxu0 0.0
      %8007 = vmatpush1.msra.mxu0 0.0
      %8008 = vmatprep.subr.mxu0 0.0
      %8009 = vmatpush1.msra.mxu0 0.0
      %8010 = vmatprep.subr.mxu0 0.0
      %8011 = vmatpush1.msra.mxu0 0.0
      %8012 = vmatprep.subr.mxu0 0.0
      %8013 = vmatpush1.msra.mxu0 0.0
      %8014 = vmatprep.subr.mxu0 0.0
      %8015 = vmatpush1.msra.mxu0 0.0
      %8016 = vmatprep.subr.mxu0 0.0
      %8017 = vmatpush1.msra.mxu0 0.0
      %8018 = vmatprep.subr.mxu0 0.0
      %8019 = vmatpush1.msra.mxu0 0.0
      %8020 = vmatprep.subr.mxu0 0.0
      %8021 = vmatpush1.msra.mxu0 0.0
      %8022 = vmatprep.subr.mxu0 0.0
      %8023 = vmatpush1.msra.mxu0 0.0
      %8024 = vmatprep.subr.mxu0 0.0
      %8025 = vmatpush1.msra.mxu0 0.0
      %8026 = vmatprep.subr.mxu0 0.0
      %8027 = vmatpush1.msra.mxu0 0.0
      %8028 = vmatprep.subr.mxu0 0.0
      %8029 = vmatpush1.msra.mxu0 0.0
      %8030 = vmatprep.subr.mxu0 0.0
      %8031 = vmatpush1.msra.mxu0 0.0
      %8032 = vmatprep.subr.mxu0 0.0
      %8033 = vmatpush1.msra.mxu0 0.0
      %8034 = vmatprep.subr.mxu0 0.0
      %8035 = vmatpush1.msra.mxu0 0.0
      %8036 = vmatprep.subr.mxu0 0.0
      %8037 = vmatpush1.msra.mxu0 0.0
      %8038 = vmatprep.subr.mxu0 0.0
      %8039 = vmatpush1.msra.mxu0 0.0
      %8040 = vmatprep.subr.mxu0 0.0
      %8041 = vmatpush1.msra.mxu0 0.0
      %8042 = vmatprep.subr.mxu0 0.0
      %8043 = vmatpush1.msra.mxu0 0.0
      %8044 = vmatprep.subr.mxu0 0.0
      %8045 = vmatpush1.msra.mxu0 0.0
      %8046 = vmatprep.subr.mxu0 0.0
      %8047 = vmatpush1.msra.mxu0 0.0
      %8048 = vmatprep.subr.mxu0 0.0
      %8049 = vmatpush1.msra.mxu0 0.0
      %8050 = vmatprep.subr.mxu0 0.0
      %8051 = vmatpush1.msra.mxu0 0.0
      %8052 = vmatprep.subr.mxu0 0.0
      %8053 = vmatpush1.msra.mxu0 0.0
      %8054 = vmatprep.subr.mxu0 0.0
      %8055 = vmatpush1.msra.mxu0 0.0
      %8056 = vmatprep.subr.mxu0 0.0
      %8057 = vmatpush1.msra.mxu0 0.0
      %8058 = vmatprep.subr.mxu0 0.0
      %8059 = vmatpush1.msra.mxu0 0.0
      %8060 = vmatprep.mubr.f32.mxu0 0.0
      %v8061 = vand.u32 %v3562, 4294901760
      %8062 = vmatmul.mubr.f32.gmra.mrb[0].mxu0 %v8061
      %v8063 = vpop.f32.mrb[0].mxu0
      %v8064 = vadd.f32 %v7870, %v8063
      %v8065 = vpop.f32.mrb[0].mxu0
      %8066 = vmatprep.mubr.f32.mxu0 0.0
      %v8067 = vand.u32 %v3565, 4294901760
      %8068 = vmatmul.mubr.f32.gmra.mrb[0].mxu0 %v8067
      %v8069 = vpop.f32.mrb[0].mxu0
      %v8070 = vadd.f32 %v7878, %v8069
      %v8071 = vpop.f32.mrb[0].mxu0
      %8072 = vmatprep.mubr.f32.mxu0 0.0
      %v8073 = vand.u32 %v3568, 4294901760
      %8074 = vmatmul.mubr.f32.gmra.mrb[0].mxu0 %v8073
      %v8075 = vpop.f32.mrb[0].mxu0
      %v8076 = vadd.f32 %v7886, %v8075
      %v8077 = vpop.f32.mrb[0].mxu0
      %8078 = vmatprep.mubr.f32.mxu0 0.0
      %v8079 = vand.u32 %v3571, 4294901760
      %8080 = vmatmul.mubr.f32.gmra.mrb[0].mxu0 %v8079
      %v8081 = vpop.f32.mrb[0].mxu0
      %v8082 = vadd.f32 %v7894, %v8081
      %v8083 = vpop.f32.mrb[0].mxu0
      %8084 = vmatprep.mubr.f32.mxu0 0.0
      %v8085 = vand.u32 %v3574, 4294901760
      %8086 = vmatmul.mubr.f32.gmra.mrb[0].mxu0 %v8085
      %v8087 = vpop.f32.mrb[0].mxu0
      %v8088 = vadd.f32 %v7902, %v8087
      %v8089 = vpop.f32.mrb[0].mxu0
      %8090 = vmatprep.mubr.f32.mxu0 0.0
      %v8091 = vand.u32 %v3577, 4294901760
      %8092 = vmatmul.mubr.f32.gmra.mrb[0].mxu0 %v8091
      %v8093 = vpop.f32.mrb[0].mxu0
      %v8094 = vadd.f32 %v7910, %v8093
      %v8095 = vpop.f32.mrb[0].mxu0
      %8096 = vmatprep.mubr.f32.mxu0 0.0
      %v8097 = vand.u32 %v3580, 4294901760
      %8098 = vmatmul.mubr.f32.gmra.mrb[0].mxu0 %v8097
      %v8099 = vpop.f32.mrb[0].mxu0
      %v8100 = vadd.f32 %v7918, %v8099
      %v8101 = vpop.f32.mrb[0].mxu0
      %8102 = vmatprep.mubr.f32.mxu0 0.0
      %v8103 = vand.u32 %v3583, 4294901760
      %8104 = vmatmul.mubr.f32.gmra.mrb[0].mxu0 %v8103
      %v8105 = vpop.f32.mrb[0].mxu0
      %v8106 = vadd.f32 %v7926, %v8105
      %v8107 = vpop.f32.mrb[0].mxu0
      %8108 = vmatprep.mubr.f32.mxu0 0.0
      %v8109 = vand.u32 %v3586, 4294901760
      %8110 = vmatmul.mubr.f32.gmra.mrb[0].mxu0 %v8109
      %v8111 = vpop.f32.mrb[0].mxu0
      %v8112 = vadd.f32 %v7934, %v8111
      %v8113 = vpop.f32.mrb[0].mxu0
      %8114 = vmatprep.mubr.f32.mxu0 0.0
      %v8115 = vand.u32 %v3589, 4294901760
      %8116 = vmatmul.mubr.f32.gmra.mrb[0].mxu0 %v8115
      %v8117 = vpop.f32.mrb[0].mxu0
      %v8118 = vadd.f32 %v7942, %v8117
      %v8119 = vpop.f32.mrb[0].mxu0
      %8120 = vmatprep.mubr.f32.mxu0 0.0
      %v8121 = vand.u32 %v3592, 4294901760
      %8122 = vmatmul.mubr.f32.gmra.mrb[0].mxu0 %v8121
      %v8123 = vpop.f32.mrb[0].mxu0
      %v8124 = vadd.f32 %v7950, %v8123
      %v8125 = vpop.f32.mrb[0].mxu0
      %8126 = vmatprep.mubr.f32.mxu0 0.0
      %v8127 = vand.u32 %v3595, 4294901760
      %8128 = vmatmul.mubr.f32.gmra.mrb[0].mxu0 %v8127
      %v8129 = vpop.f32.mrb[0].mxu0
      %v8130 = vadd.f32 %v7958, %v8129
      %v8131 = vpop.f32.mrb[0].mxu0
      %8132 = vmatprep.mubr.f32.mxu0 0.0
      %v8133 = vand.u32 %v3598, 4294901760
      %8134 = vmatmul.mubr.f32.gmra.mrb[0].mxu0 %v8133
      %v8135 = vpop.f32.mrb[0].mxu0
      %v8136 = vadd.f32 %v7966, %v8135
      %v8137 = vpop.f32.mrb[0].mxu0
      %8138 = vmatprep.mubr.f32.mxu0 0.0
      %v8139 = vand.u32 %v3601, 4294901760
      %8140 = vmatmul.mubr.f32.gmra.mrb[0].mxu0 %v8139
      %v8141 = vpop.f32.mrb[0].mxu0
      %v8142 = vadd.f32 %v7974, %v8141
      %v8143 = vpop.f32.mrb[0].mxu0
      %8144 = vmatprep.mubr.f32.mxu0 0.0
      %v8145 = vand.u32 %v3604, 4294901760
      %8146 = vmatmul.mubr.f32.gmra.mrb[0].mxu0 %v8145
      %v8147 = vpop.f32.mrb[0].mxu0
      %v8148 = vadd.f32 %v7982, %v8147
      %v8149 = vpop.f32.mrb[0].mxu0
      %8150 = vmatprep.mubr.f32.mxu0 0.0
      %v8151 = vand.u32 %v3607, 4294901760
      %8152 = vmatmul.mubr.f32.gmra.mrb[0].mxu0 %v8151
      %v8153 = vpop.f32.mrb[0].mxu0
      %v8154 = vadd.f32 %v7990, %v8153
      %v8155 = vpop.f32.mrb[0].mxu0
      %8156 = vdwg.mxu0
      %8157 = vmatprep.subr.mxu0 0.0
      %v8158 = vand.u32 %v7227, 4294901760
      %8159 = vmatpush1.msra.mxu0 %v8158
      %8160 = vmatprep.subr.mxu0 0.0
      %8161 = vmatpush1.msra.mxu0 0.0
      %8162 = vmatprep.subr.mxu0 0.0
      %8163 = vmatpush1.msra.mxu0 0.0
      %8164 = vmatprep.subr.mxu0 0.0
      %8165 = vmatpush1.msra.mxu0 0.0
      %8166 = vmatprep.subr.mxu0 0.0
      %8167 = vmatpush1.msra.mxu0 0.0
      %8168 = vmatprep.subr.mxu0 0.0
      %8169 = vmatpush1.msra.mxu0 0.0
      %8170 = vmatprep.subr.mxu0 0.0
      %8171 = vmatpush1.msra.mxu0 0.0
      %8172 = vmatprep.subr.mxu0 0.0
      %8173 = vmatpush1.msra.mxu0 0.0
      %8174 = vmatprep.subr.mxu0 0.0
      %8175 = vmatpush1.msra.mxu0 0.0
      %8176 = vmatprep.subr.mxu0 0.0
      %8177 = vmatpush1.msra.mxu0 0.0
      %8178 = vmatprep.subr.mxu0 0.0
      %8179 = vmatpush1.msra.mxu0 0.0
      %8180 = vmatprep.subr.mxu0 0.0
      %8181 = vmatpush1.msra.mxu0 0.0
      %8182 = vmatprep.subr.mxu0 0.0
      %8183 = vmatpush1.msra.mxu0 0.0
      %8184 = vmatprep.subr.mxu0 0.0
      %8185 = vmatpush1.msra.mxu0 0.0
      %8186 = vmatprep.subr.mxu0 0.0
      %8187 = vmatpush1.msra.mxu0 0.0
      %8188 = vmatprep.subr.mxu0 0.0
      %8189 = vmatpush1.msra.mxu0 0.0
      %8190 = vmatprep.subr.mxu0 0.0
      %8191 = vmatpush1.msra.mxu0 0.0
      %8192 = vmatprep.subr.mxu0 0.0
      %8193 = vmatpush1.msra.mxu0 0.0
      %8194 = vmatprep.subr.mxu0 0.0
      %8195 = vmatpush1.msra.mxu0 0.0
      %8196 = vmatprep.subr.mxu0 0.0
      %8197 = vmatpush1.msra.mxu0 0.0
      %8198 = vmatprep.subr.mxu0 0.0
      %8199 = vmatpush1.msra.mxu0 0.0
      %8200 = vmatprep.subr.mxu0 0.0
      %8201 = vmatpush1.msra.mxu0 0.0
      %8202 = vmatprep.subr.mxu0 0.0
      %8203 = vmatpush1.msra.mxu0 0.0
      %8204 = vmatprep.subr.mxu0 0.0
      %8205 = vmatpush1.msra.mxu0 0.0
      %8206 = vmatprep.subr.mxu0 0.0
      %8207 = vmatpush1.msra.mxu0 0.0
      %8208 = vmatprep.subr.mxu0 0.0
      %8209 = vmatpush1.msra.mxu0 0.0
      %8210 = vmatprep.subr.mxu0 0.0
      %8211 = vmatpush1.msra.mxu0 0.0
      %8212 = vmatprep.subr.mxu0 0.0
      %8213 = vmatpush1.msra.mxu0 0.0
      %8214 = vmatprep.subr.mxu0 0.0
      %8215 = vmatpush1.msra.mxu0 0.0
      %8216 = vmatprep.subr.mxu0 0.0
      %8217 = vmatpush1.msra.mxu0 0.0
      %8218 = vmatprep.subr.mxu0 0.0
      %8219 = vmatpush1.msra.mxu0 0.0
      %8220 = vmatprep.subr.mxu0 0.0
      %8221 = vmatpush1.msra.mxu0 0.0
      %8222 = vmatprep.mubr.f32.mxu0 0.0
      %v8223 = vand.u32 %v3562, 4294901760
      %8224 = vmatmul.mubr.f32.gmra.mrb[0].mxu0 %v8223
      %v8225 = vpop.f32.mrb[0].mxu0
      %v8226 = vadd.f32 %v8064, %v8225
      %v8227 = vpop.f32.mrb[0].mxu0
      %8228 = vmatprep.mubr.f32.mxu0 0.0
      %v8229 = vand.u32 %v3565, 4294901760
      %8230 = vmatmul.mubr.f32.gmra.mrb[0].mxu0 %v8229
      %v8231 = vpop.f32.mrb[0].mxu0
      %v8232 = vadd.f32 %v8070, %v8231
      %v8233 = vpop.f32.mrb[0].mxu0
      %8234 = vmatprep.mubr.f32.mxu0 0.0
      %v8235 = vand.u32 %v3568, 4294901760
      %8236 = vmatmul.mubr.f32.gmra.mrb[0].mxu0 %v8235
      %v8237 = vpop.f32.mrb[0].mxu0
      %v8238 = vadd.f32 %v8076, %v8237
      %v8239 = vpop.f32.mrb[0].mxu0
      %8240 = vmatprep.mubr.f32.mxu0 0.0
      %v8241 = vand.u32 %v3571, 4294901760
      %8242 = vmatmul.mubr.f32.gmra.mrb[0].mxu0 %v8241
      %v8243 = vpop.f32.mrb[0].mxu0
      %v8244 = vadd.f32 %v8082, %v8243
      %v8245 = vpop.f32.mrb[0].mxu0
      %8246 = vmatprep.mubr.f32.mxu0 0.0
      %v8247 = vand.u32 %v3574, 4294901760
      %8248 = vmatmul.mubr.f32.gmra.mrb[0].mxu0 %v8247
      %v8249 = vpop.f32.mrb[0].mxu0
      %v8250 = vadd.f32 %v8088, %v8249
      %v8251 = vpop.f32.mrb[0].mxu0
      %8252 = vmatprep.mubr.f32.mxu0 0.0
      %v8253 = vand.u32 %v3577, 4294901760
      %8254 = vmatmul.mubr.f32.gmra.mrb[0].mxu0 %v8253
      %v8255 = vpop.f32.mrb[0].mxu0
      %v8256 = vadd.f32 %v8094, %v8255
      %v8257 = vpop.f32.mrb[0].mxu0
      %8258 = vmatprep.mubr.f32.mxu0 0.0
      %v8259 = vand.u32 %v3580, 4294901760
      %8260 = vmatmul.mubr.f32.gmra.mrb[0].mxu0 %v8259
      %v8261 = vpop.f32.mrb[0].mxu0
      %v8262 = vadd.f32 %v8100, %v8261
      %v8263 = vpop.f32.mrb[0].mxu0
      %8264 = vmatprep.mubr.f32.mxu0 0.0
      %v8265 = vand.u32 %v3583, 4294901760
      %8266 = vmatmul.mubr.f32.gmra.mrb[0].mxu0 %v8265
      %v8267 = vpop.f32.mrb[0].mxu0
      %v8268 = vadd.f32 %v8106, %v8267
      %v8269 = vpop.f32.mrb[0].mxu0
      %8270 = vmatprep.mubr.f32.mxu0 0.0
      %v8271 = vand.u32 %v3586, 4294901760
      %8272 = vmatmul.mubr.f32.gmra.mrb[0].mxu0 %v8271
      %v8273 = vpop.f32.mrb[0].mxu0
      %v8274 = vadd.f32 %v8112, %v8273
      %v8275 = vpop.f32.mrb[0].mxu0
      %8276 = vmatprep.mubr.f32.mxu0 0.0
      %v8277 = vand.u32 %v3589, 4294901760
      %8278 = vmatmul.mubr.f32.gmra.mrb[0].mxu0 %v8277
      %v8279 = vpop.f32.mrb[0].mxu0
      %v8280 = vadd.f32 %v8118, %v8279
      %v8281 = vpop.f32.mrb[0].mxu0
      %8282 = vmatprep.mubr.f32.mxu0 0.0
      %v8283 = vand.u32 %v3592, 4294901760
      %8284 = vmatmul.mubr.f32.gmra.mrb[0].mxu0 %v8283
      %v8285 = vpop.f32.mrb[0].mxu0
      %v8286 = vadd.f32 %v8124, %v8285
      %v8287 = vpop.f32.mrb[0].mxu0
      %8288 = vmatprep.mubr.f32.mxu0 0.0
      %v8289 = vand.u32 %v3595, 4294901760
      %8290 = vmatmul.mubr.f32.gmra.mrb[0].mxu0 %v8289
      %v8291 = vpop.f32.mrb[0].mxu0
      %v8292 = vadd.f32 %v8130, %v8291
      %v8293 = vpop.f32.mrb[0].mxu0
      %8294 = vmatprep.mubr.f32.mxu0 0.0
      %v8295 = vand.u32 %v3598, 4294901760
      %8296 = vmatmul.mubr.f32.gmra.mrb[0].mxu0 %v8295
      %v8297 = vpop.f32.mrb[0].mxu0
      %v8298 = vadd.f32 %v8136, %v8297
      %v8299 = vpop.f32.mrb[0].mxu0
      %8300 = vmatprep.mubr.f32.mxu0 0.0
      %v8301 = vand.u32 %v3601, 4294901760
      %8302 = vmatmul.mubr.f32.gmra.mrb[0].mxu0 %v8301
      %v8303 = vpop.f32.mrb[0].mxu0
      %v8304 = vadd.f32 %v8142, %v8303
      %v8305 = vpop.f32.mrb[0].mxu0
      %8306 = vmatprep.mubr.f32.mxu0 0.0
      %v8307 = vand.u32 %v3604, 4294901760
      %8308 = vmatmul.mubr.f32.gmra.mrb[0].mxu0 %v8307
      %v8309 = vpop.f32.mrb[0].mxu0
      %v8310 = vadd.f32 %v8148, %v8309
      %v8311 = vpop.f32.mrb[0].mxu0
      %8312 = vmatprep.mubr.f32.mxu0 0.0
      %v8313 = vand.u32 %v3607, 4294901760
      %8314 = vmatmul.mubr.f32.gmra.mrb[0].mxu0 %v8313
      %v8315 = vpop.f32.mrb[0].mxu0
      %v8316 = vadd.f32 %v8154, %v8315
      %v8317 = vpop.f32.mrb[0].mxu0
      %8318 = vdwg.mxu0
      %v8319 = vrcp.pop %v8226
      %v8320 = vmul.f32 1.0, %v8319
      %v8321 = vrcp.pop %v8232
      %v8322 = vmul.f32 1.0, %v8321
      %v8323 = vrcp.pop %v8238
      %v8324 = vmul.f32 1.0, %v8323
      %v8325 = vrcp.pop %v8244
      %v8326 = vmul.f32 1.0, %v8325
      %v8327 = vrcp.pop %v8250
      %v8328 = vmul.f32 1.0, %v8327
      %v8329 = vrcp.pop %v8256
      %v8330 = vmul.f32 1.0, %v8329
      %v8331 = vrcp.pop %v8262
      %v8332 = vmul.f32 1.0, %v8331
      %v8333 = vrcp.pop %v8268
      %v8334 = vmul.f32 1.0, %v8333
      %v8335 = vrcp.pop %v8274
      %v8336 = vmul.f32 1.0, %v8335
      %v8337 = vrcp.pop %v8280
      %v8338 = vmul.f32 1.0, %v8337
      %v8339 = vrcp.pop %v8286
      %v8340 = vmul.f32 1.0, %v8339
      %v8341 = vrcp.pop %v8292
      %v8342 = vmul.f32 1.0, %v8341
      %v8343 = vrcp.pop %v8298
      %v8344 = vmul.f32 1.0, %v8343
      %v8345 = vrcp.pop %v8304
      %v8346 = vmul.f32 1.0, %v8345
      %v8347 = vrcp.pop %v8310
      %v8348 = vmul.f32 1.0, %v8347
      %v8349 = vrcp.pop %v8316
      %v8350 = vmul.f32 1.0, %v8349
      %v8351 = vld [vmem:[%s8] sm:$0x7f]
      %v8352 = vld [vmem:[%s8 + $0x8] sm:$0x7f]
      %vm8353 = vcmask 56320
      %v8355 = vsel %vm8353, %v8320, 0
      %v8358 = vsel %vm8353, %v8322, 0
      %v8361 = vsel %vm8353, %v8324, 0
      %v8364 = vsel %vm8353, %v8326, 0
      %v8367 = vsel %vm8353, %v8328, 0
      %v8370 = vsel %vm8353, %v8330, 0
      %v8373 = vsel %vm8353, %v8332, 0
      %v8376 = vsel %vm8353, %v8334, 0
      %v8379 = vsel %vm8353, %v8336, 0
      %v8382 = vsel %vm8353, %v8338, 0
      %v8385 = vsel %vm8353, %v8340, 0
      %v8388 = vsel %vm8353, %v8342, 0
      %v8391 = vsel %vm8353, %v8344, 0
      %v8394 = vsel %vm8353, %v8346, 0
      %v8397 = vsel %vm8353, %v8348, 0
      %v8400 = vsel %vm8353, %v8350, 0
      %vm8402 = vcmask 1046528
      %v8404 = vsel %vm8402, %v8351, 0
      %v8407 = vsel %vm8402, %v8352, 0
      %v8409 = vand.u32 %v8407, 4294901760
      %8410 = vmatprep.subr.mxu0 %v8409
      %v8411 = vand.u32 %v8404, 4294901760
      %8412 = vmatpush1.msra.mxu0 %v8411
      %8413 = vmatprep.subr.mxu0 0.0
      %8414 = vmatpush1.msra.mxu0 0.0
      %8415 = vmatprep.subr.mxu0 0.0
      %8416 = vmatpush1.msra.mxu0 0.0
      %8417 = vmatprep.subr.mxu0 0.0
      %8418 = vmatpush1.msra.mxu0 0.0
      %8419 = vmatprep.subr.mxu0 0.0
      %8420 = vmatpush1.msra.mxu0 0.0
      %8421 = vmatprep.subr.mxu0 0.0
      %8422 = vmatpush1.msra.mxu0 0.0
      %8423 = vmatprep.subr.mxu0 0.0
      %8424 = vmatpush1.msra.mxu0 0.0
      %8425 = vmatprep.subr.mxu0 0.0
      %8426 = vmatpush1.msra.mxu0 0.0
      %8427 = vmatprep.subr.mxu0 0.0
      %8428 = vmatpush1.msra.mxu0 0.0
      %8429 = vmatprep.subr.mxu0 0.0
      %8430 = vmatpush1.msra.mxu0 0.0
      %8431 = vmatprep.subr.mxu0 0.0
      %8432 = vmatpush1.msra.mxu0 0.0
      %8433 = vmatprep.subr.mxu0 0.0
      %8434 = vmatpush1.msra.mxu0 0.0
      %8435 = vmatprep.subr.mxu0 0.0
      %8436 = vmatpush1.msra.mxu0 0.0
      %8437 = vmatprep.subr.mxu0 0.0
      %8438 = vmatpush1.msra.mxu0 0.0
      %8439 = vmatprep.subr.mxu0 0.0
      %8440 = vmatpush1.msra.mxu0 0.0
      %8441 = vmatprep.subr.mxu0 0.0
      %8442 = vmatpush1.msra.mxu0 0.0
      %8443 = vmatprep.subr.mxu0 0.0
      %8444 = vmatpush1.msra.mxu0 0.0
      %8445 = vmatprep.subr.mxu0 0.0
      %8446 = vmatpush1.msra.mxu0 0.0
      %8447 = vmatprep.subr.mxu0 0.0
      %8448 = vmatpush1.msra.mxu0 0.0
      %8449 = vmatprep.subr.mxu0 0.0
      %8450 = vmatpush1.msra.mxu0 0.0
      %8451 = vmatprep.subr.mxu0 0.0
      %8452 = vmatpush1.msra.mxu0 0.0
      %8453 = vmatprep.subr.mxu0 0.0
      %8454 = vmatpush1.msra.mxu0 0.0
      %8455 = vmatprep.subr.mxu0 0.0
      %8456 = vmatpush1.msra.mxu0 0.0
      %8457 = vmatprep.subr.mxu0 0.0
      %8458 = vmatpush1.msra.mxu0 0.0
      %8459 = vmatprep.subr.mxu0 0.0
      %8460 = vmatpush1.msra.mxu0 0.0
      %8461 = vmatprep.subr.mxu0 0.0
      %8462 = vmatpush1.msra.mxu0 0.0
      %8463 = vmatprep.subr.mxu0 0.0
      %8464 = vmatpush1.msra.mxu0 0.0
      %8465 = vmatprep.subr.mxu0 0.0
      %8466 = vmatpush1.msra.mxu0 0.0
      %8467 = vmatprep.subr.mxu0 0.0
      %8468 = vmatpush1.msra.mxu0 0.0
      %8469 = vmatprep.subr.mxu0 0.0
      %8470 = vmatpush1.msra.mxu0 0.0
      %8471 = vmatprep.subr.mxu0 0.0
      %8472 = vmatpush1.msra.mxu0 0.0
      %8473 = vmatprep.subr.mxu0 0.0
      %8474 = vmatpush1.msra.mxu0 0.0
      %8475 = vmatprep.mubr.f32.mxu0 0.0
      %v8476 = vand.u32 %v8355, 4294901760
      %v8477 = vsub.f32 %v8355, %v8476
      %v8478 = vand.u32 %v8477, 4294901760
      %v8479 = vsub.f32 %v8477, %v8478
      %v8480 = vand.u32 %v8479, 4294901760
      %8481 = vmatmul.mubr.f32.gmra.mrb[0].mxu0 %v8480
      %v8482 = vpop.f32.mrb[0].mxu0
      %v8483 = vadd.f32 0.0, %v8482
      %v8484 = vpop.f32.mrb[0].mxu0
      %v8485 = vadd.f32 0.0, %v8484
      %8486 = vmatprep.mubr.f32.mxu0 0.0
      %v8487 = vand.u32 %v8358, 4294901760
      %v8488 = vsub.f32 %v8358, %v8487
      %v8489 = vand.u32 %v8488, 4294901760
      %v8490 = vsub.f32 %v8488, %v8489
      %v8491 = vand.u32 %v8490, 4294901760
      %8492 = vmatmul.mubr.f32.gmra.mrb[0].mxu0 %v8491
      %v8493 = vpop.f32.mrb[0].mxu0
      %v8494 = vadd.f32 0.0, %v8493
      %v8495 = vpop.f32.mrb[0].mxu0
      %v8496 = vadd.f32 0.0, %v8495
      %8497 = vmatprep.mubr.f32.mxu0 0.0
      %v8498 = vand.u32 %v8361, 4294901760
      %v8499 = vsub.f32 %v8361, %v8498
      %v8500 = vand.u32 %v8499, 4294901760
      %v8501 = vsub.f32 %v8499, %v8500
      %v8502 = vand.u32 %v8501, 4294901760
      %8503 = vmatmul.mubr.f32.gmra.mrb[0].mxu0 %v8502
      %v8504 = vpop.f32.mrb[0].mxu0
      %v8505 = vadd.f32 0.0, %v8504
      %v8506 = vpop.f32.mrb[0].mxu0
      %v8507 = vadd.f32 0.0, %v8506
      %8508 = vmatprep.mubr.f32.mxu0 0.0
      %v8509 = vand.u32 %v8364, 4294901760
      %v8510 = vsub.f32 %v8364, %v8509
      %v8511 = vand.u32 %v8510, 4294901760
      %v8512 = vsub.f32 %v8510, %v8511
      %v8513 = vand.u32 %v8512, 4294901760
      %8514 = vmatmul.mubr.f32.gmra.mrb[0].mxu0 %v8513
      %v8515 = vpop.f32.mrb[0].mxu0
      %v8516 = vadd.f32 0.0, %v8515
      %v8517 = vpop.f32.mrb[0].mxu0
      %v8518 = vadd.f32 0.0, %v8517
      %8519 = vmatprep.mubr.f32.mxu0 0.0
      %v8520 = vand.u32 %v8367, 4294901760
      %v8521 = vsub.f32 %v8367, %v8520
      %v8522 = vand.u32 %v8521, 4294901760
      %v8523 = vsub.f32 %v8521, %v8522
      %v8524 = vand.u32 %v8523, 4294901760
      %8525 = vmatmul.mubr.f32.gmra.mrb[0].mxu0 %v8524
      %v8526 = vpop.f32.mrb[0].mxu0
      %v8527 = vadd.f32 0.0, %v8526
      %v8528 = vpop.f32.mrb[0].mxu0
      %v8529 = vadd.f32 0.0, %v8528
      %8530 = vmatprep.mubr.f32.mxu0 0.0
      %v8531 = vand.u32 %v8370, 4294901760
      %v8532 = vsub.f32 %v8370, %v8531
      %v8533 = vand.u32 %v8532, 4294901760
      %v8534 = vsub.f32 %v8532, %v8533
      %v8535 = vand.u32 %v8534, 4294901760
      %8536 = vmatmul.mubr.f32.gmra.mrb[0].mxu0 %v8535
      %v8537 = vpop.f32.mrb[0].mxu0
      %v8538 = vadd.f32 0.0, %v8537
      %v8539 = vpop.f32.mrb[0].mxu0
      %v8540 = vadd.f32 0.0, %v8539
      %8541 = vmatprep.mubr.f32.mxu0 0.0
      %v8542 = vand.u32 %v8373, 4294901760
      %v8543 = vsub.f32 %v8373, %v8542
      %v8544 = vand.u32 %v8543, 4294901760
      %v8545 = vsub.f32 %v8543, %v8544
      %v8546 = vand.u32 %v8545, 4294901760
      %8547 = vmatmul.mubr.f32.gmra.mrb[0].mxu0 %v8546
      %v8548 = vpop.f32.mrb[0].mxu0
      %v8549 = vadd.f32 0.0, %v8548
      %v8550 = vpop.f32.mrb[0].mxu0
      %v8551 = vadd.f32 0.0, %v8550
      %8552 = vmatprep.mubr.f32.mxu0 0.0
      %v8553 = vand.u32 %v8376, 4294901760
      %v8554 = vsub.f32 %v8376, %v8553
      %v8555 = vand.u32 %v8554, 4294901760
      %v8556 = vsub.f32 %v8554, %v8555
      %v8557 = vand.u32 %v8556, 4294901760
      %8558 = vmatmul.mubr.f32.gmra.mrb[0].mxu0 %v8557
      %v8559 = vpop.f32.mrb[0].mxu0
      %v8560 = vadd.f32 0.0, %v8559
      %v8561 = vpop.f32.mrb[0].mxu0
      %v8562 = vadd.f32 0.0, %v8561
      %8563 = vmatprep.mubr.f32.mxu0 0.0
      %v8564 = vand.u32 %v8379, 4294901760
      %v8565 = vsub.f32 %v8379, %v8564
      %v8566 = vand.u32 %v8565, 4294901760
      %v8567 = vsub.f32 %v8565, %v8566
      %v8568 = vand.u32 %v8567, 4294901760
      %8569 = vmatmul.mubr.f32.gmra.mrb[0].mxu0 %v8568
      %v8570 = vpop.f32.mrb[0].mxu0
      %v8571 = vadd.f32 0.0, %v8570
      %v8572 = vpop.f32.mrb[0].mxu0
      %v8573 = vadd.f32 0.0, %v8572
      %8574 = vmatprep.mubr.f32.mxu0 0.0
      %v8575 = vand.u32 %v8382, 4294901760
      %v8576 = vsub.f32 %v8382, %v8575
      %v8577 = vand.u32 %v8576, 4294901760
      %v8578 = vsub.f32 %v8576, %v8577
      %v8579 = vand.u32 %v8578, 4294901760
      %8580 = vmatmul.mubr.f32.gmra.mrb[0].mxu0 %v8579
      %v8581 = vpop.f32.mrb[0].mxu0
      %v8582 = vadd.f32 0.0, %v8581
      %v8583 = vpop.f32.mrb[0].mxu0
      %v8584 = vadd.f32 0.0, %v8583
      %8585 = vmatprep.mubr.f32.mxu0 0.0
      %v8586 = vand.u32 %v8385, 4294901760
      %v8587 = vsub.f32 %v8385, %v8586
      %v8588 = vand.u32 %v8587, 4294901760
      %v8589 = vsub.f32 %v8587, %v8588
      %v8590 = vand.u32 %v8589, 4294901760
      %8591 = vmatmul.mubr.f32.gmra.mrb[0].mxu0 %v8590
      %v8592 = vpop.f32.mrb[0].mxu0
      %v8593 = vadd.f32 0.0, %v8592
      %v8594 = vpop.f32.mrb[0].mxu0
      %v8595 = vadd.f32 0.0, %v8594
      %8596 = vmatprep.mubr.f32.mxu0 0.0
      %v8597 = vand.u32 %v8388, 4294901760
      %v8598 = vsub.f32 %v8388, %v8597
      %v8599 = vand.u32 %v8598, 4294901760
      %v8600 = vsub.f32 %v8598, %v8599
      %v8601 = vand.u32 %v8600, 4294901760
      %8602 = vmatmul.mubr.f32.gmra.mrb[0].mxu0 %v8601
      %v8603 = vpop.f32.mrb[0].mxu0
      %v8604 = vadd.f32 0.0, %v8603
      %v8605 = vpop.f32.mrb[0].mxu0
      %v8606 = vadd.f32 0.0, %v8605
      %8607 = vmatprep.mubr.f32.mxu0 0.0
      %v8608 = vand.u32 %v8391, 4294901760
      %v8609 = vsub.f32 %v8391, %v8608
      %v8610 = vand.u32 %v8609, 4294901760
      %v8611 = vsub.f32 %v8609, %v8610
      %v8612 = vand.u32 %v8611, 4294901760
      %8613 = vmatmul.mubr.f32.gmra.mrb[0].mxu0 %v8612
      %v8614 = vpop.f32.mrb[0].mxu0
      %v8615 = vadd.f32 0.0, %v8614
      %v8616 = vpop.f32.mrb[0].mxu0
      %v8617 = vadd.f32 0.0, %v8616
      %8618 = vmatprep.mubr.f32.mxu0 0.0
      %v8619 = vand.u32 %v8394, 4294901760
      %v8620 = vsub.f32 %v8394, %v8619
      %v8621 = vand.u32 %v8620, 4294901760
      %v8622 = vsub.f32 %v8620, %v8621
      %v8623 = vand.u32 %v8622, 4294901760
      %8624 = vmatmul.mubr.f32.gmra.mrb[0].mxu0 %v8623
      %v8625 = vpop.f32.mrb[0].mxu0
      %v8626 = vadd.f32 0.0, %v8625
      %v8627 = vpop.f32.mrb[0].mxu0
      %v8628 = vadd.f32 0.0, %v8627
      %8629 = vmatprep.mubr.f32.mxu0 0.0
      %v8630 = vand.u32 %v8397, 4294901760
      %v8631 = vsub.f32 %v8397, %v8630
      %v8632 = vand.u32 %v8631, 4294901760
      %v8633 = vsub.f32 %v8631, %v8632
      %v8634 = vand.u32 %v8633, 4294901760
      %8635 = vmatmul.mubr.f32.gmra.mrb[0].mxu0 %v8634
      %v8636 = vpop.f32.mrb[0].mxu0
      %v8637 = vadd.f32 0.0, %v8636
      %v8638 = vpop.f32.mrb[0].mxu0
      %v8639 = vadd.f32 0.0, %v8638
      %8640 = vmatprep.mubr.f32.mxu0 0.0
      %v8641 = vand.u32 %v8400, 4294901760
      %v8642 = vsub.f32 %v8400, %v8641
      %v8643 = vand.u32 %v8642, 4294901760
      %v8644 = vsub.f32 %v8642, %v8643
      %v8645 = vand.u32 %v8644, 4294901760
      %8646 = vmatmul.mubr.f32.gmra.mrb[0].mxu0 %v8645
      %v8647 = vpop.f32.mrb[0].mxu0
      %v8648 = vadd.f32 0.0, %v8647
      %v8649 = vpop.f32.mrb[0].mxu0
      %v8650 = vadd.f32 0.0, %v8649
      %8651 = vdwg.mxu0
      %v8652 = vand.u32 %v8407, 4294901760
      %v8653 = vsub.f32 %v8407, %v8652
      %v8654 = vand.u32 %v8653, 4294901760
      %v8655 = vsub.f32 %v8653, %v8654
      %v8656 = vand.u32 %v8655, 4294901760
      %8657 = vmatprep.subr.mxu0 %v8656
      %v8658 = vand.u32 %v8404, 4294901760
      %v8659 = vsub.f32 %v8404, %v8658
      %v8660 = vand.u32 %v8659, 4294901760
      %v8661 = vsub.f32 %v8659, %v8660
      %v8662 = vand.u32 %v8661, 4294901760
      %8663 = vmatpush1.msra.mxu0 %v8662
      %8664 = vmatprep.subr.mxu0 0.0
      %8665 = vmatpush1.msra.mxu0 0.0
      %8666 = vmatprep.subr.mxu0 0.0
      %8667 = vmatpush1.msra.mxu0 0.0
      %8668 = vmatprep.subr.mxu0 0.0
      %8669 = vmatpush1.msra.mxu0 0.0
      %8670 = vmatprep.subr.mxu0 0.0
      %8671 = vmatpush1.msra.mxu0 0.0
      %8672 = vmatprep.subr.mxu0 0.0
      %8673 = vmatpush1.msra.mxu0 0.0
      %8674 = vmatprep.subr.mxu0 0.0
      %8675 = vmatpush1.msra.mxu0 0.0
      %8676 = vmatprep.subr.mxu0 0.0
      %8677 = vmatpush1.msra.mxu0 0.0
      %8678 = vmatprep.subr.mxu0 0.0
      %8679 = vmatpush1.msra.mxu0 0.0
      %8680 = vmatprep.subr.mxu0 0.0
      %8681 = vmatpush1.msra.mxu0 0.0
      %8682 = vmatprep.subr.mxu0 0.0
      %8683 = vmatpush1.msra.mxu0 0.0
      %8684 = vmatprep.subr.mxu0 0.0
      %8685 = vmatpush1.msra.mxu0 0.0
      %8686 = vmatprep.subr.mxu0 0.0
      %8687 = vmatpush1.msra.mxu0 0.0
      %8688 = vmatprep.subr.mxu0 0.0
      %8689 = vmatpush1.msra.mxu0 0.0
      %8690 = vmatprep.subr.mxu0 0.0
      %8691 = vmatpush1.msra.mxu0 0.0
      %8692 = vmatprep.subr.mxu0 0.0
      %8693 = vmatpush1.msra.mxu0 0.0
      %8694 = vmatprep.subr.mxu0 0.0
      %8695 = vmatpush1.msra.mxu0 0.0
      %8696 = vmatprep.subr.mxu0 0.0
      %8697 = vmatpush1.msra.mxu0 0.0
      %8698 = vmatprep.subr.mxu0 0.0
      %8699 = vmatpush1.msra.mxu0 0.0
      %8700 = vmatprep.subr.mxu0 0.0
      %8701 = vmatpush1.msra.mxu0 0.0
      %8702 = vmatprep.subr.mxu0 0.0
      %8703 = vmatpush1.msra.mxu0 0.0
      %8704 = vmatprep.subr.mxu0 0.0
      %8705 = vmatpush1.msra.mxu0 0.0
      %8706 = vmatprep.subr.mxu0 0.0
      %8707 = vmatpush1.msra.mxu0 0.0
      %8708 = vmatprep.subr.mxu0 0.0
      %8709 = vmatpush1.msra.mxu0 0.0
      %8710 = vmatprep.subr.mxu0 0.0
      %8711 = vmatpush1.msra.mxu0 0.0
      %8712 = vmatprep.subr.mxu0 0.0
      %8713 = vmatpush1.msra.mxu0 0.0
      %8714 = vmatprep.subr.mxu0 0.0
      %8715 = vmatpush1.msra.mxu0 0.0
      %8716 = vmatprep.subr.mxu0 0.0
      %8717 = vmatpush1.msra.mxu0 0.0
      %8718 = vmatprep.subr.mxu0 0.0
      %8719 = vmatpush1.msra.mxu0 0.0
      %8720 = vmatprep.subr.mxu0 0.0
      %8721 = vmatpush1.msra.mxu0 0.0
      %8722 = vmatprep.subr.mxu0 0.0
      %8723 = vmatpush1.msra.mxu0 0.0
      %8724 = vmatprep.subr.mxu0 0.0
      %8725 = vmatpush1.msra.mxu0 0.0
      %8726 = vmatprep.mubr.f32.mxu0 0.0
      %v8727 = vand.u32 %v8355, 4294901760
      %8728 = vmatmul.mubr.f32.gmra.mrb[0].mxu0 %v8727
      %v8729 = vpop.f32.mrb[0].mxu0
      %v8730 = vadd.f32 %v8483, %v8729
      %v8731 = vpop.f32.mrb[0].mxu0
      %v8732 = vadd.f32 %v8485, %v8731
      %8733 = vmatprep.mubr.f32.mxu0 0.0
      %v8734 = vand.u32 %v8358, 4294901760
      %8735 = vmatmul.mubr.f32.gmra.mrb[0].mxu0 %v8734
      %v8736 = vpop.f32.mrb[0].mxu0
      %v8737 = vadd.f32 %v8494, %v8736
      %v8738 = vpop.f32.mrb[0].mxu0
      %v8739 = vadd.f32 %v8496, %v8738
      %8740 = vmatprep.mubr.f32.mxu0 0.0
      %v8741 = vand.u32 %v8361, 4294901760
      %8742 = vmatmul.mubr.f32.gmra.mrb[0].mxu0 %v8741
      %v8743 = vpop.f32.mrb[0].mxu0
      %v8744 = vadd.f32 %v8505, %v8743
      %v8745 = vpop.f32.mrb[0].mxu0
      %v8746 = vadd.f32 %v8507, %v8745
      %8747 = vmatprep.mubr.f32.mxu0 0.0
      %v8748 = vand.u32 %v8364, 4294901760
      %8749 = vmatmul.mubr.f32.gmra.mrb[0].mxu0 %v8748
      %v8750 = vpop.f32.mrb[0].mxu0
      %v8751 = vadd.f32 %v8516, %v8750
      %v8752 = vpop.f32.mrb[0].mxu0
      %v8753 = vadd.f32 %v8518, %v8752
      %8754 = vmatprep.mubr.f32.mxu0 0.0
      %v8755 = vand.u32 %v8367, 4294901760
      %8756 = vmatmul.mubr.f32.gmra.mrb[0].mxu0 %v8755
      %v8757 = vpop.f32.mrb[0].mxu0
      %v8758 = vadd.f32 %v8527, %v8757
      %v8759 = vpop.f32.mrb[0].mxu0
      %v8760 = vadd.f32 %v8529, %v8759
      %8761 = vmatprep.mubr.f32.mxu0 0.0
      %v8762 = vand.u32 %v8370, 4294901760
      %8763 = vmatmul.mubr.f32.gmra.mrb[0].mxu0 %v8762
      %v8764 = vpop.f32.mrb[0].mxu0
      %v8765 = vadd.f32 %v8538, %v8764
      %v8766 = vpop.f32.mrb[0].mxu0
      %v8767 = vadd.f32 %v8540, %v8766
      %8768 = vmatprep.mubr.f32.mxu0 0.0
      %v8769 = vand.u32 %v8373, 4294901760
      %8770 = vmatmul.mubr.f32.gmra.mrb[0].mxu0 %v8769
      %v8771 = vpop.f32.mrb[0].mxu0
      %v8772 = vadd.f32 %v8549, %v8771
      %v8773 = vpop.f32.mrb[0].mxu0
      %v8774 = vadd.f32 %v8551, %v8773
      %8775 = vmatprep.mubr.f32.mxu0 0.0
      %v8776 = vand.u32 %v8376, 4294901760
      %8777 = vmatmul.mubr.f32.gmra.mrb[0].mxu0 %v8776
      %v8778 = vpop.f32.mrb[0].mxu0
      %v8779 = vadd.f32 %v8560, %v8778
      %v8780 = vpop.f32.mrb[0].mxu0
      %v8781 = vadd.f32 %v8562, %v8780
      %8782 = vmatprep.mubr.f32.mxu0 0.0
      %v8783 = vand.u32 %v8379, 4294901760
      %8784 = vmatmul.mubr.f32.gmra.mrb[0].mxu0 %v8783
      %v8785 = vpop.f32.mrb[0].mxu0
      %v8786 = vadd.f32 %v8571, %v8785
      %v8787 = vpop.f32.mrb[0].mxu0
      %v8788 = vadd.f32 %v8573, %v8787
      %8789 = vmatprep.mubr.f32.mxu0 0.0
      %v8790 = vand.u32 %v8382, 4294901760
      %8791 = vmatmul.mubr.f32.gmra.mrb[0].mxu0 %v8790
      %v8792 = vpop.f32.mrb[0].mxu0
      %v8793 = vadd.f32 %v8582, %v8792
      %v8794 = vpop.f32.mrb[0].mxu0
      %v8795 = vadd.f32 %v8584, %v8794
      %8796 = vmatprep.mubr.f32.mxu0 0.0
      %v8797 = vand.u32 %v8385, 4294901760
      %8798 = vmatmul.mubr.f32.gmra.mrb[0].mxu0 %v8797
      %v8799 = vpop.f32.mrb[0].mxu0
      %v8800 = vadd.f32 %v8593, %v8799
      %v8801 = vpop.f32.mrb[0].mxu0
      %v8802 = vadd.f32 %v8595, %v8801
      %8803 = vmatprep.mubr.f32.mxu0 0.0
      %v8804 = vand.u32 %v8388, 4294901760
      %8805 = vmatmul.mubr.f32.gmra.mrb[0].mxu0 %v8804
      %v8806 = vpop.f32.mrb[0].mxu0
      %v8807 = vadd.f32 %v8604, %v8806
      %v8808 = vpop.f32.mrb[0].mxu0
      %v8809 = vadd.f32 %v8606, %v8808
      %8810 = vmatprep.mubr.f32.mxu0 0.0
      %v8811 = vand.u32 %v8391, 4294901760
      %8812 = vmatmul.mubr.f32.gmra.mrb[0].mxu0 %v8811
      %v8813 = vpop.f32.mrb[0].mxu0
      %v8814 = vadd.f32 %v8615, %v8813
      %v8815 = vpop.f32.mrb[0].mxu0
      %v8816 = vadd.f32 %v8617, %v8815
      %8817 = vmatprep.mubr.f32.mxu0 0.0
      %v8818 = vand.u32 %v8394, 4294901760
      %8819 = vmatmul.mubr.f32.gmra.mrb[0].mxu0 %v8818
      %v8820 = vpop.f32.mrb[0].mxu0
      %v8821 = vadd.f32 %v8626, %v8820
      %v8822 = vpop.f32.mrb[0].mxu0
      %v8823 = vadd.f32 %v8628, %v8822
      %8824 = vmatprep.mubr.f32.mxu0 0.0
      %v8825 = vand.u32 %v8397, 4294901760
      %8826 = vmatmul.mubr.f32.gmra.mrb[0].mxu0 %v8825
      %v8827 = vpop.f32.mrb[0].mxu0
      %v8828 = vadd.f32 %v8637, %v8827
      %v8829 = vpop.f32.mrb[0].mxu0
      %v8830 = vadd.f32 %v8639, %v8829
      %8831 = vmatprep.mubr.f32.mxu0 0.0
      %v8832 = vand.u32 %v8400, 4294901760
      %8833 = vmatmul.mubr.f32.gmra.mrb[0].mxu0 %v8832
      %v8834 = vpop.f32.mrb[0].mxu0
      %v8835 = vadd.f32 %v8648, %v8834
      %v8836 = vpop.f32.mrb[0].mxu0
      %v8837 = vadd.f32 %v8650, %v8836
      %8838 = vdwg.mxu0
      %v8839 = vand.u32 %v8407, 4294901760
      %v8840 = vsub.f32 %v8407, %v8839
      %8841 = vmatprep.subr.mxu0 %v8840
      %v8842 = vand.u32 %v8404, 4294901760
      %v8843 = vsub.f32 %v8404, %v8842
      %8844 = vmatpush1.msra.mxu0 %v8843
      %8845 = vmatprep.subr.mxu0 0.0
      %8846 = vmatpush1.msra.mxu0 0.0
      %8847 = vmatprep.subr.mxu0 0.0
      %8848 = vmatpush1.msra.mxu0 0.0
      %8849 = vmatprep.subr.mxu0 0.0
      %8850 = vmatpush1.msra.mxu0 0.0
      %8851 = vmatprep.subr.mxu0 0.0
      %8852 = vmatpush1.msra.mxu0 0.0
      %8853 = vmatprep.subr.mxu0 0.0
      %8854 = vmatpush1.msra.mxu0 0.0
      %8855 = vmatprep.subr.mxu0 0.0
      %8856 = vmatpush1.msra.mxu0 0.0
      %8857 = vmatprep.subr.mxu0 0.0
      %8858 = vmatpush1.msra.mxu0 0.0
      %8859 = vmatprep.subr.mxu0 0.0
      %8860 = vmatpush1.msra.mxu0 0.0
      %8861 = vmatprep.subr.mxu0 0.0
      %8862 = vmatpush1.msra.mxu0 0.0
      %8863 = vmatprep.subr.mxu0 0.0
      %8864 = vmatpush1.msra.mxu0 0.0
      %8865 = vmatprep.subr.mxu0 0.0
      %8866 = vmatpush1.msra.mxu0 0.0
      %8867 = vmatprep.subr.mxu0 0.0
      %8868 = vmatpush1.msra.mxu0 0.0
      %8869 = vmatprep.subr.mxu0 0.0
      %8870 = vmatpush1.msra.mxu0 0.0
      %8871 = vmatprep.subr.mxu0 0.0
      %8872 = vmatpush1.msra.mxu0 0.0
      %8873 = vmatprep.subr.mxu0 0.0
      %8874 = vmatpush1.msra.mxu0 0.0
      %8875 = vmatprep.subr.mxu0 0.0
      %8876 = vmatpush1.msra.mxu0 0.0
      %8877 = vmatprep.subr.mxu0 0.0
      %8878 = vmatpush1.msra.mxu0 0.0
      %8879 = vmatprep.subr.mxu0 0.0
      %8880 = vmatpush1.msra.mxu0 0.0
      %8881 = vmatprep.subr.mxu0 0.0
      %8882 = vmatpush1.msra.mxu0 0.0
      %8883 = vmatprep.subr.mxu0 0.0
      %8884 = vmatpush1.msra.mxu0 0.0
      %8885 = vmatprep.subr.mxu0 0.0
      %8886 = vmatpush1.msra.mxu0 0.0
      %8887 = vmatprep.subr.mxu0 0.0
      %8888 = vmatpush1.msra.mxu0 0.0
      %8889 = vmatprep.subr.mxu0 0.0
      %8890 = vmatpush1.msra.mxu0 0.0
      %8891 = vmatprep.subr.mxu0 0.0
      %8892 = vmatpush1.msra.mxu0 0.0
      %8893 = vmatprep.subr.mxu0 0.0
      %8894 = vmatpush1.msra.mxu0 0.0
      %8895 = vmatprep.subr.mxu0 0.0
      %8896 = vmatpush1.msra.mxu0 0.0
      %8897 = vmatprep.subr.mxu0 0.0
      %8898 = vmatpush1.msra.mxu0 0.0
      %8899 = vmatprep.subr.mxu0 0.0
      %8900 = vmatpush1.msra.mxu0 0.0
      %8901 = vmatprep.subr.mxu0 0.0
      %8902 = vmatpush1.msra.mxu0 0.0
      %8903 = vmatprep.subr.mxu0 0.0
      %8904 = vmatpush1.msra.mxu0 0.0
      %8905 = vmatprep.subr.mxu0 0.0
      %8906 = vmatpush1.msra.mxu0 0.0
      %8907 = vmatprep.mubr.f32.mxu0 0.0
      %v8908 = vand.u32 %v8355, 4294901760
      %v8909 = vsub.f32 %v8355, %v8908
      %8910 = vmatmul.mubr.f32.gmra.mrb[0].mxu0 %v8909
      %v8911 = vpop.f32.mrb[0].mxu0
      %v8912 = vadd.f32 %v8730, %v8911
      %v8913 = vpop.f32.mrb[0].mxu0
      %v8914 = vadd.f32 %v8732, %v8913
      %8915 = vmatprep.mubr.f32.mxu0 0.0
      %v8916 = vand.u32 %v8358, 4294901760
      %v8917 = vsub.f32 %v8358, %v8916
      %8918 = vmatmul.mubr.f32.gmra.mrb[0].mxu0 %v8917
      %v8919 = vpop.f32.mrb[0].mxu0
      %v8920 = vadd.f32 %v8737, %v8919
      %v8921 = vpop.f32.mrb[0].mxu0
      %v8922 = vadd.f32 %v8739, %v8921
      %8923 = vmatprep.mubr.f32.mxu0 0.0
      %v8924 = vand.u32 %v8361, 4294901760
      %v8925 = vsub.f32 %v8361, %v8924
      %8926 = vmatmul.mubr.f32.gmra.mrb[0].mxu0 %v8925
      %v8927 = vpop.f32.mrb[0].mxu0
      %v8928 = vadd.f32 %v8744, %v8927
      %v8929 = vpop.f32.mrb[0].mxu0
      %v8930 = vadd.f32 %v8746, %v8929
      %8931 = vmatprep.mubr.f32.mxu0 0.0
      %v8932 = vand.u32 %v8364, 4294901760
      %v8933 = vsub.f32 %v8364, %v8932
      %8934 = vmatmul.mubr.f32.gmra.mrb[0].mxu0 %v8933
      %v8935 = vpop.f32.mrb[0].mxu0
      %v8936 = vadd.f32 %v8751, %v8935
      %v8937 = vpop.f32.mrb[0].mxu0
      %v8938 = vadd.f32 %v8753, %v8937
      %8939 = vmatprep.mubr.f32.mxu0 0.0
      %v8940 = vand.u32 %v8367, 4294901760
      %v8941 = vsub.f32 %v8367, %v8940
      %8942 = vmatmul.mubr.f32.gmra.mrb[0].mxu0 %v8941
      %v8943 = vpop.f32.mrb[0].mxu0
      %v8944 = vadd.f32 %v8758, %v8943
      %v8945 = vpop.f32.mrb[0].mxu0
      %v8946 = vadd.f32 %v8760, %v8945
      %8947 = vmatprep.mubr.f32.mxu0 0.0
      %v8948 = vand.u32 %v8370, 4294901760
      %v8949 = vsub.f32 %v8370, %v8948
      %8950 = vmatmul.mubr.f32.gmra.mrb[0].mxu0 %v8949
      %v8951 = vpop.f32.mrb[0].mxu0
      %v8952 = vadd.f32 %v8765, %v8951
      %v8953 = vpop.f32.mrb[0].mxu0
      %v8954 = vadd.f32 %v8767, %v8953
      %8955 = vmatprep.mubr.f32.mxu0 0.0
      %v8956 = vand.u32 %v8373, 4294901760
      %v8957 = vsub.f32 %v8373, %v8956
      %8958 = vmatmul.mubr.f32.gmra.mrb[0].mxu0 %v8957
      %v8959 = vpop.f32.mrb[0].mxu0
      %v8960 = vadd.f32 %v8772, %v8959
      %v8961 = vpop.f32.mrb[0].mxu0
      %v8962 = vadd.f32 %v8774, %v8961
      %8963 = vmatprep.mubr.f32.mxu0 0.0
      %v8964 = vand.u32 %v8376, 4294901760
      %v8965 = vsub.f32 %v8376, %v8964
      %8966 = vmatmul.mubr.f32.gmra.mrb[0].mxu0 %v8965
      %v8967 = vpop.f32.mrb[0].mxu0
      %v8968 = vadd.f32 %v8779, %v8967
      %v8969 = vpop.f32.mrb[0].mxu0
      %v8970 = vadd.f32 %v8781, %v8969
      %8971 = vmatprep.mubr.f32.mxu0 0.0
      %v8972 = vand.u32 %v8379, 4294901760
      %v8973 = vsub.f32 %v8379, %v8972
      %8974 = vmatmul.mubr.f32.gmra.mrb[0].mxu0 %v8973
      %v8975 = vpop.f32.mrb[0].mxu0
      %v8976 = vadd.f32 %v8786, %v8975
      %v8977 = vpop.f32.mrb[0].mxu0
      %v8978 = vadd.f32 %v8788, %v8977
      %8979 = vmatprep.mubr.f32.mxu0 0.0
      %v8980 = vand.u32 %v8382, 4294901760
      %v8981 = vsub.f32 %v8382, %v8980
      %8982 = vmatmul.mubr.f32.gmra.mrb[0].mxu0 %v8981
      %v8983 = vpop.f32.mrb[0].mxu0
      %v8984 = vadd.f32 %v8793, %v8983
      %v8985 = vpop.f32.mrb[0].mxu0
      %v8986 = vadd.f32 %v8795, %v8985
      %8987 = vmatprep.mubr.f32.mxu0 0.0
      %v8988 = vand.u32 %v8385, 4294901760
      %v8989 = vsub.f32 %v8385, %v8988
      %8990 = vmatmul.mubr.f32.gmra.mrb[0].mxu0 %v8989
      %v8991 = vpop.f32.mrb[0].mxu0
      %v8992 = vadd.f32 %v8800, %v8991
      %v8993 = vpop.f32.mrb[0].mxu0
      %v8994 = vadd.f32 %v8802, %v8993
      %8995 = vmatprep.mubr.f32.mxu0 0.0
      %v8996 = vand.u32 %v8388, 4294901760
      %v8997 = vsub.f32 %v8388, %v8996
      %8998 = vmatmul.mubr.f32.gmra.mrb[0].mxu0 %v8997
      %v8999 = vpop.f32.mrb[0].mxu0
      %v9000 = vadd.f32 %v8807, %v8999
      %v9001 = vpop.f32.mrb[0].mxu0
      %v9002 = vadd.f32 %v8809, %v9001
      %9003 = vmatprep.mubr.f32.mxu0 0.0
      %v9004 = vand.u32 %v8391, 4294901760
      %v9005 = vsub.f32 %v8391, %v9004
      %9006 = vmatmul.mubr.f32.gmra.mrb[0].mxu0 %v9005
      %v9007 = vpop.f32.mrb[0].mxu0
      %v9008 = vadd.f32 %v8814, %v9007
      %v9009 = vpop.f32.mrb[0].mxu0
      %v9010 = vadd.f32 %v8816, %v9009
      %9011 = vmatprep.mubr.f32.mxu0 0.0
      %v9012 = vand.u32 %v8394, 4294901760
      %v9013 = vsub.f32 %v8394, %v9012
      %9014 = vmatmul.mubr.f32.gmra.mrb[0].mxu0 %v9013
      %v9015 = vpop.f32.mrb[0].mxu0
      %v9016 = vadd.f32 %v8821, %v9015
      %v9017 = vpop.f32.mrb[0].mxu0
      %v9018 = vadd.f32 %v8823, %v9017
      %9019 = vmatprep.mubr.f32.mxu0 0.0
      %v9020 = vand.u32 %v8397, 4294901760
      %v9021 = vsub.f32 %v8397, %v9020
      %9022 = vmatmul.mubr.f32.gmra.mrb[0].mxu0 %v9021
      %v9023 = vpop.f32.mrb[0].mxu0
      %v9024 = vadd.f32 %v8828, %v9023
      %v9025 = vpop.f32.mrb[0].mxu0
      %v9026 = vadd.f32 %v8830, %v9025
      %9027 = vmatprep.mubr.f32.mxu0 0.0
      %v9028 = vand.u32 %v8400, 4294901760
      %v9029 = vsub.f32 %v8400, %v9028
      %9030 = vmatmul.mubr.f32.gmra.mrb[0].mxu0 %v9029
      %v9031 = vpop.f32.mrb[0].mxu0
      %v9032 = vadd.f32 %v8835, %v9031
      %v9033 = vpop.f32.mrb[0].mxu0
      %v9034 = vadd.f32 %v8837, %v9033
      %9035 = vdwg.mxu0
      %v9036 = vand.u32 %v8407, 4294901760
      %9037 = vmatprep.subr.mxu0 %v9036
      %v9038 = vand.u32 %v8404, 4294901760
      %9039 = vmatpush1.msra.mxu0 %v9038
      %9040 = vmatprep.subr.mxu0 0.0
      %9041 = vmatpush1.msra.mxu0 0.0
      %9042 = vmatprep.subr.mxu0 0.0
      %9043 = vmatpush1.msra.mxu0 0.0
      %9044 = vmatprep.subr.mxu0 0.0
      %9045 = vmatpush1.msra.mxu0 0.0
      %9046 = vmatprep.subr.mxu0 0.0
      %9047 = vmatpush1.msra.mxu0 0.0
      %9048 = vmatprep.subr.mxu0 0.0
      %9049 = vmatpush1.msra.mxu0 0.0
      %9050 = vmatprep.subr.mxu0 0.0
      %9051 = vmatpush1.msra.mxu0 0.0
      %9052 = vmatprep.subr.mxu0 0.0
      %9053 = vmatpush1.msra.mxu0 0.0
      %9054 = vmatprep.subr.mxu0 0.0
      %9055 = vmatpush1.msra.mxu0 0.0
      %9056 = vmatprep.subr.mxu0 0.0
      %9057 = vmatpush1.msra.mxu0 0.0
      %9058 = vmatprep.subr.mxu0 0.0
      %9059 = vmatpush1.msra.mxu0 0.0
      %9060 = vmatprep.subr.mxu0 0.0
      %9061 = vmatpush1.msra.mxu0 0.0
      %9062 = vmatprep.subr.mxu0 0.0
      %9063 = vmatpush1.msra.mxu0 0.0
      %9064 = vmatprep.subr.mxu0 0.0
      %9065 = vmatpush1.msra.mxu0 0.0
      %9066 = vmatprep.subr.mxu0 0.0
      %9067 = vmatpush1.msra.mxu0 0.0
      %9068 = vmatprep.subr.mxu0 0.0
      %9069 = vmatpush1.msra.mxu0 0.0
      %9070 = vmatprep.subr.mxu0 0.0
      %9071 = vmatpush1.msra.mxu0 0.0
      %9072 = vmatprep.subr.mxu0 0.0
      %9073 = vmatpush1.msra.mxu0 0.0
      %9074 = vmatprep.subr.mxu0 0.0
      %9075 = vmatpush1.msra.mxu0 0.0
      %9076 = vmatprep.subr.mxu0 0.0
      %9077 = vmatpush1.msra.mxu0 0.0
      %9078 = vmatprep.subr.mxu0 0.0
      %9079 = vmatpush1.msra.mxu0 0.0
      %9080 = vmatprep.subr.mxu0 0.0
      %9081 = vmatpush1.msra.mxu0 0.0
      %9082 = vmatprep.subr.mxu0 0.0
      %9083 = vmatpush1.msra.mxu0 0.0
      %9084 = vmatprep.subr.mxu0 0.0
      %9085 = vmatpush1.msra.mxu0 0.0
      %9086 = vmatprep.subr.mxu0 0.0
      %9087 = vmatpush1.msra.mxu0 0.0
      %9088 = vmatprep.subr.mxu0 0.0
      %9089 = vmatpush1.msra.mxu0 0.0
      %9090 = vmatprep.subr.mxu0 0.0
      %9091 = vmatpush1.msra.mxu0 0.0
      %9092 = vmatprep.subr.mxu0 0.0
      %9093 = vmatpush1.msra.mxu0 0.0
      %9094 = vmatprep.subr.mxu0 0.0
      %9095 = vmatpush1.msra.mxu0 0.0
      %9096 = vmatprep.subr.mxu0 0.0
      %9097 = vmatpush1.msra.mxu0 0.0
      %9098 = vmatprep.subr.mxu0 0.0
      %9099 = vmatpush1.msra.mxu0 0.0
      %9100 = vmatprep.subr.mxu0 0.0
      %9101 = vmatpush1.msra.mxu0 0.0
      %9102 = vmatprep.mubr.f32.mxu0 0.0
      %v9103 = vand.u32 %v8355, 4294901760
      %v9104 = vsub.f32 %v8355, %v9103
      %v9105 = vand.u32 %v9104, 4294901760
      %9106 = vmatmul.mubr.f32.gmra.mrb[0].mxu0 %v9105
      %v9107 = vpop.f32.mrb[0].mxu0
      %v9108 = vadd.f32 %v8912, %v9107
      %v9109 = vpop.f32.mrb[0].mxu0
      %v9110 = vadd.f32 %v8914, %v9109
      %9111 = vmatprep.mubr.f32.mxu0 0.0
      %v9112 = vand.u32 %v8358, 4294901760
      %v9113 = vsub.f32 %v8358, %v9112
      %v9114 = vand.u32 %v9113, 4294901760
      %9115 = vmatmul.mubr.f32.gmra.mrb[0].mxu0 %v9114
      %v9116 = vpop.f32.mrb[0].mxu0
      %v9117 = vadd.f32 %v8920, %v9116
      %v9118 = vpop.f32.mrb[0].mxu0
      %v9119 = vadd.f32 %v8922, %v9118
      %9120 = vmatprep.mubr.f32.mxu0 0.0
      %v9121 = vand.u32 %v8361, 4294901760
      %v9122 = vsub.f32 %v8361, %v9121
      %v9123 = vand.u32 %v9122, 4294901760
      %9124 = vmatmul.mubr.f32.gmra.mrb[0].mxu0 %v9123
      %v9125 = vpop.f32.mrb[0].mxu0
      %v9126 = vadd.f32 %v8928, %v9125
      %v9127 = vpop.f32.mrb[0].mxu0
      %v9128 = vadd.f32 %v8930, %v9127
      %9129 = vmatprep.mubr.f32.mxu0 0.0
      %v9130 = vand.u32 %v8364, 4294901760
      %v9131 = vsub.f32 %v8364, %v9130
      %v9132 = vand.u32 %v9131, 4294901760
      %9133 = vmatmul.mubr.f32.gmra.mrb[0].mxu0 %v9132
      %v9134 = vpop.f32.mrb[0].mxu0
      %v9135 = vadd.f32 %v8936, %v9134
      %v9136 = vpop.f32.mrb[0].mxu0
      %v9137 = vadd.f32 %v8938, %v9136
      %9138 = vmatprep.mubr.f32.mxu0 0.0
      %v9139 = vand.u32 %v8367, 4294901760
      %v9140 = vsub.f32 %v8367, %v9139
      %v9141 = vand.u32 %v9140, 4294901760
      %9142 = vmatmul.mubr.f32.gmra.mrb[0].mxu0 %v9141
      %v9143 = vpop.f32.mrb[0].mxu0
      %v9144 = vadd.f32 %v8944, %v9143
      %v9145 = vpop.f32.mrb[0].mxu0
      %v9146 = vadd.f32 %v8946, %v9145
      %9147 = vmatprep.mubr.f32.mxu0 0.0
      %v9148 = vand.u32 %v8370, 4294901760
      %v9149 = vsub.f32 %v8370, %v9148
      %v9150 = vand.u32 %v9149, 4294901760
      %9151 = vmatmul.mubr.f32.gmra.mrb[0].mxu0 %v9150
      %v9152 = vpop.f32.mrb[0].mxu0
      %v9153 = vadd.f32 %v8952, %v9152
      %v9154 = vpop.f32.mrb[0].mxu0
      %v9155 = vadd.f32 %v8954, %v9154
      %9156 = vmatprep.mubr.f32.mxu0 0.0
      %v9157 = vand.u32 %v8373, 4294901760
      %v9158 = vsub.f32 %v8373, %v9157
      %v9159 = vand.u32 %v9158, 4294901760
      %9160 = vmatmul.mubr.f32.gmra.mrb[0].mxu0 %v9159
      %v9161 = vpop.f32.mrb[0].mxu0
      %v9162 = vadd.f32 %v8960, %v9161
      %v9163 = vpop.f32.mrb[0].mxu0
      %v9164 = vadd.f32 %v8962, %v9163
      %9165 = vmatprep.mubr.f32.mxu0 0.0
      %v9166 = vand.u32 %v8376, 4294901760
      %v9167 = vsub.f32 %v8376, %v9166
      %v9168 = vand.u32 %v9167, 4294901760
      %9169 = vmatmul.mubr.f32.gmra.mrb[0].mxu0 %v9168
      %v9170 = vpop.f32.mrb[0].mxu0
      %v9171 = vadd.f32 %v8968, %v9170
      %v9172 = vpop.f32.mrb[0].mxu0
      %v9173 = vadd.f32 %v8970, %v9172
      %9174 = vmatprep.mubr.f32.mxu0 0.0
      %v9175 = vand.u32 %v8379, 4294901760
      %v9176 = vsub.f32 %v8379, %v9175
      %v9177 = vand.u32 %v9176, 4294901760
      %9178 = vmatmul.mubr.f32.gmra.mrb[0].mxu0 %v9177
      %v9179 = vpop.f32.mrb[0].mxu0
      %v9180 = vadd.f32 %v8976, %v9179
      %v9181 = vpop.f32.mrb[0].mxu0
      %v9182 = vadd.f32 %v8978, %v9181
      %9183 = vmatprep.mubr.f32.mxu0 0.0
      %v9184 = vand.u32 %v8382, 4294901760
      %v9185 = vsub.f32 %v8382, %v9184
      %v9186 = vand.u32 %v9185, 4294901760
      %9187 = vmatmul.mubr.f32.gmra.mrb[0].mxu0 %v9186
      %v9188 = vpop.f32.mrb[0].mxu0
      %v9189 = vadd.f32 %v8984, %v9188
      %v9190 = vpop.f32.mrb[0].mxu0
      %v9191 = vadd.f32 %v8986, %v9190
      %9192 = vmatprep.mubr.f32.mxu0 0.0
      %v9193 = vand.u32 %v8385, 4294901760
      %v9194 = vsub.f32 %v8385, %v9193
      %v9195 = vand.u32 %v9194, 4294901760
      %9196 = vmatmul.mubr.f32.gmra.mrb[0].mxu0 %v9195
      %v9197 = vpop.f32.mrb[0].mxu0
      %v9198 = vadd.f32 %v8992, %v9197
      %v9199 = vpop.f32.mrb[0].mxu0
      %v9200 = vadd.f32 %v8994, %v9199
      %9201 = vmatprep.mubr.f32.mxu0 0.0
      %v9202 = vand.u32 %v8388, 4294901760
      %v9203 = vsub.f32 %v8388, %v9202
      %v9204 = vand.u32 %v9203, 4294901760
      %9205 = vmatmul.mubr.f32.gmra.mrb[0].mxu0 %v9204
      %v9206 = vpop.f32.mrb[0].mxu0
      %v9207 = vadd.f32 %v9000, %v9206
      %v9208 = vpop.f32.mrb[0].mxu0
      %v9209 = vadd.f32 %v9002, %v9208
      %9210 = vmatprep.mubr.f32.mxu0 0.0
      %v9211 = vand.u32 %v8391, 4294901760
      %v9212 = vsub.f32 %v8391, %v9211
      %v9213 = vand.u32 %v9212, 4294901760
      %9214 = vmatmul.mubr.f32.gmra.mrb[0].mxu0 %v9213
      %v9215 = vpop.f32.mrb[0].mxu0
      %v9216 = vadd.f32 %v9008, %v9215
      %v9217 = vpop.f32.mrb[0].mxu0
      %v9218 = vadd.f32 %v9010, %v9217
      %9219 = vmatprep.mubr.f32.mxu0 0.0
      %v9220 = vand.u32 %v8394, 4294901760
      %v9221 = vsub.f32 %v8394, %v9220
      %v9222 = vand.u32 %v9221, 4294901760
      %9223 = vmatmul.mubr.f32.gmra.mrb[0].mxu0 %v9222
      %v9224 = vpop.f32.mrb[0].mxu0
      %v9225 = vadd.f32 %v9016, %v9224
      %v9226 = vpop.f32.mrb[0].mxu0
      %v9227 = vadd.f32 %v9018, %v9226
      %9228 = vmatprep.mubr.f32.mxu0 0.0
      %v9229 = vand.u32 %v8397, 4294901760
      %v9230 = vsub.f32 %v8397, %v9229
      %v9231 = vand.u32 %v9230, 4294901760
      %9232 = vmatmul.mubr.f32.gmra.mrb[0].mxu0 %v9231
      %v9233 = vpop.f32.mrb[0].mxu0
      %v9234 = vadd.f32 %v9024, %v9233
      %v9235 = vpop.f32.mrb[0].mxu0
      %v9236 = vadd.f32 %v9026, %v9235
      %9237 = vmatprep.mubr.f32.mxu0 0.0
      %v9238 = vand.u32 %v8400, 4294901760
      %v9239 = vsub.f32 %v8400, %v9238
      %v9240 = vand.u32 %v9239, 4294901760
      %9241 = vmatmul.mubr.f32.gmra.mrb[0].mxu0 %v9240
      %v9242 = vpop.f32.mrb[0].mxu0
      %v9243 = vadd.f32 %v9032, %v9242
      %v9244 = vpop.f32.mrb[0].mxu0
      %v9245 = vadd.f32 %v9034, %v9244
      %9246 = vdwg.mxu0
      %v9247 = vand.u32 %v8407, 4294901760
      %v9248 = vsub.f32 %v8407, %v9247
      %v9249 = vand.u32 %v9248, 4294901760
      %9250 = vmatprep.subr.mxu0 %v9249
      %v9251 = vand.u32 %v8404, 4294901760
      %v9252 = vsub.f32 %v8404, %v9251
      %v9253 = vand.u32 %v9252, 4294901760
      %9254 = vmatpush1.msra.mxu0 %v9253
      %9255 = vmatprep.subr.mxu0 0.0
      %9256 = vmatpush1.msra.mxu0 0.0
      %9257 = vmatprep.subr.mxu0 0.0
      %9258 = vmatpush1.msra.mxu0 0.0
      %9259 = vmatprep.subr.mxu0 0.0
      %9260 = vmatpush1.msra.mxu0 0.0
      %9261 = vmatprep.subr.mxu0 0.0
      %9262 = vmatpush1.msra.mxu0 0.0
      %9263 = vmatprep.subr.mxu0 0.0
      %9264 = vmatpush1.msra.mxu0 0.0
      %9265 = vmatprep.subr.mxu0 0.0
      %9266 = vmatpush1.msra.mxu0 0.0
      %9267 = vmatprep.subr.mxu0 0.0
      %9268 = vmatpush1.msra.mxu0 0.0
      %9269 = vmatprep.subr.mxu0 0.0
      %9270 = vmatpush1.msra.mxu0 0.0
      %9271 = vmatprep.subr.mxu0 0.0
      %9272 = vmatpush1.msra.mxu0 0.0
      %9273 = vmatprep.subr.mxu0 0.0
      %9274 = vmatpush1.msra.mxu0 0.0
      %9275 = vmatprep.subr.mxu0 0.0
      %9276 = vmatpush1.msra.mxu0 0.0
      %9277 = vmatprep.subr.mxu0 0.0
      %9278 = vmatpush1.msra.mxu0 0.0
      %9279 = vmatprep.subr.mxu0 0.0
      %9280 = vmatpush1.msra.mxu0 0.0
      %9281 = vmatprep.subr.mxu0 0.0
      %9282 = vmatpush1.msra.mxu0 0.0
      %9283 = vmatprep.subr.mxu0 0.0
      %9284 = vmatpush1.msra.mxu0 0.0
      %9285 = vmatprep.subr.mxu0 0.0
      %9286 = vmatpush1.msra.mxu0 0.0
      %9287 = vmatprep.subr.mxu0 0.0
      %9288 = vmatpush1.msra.mxu0 0.0
      %9289 = vmatprep.subr.mxu0 0.0
      %9290 = vmatpush1.msra.mxu0 0.0
      %9291 = vmatprep.subr.mxu0 0.0
      %9292 = vmatpush1.msra.mxu0 0.0
      %9293 = vmatprep.subr.mxu0 0.0
      %9294 = vmatpush1.msra.mxu0 0.0
      %9295 = vmatprep.subr.mxu0 0.0
      %9296 = vmatpush1.msra.mxu0 0.0
      %9297 = vmatprep.subr.mxu0 0.0
      %9298 = vmatpush1.msra.mxu0 0.0
      %9299 = vmatprep.subr.mxu0 0.0
      %9300 = vmatpush1.msra.mxu0 0.0
      %9301 = vmatprep.subr.mxu0 0.0
      %9302 = vmatpush1.msra.mxu0 0.0
      %9303 = vmatprep.subr.mxu0 0.0
      %9304 = vmatpush1.msra.mxu0 0.0
      %9305 = vmatprep.subr.mxu0 0.0
      %9306 = vmatpush1.msra.mxu0 0.0
      %9307 = vmatprep.subr.mxu0 0.0
      %9308 = vmatpush1.msra.mxu0 0.0
      %9309 = vmatprep.subr.mxu0 0.0
      %9310 = vmatpush1.msra.mxu0 0.0
      %9311 = vmatprep.subr.mxu0 0.0
      %9312 = vmatpush1.msra.mxu0 0.0
      %9313 = vmatprep.subr.mxu0 0.0
      %9314 = vmatpush1.msra.mxu0 0.0
      %9315 = vmatprep.subr.mxu0 0.0
      %9316 = vmatpush1.msra.mxu0 0.0
      %9317 = vmatprep.mubr.f32.mxu0 0.0
      %v9318 = vand.u32 %v8355, 4294901760
      %9319 = vmatmul.mubr.f32.gmra.mrb[0].mxu0 %v9318
      %v9320 = vpop.f32.mrb[0].mxu0
      %v9321 = vadd.f32 %v9108, %v9320
      %v9322 = vpop.f32.mrb[0].mxu0
      %v9323 = vadd.f32 %v9110, %v9322
      %9324 = vmatprep.mubr.f32.mxu0 0.0
      %v9325 = vand.u32 %v8358, 4294901760
      %9326 = vmatmul.mubr.f32.gmra.mrb[0].mxu0 %v9325
      %v9327 = vpop.f32.mrb[0].mxu0
      %v9328 = vadd.f32 %v9117, %v9327
      %v9329 = vpop.f32.mrb[0].mxu0
      %v9330 = vadd.f32 %v9119, %v9329
      %9331 = vmatprep.mubr.f32.mxu0 0.0
      %v9332 = vand.u32 %v8361, 4294901760
      %9333 = vmatmul.mubr.f32.gmra.mrb[0].mxu0 %v9332
      %v9334 = vpop.f32.mrb[0].mxu0
      %v9335 = vadd.f32 %v9126, %v9334
      %v9336 = vpop.f32.mrb[0].mxu0
      %v9337 = vadd.f32 %v9128, %v9336
      %9338 = vmatprep.mubr.f32.mxu0 0.0
      %v9339 = vand.u32 %v8364, 4294901760
      %9340 = vmatmul.mubr.f32.gmra.mrb[0].mxu0 %v9339
      %v9341 = vpop.f32.mrb[0].mxu0
      %v9342 = vadd.f32 %v9135, %v9341
      %v9343 = vpop.f32.mrb[0].mxu0
      %v9344 = vadd.f32 %v9137, %v9343
      %9345 = vmatprep.mubr.f32.mxu0 0.0
      %v9346 = vand.u32 %v8367, 4294901760
      %9347 = vmatmul.mubr.f32.gmra.mrb[0].mxu0 %v9346
      %v9348 = vpop.f32.mrb[0].mxu0
      %v9349 = vadd.f32 %v9144, %v9348
      %v9350 = vpop.f32.mrb[0].mxu0
      %v9351 = vadd.f32 %v9146, %v9350
      %9352 = vmatprep.mubr.f32.mxu0 0.0
      %v9353 = vand.u32 %v8370, 4294901760
      %9354 = vmatmul.mubr.f32.gmra.mrb[0].mxu0 %v9353
      %v9355 = vpop.f32.mrb[0].mxu0
      %v9356 = vadd.f32 %v9153, %v9355
      %v9357 = vpop.f32.mrb[0].mxu0
      %v9358 = vadd.f32 %v9155, %v9357
      %9359 = vmatprep.mubr.f32.mxu0 0.0
      %v9360 = vand.u32 %v8373, 4294901760
      %9361 = vmatmul.mubr.f32.gmra.mrb[0].mxu0 %v9360
      %v9362 = vpop.f32.mrb[0].mxu0
      %v9363 = vadd.f32 %v9162, %v9362
      %v9364 = vpop.f32.mrb[0].mxu0
      %v9365 = vadd.f32 %v9164, %v9364
      %9366 = vmatprep.mubr.f32.mxu0 0.0
      %v9367 = vand.u32 %v8376, 4294901760
      %9368 = vmatmul.mubr.f32.gmra.mrb[0].mxu0 %v9367
      %v9369 = vpop.f32.mrb[0].mxu0
      %v9370 = vadd.f32 %v9171, %v9369
      %v9371 = vpop.f32.mrb[0].mxu0
      %v9372 = vadd.f32 %v9173, %v9371
      %9373 = vmatprep.mubr.f32.mxu0 0.0
      %v9374 = vand.u32 %v8379, 4294901760
      %9375 = vmatmul.mubr.f32.gmra.mrb[0].mxu0 %v9374
      %v9376 = vpop.f32.mrb[0].mxu0
      %v9377 = vadd.f32 %v9180, %v9376
      %v9378 = vpop.f32.mrb[0].mxu0
      %v9379 = vadd.f32 %v9182, %v9378
      %9380 = vmatprep.mubr.f32.mxu0 0.0
      %v9381 = vand.u32 %v8382, 4294901760
      %9382 = vmatmul.mubr.f32.gmra.mrb[0].mxu0 %v9381
      %v9383 = vpop.f32.mrb[0].mxu0
      %v9384 = vadd.f32 %v9189, %v9383
      %v9385 = vpop.f32.mrb[0].mxu0
      %v9386 = vadd.f32 %v9191, %v9385
      %9387 = vmatprep.mubr.f32.mxu0 0.0
      %v9388 = vand.u32 %v8385, 4294901760
      %9389 = vmatmul.mubr.f32.gmra.mrb[0].mxu0 %v9388
      %v9390 = vpop.f32.mrb[0].mxu0
      %v9391 = vadd.f32 %v9198, %v9390
      %v9392 = vpop.f32.mrb[0].mxu0
      %v9393 = vadd.f32 %v9200, %v9392
      %9394 = vmatprep.mubr.f32.mxu0 0.0
      %v9395 = vand.u32 %v8388, 4294901760
      %9396 = vmatmul.mubr.f32.gmra.mrb[0].mxu0 %v9395
      %v9397 = vpop.f32.mrb[0].mxu0
      %v9398 = vadd.f32 %v9207, %v9397
      %v9399 = vpop.f32.mrb[0].mxu0
      %v9400 = vadd.f32 %v9209, %v9399
      %9401 = vmatprep.mubr.f32.mxu0 0.0
      %v9402 = vand.u32 %v8391, 4294901760
      %9403 = vmatmul.mubr.f32.gmra.mrb[0].mxu0 %v9402
      %v9404 = vpop.f32.mrb[0].mxu0
      %v9405 = vadd.f32 %v9216, %v9404
      %v9406 = vpop.f32.mrb[0].mxu0
      %v9407 = vadd.f32 %v9218, %v9406
      %9408 = vmatprep.mubr.f32.mxu0 0.0
      %v9409 = vand.u32 %v8394, 4294901760
      %9410 = vmatmul.mubr.f32.gmra.mrb[0].mxu0 %v9409
      %v9411 = vpop.f32.mrb[0].mxu0
      %v9412 = vadd.f32 %v9225, %v9411
      %v9413 = vpop.f32.mrb[0].mxu0
      %v9414 = vadd.f32 %v9227, %v9413
      %9415 = vmatprep.mubr.f32.mxu0 0.0
      %v9416 = vand.u32 %v8397, 4294901760
      %9417 = vmatmul.mubr.f32.gmra.mrb[0].mxu0 %v9416
      %v9418 = vpop.f32.mrb[0].mxu0
      %v9419 = vadd.f32 %v9234, %v9418
      %v9420 = vpop.f32.mrb[0].mxu0
      %v9421 = vadd.f32 %v9236, %v9420
      %9422 = vmatprep.mubr.f32.mxu0 0.0
      %v9423 = vand.u32 %v8400, 4294901760
      %9424 = vmatmul.mubr.f32.gmra.mrb[0].mxu0 %v9423
      %v9425 = vpop.f32.mrb[0].mxu0
      %v9426 = vadd.f32 %v9243, %v9425
      %v9427 = vpop.f32.mrb[0].mxu0
      %v9428 = vadd.f32 %v9245, %v9427
      %9429 = vdwg.mxu0
      %v9430 = vand.u32 %v8407, 4294901760
      %9431 = vmatprep.subr.mxu0 %v9430
      %v9432 = vand.u32 %v8404, 4294901760
      %9433 = vmatpush1.msra.mxu0 %v9432
      %9434 = vmatprep.subr.mxu0 0.0
      %9435 = vmatpush1.msra.mxu0 0.0
      %9436 = vmatprep.subr.mxu0 0.0
      %9437 = vmatpush1.msra.mxu0 0.0
      %9438 = vmatprep.subr.mxu0 0.0
      %9439 = vmatpush1.msra.mxu0 0.0
      %9440 = vmatprep.subr.mxu0 0.0
      %9441 = vmatpush1.msra.mxu0 0.0
      %9442 = vmatprep.subr.mxu0 0.0
      %9443 = vmatpush1.msra.mxu0 0.0
      %9444 = vmatprep.subr.mxu0 0.0
      %9445 = vmatpush1.msra.mxu0 0.0
      %9446 = vmatprep.subr.mxu0 0.0
      %9447 = vmatpush1.msra.mxu0 0.0
      %9448 = vmatprep.subr.mxu0 0.0
      %9449 = vmatpush1.msra.mxu0 0.0
      %9450 = vmatprep.subr.mxu0 0.0
      %9451 = vmatpush1.msra.mxu0 0.0
      %9452 = vmatprep.subr.mxu0 0.0
      %9453 = vmatpush1.msra.mxu0 0.0
      %9454 = vmatprep.subr.mxu0 0.0
      %9455 = vmatpush1.msra.mxu0 0.0
      %9456 = vmatprep.subr.mxu0 0.0
      %9457 = vmatpush1.msra.mxu0 0.0
      %9458 = vmatprep.subr.mxu0 0.0
      %9459 = vmatpush1.msra.mxu0 0.0
      %9460 = vmatprep.subr.mxu0 0.0
      %9461 = vmatpush1.msra.mxu0 0.0
      %9462 = vmatprep.subr.mxu0 0.0
      %9463 = vmatpush1.msra.mxu0 0.0
      %9464 = vmatprep.subr.mxu0 0.0
      %9465 = vmatpush1.msra.mxu0 0.0
      %9466 = vmatprep.subr.mxu0 0.0
      %9467 = vmatpush1.msra.mxu0 0.0
      %9468 = vmatprep.subr.mxu0 0.0
      %9469 = vmatpush1.msra.mxu0 0.0
      %9470 = vmatprep.subr.mxu0 0.0
      %9471 = vmatpush1.msra.mxu0 0.0
      %9472 = vmatprep.subr.mxu0 0.0
      %9473 = vmatpush1.msra.mxu0 0.0
      %9474 = vmatprep.subr.mxu0 0.0
      %9475 = vmatpush1.msra.mxu0 0.0
      %9476 = vmatprep.subr.mxu0 0.0
      %9477 = vmatpush1.msra.mxu0 0.0
      %9478 = vmatprep.subr.mxu0 0.0
      %9479 = vmatpush1.msra.mxu0 0.0
      %9480 = vmatprep.subr.mxu0 0.0
      %9481 = vmatpush1.msra.mxu0 0.0
      %9482 = vmatprep.subr.mxu0 0.0
      %9483 = vmatpush1.msra.mxu0 0.0
      %9484 = vmatprep.subr.mxu0 0.0
      %9485 = vmatpush1.msra.mxu0 0.0
      %9486 = vmatprep.subr.mxu0 0.0
      %9487 = vmatpush1.msra.mxu0 0.0
      %9488 = vmatprep.subr.mxu0 0.0
      %9489 = vmatpush1.msra.mxu0 0.0
      %9490 = vmatprep.subr.mxu0 0.0
      %9491 = vmatpush1.msra.mxu0 0.0
      %9492 = vmatprep.subr.mxu0 0.0
      %9493 = vmatpush1.msra.mxu0 0.0
      %9494 = vmatprep.subr.mxu0 0.0
      %9495 = vmatpush1.msra.mxu0 0.0
      %9496 = vmatprep.mubr.f32.mxu0 0.0
      %v9497 = vand.u32 %v8355, 4294901760
      %9498 = vmatmul.mubr.f32.gmra.mrb[0].mxu0 %v9497
      %v9499 = vpop.f32.mrb[0].mxu0
      %v9500 = vadd.f32 %v9321, %v9499
      %v9501 = vpop.f32.mrb[0].mxu0
      %v9502 = vadd.f32 %v9323, %v9501
      %9503 = vmatprep.mubr.f32.mxu0 0.0
      %v9504 = vand.u32 %v8358, 4294901760
      %9505 = vmatmul.mubr.f32.gmra.mrb[0].mxu0 %v9504
      %v9506 = vpop.f32.mrb[0].mxu0
      %v9507 = vadd.f32 %v9328, %v9506
      %v9508 = vpop.f32.mrb[0].mxu0
      %v9509 = vadd.f32 %v9330, %v9508
      %9510 = vmatprep.mubr.f32.mxu0 0.0
      %v9511 = vand.u32 %v8361, 4294901760
      %9512 = vmatmul.mubr.f32.gmra.mrb[0].mxu0 %v9511
      %v9513 = vpop.f32.mrb[0].mxu0
      %v9514 = vadd.f32 %v9335, %v9513
      %v9515 = vpop.f32.mrb[0].mxu0
      %v9516 = vadd.f32 %v9337, %v9515
      %9517 = vmatprep.mubr.f32.mxu0 0.0
      %v9518 = vand.u32 %v8364, 4294901760
      %9519 = vmatmul.mubr.f32.gmra.mrb[0].mxu0 %v9518
      %v9520 = vpop.f32.mrb[0].mxu0
      %v9521 = vadd.f32 %v9342, %v9520
      %v9522 = vpop.f32.mrb[0].mxu0
      %v9523 = vadd.f32 %v9344, %v9522
      %9524 = vmatprep.mubr.f32.mxu0 0.0
      %v9525 = vand.u32 %v8367, 4294901760
      %9526 = vmatmul.mubr.f32.gmra.mrb[0].mxu0 %v9525
      %v9527 = vpop.f32.mrb[0].mxu0
      %v9528 = vadd.f32 %v9349, %v9527
      %v9529 = vpop.f32.mrb[0].mxu0
      %v9530 = vadd.f32 %v9351, %v9529
      %9531 = vmatprep.mubr.f32.mxu0 0.0
      %v9532 = vand.u32 %v8370, 4294901760
      %9533 = vmatmul.mubr.f32.gmra.mrb[0].mxu0 %v9532
      %v9534 = vpop.f32.mrb[0].mxu0
      %v9535 = vadd.f32 %v9356, %v9534
      %v9536 = vpop.f32.mrb[0].mxu0
      %v9537 = vadd.f32 %v9358, %v9536
      %9538 = vmatprep.mubr.f32.mxu0 0.0
      %v9539 = vand.u32 %v8373, 4294901760
      %9540 = vmatmul.mubr.f32.gmra.mrb[0].mxu0 %v9539
      %v9541 = vpop.f32.mrb[0].mxu0
      %v9542 = vadd.f32 %v9363, %v9541
      %v9543 = vpop.f32.mrb[0].mxu0
      %v9544 = vadd.f32 %v9365, %v9543
      %9545 = vmatprep.mubr.f32.mxu0 0.0
      %v9546 = vand.u32 %v8376, 4294901760
      %9547 = vmatmul.mubr.f32.gmra.mrb[0].mxu0 %v9546
      %v9548 = vpop.f32.mrb[0].mxu0
      %v9549 = vadd.f32 %v9370, %v9548
      %v9550 = vpop.f32.mrb[0].mxu0
      %v9551 = vadd.f32 %v9372, %v9550
      %9552 = vmatprep.mubr.f32.mxu0 0.0
      %v9553 = vand.u32 %v8379, 4294901760
      %9554 = vmatmul.mubr.f32.gmra.mrb[0].mxu0 %v9553
      %v9555 = vpop.f32.mrb[0].mxu0
      %v9556 = vadd.f32 %v9377, %v9555
      %v9557 = vpop.f32.mrb[0].mxu0
      %v9558 = vadd.f32 %v9379, %v9557
      %9559 = vmatprep.mubr.f32.mxu0 0.0
      %v9560 = vand.u32 %v8382, 4294901760
      %9561 = vmatmul.mubr.f32.gmra.mrb[0].mxu0 %v9560
      %v9562 = vpop.f32.mrb[0].mxu0
      %v9563 = vadd.f32 %v9384, %v9562
      %v9564 = vpop.f32.mrb[0].mxu0
      %v9565 = vadd.f32 %v9386, %v9564
      %9566 = vmatprep.mubr.f32.mxu0 0.0
      %v9567 = vand.u32 %v8385, 4294901760
      %9568 = vmatmul.mubr.f32.gmra.mrb[0].mxu0 %v9567
      %v9569 = vpop.f32.mrb[0].mxu0
      %v9570 = vadd.f32 %v9391, %v9569
      %v9571 = vpop.f32.mrb[0].mxu0
      %v9572 = vadd.f32 %v9393, %v9571
      %9573 = vmatprep.mubr.f32.mxu0 0.0
      %v9574 = vand.u32 %v8388, 4294901760
      %9575 = vmatmul.mubr.f32.gmra.mrb[0].mxu0 %v9574
      %v9576 = vpop.f32.mrb[0].mxu0
      %v9577 = vadd.f32 %v9398, %v9576
      %v9578 = vpop.f32.mrb[0].mxu0
      %v9579 = vadd.f32 %v9400, %v9578
      %9580 = vmatprep.mubr.f32.mxu0 0.0
      %v9581 = vand.u32 %v8391, 4294901760
      %9582 = vmatmul.mubr.f32.gmra.mrb[0].mxu0 %v9581
      %v9583 = vpop.f32.mrb[0].mxu0
      %v9584 = vadd.f32 %v9405, %v9583
      %v9585 = vpop.f32.mrb[0].mxu0
      %v9586 = vadd.f32 %v9407, %v9585
      %9587 = vmatprep.mubr.f32.mxu0 0.0
      %v9588 = vand.u32 %v8394, 4294901760
      %9589 = vmatmul.mubr.f32.gmra.mrb[0].mxu0 %v9588
      %v9590 = vpop.f32.mrb[0].mxu0
      %v9591 = vadd.f32 %v9412, %v9590
      %v9592 = vpop.f32.mrb[0].mxu0
      %v9593 = vadd.f32 %v9414, %v9592
      %9594 = vmatprep.mubr.f32.mxu0 0.0
      %v9595 = vand.u32 %v8397, 4294901760
      %9596 = vmatmul.mubr.f32.gmra.mrb[0].mxu0 %v9595
      %v9597 = vpop.f32.mrb[0].mxu0
      %v9598 = vadd.f32 %v9419, %v9597
      %v9599 = vpop.f32.mrb[0].mxu0
      %v9600 = vadd.f32 %v9421, %v9599
      %9601 = vmatprep.mubr.f32.mxu0 0.0
      %v9602 = vand.u32 %v8400, 4294901760
      %9603 = vmatmul.mubr.f32.gmra.mrb[0].mxu0 %v9602
      %v9604 = vpop.f32.mrb[0].mxu0
      %v9605 = vadd.f32 %v9426, %v9604
      %v9606 = vpop.f32.mrb[0].mxu0
      %v9607 = vadd.f32 %v9428, %v9606
      %9608 = vdwg.mxu0
      %v9609 = vmul.f32 %v7103, %v9500
      %v9610 = vmul.f32 %v7105, %v9502
      %v9611 = vmul.f32 %v7111, %v9507
      %v9612 = vmul.f32 %v7113, %v9509
      %v9613 = vmul.f32 %v7119, %v9514
      %v9614 = vmul.f32 %v7121, %v9516
      %v9615 = vmul.f32 %v7127, %v9521
      %v9616 = vmul.f32 %v7129, %v9523
      %v9617 = vmul.f32 %v7135, %v9528
      %v9618 = vmul.f32 %v7137, %v9530
      %v9619 = vmul.f32 %v7143, %v9535
      %v9620 = vmul.f32 %v7145, %v9537
      %v9621 = vmul.f32 %v7151, %v9542
      %v9622 = vmul.f32 %v7153, %v9544
      %v9623 = vmul.f32 %v7159, %v9549
      %v9624 = vmul.f32 %v7161, %v9551
      %v9625 = vmul.f32 %v7167, %v9556
      %v9626 = vmul.f32 %v7169, %v9558
      %v9627 = vmul.f32 %v7175, %v9563
      %v9628 = vmul.f32 %v7177, %v9565
      %v9629 = vmul.f32 %v7183, %v9570
      %v9630 = vmul.f32 %v7185, %v9572
      %v9631 = vmul.f32 %v7191, %v9577
      %v9632 = vmul.f32 %v7193, %v9579
      %v9633 = vmul.f32 %v7199, %v9584
      %v9634 = vmul.f32 %v7201, %v9586
      %v9635 = vmul.f32 %v7207, %v9591
      %v9636 = vmul.f32 %v7209, %v9593
      %v9637 = vmul.f32 %v7215, %v9598
      %v9638 = vmul.f32 %v7217, %v9600
      %v9639 = vmul.f32 %v7223, %v9605
      %v9640 = vmul.f32 %v7225, %v9607
      %9641 = vst [vmem:[%s367] sm:$0xff] %v9609
      %vm9642 = vcmask 785408
      %9643 = vst.msk [vmem:[%s367 + $0x8] sm:$0xff] %vm9642, %v9610
      %9644 = vst [vmem:[%s367 + $0x10] sm:$0xff] %v9611
      %9645 = vst.msk [vmem:[%s367 + $0x18] sm:$0xff] %vm9642, %v9612
      %9646 = vst [vmem:[%s367 + $0x20] sm:$0xff] %v9613
      %9647 = vst.msk [vmem:[%s367 + $0x28] sm:$0xff] %vm9642, %v9614
      %9648 = vst [vmem:[%s367 + $0x30] sm:$0xff] %v9615
      %9649 = vst.msk [vmem:[%s367 + $0x38] sm:$0xff] %vm9642, %v9616
      %9650 = vst [vmem:[%s367 + $0x40] sm:$0xff] %v9617
      %9651 = vst.msk [vmem:[%s367 + $0x48] sm:$0xff] %vm9642, %v9618
      %9652 = vst [vmem:[%s367 + $0x50] sm:$0xff] %v9619
      %9653 = vst.msk [vmem:[%s367 + $0x58] sm:$0xff] %vm9642, %v9620
      %9654 = vst [vmem:[%s367 + $0x60] sm:$0xff] %v9621
      %9655 = vst.msk [vmem:[%s367 + $0x68] sm:$0xff] %vm9642, %v9622
      %9656 = vst [vmem:[%s367 + $0x70] sm:$0xff] %v9623
      %9657 = vst.msk [vmem:[%s367 + $0x78] sm:$0xff] %vm9642, %v9624
      %9658 = vst [vmem:[%s367 + $0x80] sm:$0xff] %v9625
      %9659 = vst.msk [vmem:[%s367 + $0x88] sm:$0xff] %vm9642, %v9626
      %9660 = vst [vmem:[%s367 + $0x90] sm:$0xff] %v9627
      %9661 = vst.msk [vmem:[%s367 + $0x98] sm:$0xff] %vm9642, %v9628
      %9662 = vst [vmem:[%s367 + $0xa0] sm:$0xff] %v9629
      %9663 = vst.msk [vmem:[%s367 + $0xa8] sm:$0xff] %vm9642, %v9630
      %9664 = vst [vmem:[%s367 + $0xb0] sm:$0xff] %v9631
      %9665 = vst.msk [vmem:[%s367 + $0xb8] sm:$0xff] %vm9642, %v9632
      %9666 = vst [vmem:[%s367 + $0xc0] sm:$0xff] %v9633
      %9667 = vst.msk [vmem:[%s367 + $0xc8] sm:$0xff] %vm9642, %v9634
      %9668 = vst [vmem:[%s367 + $0xd0] sm:$0xff] %v9635
      %9669 = vst.msk [vmem:[%s367 + $0xd8] sm:$0xff] %vm9642, %v9636
      %9670 = vst [vmem:[%s367 + $0xe0] sm:$0xff] %v9637
      %9671 = vst.msk [vmem:[%s367 + $0xe8] sm:$0xff] %vm9642, %v9638
      %9672 = vst [vmem:[%s367 + $0xf0] sm:$0xff] %v9639
      %9673 = vst.msk [vmem:[%s367 + $0xf8] sm:$0xff] %vm9642, %v9640
      %s9674 = smul.u32 16, %s22
      %p9675 = scmp.lt.s32.totalorder %s9674, 31
      %s9676 = scalar_select %p9675, %s9674, 31
      %s9677 = smul.addr %s9676, 2
      %s9678 = smul.addr %s9677, 8
      %s9679 = scalar_lea.vmem %s10, %s9678
      // Predicated region
      $region61: #{tpu_custom_call.1} parent=59 // pred_check
        %p9680 = pneg %p255
      $region62: #{tpu_custom_call.1} parent=59 // pred_check_branch
        %9682 = sbr.rel (%p9680) target = $region64
      $region63: #{tpu_custom_call.1} parent=59 // pred_region
        %s9683 = smul.u32 16, %s22
      $region64: #{tpu_custom_call.1} parent=59 // pred_fallthru
        _
    $region60: #{tpu_custom_call.1} parent=5 // pred_fallthru
      _
    %p9684 = scmp.le.s32.totalorder 2, %s17
    // Predicated region
    $region65: #{tpu_custom_call.1} parent=5 // pred_check
      %p9685 = pneg %p9684
    $region66: #{tpu_custom_call.1} parent=5 // pred_check_branch
      %9687 = sbr.rel (%p9685) target = $region68
    $region67: #{tpu_custom_call.1} parent=5 // pred_region
      %s9688 = ssub.s32 %s17, 2
      // Predicated region
      $region69: #{tpu_custom_call.1} parent=67 // pred_check
        %p9689 = pneg %p261
      $region70: #{tpu_custom_call.1} parent=67 // pred_check_branch
        %9691 = sbr.rel (%p9689) target = $region72
      $region71: #{tpu_custom_call.1} parent=67 // pred_region
        %s9692 = smul.u32 16, %s23
        %p9693 = scmp.lt.s32.totalorder %s9692, 31
        %s9694 = scalar_select %p9693, %s9692, 31
        %s9695 = smul.addr %s9694, 2
        %s9696 = smul.addr %s9695, 8
        %s9697 = scalar_lea.vmem %s10, %s9696
      $region72: #{tpu_custom_call.1} parent=67 // pred_fallthru
        _
    $region68: #{tpu_custom_call.1} parent=5 // pred_fallthru
      _
  $region6: #{tpu_custom_call.1} parent=0 // loop_footer
    %s21 = sadd.s32 1, %s17
  $region7: #{tpu_custom_call.1} parent=0 // loop_footer_branch
    %16 = sbr.rel target = $region3
  $region8: #{tpu_custom_call.1} parent=0 // loop_exit
    _

</llo_original>
